<compile_context>
chip_gen: v7x
topology: tpu7x:2x2x1
jax: 0.10.0
libtpu: 0.0.40
codegen_flags: <defaults>
</compile_context>

<pallas_src>
import jax
import jax.numpy as jnp
from jax.experimental import pallas as pl
from jax.experimental.pallas import tpu as pltpu


_PACK = 64  # samples packed per lane-dense row: 10*64 = 640 = 5*128 lanes


# --------------------------------------------------------------------------
# Kernel: one fused 3-layer MLP on a (tile_rows, in_cols) activation tile.
# Works unchanged for both the row-tiled path (in_cols=10) and the packed
# lane-dense path (in_cols=640 with block-diagonal weights).
# --------------------------------------------------------------------------
def mlp_kernel(x_ref, w1_ref, b1_ref, w2_ref, b2_ref, w3_ref, b3_ref, o_ref):
    x = x_ref[...]
    h = jnp.dot(x, w1_ref[...], preferred_element_type=jnp.float32) + b1_ref[...]
    h = jnp.maximum(h, 0.0)
    h = jnp.dot(h, w2_ref[...], preferred_element_type=jnp.float32) + b2_ref[...]
    h = jnp.maximum(h, 0.0)
    h = jnp.dot(h, w3_ref[...], preferred_element_type=jnp.float32) + b3_ref[...]
    o_ref[...] = h.astype(o_ref.dtype)


# --------------------------------------------------------------------------
# Helpers
# --------------------------------------------------------------------------
def _tpu_vmem_bytes():
    """Best-effort per-core VMEM capacity; conservative fallback (v7x)."""
    try:
        info = pltpu.get_tpu_info()
        vmem = getattr(info, "vmem_capacity_bytes", None)
        if vmem:
            return int(vmem)
    except Exception:
        pass
    return 64 << 20


def _default_tiling():
    """Per-generation tile sizes / scoped-VMEM limits (see review)."""
    vmem = _tpu_vmem_bytes()
    if vmem >= (100 << 20):
        # v5e / v6e: 128 MiB physical VMEM -> big tiles, raised scoped limit.
        return dict(row_tile=16384, row_vmem=64 << 20,
                    packed_tile=512, packed_vmem=64 << 20)
    # v7x: 64 MiB physical per TensorCore -> stay under budget.
    return dict(row_tile=8192, row_vmem=None,
                packed_tile=256, packed_vmem=48 << 20)


def _choose_tile(rows, requested, *, force_split_above=None):
    """8-aligned tile <= rows; optionally force >= 2 grid steps (v7x megacore)."""
    tb = max(1, min(int(requested), int(rows)))
    if tb >= 8:
        tb -= tb % 8                 # keep (8,128) sublane constraint
    else:
        return int(rows)             # full-extent block is always legal
    if (force_split_above is not None and rows >= force_split_above
            and tb >= rows):
        half = rows // 2
        tb = max(8, half - half % 8)  # >= 2 steps -> both TCs usable on v7x
    return tb


def _pack_params(params, pack=_PACK):
    """Block-diagonal (lane-dense) copies of the tiny Linear weights."""
    w1, b1, w2, b2, w3, b3 = params
    eye = jnp.eye(pack, dtype=w1.dtype)
    return (jnp.kron(eye, w1), jnp.tile(b1, (1, pack)),
            jnp.kron(eye, w2), jnp.tile(b2, (1, pack)),
            jnp.kron(eye, w3), jnp.tile(b3, (1, pack)))


def _cost_estimate(x2d, wb, out_elems):
    flops = sum(2 * x2d.shape[0] * w.shape[0] * w.shape[1] for w in wb[::2])
    bytes_accessed = (int(x2d.size) * x2d.dtype.itemsize
                      + out_elems * x2d.dtype.itemsize
                      + sum(int(p.size) * p.dtype.itemsize for p in wb))
    return pl.CostEstimate(flops=flops, transcendentals=0,
                           bytes_accessed=bytes_accessed)


def _run_fused_mlp(x2d, wb, out_cols, *, tile_rows, vmem_limit_bytes):
    rows, in_cols = x2d.shape
    grid = (pl.cdiv(rows, tile_rows),)

    tile_map = lambda i: (i, 0)      # streamed row tiles (x / out)
    const_map = lambda i: (0, 0)     # weights/biases: VMEM-resident

    in_specs = [pl.BlockSpec((tile_rows, in_cols), tile_map)]
    in_specs += [pl.BlockSpec(p.shape, const_map) for p in wb]
    out_spec = pl.BlockSpec((tile_rows, out_cols), tile_map)

    cp_kwargs = dict(dimension_semantics=("parallel",))
    if vmem_limit_bytes:
        cp_kwargs["vmem_limit_bytes"] = int(vmem_limit_bytes)

    return pl.pallas_call(
        mlp_kernel,
        out_shape=jax.ShapeDtypeStruct((rows, out_cols), x2d.dtype),
        grid=grid,
        in_specs=in_specs,
        out_specs=out_spec,
        compiler_params=pltpu.CompilerParams(**cp_kwargs),
        cost_estimate=_cost_estimate(x2d, wb, rows * out_cols),
    )(x2d, *wb)


# --------------------------------------------------------------------------
# Public forward
# --------------------------------------------------------------------------
def mlp_forward(x, params, *, block_batch=None, use_packed=None):
    """Fused MLP forward. x: (batch, 10) -> (batch, 10)."""
    w1, b1, w2, b2, w3, b3 = params
    batch, in_f = x.shape
    out_f = w3.shape[1]
    cfg = _default_tiling()

    if use_packed is None:
        use_packed = (batch % _PACK == 0) and batch >= _PACK

    if use_packed and batch % _PACK == 0:
        rows = batch // _PACK
        req_rows = (block_batch // _PACK) if block_batch else cfg["packed_tile"]
        tile = _choose_tile(rows, max(1, req_rows), force_split_above=128)
        xp = x.reshape(rows, in_f * _PACK)            # free row-major view
        wb = _pack_params(params, _PACK)
        out = _run_fused_mlp(xp, wb, out_f * _PACK,
                             tile_rows=tile,
                             vmem_limit_bytes=cfg["packed_vmem"])
        return out.reshape(batch, out_f)

    req = block_batch if block_batch else cfg["row_tile"]
    tile = _choose_tile(batch, req, force_split_above=512)
    return _run_fused_mlp(x, params, out_f,
                          tile_rows=tile, vmem_limit_bytes=cfg["row_vmem"])


# --------------------------------------------------------------------------
# Parameter init + pure-JAX reference (mirrors the PyTorch module)
# --------------------------------------------------------------------------
def init_params(key):
    """nn.Linear-shaped params; weights stored (in, out) so kernel does x @ W."""
    dims = [(10, 20), (20, 20), (20, 10)]
    params = []
    keys = jax.random.split(key, 2 * len(dims))
    for i, (fan_in, fan_out) in enumerate(dims):
        bound = 1.0 / jnp.sqrt(fan_in)
        w = jax.random.uniform(keys[2 * i], (fan_in, fan_out),
                               jnp.float32, -bound, bound)
        b = jax.random.uniform(keys[2 * i + 1], (1, fan_out),
                               jnp.float32, -bound, bound)
        params.extend([w, b])
    return tuple(params)


def mlp_reference(x, params):
    w1, b1, w2, b2, w3, b3 = params
    h = jnp.maximum(x @ w1 + b1, 0.0)
    h = jnp.maximum(h @ w2 + b2, 0.0)
    return h @ w3 + b3


if __name__ == "__main__":
    key = jax.random.PRNGKey(0)
    k_x, k_p, k_x2 = jax.random.split(key, 3)

    params = init_params(k_p)

    # Small shapes consistent with Linear(10, ...).
    batch = 128
    x = jax.random.normal(k_x, (batch, 10), jnp.float32)
    ref = mlp_reference(x, params)

    # 1) Default path: lane-dense packed layout (batch % 64 == 0).
    out_packed = jax.block_until_ready(mlp_forward(x, params))
    assert out_packed.shape == (batch, 10)
    assert jnp.allclose(out_packed, ref, atol=1e-4, rtol=1e-4)

    # 2) Row-tiled path with a multi-step grid (tile=32 -> grid=(4,)).
    out_rows = jax.block_until_ready(
        mlp_forward(x, params, use_packed=False, block_batch=32))
    assert jnp.allclose(out_rows, ref, atol=1e-4, rtol=1e-4)

    # 3) Larger batch: row path exercises the forced >=2-step split (megacore);
    #    packed path exercises a multiple-of-8 packed-row tile.
    batch2 = 1024
    x2 = jax.random.normal(k_x2, (batch2, 10), jnp.float32)
    ref2 = mlp_reference(x2, params)
    out2_rows = jax.block_until_ready(mlp_forward(x2, params, use_packed=False))
    out2_packed = jax.block_until_ready(mlp_forward(x2, params))
    assert jnp.allclose(out2_rows, ref2, atol=1e-4, rtol=1e-4)
    assert jnp.allclose(out2_packed, ref2, atol=1e-4, rtol=1e-4)

    print("KERNEL_OK")
</pallas_src>

<mosaic_0001>
module attributes {stable_mosaic.version = 11 : i64} {
  func.func @mlp_kernel(%arg0: i32, %arg1: memref<2x640xf32, #tpu.memory_space<vmem>>, %arg2: memref<640x1280xf32, #tpu.memory_space<vmem>>, %arg3: memref<1x1280xf32, #tpu.memory_space<vmem>>, %arg4: memref<1280x1280xf32, #tpu.memory_space<vmem>>, %arg5: memref<1x1280xf32, #tpu.memory_space<vmem>>, %arg6: memref<1280x640xf32, #tpu.memory_space<vmem>>, %arg7: memref<1x640xf32, #tpu.memory_space<vmem>>, %arg8: memref<2x640xf32, #tpu.memory_space<vmem>>) attributes {dimension_semantics = [#tpu.dimension_semantics<parallel>], iteration_bounds = array<i64: 1>, scalar_prefetch = 0 : i64, scratch_operands = 0 : i64, tpu.core_type = #tpu.core_type<tc>, window_params = [{transform_indices = @transform_0, window_bounds = array<i64: 2, 640>}, {pipeline_mode = #tpu.pipeline_mode<synchronous>, transform_indices = @transform_1, window_bounds = array<i64: 640, 1280>}, {pipeline_mode = #tpu.pipeline_mode<synchronous>, transform_indices = @transform_2, window_bounds = array<i64: 1, 1280>}, {pipeline_mode = #tpu.pipeline_mode<synchronous>, transform_indices = @transform_3, window_bounds = array<i64: 1280, 1280>}, {pipeline_mode = #tpu.pipeline_mode<synchronous>, transform_indices = @transform_4, window_bounds = array<i64: 1, 1280>}, {pipeline_mode = #tpu.pipeline_mode<synchronous>, transform_indices = @transform_5, window_bounds = array<i64: 1280, 640>}, {pipeline_mode = #tpu.pipeline_mode<synchronous>, transform_indices = @transform_6, window_bounds = array<i64: 1, 640>}, {transform_indices = @transform_7, window_bounds = array<i64: 2, 640>}]} {
    %c0 = arith.constant 0 : index
    %c0_0 = arith.constant 0 : index
    %0 = vector.load %arg1[%c0, %c0_0] : memref<2x640xf32, #tpu.memory_space<vmem>>, vector<2x640xf32>
    %c0_1 = arith.constant 0 : index
    %c0_2 = arith.constant 0 : index
    %1 = vector.load %arg2[%c0_1, %c0_2] : memref<640x1280xf32, #tpu.memory_space<vmem>>, vector<640x1280xf32>
    %cst = arith.constant dense<0.000000e+00> : vector<2x1280xf32>
    %2 = tpu.matmul %0, %1, %cst {dimension_numbers = #tpu.dot_dimension_numbers<[1], [0], [0], [1], [0, 0, 1, 1], [], []>} : vector<2x640xf32>, vector<640x1280xf32>, vector<2x1280xf32> -> vector<2x1280xf32>
    %c0_3 = arith.constant 0 : index
    %c0_4 = arith.constant 0 : index
    %3 = vector.load %arg3[%c0_3, %c0_4] : memref<1x1280xf32, #tpu.memory_space<vmem>>, vector<1x1280xf32>
    %4 = vector.broadcast %3 : vector<1x1280xf32> to vector<2x1280xf32>
    %5 = arith.addf %2, %4 : vector<2x1280xf32>
    %cst_5 = arith.constant 0.000000e+00 : f32
    %6 = vector.broadcast %cst_5 : f32 to vector<2x1280xf32>
    %7 = arith.maximumf %5, %6 : vector<2x1280xf32>
    %c0_6 = arith.constant 0 : index
    %c0_7 = arith.constant 0 : index
    %8 = vector.load %arg4[%c0_6, %c0_7] : memref<1280x1280xf32, #tpu.memory_space<vmem>>, vector<1280x1280xf32>
    %cst_8 = arith.constant dense<0.000000e+00> : vector<2x1280xf32>
    %9 = tpu.matmul %7, %8, %cst_8 {dimension_numbers = #tpu.dot_dimension_numbers<[1], [0], [0], [1], [0, 0, 1, 1], [], []>} : vector<2x1280xf32>, vector<1280x1280xf32>, vector<2x1280xf32> -> vector<2x1280xf32>
    %c0_9 = arith.constant 0 : index
    %c0_10 = arith.constant 0 : index
    %10 = vector.load %arg5[%c0_9, %c0_10] : memref<1x1280xf32, #tpu.memory_space<vmem>>, vector<1x1280xf32>
    %11 = vector.broadcast %10 : vector<1x1280xf32> to vector<2x1280xf32>
    %12 = arith.addf %9, %11 : vector<2x1280xf32>
    %cst_11 = arith.constant 0.000000e+00 : f32
    %13 = vector.broadcast %cst_11 : f32 to vector<2x1280xf32>
    %14 = arith.maximumf %12, %13 : vector<2x1280xf32>
    %c0_12 = arith.constant 0 : index
    %c0_13 = arith.constant 0 : index
    %15 = vector.load %arg6[%c0_12, %c0_13] : memref<1280x640xf32, #tpu.memory_space<vmem>>, vector<1280x640xf32>
    %cst_14 = arith.constant dense<0.000000e+00> : vector<2x640xf32>
    %16 = tpu.matmul %14, %15, %cst_14 {dimension_numbers = #tpu.dot_dimension_numbers<[1], [0], [0], [1], [0, 0, 1, 1], [], []>} : vector<2x1280xf32>, vector<1280x640xf32>, vector<2x640xf32> -> vector<2x640xf32>
    %c0_15 = arith.constant 0 : index
    %c0_16 = arith.constant 0 : index
    %17 = vector.load %arg7[%c0_15, %c0_16] : memref<1x640xf32, #tpu.memory_space<vmem>>, vector<1x640xf32>
    %18 = vector.broadcast %17 : vector<1x640xf32> to vector<2x640xf32>
    %19 = arith.addf %16, %18 : vector<2x640xf32>
    %c0_17 = arith.constant 0 : index
    %c0_18 = arith.constant 0 : index
    %20 = vector.load %arg8[%c0_17, %c0_18] : memref<2x640xf32, #tpu.memory_space<vmem>>, vector<2x640xf32>
    tpu.vector_store %arg8[%c0_17, %c0_18], %19 {strides = array<i32>} : memref<2x640xf32, #tpu.memory_space<vmem>>, vector<2x640xf32>,
    return
  }
  func.func @transform_0(%arg0: i32) -> (i32, i32) {
    %c0_i32 = arith.constant 0 : i32
    %c0_i32_0 = arith.constant 0 : i32
    return %arg0, %c0_i32 : i32, i32
  }
  func.func @transform_1(%arg0: i32) -> (i32, i32) {
    %c0_i32 = arith.constant 0 : i32
    %c0_i32_0 = arith.constant 0 : i32
    %c0_i32_1 = arith.constant 0 : i32
    return %c0_i32, %c0_i32_0 : i32, i32
  }
  func.func @transform_2(%arg0: i32) -> (i32, i32) {
    %c0_i32 = arith.constant 0 : i32
    %c0_i32_0 = arith.constant 0 : i32
    %c0_i32_1 = arith.constant 0 : i32
    return %c0_i32, %c0_i32_0 : i32, i32
  }
  func.func @transform_3(%arg0: i32) -> (i32, i32) {
    %c0_i32 = arith.constant 0 : i32
    %c0_i32_0 = arith.constant 0 : i32
    %c0_i32_1 = arith.constant 0 : i32
    return %c0_i32, %c0_i32_0 : i32, i32
  }
  func.func @transform_4(%arg0: i32) -> (i32, i32) {
    %c0_i32 = arith.constant 0 : i32
    %c0_i32_0 = arith.constant 0 : i32
    %c0_i32_1 = arith.constant 0 : i32
    return %c0_i32, %c0_i32_0 : i32, i32
  }
  func.func @transform_5(%arg0: i32) -> (i32, i32) {
    %c0_i32 = arith.constant 0 : i32
    %c0_i32_0 = arith.constant 0 : i32
    %c0_i32_1 = arith.constant 0 : i32
    return %c0_i32, %c0_i32_0 : i32, i32
  }
  func.func @transform_6(%arg0: i32) -> (i32, i32) {
    %c0_i32 = arith.constant 0 : i32
    %c0_i32_0 = arith.constant 0 : i32
    %c0_i32_1 = arith.constant 0 : i32
    return %c0_i32, %c0_i32_0 : i32, i32
  }
  func.func @transform_7(%arg0: i32) -> (i32, i32) {
    %c0_i32 = arith.constant 0 : i32
    %c0_i32_0 = arith.constant 0 : i32
    return %arg0, %c0_i32 : i32, i32
  }
}

</mosaic_0001>

<llo_original>
// kernel: tpu_custom_call.1
$region0: #{tpu_custom_call.1}
  #allocation0 [shape = 'u32[]', space=smem, size = 0x4, offset = 0x4, fixed_abs, tag = 'smem constant byte address 0x4 - core index']
  #allocation1 [shape = 'u32[144,128]{1,0:T(1,128)}', space=vmem, size = 0x12000, scoped, tag = 'internal scratch']
  %s0 = inlined_call_operand.hbm [shape: f32[2,640], index: 0, kind: input, shape index: {}]
  %s1 = inlined_call_operand.hbm [shape: f32[640,1280], index: 1, kind: input, shape index: {}]
  %s2 = inlined_call_operand.hbm [shape: f32[1,1280], index: 2, kind: input, shape index: {}]
  %s3 = inlined_call_operand.hbm [shape: f32[1280,1280], index: 3, kind: input, shape index: {}]
  %s4 = inlined_call_operand.hbm [shape: f32[1,1280], index: 4, kind: input, shape index: {}]
  %s5 = inlined_call_operand.hbm [shape: f32[1280,640], index: 5, kind: input, shape index: {}]
  %s6 = inlined_call_operand.hbm [shape: f32[1,640], index: 6, kind: input, shape index: {}]
  %s7 = inlined_call_operand.hbm [shape: f32[2,640], index: 7, kind: output, shape index: {}]
  %s8 = sld [smem:[#allocation0]]
  $region66: #{tpu_custom_call.1} parent=0
    _
  %s10 = ssub.s32 1, %s8
  %s11 = scalar_select 0, %s10, %s8
  $region1: #{tpu_custom_call.1} parent=0
    #allocation2 [shape = 'u8[5120]{0}', space=vmem, size = 0x1400, scoped, tag = 'input window, operand 0, single buffered']
    #allocation3 [shape = 's32[1]{0}', space=sflag, size = 0x4, scoped, tag = 'scoped memory for tpu_custom_call.1']
    #allocation4 [shape = 's32[1]{0}', space=sflag, size = 0x4, scoped, tag = 'scoped memory for tpu_custom_call.1']
    #allocation5 [shape = 'u8[3276800]{0}', space=vmem, size = 0x320000, scoped, tag = 'input window, operand 1, single buffered']
    #allocation6 [shape = 's32[1]{0}', space=sflag, size = 0x4, scoped, tag = 'scoped memory for tpu_custom_call.1']
    #allocation7 [shape = 'u8[5120]{0}', space=vmem, size = 0x1400, scoped, tag = 'input window, operand 2, single buffered']
    #allocation8 [shape = 'u8[6553600]{0}', space=vmem, size = 0x640000, scoped, tag = 'input window, operand 3, single buffered']
    #allocation9 [shape = 's32[1]{0}', space=sflag, size = 0x4, scoped, tag = 'scoped memory for tpu_custom_call.1']
    #allocation10 [shape = 'u8[5120]{0}', space=vmem, size = 0x1400, scoped, tag = 'input window, operand 4, single buffered']
    #allocation11 [shape = 'u8[3276800]{0}', space=vmem, size = 0x320000, scoped, tag = 'input window, operand 5, single buffered']
    #allocation12 [shape = 's32[1]{0}', space=sflag, size = 0x4, scoped, tag = 'scoped memory for tpu_custom_call.1']
    #allocation13 [shape = 'u8[2560]{0}', space=vmem, size = 0xc00, scoped, tag = 'input window, operand 6, single buffered']
    #allocation14 [shape = 'u8[5120]{0}', space=vmem, size = 0x1400, scoped, tag = 'output window, operand 0, single buffered']
    %12 = vsyncpa [#allocation3], 0
    %13 = vsyncpa [#allocation6], 0
    %14 = vsyncpa [#allocation9], 0
    %15 = vsyncpa [#allocation12], 0
    %16 = vsyncpa [#allocation4], 0
    // Predicated region
    $region2: #{tpu_custom_call.1} parent=1 // pred_check
      _
    $region3: #{tpu_custom_call.1} parent=1 // pred_check_branch
      %18 = sbr.rel (0) target = $region5
    $region4: #{tpu_custom_call.1} parent=1 // pred_region
      %s20 = ssub.s32 160, 160
      %21 = vsyncadd [#allocation3], %s20
      %s23 = sshll.u32 [#allocation2], 4
      %s24 = int_to_ptr.vmem [resolvable:$true] %s23
      %26 = dma.hbm_to_vmem [thread:$0]  %s0, 160, %s24, [#allocation3]
    $region5: #{tpu_custom_call.1} parent=1 // pred_fallthru
      _
    // Predicated region
    $region6: #{tpu_custom_call.1} parent=1 // pred_check
      _
    $region7: #{tpu_custom_call.1} parent=1 // pred_check_branch
      %28 = sbr.rel (0) target = $region9
    $region8: #{tpu_custom_call.1} parent=1 // pred_region
      %s30 = ssub.s32 102400, 102400
      %31 = vsyncadd [#allocation6], %s30
      %s32 = sshll.u32 [#allocation5], 4
      %s33 = int_to_ptr.vmem [resolvable:$true] %s32
      %38 = dma.hbm_to_vmem [thread:$0]  %s1, 102400, %s33, [#allocation6], 1280, 1280, 80
    $region9: #{tpu_custom_call.1} parent=1 // pred_fallthru
      _
    // Predicated region
    $region10: #{tpu_custom_call.1} parent=1 // pred_check
      _
    $region11: #{tpu_custom_call.1} parent=1 // pred_check_branch
      %40 = sbr.rel (0) target = $region13
    $region12: #{tpu_custom_call.1} parent=1 // pred_region
      %s42 = ssub.s32 160, 160
      %43 = vsyncadd [#allocation6], %s42
      %s45 = sshll.u32 [#allocation7], 4
      %s46 = int_to_ptr.vmem [resolvable:$true] %s45
      %48 = dma.hbm_to_vmem [thread:$0]  %s2, 160, %s46, [#allocation6]
    $region13: #{tpu_custom_call.1} parent=1 // pred_fallthru
      _
    // Predicated region
    $region14: #{tpu_custom_call.1} parent=1 // pred_check
      _
    $region15: #{tpu_custom_call.1} parent=1 // pred_check_branch
      %50 = sbr.rel (0) target = $region17
    $region16: #{tpu_custom_call.1} parent=1 // pred_region
      %s52 = ssub.s32 204800, 204800
      %53 = vsyncadd [#allocation9], %s52
      %s54 = sshll.u32 [#allocation8], 4
      %s55 = int_to_ptr.vmem [resolvable:$true] %s54
      %60 = dma.hbm_to_vmem [thread:$0]  %s3, 204800, %s55, [#allocation9], 1280, 1280, 80
    $region17: #{tpu_custom_call.1} parent=1 // pred_fallthru
      _
    // Predicated region
    $region18: #{tpu_custom_call.1} parent=1 // pred_check
      _
    $region19: #{tpu_custom_call.1} parent=1 // pred_check_branch
      %62 = sbr.rel (0) target = $region21
    $region20: #{tpu_custom_call.1} parent=1 // pred_region
      %s64 = ssub.s32 160, 160
      %65 = vsyncadd [#allocation9], %s64
      %s67 = sshll.u32 [#allocation10], 4
      %s68 = int_to_ptr.vmem [resolvable:$true] %s67
      %70 = dma.hbm_to_vmem [thread:$0]  %s4, 160, %s68, [#allocation9]
    $region21: #{tpu_custom_call.1} parent=1 // pred_fallthru
      _
    // Predicated region
    $region22: #{tpu_custom_call.1} parent=1 // pred_check
      _
    $region23: #{tpu_custom_call.1} parent=1 // pred_check_branch
      %72 = sbr.rel (0) target = $region25
    $region24: #{tpu_custom_call.1} parent=1 // pred_region
      %s74 = ssub.s32 102400, 102400
      %75 = vsyncadd [#allocation12], %s74
      %s76 = sshll.u32 [#allocation11], 4
      %s77 = int_to_ptr.vmem [resolvable:$true] %s76
      %82 = dma.hbm_to_vmem [thread:$0]  %s5, 102400, %s77, [#allocation12], 640, 640, 40
    $region25: #{tpu_custom_call.1} parent=1 // pred_fallthru
      _
    // Predicated region
    $region26: #{tpu_custom_call.1} parent=1 // pred_check
      _
    $region27: #{tpu_custom_call.1} parent=1 // pred_check_branch
      %84 = sbr.rel (0) target = $region29
    $region28: #{tpu_custom_call.1} parent=1 // pred_region
      %s86 = ssub.s32 80, 80
      %87 = vsyncadd [#allocation12], %s86
      %s89 = sshll.u32 [#allocation13], 4
      %s90 = int_to_ptr.vmem [resolvable:$true] %s89
      %92 = dma.hbm_to_vmem [thread:$0]  %s6, 80, %s90, [#allocation12]
    $region29: #{tpu_custom_call.1} parent=1 // pred_fallthru
      _
    // Predicated region
    $region30: #{tpu_custom_call.1} parent=1 // pred_check
      _
    $region31: #{tpu_custom_call.1} parent=1 // pred_check_branch
      %94 = sbr.rel (0) target = $region33
    $region32: #{tpu_custom_call.1} parent=1 // pred_region
      %95 = dma.done [#allocation3], 160
    $region33: #{tpu_custom_call.1} parent=1 // pred_fallthru
      _
    // Predicated region
    $region34: #{tpu_custom_call.1} parent=1 // pred_check
      _
    $region35: #{tpu_custom_call.1} parent=1 // pred_check_branch
      %97 = sbr.rel (0) target = $region37
    $region36: #{tpu_custom_call.1} parent=1 // pred_region
      %98 = dma.done [#allocation6], 102400
    $region37: #{tpu_custom_call.1} parent=1 // pred_fallthru
      _
    // Predicated region
    $region38: #{tpu_custom_call.1} parent=1 // pred_check
      _
    $region39: #{tpu_custom_call.1} parent=1 // pred_check_branch
      %100 = sbr.rel (0) target = $region41
    $region40: #{tpu_custom_call.1} parent=1 // pred_region
      %101 = dma.done [#allocation6], 160
    $region41: #{tpu_custom_call.1} parent=1 // pred_fallthru
      _
    // Predicated region
    $region42: #{tpu_custom_call.1} parent=1 // pred_check
      _
    $region43: #{tpu_custom_call.1} parent=1 // pred_check_branch
      %103 = sbr.rel (0) target = $region45
    $region44: #{tpu_custom_call.1} parent=1 // pred_region
      %104 = dma.done [#allocation9], 204800
    $region45: #{tpu_custom_call.1} parent=1 // pred_fallthru
      _
    // Predicated region
    $region46: #{tpu_custom_call.1} parent=1 // pred_check
      _
    $region47: #{tpu_custom_call.1} parent=1 // pred_check_branch
      %106 = sbr.rel (0) target = $region49
    $region48: #{tpu_custom_call.1} parent=1 // pred_region
      %107 = dma.done [#allocation9], 160
    $region49: #{tpu_custom_call.1} parent=1 // pred_fallthru
      _
    // Predicated region
    $region50: #{tpu_custom_call.1} parent=1 // pred_check
      _
    $region51: #{tpu_custom_call.1} parent=1 // pred_check_branch
      %109 = sbr.rel (0) target = $region53
    $region52: #{tpu_custom_call.1} parent=1 // pred_region
      %110 = dma.done [#allocation12], 102400
    $region53: #{tpu_custom_call.1} parent=1 // pred_fallthru
      _
    // Predicated region
    $region54: #{tpu_custom_call.1} parent=1 // pred_check
      _
    $region55: #{tpu_custom_call.1} parent=1 // pred_check_branch
      %112 = sbr.rel (0) target = $region57
    $region56: #{tpu_custom_call.1} parent=1 // pred_region
      %113 = dma.done [#allocation12], 80
    $region57: #{tpu_custom_call.1} parent=1 // pred_fallthru
      _
    %v114 = vld [vmem:[#allocation2] sm:$0xff]
    %v115 = vld [vmem:[#allocation2 + $0x8] sm:$0x3]
    %v116 = vld [vmem:[#allocation5] sm:$0xff]
    %v117 = vld [vmem:[#allocation5 + $0x8] sm:$0xff]
    %v118 = vld [vmem:[#allocation5 + $0x10] sm:$0xff]
    %v119 = vld [vmem:[#allocation5 + $0x18] sm:$0xff]
    %v120 = vld [vmem:[#allocation5 + $0x20] sm:$0xff]
    %v121 = vld [vmem:[#allocation5 + $0x28] sm:$0xff]
    %v122 = vld [vmem:[#allocation5 + $0x30] sm:$0xff]
    %v123 = vld [vmem:[#allocation5 + $0x38] sm:$0xff]
    %v124 = vld [vmem:[#allocation5 + $0x40] sm:$0xff]
    %v125 = vld [vmem:[#allocation5 + $0x48] sm:$0xff]
    %v126 = vld [vmem:[#allocation5 + $0x50] sm:$0xff]
    %v127 = vld [vmem:[#allocation5 + $0x58] sm:$0xff]
    %v128 = vld [vmem:[#allocation5 + $0x60] sm:$0xff]
    %v129 = vld [vmem:[#allocation5 + $0x68] sm:$0xff]
    %v130 = vld [vmem:[#allocation5 + $0x70] sm:$0xff]
    %v131 = vld [vmem:[#allocation5 + $0x78] sm:$0xff]
    %v132 = vld [vmem:[#allocation5 + $0x80] sm:$0xff]
    %v133 = vld [vmem:[#allocation5 + $0x88] sm:$0xff]
    %v134 = vld [vmem:[#allocation5 + $0x90] sm:$0xff]
    %v135 = vld [vmem:[#allocation5 + $0x98] sm:$0xff]
    %v136 = vld [vmem:[#allocation5 + $0xa0] sm:$0xff]
    %v137 = vld [vmem:[#allocation5 + $0xa8] sm:$0xff]
    %v138 = vld [vmem:[#allocation5 + $0xb0] sm:$0xff]
    %v139 = vld [vmem:[#allocation5 + $0xb8] sm:$0xff]
    %v140 = vld [vmem:[#allocation5 + $0xc0] sm:$0xff]
    %v141 = vld [vmem:[#allocation5 + $0xc8] sm:$0xff]
    %v142 = vld [vmem:[#allocation5 + $0xd0] sm:$0xff]
    %v143 = vld [vmem:[#allocation5 + $0xd8] sm:$0xff]
    %v144 = vld [vmem:[#allocation5 + $0xe0] sm:$0xff]
    %v145 = vld [vmem:[#allocation5 + $0xe8] sm:$0xff]
    %v146 = vld [vmem:[#allocation5 + $0xf0] sm:$0xff]
    %v147 = vld [vmem:[#allocation5 + $0xf8] sm:$0xff]
    %v148 = vld [vmem:[#allocation5 + $0x100] sm:$0xff]
    %v149 = vld [vmem:[#allocation5 + $0x108] sm:$0xff]
    %v150 = vld [vmem:[#allocation5 + $0x110] sm:$0xff]
    %v151 = vld [vmem:[#allocation5 + $0x118] sm:$0xff]
    %v152 = vld [vmem:[#allocation5 + $0x120] sm:$0xff]
    %v153 = vld [vmem:[#allocation5 + $0x128] sm:$0xff]
    %v154 = vld [vmem:[#allocation5 + $0x130] sm:$0xff]
    %v155 = vld [vmem:[#allocation5 + $0x138] sm:$0xff]
    %v156 = vld [vmem:[#allocation5 + $0x140] sm:$0xff]
    %v157 = vld [vmem:[#allocation5 + $0x148] sm:$0xff]
    %v158 = vld [vmem:[#allocation5 + $0x150] sm:$0xff]
    %v159 = vld [vmem:[#allocation5 + $0x158] sm:$0xff]
    %v160 = vld [vmem:[#allocation5 + $0x160] sm:$0xff]
    %v161 = vld [vmem:[#allocation5 + $0x168] sm:$0xff]
    %v162 = vld [vmem:[#allocation5 + $0x170] sm:$0xff]
    %v163 = vld [vmem:[#allocation5 + $0x178] sm:$0xff]
    %v164 = vld [vmem:[#allocation5 + $0x180] sm:$0xff]
    %v165 = vld [vmem:[#allocation5 + $0x188] sm:$0xff]
    %v166 = vld [vmem:[#allocation5 + $0x190] sm:$0xff]
    %v167 = vld [vmem:[#allocation5 + $0x198] sm:$0xff]
    %v168 = vld [vmem:[#allocation5 + $0x1a0] sm:$0xff]
    %v169 = vld [vmem:[#allocation5 + $0x1a8] sm:$0xff]
    %v170 = vld [vmem:[#allocation5 + $0x1b0] sm:$0xff]
    %v171 = vld [vmem:[#allocation5 + $0x1b8] sm:$0xff]
    %v172 = vld [vmem:[#allocation5 + $0x1c0] sm:$0xff]
    %v173 = vld [vmem:[#allocation5 + $0x1c8] sm:$0xff]
    %v174 = vld [vmem:[#allocation5 + $0x1d0] sm:$0xff]
    %v175 = vld [vmem:[#allocation5 + $0x1d8] sm:$0xff]
    %v176 = vld [vmem:[#allocation5 + $0x1e0] sm:$0xff]
    %v177 = vld [vmem:[#allocation5 + $0x1e8] sm:$0xff]
    %v178 = vld [vmem:[#allocation5 + $0x1f0] sm:$0xff]
    %v179 = vld [vmem:[#allocation5 + $0x1f8] sm:$0xff]
    %v180 = vld [vmem:[#allocation5 + $0x200] sm:$0xff]
    %v181 = vld [vmem:[#allocation5 + $0x208] sm:$0xff]
    %v182 = vld [vmem:[#allocation5 + $0x210] sm:$0xff]
    %v183 = vld [vmem:[#allocation5 + $0x218] sm:$0xff]
    %v184 = vld [vmem:[#allocation5 + $0x220] sm:$0xff]
    %v185 = vld [vmem:[#allocation5 + $0x228] sm:$0xff]
    %v186 = vld [vmem:[#allocation5 + $0x230] sm:$0xff]
    %v187 = vld [vmem:[#allocation5 + $0x238] sm:$0xff]
    %v188 = vld [vmem:[#allocation5 + $0x240] sm:$0xff]
    %v189 = vld [vmem:[#allocation5 + $0x248] sm:$0xff]
    %v190 = vld [vmem:[#allocation5 + $0x250] sm:$0xff]
    %v191 = vld [vmem:[#allocation5 + $0x258] sm:$0xff]
    %v192 = vld [vmem:[#allocation5 + $0x260] sm:$0xff]
    %v193 = vld [vmem:[#allocation5 + $0x268] sm:$0xff]
    %v194 = vld [vmem:[#allocation5 + $0x270] sm:$0xff]
    %v195 = vld [vmem:[#allocation5 + $0x278] sm:$0xff]
    %v196 = vld [vmem:[#allocation5 + $0x280] sm:$0xff]
    %v197 = vld [vmem:[#allocation5 + $0x288] sm:$0xff]
    %v198 = vld [vmem:[#allocation5 + $0x290] sm:$0xff]
    %v199 = vld [vmem:[#allocation5 + $0x298] sm:$0xff]
    %v200 = vld [vmem:[#allocation5 + $0x2a0] sm:$0xff]
    %v201 = vld [vmem:[#allocation5 + $0x2a8] sm:$0xff]
    %v202 = vld [vmem:[#allocation5 + $0x2b0] sm:$0xff]
    %v203 = vld [vmem:[#allocation5 + $0x2b8] sm:$0xff]
    %v204 = vld [vmem:[#allocation5 + $0x2c0] sm:$0xff]
    %v205 = vld [vmem:[#allocation5 + $0x2c8] sm:$0xff]
    %v206 = vld [vmem:[#allocation5 + $0x2d0] sm:$0xff]
    %v207 = vld [vmem:[#allocation5 + $0x2d8] sm:$0xff]
    %v208 = vld [vmem:[#allocation5 + $0x2e0] sm:$0xff]
    %v209 = vld [vmem:[#allocation5 + $0x2e8] sm:$0xff]
    %v210 = vld [vmem:[#allocation5 + $0x2f0] sm:$0xff]
    %v211 = vld [vmem:[#allocation5 + $0x2f8] sm:$0xff]
    %v212 = vld [vmem:[#allocation5 + $0x300] sm:$0xff]
    %v213 = vld [vmem:[#allocation5 + $0x308] sm:$0xff]
    %v214 = vld [vmem:[#allocation5 + $0x310] sm:$0xff]
    %v215 = vld [vmem:[#allocation5 + $0x318] sm:$0xff]
    %v216 = vld [vmem:[#allocation5 + $0x320] sm:$0xff]
    %v217 = vld [vmem:[#allocation5 + $0x328] sm:$0xff]
    %v218 = vld [vmem:[#allocation5 + $0x330] sm:$0xff]
    %v219 = vld [vmem:[#allocation5 + $0x338] sm:$0xff]
    %v220 = vld [vmem:[#allocation5 + $0x340] sm:$0xff]
    %v221 = vld [vmem:[#allocation5 + $0x348] sm:$0xff]
    %v222 = vld [vmem:[#allocation5 + $0x350] sm:$0xff]
    %v223 = vld [vmem:[#allocation5 + $0x358] sm:$0xff]
    %v224 = vld [vmem:[#allocation5 + $0x360] sm:$0xff]
    %v225 = vld [vmem:[#allocation5 + $0x368] sm:$0xff]
    %v226 = vld [vmem:[#allocation5 + $0x370] sm:$0xff]
    %v227 = vld [vmem:[#allocation5 + $0x378] sm:$0xff]
    %v228 = vld [vmem:[#allocation5 + $0x380] sm:$0xff]
    %v229 = vld [vmem:[#allocation5 + $0x388] sm:$0xff]
    %v230 = vld [vmem:[#allocation5 + $0x390] sm:$0xff]
    %v231 = vld [vmem:[#allocation5 + $0x398] sm:$0xff]
    %v232 = vld [vmem:[#allocation5 + $0x3a0] sm:$0xff]
    %v233 = vld [vmem:[#allocation5 + $0x3a8] sm:$0xff]
    %v234 = vld [vmem:[#allocation5 + $0x3b0] sm:$0xff]
    %v235 = vld [vmem:[#allocation5 + $0x3b8] sm:$0xff]
    %v236 = vld [vmem:[#allocation5 + $0x3c0] sm:$0xff]
    %v237 = vld [vmem:[#allocation5 + $0x3c8] sm:$0xff]
    %v238 = vld [vmem:[#allocation5 + $0x3d0] sm:$0xff]
    %v239 = vld [vmem:[#allocation5 + $0x3d8] sm:$0xff]
    %v240 = vld [vmem:[#allocation5 + $0x3e0] sm:$0xff]
    %v241 = vld [vmem:[#allocation5 + $0x3e8] sm:$0xff]
    %v242 = vld [vmem:[#allocation5 + $0x3f0] sm:$0xff]
    %v243 = vld [vmem:[#allocation5 + $0x3f8] sm:$0xff]
    %v244 = vld [vmem:[#allocation5 + $0x400] sm:$0xff]
    %v245 = vld [vmem:[#allocation5 + $0x408] sm:$0xff]
    %v246 = vld [vmem:[#allocation5 + $0x410] sm:$0xff]
    %v247 = vld [vmem:[#allocation5 + $0x418] sm:$0xff]
    %v248 = vld [vmem:[#allocation5 + $0x420] sm:$0xff]
    %v249 = vld [vmem:[#allocation5 + $0x428] sm:$0xff]
    %v250 = vld [vmem:[#allocation5 + $0x430] sm:$0xff]
    %v251 = vld [vmem:[#allocation5 + $0x438] sm:$0xff]
    %v252 = vld [vmem:[#allocation5 + $0x440] sm:$0xff]
    %v253 = vld [vmem:[#allocation5 + $0x448] sm:$0xff]
    %v254 = vld [vmem:[#allocation5 + $0x450] sm:$0xff]
    %v255 = vld [vmem:[#allocation5 + $0x458] sm:$0xff]
    %v256 = vld [vmem:[#allocation5 + $0x460] sm:$0xff]
    %v257 = vld [vmem:[#allocation5 + $0x468] sm:$0xff]
    %v258 = vld [vmem:[#allocation5 + $0x470] sm:$0xff]
    %v259 = vld [vmem:[#allocation5 + $0x478] sm:$0xff]
    %v260 = vld [vmem:[#allocation5 + $0x480] sm:$0xff]
    %v261 = vld [vmem:[#allocation5 + $0x488] sm:$0xff]
    %v262 = vld [vmem:[#allocation5 + $0x490] sm:$0xff]
    %v263 = vld [vmem:[#allocation5 + $0x498] sm:$0xff]
    %v264 = vld [vmem:[#allocation5 + $0x4a0] sm:$0xff]
    %v265 = vld [vmem:[#allocation5 + $0x4a8] sm:$0xff]
    %v266 = vld [vmem:[#allocation5 + $0x4b0] sm:$0xff]
    %v267 = vld [vmem:[#allocation5 + $0x4b8] sm:$0xff]
    %v268 = vld [vmem:[#allocation5 + $0x4c0] sm:$0xff]
    %v269 = vld [vmem:[#allocation5 + $0x4c8] sm:$0xff]
    %v270 = vld [vmem:[#allocation5 + $0x4d0] sm:$0xff]
    %v271 = vld [vmem:[#allocation5 + $0x4d8] sm:$0xff]
    %v272 = vld [vmem:[#allocation5 + $0x4e0] sm:$0xff]
    %v273 = vld [vmem:[#allocation5 + $0x4e8] sm:$0xff]
    %v274 = vld [vmem:[#allocation5 + $0x4f0] sm:$0xff]
    %v275 = vld [vmem:[#allocation5 + $0x4f8] sm:$0xff]
    %v276 = vld [vmem:[#allocation5 + $0x500] sm:$0xff]
    %v277 = vld [vmem:[#allocation5 + $0x508] sm:$0xff]
    %v278 = vld [vmem:[#allocation5 + $0x510] sm:$0xff]
    %v279 = vld [vmem:[#allocation5 + $0x518] sm:$0xff]
    %v280 = vld [vmem:[#allocation5 + $0x520] sm:$0xff]
    %v281 = vld [vmem:[#allocation5 + $0x528] sm:$0xff]
    %v282 = vld [vmem:[#allocation5 + $0x530] sm:$0xff]
    %v283 = vld [vmem:[#allocation5 + $0x538] sm:$0xff]
    %v284 = vld [vmem:[#allocation5 + $0x540] sm:$0xff]
    %v285 = vld [vmem:[#allocation5 + $0x548] sm:$0xff]
    %v286 = vld [vmem:[#allocation5 + $0x550] sm:$0xff]
    %v287 = vld [vmem:[#allocation5 + $0x558] sm:$0xff]
    %v288 = vld [vmem:[#allocation5 + $0x560] sm:$0xff]
    %v289 = vld [vmem:[#allocation5 + $0x568] sm:$0xff]
    %v290 = vld [vmem:[#allocation5 + $0x570] sm:$0xff]
    %v291 = vld [vmem:[#allocation5 + $0x578] sm:$0xff]
    %v292 = vld [vmem:[#allocation5 + $0x580] sm:$0xff]
    %v293 = vld [vmem:[#allocation5 + $0x588] sm:$0xff]
    %v294 = vld [vmem:[#allocation5 + $0x590] sm:$0xff]
    %v295 = vld [vmem:[#allocation5 + $0x598] sm:$0xff]
    %v296 = vld [vmem:[#allocation5 + $0x5a0] sm:$0xff]
    %v297 = vld [vmem:[#allocation5 + $0x5a8] sm:$0xff]
    %v298 = vld [vmem:[#allocation5 + $0x5b0] sm:$0xff]
    %v299 = vld [vmem:[#allocation5 + $0x5b8] sm:$0xff]
    %v300 = vld [vmem:[#allocation5 + $0x5c0] sm:$0xff]
    %v301 = vld [vmem:[#allocation5 + $0x5c8] sm:$0xff]
    %v302 = vld [vmem:[#allocation5 + $0x5d0] sm:$0xff]
    %v303 = vld [vmem:[#allocation5 + $0x5d8] sm:$0xff]
    %v304 = vld [vmem:[#allocation5 + $0x5e0] sm:$0xff]
    %v305 = vld [vmem:[#allocation5 + $0x5e8] sm:$0xff]
    %v306 = vld [vmem:[#allocation5 + $0x5f0] sm:$0xff]
    %v307 = vld [vmem:[#allocation5 + $0x5f8] sm:$0xff]
    %v308 = vld [vmem:[#allocation5 + $0x600] sm:$0xff]
    %v309 = vld [vmem:[#allocation5 + $0x608] sm:$0xff]
    %v310 = vld [vmem:[#allocation5 + $0x610] sm:$0xff]
    %v311 = vld [vmem:[#allocation5 + $0x618] sm:$0xff]
    %v312 = vld [vmem:[#allocation5 + $0x620] sm:$0xff]
    %v313 = vld [vmem:[#allocation5 + $0x628] sm:$0xff]
    %v314 = vld [vmem:[#allocation5 + $0x630] sm:$0xff]
    %v315 = vld [vmem:[#allocation5 + $0x638] sm:$0xff]
    %v316 = vld [vmem:[#allocation5 + $0x640] sm:$0xff]
    %v317 = vld [vmem:[#allocation5 + $0x648] sm:$0xff]
    %v318 = vld [vmem:[#allocation5 + $0x650] sm:$0xff]
    %v319 = vld [vmem:[#allocation5 + $0x658] sm:$0xff]
    %v320 = vld [vmem:[#allocation5 + $0x660] sm:$0xff]
    %v321 = vld [vmem:[#allocation5 + $0x668] sm:$0xff]
    %v322 = vld [vmem:[#allocation5 + $0x670] sm:$0xff]
    %v323 = vld [vmem:[#allocation5 + $0x678] sm:$0xff]
    %v324 = vld [vmem:[#allocation5 + $0x680] sm:$0xff]
    %v325 = vld [vmem:[#allocation5 + $0x688] sm:$0xff]
    %v326 = vld [vmem:[#allocation5 + $0x690] sm:$0xff]
    %v327 = vld [vmem:[#allocation5 + $0x698] sm:$0xff]
    %v328 = vld [vmem:[#allocation5 + $0x6a0] sm:$0xff]
    %v329 = vld [vmem:[#allocation5 + $0x6a8] sm:$0xff]
    %v330 = vld [vmem:[#allocation5 + $0x6b0] sm:$0xff]
    %v331 = vld [vmem:[#allocation5 + $0x6b8] sm:$0xff]
    %v332 = vld [vmem:[#allocation5 + $0x6c0] sm:$0xff]
    %v333 = vld [vmem:[#allocation5 + $0x6c8] sm:$0xff]
    %v334 = vld [vmem:[#allocation5 + $0x6d0] sm:$0xff]
    %v335 = vld [vmem:[#allocation5 + $0x6d8] sm:$0xff]
    %v336 = vld [vmem:[#allocation5 + $0x6e0] sm:$0xff]
    %v337 = vld [vmem:[#allocation5 + $0x6e8] sm:$0xff]
    %v338 = vld [vmem:[#allocation5 + $0x6f0] sm:$0xff]
    %v339 = vld [vmem:[#allocation5 + $0x6f8] sm:$0xff]
    %v340 = vld [vmem:[#allocation5 + $0x700] sm:$0xff]
    %v341 = vld [vmem:[#allocation5 + $0x708] sm:$0xff]
    %v342 = vld [vmem:[#allocation5 + $0x710] sm:$0xff]
    %v343 = vld [vmem:[#allocation5 + $0x718] sm:$0xff]
    %v344 = vld [vmem:[#allocation5 + $0x720] sm:$0xff]
    %v345 = vld [vmem:[#allocation5 + $0x728] sm:$0xff]
    %v346 = vld [vmem:[#allocation5 + $0x730] sm:$0xff]
    %v347 = vld [vmem:[#allocation5 + $0x738] sm:$0xff]
    %v348 = vld [vmem:[#allocation5 + $0x740] sm:$0xff]
    %v349 = vld [vmem:[#allocation5 + $0x748] sm:$0xff]
    %v350 = vld [vmem:[#allocation5 + $0x750] sm:$0xff]
    %v351 = vld [vmem:[#allocation5 + $0x758] sm:$0xff]
    %v352 = vld [vmem:[#allocation5 + $0x760] sm:$0xff]
    %v353 = vld [vmem:[#allocation5 + $0x768] sm:$0xff]
    %v354 = vld [vmem:[#allocation5 + $0x770] sm:$0xff]
    %v355 = vld [vmem:[#allocation5 + $0x778] sm:$0xff]
    %v356 = vld [vmem:[#allocation5 + $0x780] sm:$0xff]
    %v357 = vld [vmem:[#allocation5 + $0x788] sm:$0xff]
    %v358 = vld [vmem:[#allocation5 + $0x790] sm:$0xff]
    %v359 = vld [vmem:[#allocation5 + $0x798] sm:$0xff]
    %v360 = vld [vmem:[#allocation5 + $0x7a0] sm:$0xff]
    %v361 = vld [vmem:[#allocation5 + $0x7a8] sm:$0xff]
    %v362 = vld [vmem:[#allocation5 + $0x7b0] sm:$0xff]
    %v363 = vld [vmem:[#allocation5 + $0x7b8] sm:$0xff]
    %v364 = vld [vmem:[#allocation5 + $0x7c0] sm:$0xff]
    %v365 = vld [vmem:[#allocation5 + $0x7c8] sm:$0xff]
    %v366 = vld [vmem:[#allocation5 + $0x7d0] sm:$0xff]
    %v367 = vld [vmem:[#allocation5 + $0x7d8] sm:$0xff]
    %v368 = vld [vmem:[#allocation5 + $0x7e0] sm:$0xff]
    %v369 = vld [vmem:[#allocation5 + $0x7e8] sm:$0xff]
    %v370 = vld [vmem:[#allocation5 + $0x7f0] sm:$0xff]
    %v371 = vld [vmem:[#allocation5 + $0x7f8] sm:$0xff]
    %v372 = vld [vmem:[#allocation5 + $0x800] sm:$0xff]
    %v373 = vld [vmem:[#allocation5 + $0x808] sm:$0xff]
    %v374 = vld [vmem:[#allocation5 + $0x810] sm:$0xff]
    %v375 = vld [vmem:[#allocation5 + $0x818] sm:$0xff]
    %v376 = vld [vmem:[#allocation5 + $0x820] sm:$0xff]
    %v377 = vld [vmem:[#allocation5 + $0x828] sm:$0xff]
    %v378 = vld [vmem:[#allocation5 + $0x830] sm:$0xff]
    %v379 = vld [vmem:[#allocation5 + $0x838] sm:$0xff]
    %v380 = vld [vmem:[#allocation5 + $0x840] sm:$0xff]
    %v381 = vld [vmem:[#allocation5 + $0x848] sm:$0xff]
    %v382 = vld [vmem:[#allocation5 + $0x850] sm:$0xff]
    %v383 = vld [vmem:[#allocation5 + $0x858] sm:$0xff]
    %v384 = vld [vmem:[#allocation5 + $0x860] sm:$0xff]
    %v385 = vld [vmem:[#allocation5 + $0x868] sm:$0xff]
    %v386 = vld [vmem:[#allocation5 + $0x870] sm:$0xff]
    %v387 = vld [vmem:[#allocation5 + $0x878] sm:$0xff]
    %v388 = vld [vmem:[#allocation5 + $0x880] sm:$0xff]
    %v389 = vld [vmem:[#allocation5 + $0x888] sm:$0xff]
    %v390 = vld [vmem:[#allocation5 + $0x890] sm:$0xff]
    %v391 = vld [vmem:[#allocation5 + $0x898] sm:$0xff]
    %v392 = vld [vmem:[#allocation5 + $0x8a0] sm:$0xff]
    %v393 = vld [vmem:[#allocation5 + $0x8a8] sm:$0xff]
    %v394 = vld [vmem:[#allocation5 + $0x8b0] sm:$0xff]
    %v395 = vld [vmem:[#allocation5 + $0x8b8] sm:$0xff]
    %v396 = vld [vmem:[#allocation5 + $0x8c0] sm:$0xff]
    %v397 = vld [vmem:[#allocation5 + $0x8c8] sm:$0xff]
    %v398 = vld [vmem:[#allocation5 + $0x8d0] sm:$0xff]
    %v399 = vld [vmem:[#allocation5 + $0x8d8] sm:$0xff]
    %v400 = vld [vmem:[#allocation5 + $0x8e0] sm:$0xff]
    %v401 = vld [vmem:[#allocation5 + $0x8e8] sm:$0xff]
    %v402 = vld [vmem:[#allocation5 + $0x8f0] sm:$0xff]
    %v403 = vld [vmem:[#allocation5 + $0x8f8] sm:$0xff]
    %v404 = vld [vmem:[#allocation5 + $0x900] sm:$0xff]
    %v405 = vld [vmem:[#allocation5 + $0x908] sm:$0xff]
    %v406 = vld [vmem:[#allocation5 + $0x910] sm:$0xff]
    %v407 = vld [vmem:[#allocation5 + $0x918] sm:$0xff]
    %v408 = vld [vmem:[#allocation5 + $0x920] sm:$0xff]
    %v409 = vld [vmem:[#allocation5 + $0x928] sm:$0xff]
    %v410 = vld [vmem:[#allocation5 + $0x930] sm:$0xff]
    %v411 = vld [vmem:[#allocation5 + $0x938] sm:$0xff]
    %v412 = vld [vmem:[#allocation5 + $0x940] sm:$0xff]
    %v413 = vld [vmem:[#allocation5 + $0x948] sm:$0xff]
    %v414 = vld [vmem:[#allocation5 + $0x950] sm:$0xff]
    %v415 = vld [vmem:[#allocation5 + $0x958] sm:$0xff]
    %v416 = vld [vmem:[#allocation5 + $0x960] sm:$0xff]
    %v417 = vld [vmem:[#allocation5 + $0x968] sm:$0xff]
    %v418 = vld [vmem:[#allocation5 + $0x970] sm:$0xff]
    %v419 = vld [vmem:[#allocation5 + $0x978] sm:$0xff]
    %v420 = vld [vmem:[#allocation5 + $0x980] sm:$0xff]
    %v421 = vld [vmem:[#allocation5 + $0x988] sm:$0xff]
    %v422 = vld [vmem:[#allocation5 + $0x990] sm:$0xff]
    %v423 = vld [vmem:[#allocation5 + $0x998] sm:$0xff]
    %v424 = vld [vmem:[#allocation5 + $0x9a0] sm:$0xff]
    %v425 = vld [vmem:[#allocation5 + $0x9a8] sm:$0xff]
    %v426 = vld [vmem:[#allocation5 + $0x9b0] sm:$0xff]
    %v427 = vld [vmem:[#allocation5 + $0x9b8] sm:$0xff]
    %v428 = vld [vmem:[#allocation5 + $0x9c0] sm:$0xff]
    %v429 = vld [vmem:[#allocation5 + $0x9c8] sm:$0xff]
    %v430 = vld [vmem:[#allocation5 + $0x9d0] sm:$0xff]
    %v431 = vld [vmem:[#allocation5 + $0x9d8] sm:$0xff]
    %v432 = vld [vmem:[#allocation5 + $0x9e0] sm:$0xff]
    %v433 = vld [vmem:[#allocation5 + $0x9e8] sm:$0xff]
    %v434 = vld [vmem:[#allocation5 + $0x9f0] sm:$0xff]
    %v435 = vld [vmem:[#allocation5 + $0x9f8] sm:$0xff]
    %v436 = vld [vmem:[#allocation5 + $0xa00] sm:$0xff]
    %v437 = vld [vmem:[#allocation5 + $0xa08] sm:$0xff]
    %v438 = vld [vmem:[#allocation5 + $0xa10] sm:$0xff]
    %v439 = vld [vmem:[#allocation5 + $0xa18] sm:$0xff]
    %v440 = vld [vmem:[#allocation5 + $0xa20] sm:$0xff]
    %v441 = vld [vmem:[#allocation5 + $0xa28] sm:$0xff]
    %v442 = vld [vmem:[#allocation5 + $0xa30] sm:$0xff]
    %v443 = vld [vmem:[#allocation5 + $0xa38] sm:$0xff]
    %v444 = vld [vmem:[#allocation5 + $0xa40] sm:$0xff]
    %v445 = vld [vmem:[#allocation5 + $0xa48] sm:$0xff]
    %v446 = vld [vmem:[#allocation5 + $0xa50] sm:$0xff]
    %v447 = vld [vmem:[#allocation5 + $0xa58] sm:$0xff]
    %v448 = vld [vmem:[#allocation5 + $0xa60] sm:$0xff]
    %v449 = vld [vmem:[#allocation5 + $0xa68] sm:$0xff]
    %v450 = vld [vmem:[#allocation5 + $0xa70] sm:$0xff]
    %v451 = vld [vmem:[#allocation5 + $0xa78] sm:$0xff]
    %v452 = vld [vmem:[#allocation5 + $0xa80] sm:$0xff]
    %v453 = vld [vmem:[#allocation5 + $0xa88] sm:$0xff]
    %v454 = vld [vmem:[#allocation5 + $0xa90] sm:$0xff]
    %v455 = vld [vmem:[#allocation5 + $0xa98] sm:$0xff]
    %v456 = vld [vmem:[#allocation5 + $0xaa0] sm:$0xff]
    %v457 = vld [vmem:[#allocation5 + $0xaa8] sm:$0xff]
    %v458 = vld [vmem:[#allocation5 + $0xab0] sm:$0xff]
    %v459 = vld [vmem:[#allocation5 + $0xab8] sm:$0xff]
    %v460 = vld [vmem:[#allocation5 + $0xac0] sm:$0xff]
    %v461 = vld [vmem:[#allocation5 + $0xac8] sm:$0xff]
    %v462 = vld [vmem:[#allocation5 + $0xad0] sm:$0xff]
    %v463 = vld [vmem:[#allocation5 + $0xad8] sm:$0xff]
    %v464 = vld [vmem:[#allocation5 + $0xae0] sm:$0xff]
    %v465 = vld [vmem:[#allocation5 + $0xae8] sm:$0xff]
    %v466 = vld [vmem:[#allocation5 + $0xaf0] sm:$0xff]
    %v467 = vld [vmem:[#allocation5 + $0xaf8] sm:$0xff]
    %v468 = vld [vmem:[#allocation5 + $0xb00] sm:$0xff]
    %v469 = vld [vmem:[#allocation5 + $0xb08] sm:$0xff]
    %v470 = vld [vmem:[#allocation5 + $0xb10] sm:$0xff]
    %v471 = vld [vmem:[#allocation5 + $0xb18] sm:$0xff]
    %v472 = vld [vmem:[#allocation5 + $0xb20] sm:$0xff]
    %v473 = vld [vmem:[#allocation5 + $0xb28] sm:$0xff]
    %v474 = vld [vmem:[#allocation5 + $0xb30] sm:$0xff]
    %v475 = vld [vmem:[#allocation5 + $0xb38] sm:$0xff]
    %v476 = vld [vmem:[#allocation5 + $0xb40] sm:$0xff]
    %v477 = vld [vmem:[#allocation5 + $0xb48] sm:$0xff]
    %v478 = vld [vmem:[#allocation5 + $0xb50] sm:$0xff]
    %v479 = vld [vmem:[#allocation5 + $0xb58] sm:$0xff]
    %v480 = vld [vmem:[#allocation5 + $0xb60] sm:$0xff]
    %v481 = vld [vmem:[#allocation5 + $0xb68] sm:$0xff]
    %v482 = vld [vmem:[#allocation5 + $0xb70] sm:$0xff]
    %v483 = vld [vmem:[#allocation5 + $0xb78] sm:$0xff]
    %v484 = vld [vmem:[#allocation5 + $0xb80] sm:$0xff]
    %v485 = vld [vmem:[#allocation5 + $0xb88] sm:$0xff]
    %v486 = vld [vmem:[#allocation5 + $0xb90] sm:$0xff]
    %v487 = vld [vmem:[#allocation5 + $0xb98] sm:$0xff]
    %v488 = vld [vmem:[#allocation5 + $0xba0] sm:$0xff]
    %v489 = vld [vmem:[#allocation5 + $0xba8] sm:$0xff]
    %v490 = vld [vmem:[#allocation5 + $0xbb0] sm:$0xff]
    %v491 = vld [vmem:[#allocation5 + $0xbb8] sm:$0xff]
    %v492 = vld [vmem:[#allocation5 + $0xbc0] sm:$0xff]
    %v493 = vld [vmem:[#allocation5 + $0xbc8] sm:$0xff]
    %v494 = vld [vmem:[#allocation5 + $0xbd0] sm:$0xff]
    %v495 = vld [vmem:[#allocation5 + $0xbd8] sm:$0xff]
    %v496 = vld [vmem:[#allocation5 + $0xbe0] sm:$0xff]
    %v497 = vld [vmem:[#allocation5 + $0xbe8] sm:$0xff]
    %v498 = vld [vmem:[#allocation5 + $0xbf0] sm:$0xff]
    %v499 = vld [vmem:[#allocation5 + $0xbf8] sm:$0xff]
    %v500 = vld [vmem:[#allocation5 + $0xc00] sm:$0xff]
    %v501 = vld [vmem:[#allocation5 + $0xc08] sm:$0xff]
    %v502 = vld [vmem:[#allocation5 + $0xc10] sm:$0xff]
    %v503 = vld [vmem:[#allocation5 + $0xc18] sm:$0xff]
    %v504 = vld [vmem:[#allocation5 + $0xc20] sm:$0xff]
    %v505 = vld [vmem:[#allocation5 + $0xc28] sm:$0xff]
    %v506 = vld [vmem:[#allocation5 + $0xc30] sm:$0xff]
    %v507 = vld [vmem:[#allocation5 + $0xc38] sm:$0xff]
    %v508 = vld [vmem:[#allocation5 + $0xc40] sm:$0xff]
    %v509 = vld [vmem:[#allocation5 + $0xc48] sm:$0xff]
    %v510 = vld [vmem:[#allocation5 + $0xc50] sm:$0xff]
    %v511 = vld [vmem:[#allocation5 + $0xc58] sm:$0xff]
    %v512 = vld [vmem:[#allocation5 + $0xc60] sm:$0xff]
    %v513 = vld [vmem:[#allocation5 + $0xc68] sm:$0xff]
    %v514 = vld [vmem:[#allocation5 + $0xc70] sm:$0xff]
    %v515 = vld [vmem:[#allocation5 + $0xc78] sm:$0xff]
    %v516 = vld [vmem:[#allocation5 + $0xc80] sm:$0xff]
    %v517 = vld [vmem:[#allocation5 + $0xc88] sm:$0xff]
    %v518 = vld [vmem:[#allocation5 + $0xc90] sm:$0xff]
    %v519 = vld [vmem:[#allocation5 + $0xc98] sm:$0xff]
    %v520 = vld [vmem:[#allocation5 + $0xca0] sm:$0xff]
    %v521 = vld [vmem:[#allocation5 + $0xca8] sm:$0xff]
    %v522 = vld [vmem:[#allocation5 + $0xcb0] sm:$0xff]
    %v523 = vld [vmem:[#allocation5 + $0xcb8] sm:$0xff]
    %v524 = vld [vmem:[#allocation5 + $0xcc0] sm:$0xff]
    %v525 = vld [vmem:[#allocation5 + $0xcc8] sm:$0xff]
    %v526 = vld [vmem:[#allocation5 + $0xcd0] sm:$0xff]
    %v527 = vld [vmem:[#allocation5 + $0xcd8] sm:$0xff]
    %v528 = vld [vmem:[#allocation5 + $0xce0] sm:$0xff]
    %v529 = vld [vmem:[#allocation5 + $0xce8] sm:$0xff]
    %v530 = vld [vmem:[#allocation5 + $0xcf0] sm:$0xff]
    %v531 = vld [vmem:[#allocation5 + $0xcf8] sm:$0xff]
    %v532 = vld [vmem:[#allocation5 + $0xd00] sm:$0xff]
    %v533 = vld [vmem:[#allocation5 + $0xd08] sm:$0xff]
    %v534 = vld [vmem:[#allocation5 + $0xd10] sm:$0xff]
    %v535 = vld [vmem:[#allocation5 + $0xd18] sm:$0xff]
    %v536 = vld [vmem:[#allocation5 + $0xd20] sm:$0xff]
    %v537 = vld [vmem:[#allocation5 + $0xd28] sm:$0xff]
    %v538 = vld [vmem:[#allocation5 + $0xd30] sm:$0xff]
    %v539 = vld [vmem:[#allocation5 + $0xd38] sm:$0xff]
    %v540 = vld [vmem:[#allocation5 + $0xd40] sm:$0xff]
    %v541 = vld [vmem:[#allocation5 + $0xd48] sm:$0xff]
    %v542 = vld [vmem:[#allocation5 + $0xd50] sm:$0xff]
    %v543 = vld [vmem:[#allocation5 + $0xd58] sm:$0xff]
    %v544 = vld [vmem:[#allocation5 + $0xd60] sm:$0xff]
    %v545 = vld [vmem:[#allocation5 + $0xd68] sm:$0xff]
    %v546 = vld [vmem:[#allocation5 + $0xd70] sm:$0xff]
    %v547 = vld [vmem:[#allocation5 + $0xd78] sm:$0xff]
    %v548 = vld [vmem:[#allocation5 + $0xd80] sm:$0xff]
    %v549 = vld [vmem:[#allocation5 + $0xd88] sm:$0xff]
    %v550 = vld [vmem:[#allocation5 + $0xd90] sm:$0xff]
    %v551 = vld [vmem:[#allocation5 + $0xd98] sm:$0xff]
    %v552 = vld [vmem:[#allocation5 + $0xda0] sm:$0xff]
    %v553 = vld [vmem:[#allocation5 + $0xda8] sm:$0xff]
    %v554 = vld [vmem:[#allocation5 + $0xdb0] sm:$0xff]
    %v555 = vld [vmem:[#allocation5 + $0xdb8] sm:$0xff]
    %v556 = vld [vmem:[#allocation5 + $0xdc0] sm:$0xff]
    %v557 = vld [vmem:[#allocation5 + $0xdc8] sm:$0xff]
    %v558 = vld [vmem:[#allocation5 + $0xdd0] sm:$0xff]
    %v559 = vld [vmem:[#allocation5 + $0xdd8] sm:$0xff]
    %v560 = vld [vmem:[#allocation5 + $0xde0] sm:$0xff]
    %v561 = vld [vmem:[#allocation5 + $0xde8] sm:$0xff]
    %v562 = vld [vmem:[#allocation5 + $0xdf0] sm:$0xff]
    %v563 = vld [vmem:[#allocation5 + $0xdf8] sm:$0xff]
    %v564 = vld [vmem:[#allocation5 + $0xe00] sm:$0xff]
    %v565 = vld [vmem:[#allocation5 + $0xe08] sm:$0xff]
    %v566 = vld [vmem:[#allocation5 + $0xe10] sm:$0xff]
    %v567 = vld [vmem:[#allocation5 + $0xe18] sm:$0xff]
    %v568 = vld [vmem:[#allocation5 + $0xe20] sm:$0xff]
    %v569 = vld [vmem:[#allocation5 + $0xe28] sm:$0xff]
    %v570 = vld [vmem:[#allocation5 + $0xe30] sm:$0xff]
    %v571 = vld [vmem:[#allocation5 + $0xe38] sm:$0xff]
    %v572 = vld [vmem:[#allocation5 + $0xe40] sm:$0xff]
    %v573 = vld [vmem:[#allocation5 + $0xe48] sm:$0xff]
    %v574 = vld [vmem:[#allocation5 + $0xe50] sm:$0xff]
    %v575 = vld [vmem:[#allocation5 + $0xe58] sm:$0xff]
    %v576 = vld [vmem:[#allocation5 + $0xe60] sm:$0xff]
    %v577 = vld [vmem:[#allocation5 + $0xe68] sm:$0xff]
    %v578 = vld [vmem:[#allocation5 + $0xe70] sm:$0xff]
    %v579 = vld [vmem:[#allocation5 + $0xe78] sm:$0xff]
    %v580 = vld [vmem:[#allocation5 + $0xe80] sm:$0xff]
    %v581 = vld [vmem:[#allocation5 + $0xe88] sm:$0xff]
    %v582 = vld [vmem:[#allocation5 + $0xe90] sm:$0xff]
    %v583 = vld [vmem:[#allocation5 + $0xe98] sm:$0xff]
    %v584 = vld [vmem:[#allocation5 + $0xea0] sm:$0xff]
    %v585 = vld [vmem:[#allocation5 + $0xea8] sm:$0xff]
    %v586 = vld [vmem:[#allocation5 + $0xeb0] sm:$0xff]
    %v587 = vld [vmem:[#allocation5 + $0xeb8] sm:$0xff]
    %v588 = vld [vmem:[#allocation5 + $0xec0] sm:$0xff]
    %v589 = vld [vmem:[#allocation5 + $0xec8] sm:$0xff]
    %v590 = vld [vmem:[#allocation5 + $0xed0] sm:$0xff]
    %v591 = vld [vmem:[#allocation5 + $0xed8] sm:$0xff]
    %v592 = vld [vmem:[#allocation5 + $0xee0] sm:$0xff]
    %v593 = vld [vmem:[#allocation5 + $0xee8] sm:$0xff]
    %v594 = vld [vmem:[#allocation5 + $0xef0] sm:$0xff]
    %v595 = vld [vmem:[#allocation5 + $0xef8] sm:$0xff]
    %v596 = vld [vmem:[#allocation5 + $0xf00] sm:$0xff]
    %v597 = vld [vmem:[#allocation5 + $0xf08] sm:$0xff]
    %v598 = vld [vmem:[#allocation5 + $0xf10] sm:$0xff]
    %v599 = vld [vmem:[#allocation5 + $0xf18] sm:$0xff]
    %v600 = vld [vmem:[#allocation5 + $0xf20] sm:$0xff]
    %v601 = vld [vmem:[#allocation5 + $0xf28] sm:$0xff]
    %v602 = vld [vmem:[#allocation5 + $0xf30] sm:$0xff]
    %v603 = vld [vmem:[#allocation5 + $0xf38] sm:$0xff]
    %v604 = vld [vmem:[#allocation5 + $0xf40] sm:$0xff]
    %v605 = vld [vmem:[#allocation5 + $0xf48] sm:$0xff]
    %v606 = vld [vmem:[#allocation5 + $0xf50] sm:$0xff]
    %v607 = vld [vmem:[#allocation5 + $0xf58] sm:$0xff]
    %v608 = vld [vmem:[#allocation5 + $0xf60] sm:$0xff]
    %v609 = vld [vmem:[#allocation5 + $0xf68] sm:$0xff]
    %v610 = vld [vmem:[#allocation5 + $0xf70] sm:$0xff]
    %v611 = vld [vmem:[#allocation5 + $0xf78] sm:$0xff]
    %v612 = vld [vmem:[#allocation5 + $0xf80] sm:$0xff]
    %v613 = vld [vmem:[#allocation5 + $0xf88] sm:$0xff]
    %v614 = vld [vmem:[#allocation5 + $0xf90] sm:$0xff]
    %v615 = vld [vmem:[#allocation5 + $0xf98] sm:$0xff]
    %v616 = vld [vmem:[#allocation5 + $0xfa0] sm:$0xff]
    %v617 = vld [vmem:[#allocation5 + $0xfa8] sm:$0xff]
    %v618 = vld [vmem:[#allocation5 + $0xfb0] sm:$0xff]
    %v619 = vld [vmem:[#allocation5 + $0xfb8] sm:$0xff]
    %v620 = vld [vmem:[#allocation5 + $0xfc0] sm:$0xff]
    %v621 = vld [vmem:[#allocation5 + $0xfc8] sm:$0xff]
    %v622 = vld [vmem:[#allocation5 + $0xfd0] sm:$0xff]
    %v623 = vld [vmem:[#allocation5 + $0xfd8] sm:$0xff]
    %v624 = vld [vmem:[#allocation5 + $0xfe0] sm:$0xff]
    %v625 = vld [vmem:[#allocation5 + $0xfe8] sm:$0xff]
    %v626 = vld [vmem:[#allocation5 + $0xff0] sm:$0xff]
    %v627 = vld [vmem:[#allocation5 + $0xff8] sm:$0xff]
    %v628 = vld [vmem:[#allocation5 + $0x1000] sm:$0xff]
    %v629 = vld [vmem:[#allocation5 + $0x1008] sm:$0xff]
    %v630 = vld [vmem:[#allocation5 + $0x1010] sm:$0xff]
    %v631 = vld [vmem:[#allocation5 + $0x1018] sm:$0xff]
    %v632 = vld [vmem:[#allocation5 + $0x1020] sm:$0xff]
    %v633 = vld [vmem:[#allocation5 + $0x1028] sm:$0xff]
    %v634 = vld [vmem:[#allocation5 + $0x1030] sm:$0xff]
    %v635 = vld [vmem:[#allocation5 + $0x1038] sm:$0xff]
    %v636 = vld [vmem:[#allocation5 + $0x1040] sm:$0xff]
    %v637 = vld [vmem:[#allocation5 + $0x1048] sm:$0xff]
    %v638 = vld [vmem:[#allocation5 + $0x1050] sm:$0xff]
    %v639 = vld [vmem:[#allocation5 + $0x1058] sm:$0xff]
    %v640 = vld [vmem:[#allocation5 + $0x1060] sm:$0xff]
    %v641 = vld [vmem:[#allocation5 + $0x1068] sm:$0xff]
    %v642 = vld [vmem:[#allocation5 + $0x1070] sm:$0xff]
    %v643 = vld [vmem:[#allocation5 + $0x1078] sm:$0xff]
    %v644 = vld [vmem:[#allocation5 + $0x1080] sm:$0xff]
    %v645 = vld [vmem:[#allocation5 + $0x1088] sm:$0xff]
    %v646 = vld [vmem:[#allocation5 + $0x1090] sm:$0xff]
    %v647 = vld [vmem:[#allocation5 + $0x1098] sm:$0xff]
    %v648 = vld [vmem:[#allocation5 + $0x10a0] sm:$0xff]
    %v649 = vld [vmem:[#allocation5 + $0x10a8] sm:$0xff]
    %v650 = vld [vmem:[#allocation5 + $0x10b0] sm:$0xff]
    %v651 = vld [vmem:[#allocation5 + $0x10b8] sm:$0xff]
    %v652 = vld [vmem:[#allocation5 + $0x10c0] sm:$0xff]
    %v653 = vld [vmem:[#allocation5 + $0x10c8] sm:$0xff]
    %v654 = vld [vmem:[#allocation5 + $0x10d0] sm:$0xff]
    %v655 = vld [vmem:[#allocation5 + $0x10d8] sm:$0xff]
    %v656 = vld [vmem:[#allocation5 + $0x10e0] sm:$0xff]
    %v657 = vld [vmem:[#allocation5 + $0x10e8] sm:$0xff]
    %v658 = vld [vmem:[#allocation5 + $0x10f0] sm:$0xff]
    %v659 = vld [vmem:[#allocation5 + $0x10f8] sm:$0xff]
    %v660 = vld [vmem:[#allocation5 + $0x1100] sm:$0xff]
    %v661 = vld [vmem:[#allocation5 + $0x1108] sm:$0xff]
    %v662 = vld [vmem:[#allocation5 + $0x1110] sm:$0xff]
    %v663 = vld [vmem:[#allocation5 + $0x1118] sm:$0xff]
    %v664 = vld [vmem:[#allocation5 + $0x1120] sm:$0xff]
    %v665 = vld [vmem:[#allocation5 + $0x1128] sm:$0xff]
    %v666 = vld [vmem:[#allocation5 + $0x1130] sm:$0xff]
    %v667 = vld [vmem:[#allocation5 + $0x1138] sm:$0xff]
    %v668 = vld [vmem:[#allocation5 + $0x1140] sm:$0xff]
    %v669 = vld [vmem:[#allocation5 + $0x1148] sm:$0xff]
    %v670 = vld [vmem:[#allocation5 + $0x1150] sm:$0xff]
    %v671 = vld [vmem:[#allocation5 + $0x1158] sm:$0xff]
    %v672 = vld [vmem:[#allocation5 + $0x1160] sm:$0xff]
    %v673 = vld [vmem:[#allocation5 + $0x1168] sm:$0xff]
    %v674 = vld [vmem:[#allocation5 + $0x1170] sm:$0xff]
    %v675 = vld [vmem:[#allocation5 + $0x1178] sm:$0xff]
    %v676 = vld [vmem:[#allocation5 + $0x1180] sm:$0xff]
    %v677 = vld [vmem:[#allocation5 + $0x1188] sm:$0xff]
    %v678 = vld [vmem:[#allocation5 + $0x1190] sm:$0xff]
    %v679 = vld [vmem:[#allocation5 + $0x1198] sm:$0xff]
    %v680 = vld [vmem:[#allocation5 + $0x11a0] sm:$0xff]
    %v681 = vld [vmem:[#allocation5 + $0x11a8] sm:$0xff]
    %v682 = vld [vmem:[#allocation5 + $0x11b0] sm:$0xff]
    %v683 = vld [vmem:[#allocation5 + $0x11b8] sm:$0xff]
    %v684 = vld [vmem:[#allocation5 + $0x11c0] sm:$0xff]
    %v685 = vld [vmem:[#allocation5 + $0x11c8] sm:$0xff]
    %v686 = vld [vmem:[#allocation5 + $0x11d0] sm:$0xff]
    %v687 = vld [vmem:[#allocation5 + $0x11d8] sm:$0xff]
    %v688 = vld [vmem:[#allocation5 + $0x11e0] sm:$0xff]
    %v689 = vld [vmem:[#allocation5 + $0x11e8] sm:$0xff]
    %v690 = vld [vmem:[#allocation5 + $0x11f0] sm:$0xff]
    %v691 = vld [vmem:[#allocation5 + $0x11f8] sm:$0xff]
    %v692 = vld [vmem:[#allocation5 + $0x1200] sm:$0xff]
    %v693 = vld [vmem:[#allocation5 + $0x1208] sm:$0xff]
    %v694 = vld [vmem:[#allocation5 + $0x1210] sm:$0xff]
    %v695 = vld [vmem:[#allocation5 + $0x1218] sm:$0xff]
    %v696 = vld [vmem:[#allocation5 + $0x1220] sm:$0xff]
    %v697 = vld [vmem:[#allocation5 + $0x1228] sm:$0xff]
    %v698 = vld [vmem:[#allocation5 + $0x1230] sm:$0xff]
    %v699 = vld [vmem:[#allocation5 + $0x1238] sm:$0xff]
    %v700 = vld [vmem:[#allocation5 + $0x1240] sm:$0xff]
    %v701 = vld [vmem:[#allocation5 + $0x1248] sm:$0xff]
    %v702 = vld [vmem:[#allocation5 + $0x1250] sm:$0xff]
    %v703 = vld [vmem:[#allocation5 + $0x1258] sm:$0xff]
    %v704 = vld [vmem:[#allocation5 + $0x1260] sm:$0xff]
    %v705 = vld [vmem:[#allocation5 + $0x1268] sm:$0xff]
    %v706 = vld [vmem:[#allocation5 + $0x1270] sm:$0xff]
    %v707 = vld [vmem:[#allocation5 + $0x1278] sm:$0xff]
    %v708 = vld [vmem:[#allocation5 + $0x1280] sm:$0xff]
    %v709 = vld [vmem:[#allocation5 + $0x1288] sm:$0xff]
    %v710 = vld [vmem:[#allocation5 + $0x1290] sm:$0xff]
    %v711 = vld [vmem:[#allocation5 + $0x1298] sm:$0xff]
    %v712 = vld [vmem:[#allocation5 + $0x12a0] sm:$0xff]
    %v713 = vld [vmem:[#allocation5 + $0x12a8] sm:$0xff]
    %v714 = vld [vmem:[#allocation5 + $0x12b0] sm:$0xff]
    %v715 = vld [vmem:[#allocation5 + $0x12b8] sm:$0xff]
    %v716 = vld [vmem:[#allocation5 + $0x12c0] sm:$0xff]
    %v717 = vld [vmem:[#allocation5 + $0x12c8] sm:$0xff]
    %v718 = vld [vmem:[#allocation5 + $0x12d0] sm:$0xff]
    %v719 = vld [vmem:[#allocation5 + $0x12d8] sm:$0xff]
    %v720 = vld [vmem:[#allocation5 + $0x12e0] sm:$0xff]
    %v721 = vld [vmem:[#allocation5 + $0x12e8] sm:$0xff]
    %v722 = vld [vmem:[#allocation5 + $0x12f0] sm:$0xff]
    %v723 = vld [vmem:[#allocation5 + $0x12f8] sm:$0xff]
    %v724 = vld [vmem:[#allocation5 + $0x1300] sm:$0xff]
    %v725 = vld [vmem:[#allocation5 + $0x1308] sm:$0xff]
    %v726 = vld [vmem:[#allocation5 + $0x1310] sm:$0xff]
    %v727 = vld [vmem:[#allocation5 + $0x1318] sm:$0xff]
    %v728 = vld [vmem:[#allocation5 + $0x1320] sm:$0xff]
    %v729 = vld [vmem:[#allocation5 + $0x1328] sm:$0xff]
    %v730 = vld [vmem:[#allocation5 + $0x1330] sm:$0xff]
    %v731 = vld [vmem:[#allocation5 + $0x1338] sm:$0xff]
    %v732 = vld [vmem:[#allocation5 + $0x1340] sm:$0xff]
    %v733 = vld [vmem:[#allocation5 + $0x1348] sm:$0xff]
    %v734 = vld [vmem:[#allocation5 + $0x1350] sm:$0xff]
    %v735 = vld [vmem:[#allocation5 + $0x1358] sm:$0xff]
    %v736 = vld [vmem:[#allocation5 + $0x1360] sm:$0xff]
    %v737 = vld [vmem:[#allocation5 + $0x1368] sm:$0xff]
    %v738 = vld [vmem:[#allocation5 + $0x1370] sm:$0xff]
    %v739 = vld [vmem:[#allocation5 + $0x1378] sm:$0xff]
    %v740 = vld [vmem:[#allocation5 + $0x1380] sm:$0xff]
    %v741 = vld [vmem:[#allocation5 + $0x1388] sm:$0xff]
    %v742 = vld [vmem:[#allocation5 + $0x1390] sm:$0xff]
    %v743 = vld [vmem:[#allocation5 + $0x1398] sm:$0xff]
    %v744 = vld [vmem:[#allocation5 + $0x13a0] sm:$0xff]
    %v745 = vld [vmem:[#allocation5 + $0x13a8] sm:$0xff]
    %v746 = vld [vmem:[#allocation5 + $0x13b0] sm:$0xff]
    %v747 = vld [vmem:[#allocation5 + $0x13b8] sm:$0xff]
    %v748 = vld [vmem:[#allocation5 + $0x13c0] sm:$0xff]
    %v749 = vld [vmem:[#allocation5 + $0x13c8] sm:$0xff]
    %v750 = vld [vmem:[#allocation5 + $0x13d0] sm:$0xff]
    %v751 = vld [vmem:[#allocation5 + $0x13d8] sm:$0xff]
    %v752 = vld [vmem:[#allocation5 + $0x13e0] sm:$0xff]
    %v753 = vld [vmem:[#allocation5 + $0x13e8] sm:$0xff]
    %v754 = vld [vmem:[#allocation5 + $0x13f0] sm:$0xff]
    %v755 = vld [vmem:[#allocation5 + $0x13f8] sm:$0xff]
    %v756 = vld [vmem:[#allocation5 + $0x1400] sm:$0xff]
    %v757 = vld [vmem:[#allocation5 + $0x1408] sm:$0xff]
    %v758 = vld [vmem:[#allocation5 + $0x1410] sm:$0xff]
    %v759 = vld [vmem:[#allocation5 + $0x1418] sm:$0xff]
    %v760 = vld [vmem:[#allocation5 + $0x1420] sm:$0xff]
    %v761 = vld [vmem:[#allocation5 + $0x1428] sm:$0xff]
    %v762 = vld [vmem:[#allocation5 + $0x1430] sm:$0xff]
    %v763 = vld [vmem:[#allocation5 + $0x1438] sm:$0xff]
    %v764 = vld [vmem:[#allocation5 + $0x1440] sm:$0xff]
    %v765 = vld [vmem:[#allocation5 + $0x1448] sm:$0xff]
    %v766 = vld [vmem:[#allocation5 + $0x1450] sm:$0xff]
    %v767 = vld [vmem:[#allocation5 + $0x1458] sm:$0xff]
    %v768 = vld [vmem:[#allocation5 + $0x1460] sm:$0xff]
    %v769 = vld [vmem:[#allocation5 + $0x1468] sm:$0xff]
    %v770 = vld [vmem:[#allocation5 + $0x1470] sm:$0xff]
    %v771 = vld [vmem:[#allocation5 + $0x1478] sm:$0xff]
    %v772 = vld [vmem:[#allocation5 + $0x1480] sm:$0xff]
    %v773 = vld [vmem:[#allocation5 + $0x1488] sm:$0xff]
    %v774 = vld [vmem:[#allocation5 + $0x1490] sm:$0xff]
    %v775 = vld [vmem:[#allocation5 + $0x1498] sm:$0xff]
    %v776 = vld [vmem:[#allocation5 + $0x14a0] sm:$0xff]
    %v777 = vld [vmem:[#allocation5 + $0x14a8] sm:$0xff]
    %v778 = vld [vmem:[#allocation5 + $0x14b0] sm:$0xff]
    %v779 = vld [vmem:[#allocation5 + $0x14b8] sm:$0xff]
    %v780 = vld [vmem:[#allocation5 + $0x14c0] sm:$0xff]
    %v781 = vld [vmem:[#allocation5 + $0x14c8] sm:$0xff]
    %v782 = vld [vmem:[#allocation5 + $0x14d0] sm:$0xff]
    %v783 = vld [vmem:[#allocation5 + $0x14d8] sm:$0xff]
    %v784 = vld [vmem:[#allocation5 + $0x14e0] sm:$0xff]
    %v785 = vld [vmem:[#allocation5 + $0x14e8] sm:$0xff]
    %v786 = vld [vmem:[#allocation5 + $0x14f0] sm:$0xff]
    %v787 = vld [vmem:[#allocation5 + $0x14f8] sm:$0xff]
    %v788 = vld [vmem:[#allocation5 + $0x1500] sm:$0xff]
    %v789 = vld [vmem:[#allocation5 + $0x1508] sm:$0xff]
    %v790 = vld [vmem:[#allocation5 + $0x1510] sm:$0xff]
    %v791 = vld [vmem:[#allocation5 + $0x1518] sm:$0xff]
    %v792 = vld [vmem:[#allocation5 + $0x1520] sm:$0xff]
    %v793 = vld [vmem:[#allocation5 + $0x1528] sm:$0xff]
    %v794 = vld [vmem:[#allocation5 + $0x1530] sm:$0xff]
    %v795 = vld [vmem:[#allocation5 + $0x1538] sm:$0xff]
    %v796 = vld [vmem:[#allocation5 + $0x1540] sm:$0xff]
    %v797 = vld [vmem:[#allocation5 + $0x1548] sm:$0xff]
    %v798 = vld [vmem:[#allocation5 + $0x1550] sm:$0xff]
    %v799 = vld [vmem:[#allocation5 + $0x1558] sm:$0xff]
    %v800 = vld [vmem:[#allocation5 + $0x1560] sm:$0xff]
    %v801 = vld [vmem:[#allocation5 + $0x1568] sm:$0xff]
    %v802 = vld [vmem:[#allocation5 + $0x1570] sm:$0xff]
    %v803 = vld [vmem:[#allocation5 + $0x1578] sm:$0xff]
    %v804 = vld [vmem:[#allocation5 + $0x1580] sm:$0xff]
    %v805 = vld [vmem:[#allocation5 + $0x1588] sm:$0xff]
    %v806 = vld [vmem:[#allocation5 + $0x1590] sm:$0xff]
    %v807 = vld [vmem:[#allocation5 + $0x1598] sm:$0xff]
    %v808 = vld [vmem:[#allocation5 + $0x15a0] sm:$0xff]
    %v809 = vld [vmem:[#allocation5 + $0x15a8] sm:$0xff]
    %v810 = vld [vmem:[#allocation5 + $0x15b0] sm:$0xff]
    %v811 = vld [vmem:[#allocation5 + $0x15b8] sm:$0xff]
    %v812 = vld [vmem:[#allocation5 + $0x15c0] sm:$0xff]
    %v813 = vld [vmem:[#allocation5 + $0x15c8] sm:$0xff]
    %v814 = vld [vmem:[#allocation5 + $0x15d0] sm:$0xff]
    %v815 = vld [vmem:[#allocation5 + $0x15d8] sm:$0xff]
    %v816 = vld [vmem:[#allocation5 + $0x15e0] sm:$0xff]
    %v817 = vld [vmem:[#allocation5 + $0x15e8] sm:$0xff]
    %v818 = vld [vmem:[#allocation5 + $0x15f0] sm:$0xff]
    %v819 = vld [vmem:[#allocation5 + $0x15f8] sm:$0xff]
    %v820 = vld [vmem:[#allocation5 + $0x1600] sm:$0xff]
    %v821 = vld [vmem:[#allocation5 + $0x1608] sm:$0xff]
    %v822 = vld [vmem:[#allocation5 + $0x1610] sm:$0xff]
    %v823 = vld [vmem:[#allocation5 + $0x1618] sm:$0xff]
    %v824 = vld [vmem:[#allocation5 + $0x1620] sm:$0xff]
    %v825 = vld [vmem:[#allocation5 + $0x1628] sm:$0xff]
    %v826 = vld [vmem:[#allocation5 + $0x1630] sm:$0xff]
    %v827 = vld [vmem:[#allocation5 + $0x1638] sm:$0xff]
    %v828 = vld [vmem:[#allocation5 + $0x1640] sm:$0xff]
    %v829 = vld [vmem:[#allocation5 + $0x1648] sm:$0xff]
    %v830 = vld [vmem:[#allocation5 + $0x1650] sm:$0xff]
    %v831 = vld [vmem:[#allocation5 + $0x1658] sm:$0xff]
    %v832 = vld [vmem:[#allocation5 + $0x1660] sm:$0xff]
    %v833 = vld [vmem:[#allocation5 + $0x1668] sm:$0xff]
    %v834 = vld [vmem:[#allocation5 + $0x1670] sm:$0xff]
    %v835 = vld [vmem:[#allocation5 + $0x1678] sm:$0xff]
    %v836 = vld [vmem:[#allocation5 + $0x1680] sm:$0xff]
    %v837 = vld [vmem:[#allocation5 + $0x1688] sm:$0xff]
    %v838 = vld [vmem:[#allocation5 + $0x1690] sm:$0xff]
    %v839 = vld [vmem:[#allocation5 + $0x1698] sm:$0xff]
    %v840 = vld [vmem:[#allocation5 + $0x16a0] sm:$0xff]
    %v841 = vld [vmem:[#allocation5 + $0x16a8] sm:$0xff]
    %v842 = vld [vmem:[#allocation5 + $0x16b0] sm:$0xff]
    %v843 = vld [vmem:[#allocation5 + $0x16b8] sm:$0xff]
    %v844 = vld [vmem:[#allocation5 + $0x16c0] sm:$0xff]
    %v845 = vld [vmem:[#allocation5 + $0x16c8] sm:$0xff]
    %v846 = vld [vmem:[#allocation5 + $0x16d0] sm:$0xff]
    %v847 = vld [vmem:[#allocation5 + $0x16d8] sm:$0xff]
    %v848 = vld [vmem:[#allocation5 + $0x16e0] sm:$0xff]
    %v849 = vld [vmem:[#allocation5 + $0x16e8] sm:$0xff]
    %v850 = vld [vmem:[#allocation5 + $0x16f0] sm:$0xff]
    %v851 = vld [vmem:[#allocation5 + $0x16f8] sm:$0xff]
    %v852 = vld [vmem:[#allocation5 + $0x1700] sm:$0xff]
    %v853 = vld [vmem:[#allocation5 + $0x1708] sm:$0xff]
    %v854 = vld [vmem:[#allocation5 + $0x1710] sm:$0xff]
    %v855 = vld [vmem:[#allocation5 + $0x1718] sm:$0xff]
    %v856 = vld [vmem:[#allocation5 + $0x1720] sm:$0xff]
    %v857 = vld [vmem:[#allocation5 + $0x1728] sm:$0xff]
    %v858 = vld [vmem:[#allocation5 + $0x1730] sm:$0xff]
    %v859 = vld [vmem:[#allocation5 + $0x1738] sm:$0xff]
    %v860 = vld [vmem:[#allocation5 + $0x1740] sm:$0xff]
    %v861 = vld [vmem:[#allocation5 + $0x1748] sm:$0xff]
    %v862 = vld [vmem:[#allocation5 + $0x1750] sm:$0xff]
    %v863 = vld [vmem:[#allocation5 + $0x1758] sm:$0xff]
    %v864 = vld [vmem:[#allocation5 + $0x1760] sm:$0xff]
    %v865 = vld [vmem:[#allocation5 + $0x1768] sm:$0xff]
    %v866 = vld [vmem:[#allocation5 + $0x1770] sm:$0xff]
    %v867 = vld [vmem:[#allocation5 + $0x1778] sm:$0xff]
    %v868 = vld [vmem:[#allocation5 + $0x1780] sm:$0xff]
    %v869 = vld [vmem:[#allocation5 + $0x1788] sm:$0xff]
    %v870 = vld [vmem:[#allocation5 + $0x1790] sm:$0xff]
    %v871 = vld [vmem:[#allocation5 + $0x1798] sm:$0xff]
    %v872 = vld [vmem:[#allocation5 + $0x17a0] sm:$0xff]
    %v873 = vld [vmem:[#allocation5 + $0x17a8] sm:$0xff]
    %v874 = vld [vmem:[#allocation5 + $0x17b0] sm:$0xff]
    %v875 = vld [vmem:[#allocation5 + $0x17b8] sm:$0xff]
    %v876 = vld [vmem:[#allocation5 + $0x17c0] sm:$0xff]
    %v877 = vld [vmem:[#allocation5 + $0x17c8] sm:$0xff]
    %v878 = vld [vmem:[#allocation5 + $0x17d0] sm:$0xff]
    %v879 = vld [vmem:[#allocation5 + $0x17d8] sm:$0xff]
    %v880 = vld [vmem:[#allocation5 + $0x17e0] sm:$0xff]
    %v881 = vld [vmem:[#allocation5 + $0x17e8] sm:$0xff]
    %v882 = vld [vmem:[#allocation5 + $0x17f0] sm:$0xff]
    %v883 = vld [vmem:[#allocation5 + $0x17f8] sm:$0xff]
    %v884 = vld [vmem:[#allocation5 + $0x1800] sm:$0xff]
    %v885 = vld [vmem:[#allocation5 + $0x1808] sm:$0xff]
    %v886 = vld [vmem:[#allocation5 + $0x1810] sm:$0xff]
    %v887 = vld [vmem:[#allocation5 + $0x1818] sm:$0xff]
    %v888 = vld [vmem:[#allocation5 + $0x1820] sm:$0xff]
    %v889 = vld [vmem:[#allocation5 + $0x1828] sm:$0xff]
    %v890 = vld [vmem:[#allocation5 + $0x1830] sm:$0xff]
    %v891 = vld [vmem:[#allocation5 + $0x1838] sm:$0xff]
    %v892 = vld [vmem:[#allocation5 + $0x1840] sm:$0xff]
    %v893 = vld [vmem:[#allocation5 + $0x1848] sm:$0xff]
    %v894 = vld [vmem:[#allocation5 + $0x1850] sm:$0xff]
    %v895 = vld [vmem:[#allocation5 + $0x1858] sm:$0xff]
    %v896 = vld [vmem:[#allocation5 + $0x1860] sm:$0xff]
    %v897 = vld [vmem:[#allocation5 + $0x1868] sm:$0xff]
    %v898 = vld [vmem:[#allocation5 + $0x1870] sm:$0xff]
    %v899 = vld [vmem:[#allocation5 + $0x1878] sm:$0xff]
    %v900 = vld [vmem:[#allocation5 + $0x1880] sm:$0xff]
    %v901 = vld [vmem:[#allocation5 + $0x1888] sm:$0xff]
    %v902 = vld [vmem:[#allocation5 + $0x1890] sm:$0xff]
    %v903 = vld [vmem:[#allocation5 + $0x1898] sm:$0xff]
    %v904 = vld [vmem:[#allocation5 + $0x18a0] sm:$0xff]
    %v905 = vld [vmem:[#allocation5 + $0x18a8] sm:$0xff]
    %v906 = vld [vmem:[#allocation5 + $0x18b0] sm:$0xff]
    %v907 = vld [vmem:[#allocation5 + $0x18b8] sm:$0xff]
    %v908 = vld [vmem:[#allocation5 + $0x18c0] sm:$0xff]
    %v909 = vld [vmem:[#allocation5 + $0x18c8] sm:$0xff]
    %v910 = vld [vmem:[#allocation5 + $0x18d0] sm:$0xff]
    %v911 = vld [vmem:[#allocation5 + $0x18d8] sm:$0xff]
    %v912 = vld [vmem:[#allocation5 + $0x18e0] sm:$0xff]
    %v913 = vld [vmem:[#allocation5 + $0x18e8] sm:$0xff]
    %v914 = vld [vmem:[#allocation5 + $0x18f0] sm:$0xff]
    %v915 = vld [vmem:[#allocation5 + $0x18f8] sm:$0xff]
    %v916 = vld [vmem:[#allocation7] sm:$0xff]
    %v917 = vld [vmem:[#allocation7 + $0x8] sm:$0x3]
    %v920 = vlaneseq
    %v921 = vshrl.u32 %v920, 7
    %v922 = vsub.s32 0, %v921
    %v923 = vrot.slane %v916, %v922
    %v924 = vlaneseq
    %v925 = vshrl.u32 %v924, 7
    %v926 = vsub.s32 1, %v925
    %v927 = vrot.slane %v916, %v926
    %v928 = vlaneseq
    %v929 = vshrl.u32 %v928, 7
    %v930 = vsub.s32 2, %v929
    %v931 = vrot.slane %v916, %v930
    %v932 = vlaneseq
    %v933 = vshrl.u32 %v932, 7
    %v934 = vsub.s32 3, %v933
    %v935 = vrot.slane %v916, %v934
    %v936 = vlaneseq
    %v937 = vshrl.u32 %v936, 7
    %v938 = vsub.s32 4, %v937
    %v939 = vrot.slane %v916, %v938
    %v940 = vlaneseq
    %v941 = vshrl.u32 %v940, 7
    %v942 = vsub.s32 5, %v941
    %v943 = vrot.slane %v916, %v942
    %v944 = vlaneseq
    %v945 = vshrl.u32 %v944, 7
    %v946 = vsub.s32 6, %v945
    %v947 = vrot.slane %v916, %v946
    %v948 = vlaneseq
    %v949 = vshrl.u32 %v948, 7
    %v950 = vsub.s32 7, %v949
    %v951 = vrot.slane %v916, %v950
    %v952 = vlaneseq
    %v953 = vshrl.u32 %v952, 7
    %v954 = vsub.s32 0, %v953
    %v955 = vrot.slane %v917, %v954
    %v956 = vlaneseq
    %v957 = vshrl.u32 %v956, 7
    %v958 = vsub.s32 1, %v957
    %v959 = vrot.slane %v917, %v958
    %v972 = vcombine.high %v114, %v114
    %v974 = vunpack.c.l.s4 1983009808
    %v975 = vunpack.c.0.s8 %v974
    %v976 = vlaneseq
    %v977 = vshrl.u32 %v976, 7
    %v978 = vsub.s32 %v975, %v977
    %v979 = vrot.slane %v114, %v978
    %v981 = vunpack.c.l.s4 1983009808
    %v982 = vunpack.c.0.s8 %v981
    %v983 = vlaneseq
    %v984 = vshrl.u32 %v983, 7
    %v985 = vsub.s32 %v982, %v984
    %v986 = vrot.slane %v972, %v985
    %v987 = vcombine.high %v979, %v979
    %v988 = vcombine.high %v986, %v986
    %v990 = vunpack.c.l.s4 1983009808
    %v991 = vunpack.c.0.s8 %v990
    %v992 = vlaneseq
    %v993 = vshrl.u32 %v992, 7
    %v994 = vsub.s32 %v991, %v993
    %v995 = vrot.slane %v115, %v994
    %1001 = vmatprep.subr.mxu0 %v117
    %1002 = vmatpush1.msra.mxu0 %v116
    %1003 = vmatprep.subr.mxu0 %v127
    %1004 = vmatpush1.msra.mxu0 %v126
    %1005 = vmatprep.subr.mxu0 %v137
    %1006 = vmatpush1.msra.mxu0 %v136
    %1007 = vmatprep.subr.mxu0 %v147
    %1008 = vmatpush1.msra.mxu0 %v146
    %1009 = vmatprep.subr.mxu0 %v157
    %1010 = vmatpush1.msra.mxu0 %v156
    %1011 = vmatprep.subr.mxu0 %v167
    %1012 = vmatpush1.msra.mxu0 %v166
    %1013 = vmatprep.subr.mxu0 %v177
    %1014 = vmatpush1.msra.mxu0 %v176
    %1015 = vmatprep.subr.mxu0 %v187
    %1016 = vmatpush1.msra.mxu0 %v186
    %1017 = vmatprep.subr.mxu0 %v197
    %1018 = vmatpush1.msra.mxu0 %v196
    %1019 = vmatprep.subr.mxu0 %v207
    %1020 = vmatpush1.msra.mxu0 %v206
    %1021 = vmatprep.subr.mxu0 %v217
    %1022 = vmatpush1.msra.mxu0 %v216
    %1023 = vmatprep.subr.mxu0 %v227
    %1024 = vmatpush1.msra.mxu0 %v226
    %1025 = vmatprep.subr.mxu0 %v237
    %1026 = vmatpush1.msra.mxu0 %v236
    %1027 = vmatprep.subr.mxu0 %v247
    %1028 = vmatpush1.msra.mxu0 %v246
    %1029 = vmatprep.subr.mxu0 %v257
    %1030 = vmatpush1.msra.mxu0 %v256
    %1031 = vmatprep.subr.mxu0 %v267
    %1032 = vmatpush1.msra.mxu0 %v266
    %1033 = vmatprep.subr.mxu0 %v277
    %1034 = vmatpush1.msra.mxu0 %v276
    %1035 = vmatprep.subr.mxu0 %v287
    %1036 = vmatpush1.msra.mxu0 %v286
    %1037 = vmatprep.subr.mxu0 %v297
    %1038 = vmatpush1.msra.mxu0 %v296
    %1039 = vmatprep.subr.mxu0 %v307
    %1040 = vmatpush1.msra.mxu0 %v306
    %1041 = vmatprep.subr.mxu0 %v317
    %1042 = vmatpush1.msra.mxu0 %v316
    %1043 = vmatprep.subr.mxu0 %v327
    %1044 = vmatpush1.msra.mxu0 %v326
    %1045 = vmatprep.subr.mxu0 %v337
    %1046 = vmatpush1.msra.mxu0 %v336
    %1047 = vmatprep.subr.mxu0 %v347
    %1048 = vmatpush1.msra.mxu0 %v346
    %1049 = vmatprep.subr.mxu0 %v357
    %1050 = vmatpush1.msra.mxu0 %v356
    %1051 = vmatprep.subr.mxu0 %v367
    %1052 = vmatpush1.msra.mxu0 %v366
    %1053 = vmatprep.subr.mxu0 %v377
    %1054 = vmatpush1.msra.mxu0 %v376
    %1055 = vmatprep.subr.mxu0 %v387
    %1056 = vmatpush1.msra.mxu0 %v386
    %1057 = vmatprep.subr.mxu0 %v397
    %1058 = vmatpush1.msra.mxu0 %v396
    %1059 = vmatprep.subr.mxu0 %v407
    %1060 = vmatpush1.msra.mxu0 %v406
    %1061 = vmatprep.subr.mxu0 %v417
    %1062 = vmatpush1.msra.mxu0 %v416
    %1063 = vmatprep.subr.mxu0 %v427
    %1064 = vmatpush1.msra.mxu0 %v426
    %1065 = vmatprep.mubr.f32.mxu0 %v987
    %1066 = vmatmul.mubr.f32.gmra.mrb[0].mxu0 %v979
    %v1067 = vpop.f32.mrb[0].mxu0
    %v1068 = vadd.f32 %v923, %v1067
    %v1069 = vpop.f32.mrb[0].mxu0
    %v1070 = vadd.f32 %v927, %v1069
    %1071 = vdwg.mxu0
    %1072 = vmatprep.subr.mxu0 %v437
    %1073 = vmatpush1.msra.mxu0 %v436
    %1074 = vmatprep.subr.mxu0 %v447
    %1075 = vmatpush1.msra.mxu0 %v446
    %1076 = vmatprep.subr.mxu0 %v457
    %1077 = vmatpush1.msra.mxu0 %v456
    %1078 = vmatprep.subr.mxu0 %v467
    %1079 = vmatpush1.msra.mxu0 %v466
    %1080 = vmatprep.subr.mxu0 %v477
    %1081 = vmatpush1.msra.mxu0 %v476
    %1082 = vmatprep.subr.mxu0 %v487
    %1083 = vmatpush1.msra.mxu0 %v486
    %1084 = vmatprep.subr.mxu0 %v497
    %1085 = vmatpush1.msra.mxu0 %v496
    %1086 = vmatprep.subr.mxu0 %v507
    %1087 = vmatpush1.msra.mxu0 %v506
    %1088 = vmatprep.subr.mxu0 %v517
    %1089 = vmatpush1.msra.mxu0 %v516
    %1090 = vmatprep.subr.mxu0 %v527
    %1091 = vmatpush1.msra.mxu0 %v526
    %1092 = vmatprep.subr.mxu0 %v537
    %1093 = vmatpush1.msra.mxu0 %v536
    %1094 = vmatprep.subr.mxu0 %v547
    %1095 = vmatpush1.msra.mxu0 %v546
    %1096 = vmatprep.subr.mxu0 %v557
    %1097 = vmatpush1.msra.mxu0 %v556
    %1098 = vmatprep.subr.mxu0 %v567
    %1099 = vmatpush1.msra.mxu0 %v566
    %1100 = vmatprep.subr.mxu0 %v577
    %1101 = vmatpush1.msra.mxu0 %v576
    %1102 = vmatprep.subr.mxu0 %v587
    %1103 = vmatpush1.msra.mxu0 %v586
    %1104 = vmatprep.subr.mxu0 %v597
    %1105 = vmatpush1.msra.mxu0 %v596
    %1106 = vmatprep.subr.mxu0 %v607
    %1107 = vmatpush1.msra.mxu0 %v606
    %1108 = vmatprep.subr.mxu0 %v617
    %1109 = vmatpush1.msra.mxu0 %v616
    %1110 = vmatprep.subr.mxu0 %v627
    %1111 = vmatpush1.msra.mxu0 %v626
    %1112 = vmatprep.subr.mxu0 %v637
    %1113 = vmatpush1.msra.mxu0 %v636
    %1114 = vmatprep.subr.mxu0 %v647
    %1115 = vmatpush1.msra.mxu0 %v646
    %1116 = vmatprep.subr.mxu0 %v657
    %1117 = vmatpush1.msra.mxu0 %v656
    %1118 = vmatprep.subr.mxu0 %v667
    %1119 = vmatpush1.msra.mxu0 %v666
    %1120 = vmatprep.subr.mxu0 %v677
    %1121 = vmatpush1.msra.mxu0 %v676
    %1122 = vmatprep.subr.mxu0 %v687
    %1123 = vmatpush1.msra.mxu0 %v686
    %1124 = vmatprep.subr.mxu0 %v697
    %1125 = vmatpush1.msra.mxu0 %v696
    %1126 = vmatprep.subr.mxu0 %v707
    %1127 = vmatpush1.msra.mxu0 %v706
    %1128 = vmatprep.subr.mxu0 %v717
    %1129 = vmatpush1.msra.mxu0 %v716
    %1130 = vmatprep.subr.mxu0 %v727
    %1131 = vmatpush1.msra.mxu0 %v726
    %1132 = vmatprep.subr.mxu0 %v737
    %1133 = vmatpush1.msra.mxu0 %v736
    %1134 = vmatprep.subr.mxu0 %v747
    %1135 = vmatpush1.msra.mxu0 %v746
    %1136 = vmatprep.mubr.f32.mxu0 %v988
    %1137 = vmatmul.mubr.f32.gmra.mrb[0].mxu0 %v986
    %v1138 = vpop.f32.mrb[0].mxu0
    %v1139 = vadd.f32 %v1068, %v1138
    %v1140 = vpop.f32.mrb[0].mxu0
    %v1141 = vadd.f32 %v1070, %v1140
    %1142 = vdwg.mxu0
    %1143 = vmatprep.subr.mxu0 %v757
    %1144 = vmatpush1.msra.mxu0 %v756
    %1145 = vmatprep.subr.mxu0 %v767
    %1146 = vmatpush1.msra.mxu0 %v766
    %1147 = vmatprep.subr.mxu0 %v777
    %1148 = vmatpush1.msra.mxu0 %v776
    %1149 = vmatprep.subr.mxu0 %v787
    %1150 = vmatpush1.msra.mxu0 %v786
    %1151 = vmatprep.subr.mxu0 %v797
    %1152 = vmatpush1.msra.mxu0 %v796
    %1153 = vmatprep.subr.mxu0 %v807
    %1154 = vmatpush1.msra.mxu0 %v806
    %1155 = vmatprep.subr.mxu0 %v817
    %1156 = vmatpush1.msra.mxu0 %v816
    %1157 = vmatprep.subr.mxu0 %v827
    %1158 = vmatpush1.msra.mxu0 %v826
    %1159 = vmatprep.subr.mxu0 %v837
    %1160 = vmatpush1.msra.mxu0 %v836
    %1161 = vmatprep.subr.mxu0 %v847
    %1162 = vmatpush1.msra.mxu0 %v846
    %1163 = vmatprep.subr.mxu0 %v857
    %1164 = vmatpush1.msra.mxu0 %v856
    %1165 = vmatprep.subr.mxu0 %v867
    %1166 = vmatpush1.msra.mxu0 %v866
    %1167 = vmatprep.subr.mxu0 %v877
    %1168 = vmatpush1.msra.mxu0 %v876
    %1169 = vmatprep.subr.mxu0 %v887
    %1170 = vmatpush1.msra.mxu0 %v886
    %1171 = vmatprep.subr.mxu0 %v897
    %1172 = vmatpush1.msra.mxu0 %v896
    %1173 = vmatprep.subr.mxu0 %v907
    %1174 = vmatpush1.msra.mxu0 %v906
    %1175 = vmatprep.subr.mxu0 0.0
    %1176 = vmatpush1.msra.mxu0 0.0
    %1177 = vmatprep.subr.mxu0 0.0
    %1178 = vmatpush1.msra.mxu0 0.0
    %1179 = vmatprep.subr.mxu0 0.0
    %1180 = vmatpush1.msra.mxu0 0.0
    %1181 = vmatprep.subr.mxu0 0.0
    %1182 = vmatpush1.msra.mxu0 0.0
    %1183 = vmatprep.subr.mxu0 0.0
    %1184 = vmatpush1.msra.mxu0 0.0
    %1185 = vmatprep.subr.mxu0 0.0
    %1186 = vmatpush1.msra.mxu0 0.0
    %1187 = vmatprep.subr.mxu0 0.0
    %1188 = vmatpush1.msra.mxu0 0.0
    %1189 = vmatprep.subr.mxu0 0.0
    %1190 = vmatpush1.msra.mxu0 0.0
    %1191 = vmatprep.subr.mxu0 0.0
    %1192 = vmatpush1.msra.mxu0 0.0
    %1193 = vmatprep.subr.mxu0 0.0
    %1194 = vmatpush1.msra.mxu0 0.0
    %1195 = vmatprep.subr.mxu0 0.0
    %1196 = vmatpush1.msra.mxu0 0.0
    %1197 = vmatprep.subr.mxu0 0.0
    %1198 = vmatpush1.msra.mxu0 0.0
    %1199 = vmatprep.subr.mxu0 0.0
    %1200 = vmatpush1.msra.mxu0 0.0
    %1201 = vmatprep.subr.mxu0 0.0
    %1202 = vmatpush1.msra.mxu0 0.0
    %1203 = vmatprep.subr.mxu0 0.0
    %1204 = vmatpush1.msra.mxu0 0.0
    %1205 = vmatprep.subr.mxu0 0.0
    %1206 = vmatpush1.msra.mxu0 0.0
    %1207 = vmatprep.mubr.f32.mxu0 0.0
    %1208 = vmatmul.mubr.f32.gmra.mrb[0].mxu0 %v995
    %v1209 = vpop.f32.mrb[0].mxu0
    %v1210 = vadd.f32 %v1139, %v1209
    %v1211 = vpop.f32.mrb[0].mxu0
    %v1212 = vadd.f32 %v1141, %v1211
    %1213 = vdwg.mxu0
    %1214 = vmatprep.subr.mxu0 %v119
    %1215 = vmatpush1.msra.mxu0 %v118
    %1216 = vmatprep.subr.mxu0 %v129
    %1217 = vmatpush1.msra.mxu0 %v128
    %1218 = vmatprep.subr.mxu0 %v139
    %1219 = vmatpush1.msra.mxu0 %v138
    %1220 = vmatprep.subr.mxu0 %v149
    %1221 = vmatpush1.msra.mxu0 %v148
    %1222 = vmatprep.subr.mxu0 %v159
    %1223 = vmatpush1.msra.mxu0 %v158
    %1224 = vmatprep.subr.mxu0 %v169
    %1225 = vmatpush1.msra.mxu0 %v168
    %1226 = vmatprep.subr.mxu0 %v179
    %1227 = vmatpush1.msra.mxu0 %v178
    %1228 = vmatprep.subr.mxu0 %v189
    %1229 = vmatpush1.msra.mxu0 %v188
    %1230 = vmatprep.subr.mxu0 %v199
    %1231 = vmatpush1.msra.mxu0 %v198
    %1232 = vmatprep.subr.mxu0 %v209
    %1233 = vmatpush1.msra.mxu0 %v208
    %1234 = vmatprep.subr.mxu0 %v219
    %1235 = vmatpush1.msra.mxu0 %v218
    %1236 = vmatprep.subr.mxu0 %v229
    %1237 = vmatpush1.msra.mxu0 %v228
    %1238 = vmatprep.subr.mxu0 %v239
    %1239 = vmatpush1.msra.mxu0 %v238
    %1240 = vmatprep.subr.mxu0 %v249
    %1241 = vmatpush1.msra.mxu0 %v248
    %1242 = vmatprep.subr.mxu0 %v259
    %1243 = vmatpush1.msra.mxu0 %v258
    %1244 = vmatprep.subr.mxu0 %v269
    %1245 = vmatpush1.msra.mxu0 %v268
    %1246 = vmatprep.subr.mxu0 %v279
    %1247 = vmatpush1.msra.mxu0 %v278
    %1248 = vmatprep.subr.mxu0 %v289
    %1249 = vmatpush1.msra.mxu0 %v288
    %1250 = vmatprep.subr.mxu0 %v299
    %1251 = vmatpush1.msra.mxu0 %v298
    %1252 = vmatprep.subr.mxu0 %v309
    %1253 = vmatpush1.msra.mxu0 %v308
    %1254 = vmatprep.subr.mxu0 %v319
    %1255 = vmatpush1.msra.mxu0 %v318
    %1256 = vmatprep.subr.mxu0 %v329
    %1257 = vmatpush1.msra.mxu0 %v328
    %1258 = vmatprep.subr.mxu0 %v339
    %1259 = vmatpush1.msra.mxu0 %v338
    %1260 = vmatprep.subr.mxu0 %v349
    %1261 = vmatpush1.msra.mxu0 %v348
    %1262 = vmatprep.subr.mxu0 %v359
    %1263 = vmatpush1.msra.mxu0 %v358
    %1264 = vmatprep.subr.mxu0 %v369
    %1265 = vmatpush1.msra.mxu0 %v368
    %1266 = vmatprep.subr.mxu0 %v379
    %1267 = vmatpush1.msra.mxu0 %v378
    %1268 = vmatprep.subr.mxu0 %v389
    %1269 = vmatpush1.msra.mxu0 %v388
    %1270 = vmatprep.subr.mxu0 %v399
    %1271 = vmatpush1.msra.mxu0 %v398
    %1272 = vmatprep.subr.mxu0 %v409
    %1273 = vmatpush1.msra.mxu0 %v408
    %1274 = vmatprep.subr.mxu0 %v419
    %1275 = vmatpush1.msra.mxu0 %v418
    %1276 = vmatprep.subr.mxu0 %v429
    %1277 = vmatpush1.msra.mxu0 %v428
    %1278 = vmatprep.mubr.f32.mxu0 %v987
    %1279 = vmatmul.mubr.f32.gmra.mrb[0].mxu0 %v979
    %v1280 = vpop.f32.mrb[0].mxu0
    %v1281 = vadd.f32 %v931, %v1280
    %v1282 = vpop.f32.mrb[0].mxu0
    %v1283 = vadd.f32 %v935, %v1282
    %1284 = vdwg.mxu0
    %1285 = vmatprep.subr.mxu0 %v439
    %1286 = vmatpush1.msra.mxu0 %v438
    %1287 = vmatprep.subr.mxu0 %v449
    %1288 = vmatpush1.msra.mxu0 %v448
    %1289 = vmatprep.subr.mxu0 %v459
    %1290 = vmatpush1.msra.mxu0 %v458
    %1291 = vmatprep.subr.mxu0 %v469
    %1292 = vmatpush1.msra.mxu0 %v468
    %1293 = vmatprep.subr.mxu0 %v479
    %1294 = vmatpush1.msra.mxu0 %v478
    %1295 = vmatprep.subr.mxu0 %v489
    %1296 = vmatpush1.msra.mxu0 %v488
    %1297 = vmatprep.subr.mxu0 %v499
    %1298 = vmatpush1.msra.mxu0 %v498
    %1299 = vmatprep.subr.mxu0 %v509
    %1300 = vmatpush1.msra.mxu0 %v508
    %1301 = vmatprep.subr.mxu0 %v519
    %1302 = vmatpush1.msra.mxu0 %v518
    %1303 = vmatprep.subr.mxu0 %v529
    %1304 = vmatpush1.msra.mxu0 %v528
    %1305 = vmatprep.subr.mxu0 %v539
    %1306 = vmatpush1.msra.mxu0 %v538
    %1307 = vmatprep.subr.mxu0 %v549
    %1308 = vmatpush1.msra.mxu0 %v548
    %1309 = vmatprep.subr.mxu0 %v559
    %1310 = vmatpush1.msra.mxu0 %v558
    %1311 = vmatprep.subr.mxu0 %v569
    %1312 = vmatpush1.msra.mxu0 %v568
    %1313 = vmatprep.subr.mxu0 %v579
    %1314 = vmatpush1.msra.mxu0 %v578
    %1315 = vmatprep.subr.mxu0 %v589
    %1316 = vmatpush1.msra.mxu0 %v588
    %1317 = vmatprep.subr.mxu0 %v599
    %1318 = vmatpush1.msra.mxu0 %v598
    %1319 = vmatprep.subr.mxu0 %v609
    %1320 = vmatpush1.msra.mxu0 %v608
    %1321 = vmatprep.subr.mxu0 %v619
    %1322 = vmatpush1.msra.mxu0 %v618
    %1323 = vmatprep.subr.mxu0 %v629
    %1324 = vmatpush1.msra.mxu0 %v628
    %1325 = vmatprep.subr.mxu0 %v639
    %1326 = vmatpush1.msra.mxu0 %v638
    %1327 = vmatprep.subr.mxu0 %v649
    %1328 = vmatpush1.msra.mxu0 %v648
    %1329 = vmatprep.subr.mxu0 %v659
    %1330 = vmatpush1.msra.mxu0 %v658
    %1331 = vmatprep.subr.mxu0 %v669
    %1332 = vmatpush1.msra.mxu0 %v668
    %1333 = vmatprep.subr.mxu0 %v679
    %1334 = vmatpush1.msra.mxu0 %v678
    %1335 = vmatprep.subr.mxu0 %v689
    %1336 = vmatpush1.msra.mxu0 %v688
    %1337 = vmatprep.subr.mxu0 %v699
    %1338 = vmatpush1.msra.mxu0 %v698
    %1339 = vmatprep.subr.mxu0 %v709
    %1340 = vmatpush1.msra.mxu0 %v708
    %1341 = vmatprep.subr.mxu0 %v719
    %1342 = vmatpush1.msra.mxu0 %v718
    %1343 = vmatprep.subr.mxu0 %v729
    %1344 = vmatpush1.msra.mxu0 %v728
    %1345 = vmatprep.subr.mxu0 %v739
    %1346 = vmatpush1.msra.mxu0 %v738
    %1347 = vmatprep.subr.mxu0 %v749
    %1348 = vmatpush1.msra.mxu0 %v748
    %1349 = vmatprep.mubr.f32.mxu0 %v988
    %1350 = vmatmul.mubr.f32.gmra.mrb[0].mxu0 %v986
    %v1351 = vpop.f32.mrb[0].mxu0
    %v1352 = vadd.f32 %v1281, %v1351
    %v1353 = vpop.f32.mrb[0].mxu0
    %v1354 = vadd.f32 %v1283, %v1353
    %1355 = vdwg.mxu0
    %1356 = vmatprep.subr.mxu0 %v759
    %1357 = vmatpush1.msra.mxu0 %v758
    %1358 = vmatprep.subr.mxu0 %v769
    %1359 = vmatpush1.msra.mxu0 %v768
    %1360 = vmatprep.subr.mxu0 %v779
    %1361 = vmatpush1.msra.mxu0 %v778
    %1362 = vmatprep.subr.mxu0 %v789
    %1363 = vmatpush1.msra.mxu0 %v788
    %1364 = vmatprep.subr.mxu0 %v799
    %1365 = vmatpush1.msra.mxu0 %v798
    %1366 = vmatprep.subr.mxu0 %v809
    %1367 = vmatpush1.msra.mxu0 %v808
    %1368 = vmatprep.subr.mxu0 %v819
    %1369 = vmatpush1.msra.mxu0 %v818
    %1370 = vmatprep.subr.mxu0 %v829
    %1371 = vmatpush1.msra.mxu0 %v828
    %1372 = vmatprep.subr.mxu0 %v839
    %1373 = vmatpush1.msra.mxu0 %v838
    %1374 = vmatprep.subr.mxu0 %v849
    %1375 = vmatpush1.msra.mxu0 %v848
    %1376 = vmatprep.subr.mxu0 %v859
    %1377 = vmatpush1.msra.mxu0 %v858
    %1378 = vmatprep.subr.mxu0 %v869
    %1379 = vmatpush1.msra.mxu0 %v868
    %1380 = vmatprep.subr.mxu0 %v879
    %1381 = vmatpush1.msra.mxu0 %v878
    %1382 = vmatprep.subr.mxu0 %v889
    %1383 = vmatpush1.msra.mxu0 %v888
    %1384 = vmatprep.subr.mxu0 %v899
    %1385 = vmatpush1.msra.mxu0 %v898
    %1386 = vmatprep.subr.mxu0 %v909
    %1387 = vmatpush1.msra.mxu0 %v908
    %1388 = vmatprep.subr.mxu0 0.0
    %1389 = vmatpush1.msra.mxu0 0.0
    %1390 = vmatprep.subr.mxu0 0.0
    %1391 = vmatpush1.msra.mxu0 0.0
    %1392 = vmatprep.subr.mxu0 0.0
    %1393 = vmatpush1.msra.mxu0 0.0
    %1394 = vmatprep.subr.mxu0 0.0
    %1395 = vmatpush1.msra.mxu0 0.0
    %1396 = vmatprep.subr.mxu0 0.0
    %1397 = vmatpush1.msra.mxu0 0.0
    %1398 = vmatprep.subr.mxu0 0.0
    %1399 = vmatpush1.msra.mxu0 0.0
    %1400 = vmatprep.subr.mxu0 0.0
    %1401 = vmatpush1.msra.mxu0 0.0
    %1402 = vmatprep.subr.mxu0 0.0
    %1403 = vmatpush1.msra.mxu0 0.0
    %1404 = vmatprep.subr.mxu0 0.0
    %1405 = vmatpush1.msra.mxu0 0.0
    %1406 = vmatprep.subr.mxu0 0.0
    %1407 = vmatpush1.msra.mxu0 0.0
    %1408 = vmatprep.subr.mxu0 0.0
    %1409 = vmatpush1.msra.mxu0 0.0
    %1410 = vmatprep.subr.mxu0 0.0
    %1411 = vmatpush1.msra.mxu0 0.0
    %1412 = vmatprep.subr.mxu0 0.0
    %1413 = vmatpush1.msra.mxu0 0.0
    %1414 = vmatprep.subr.mxu0 0.0
    %1415 = vmatpush1.msra.mxu0 0.0
    %1416 = vmatprep.subr.mxu0 0.0
    %1417 = vmatpush1.msra.mxu0 0.0
    %1418 = vmatprep.subr.mxu0 0.0
    %1419 = vmatpush1.msra.mxu0 0.0
    %1420 = vmatprep.mubr.f32.mxu0 0.0
    %1421 = vmatmul.mubr.f32.gmra.mrb[0].mxu0 %v995
    %v1422 = vpop.f32.mrb[0].mxu0
    %v1423 = vadd.f32 %v1352, %v1422
    %v1424 = vpop.f32.mrb[0].mxu0
    %v1425 = vadd.f32 %v1354, %v1424
    %1426 = vdwg.mxu0
    %1427 = vmatprep.subr.mxu0 %v121
    %1428 = vmatpush1.msra.mxu0 %v120
    %1429 = vmatprep.subr.mxu0 %v131
    %1430 = vmatpush1.msra.mxu0 %v130
    %1431 = vmatprep.subr.mxu0 %v141
    %1432 = vmatpush1.msra.mxu0 %v140
    %1433 = vmatprep.subr.mxu0 %v151
    %1434 = vmatpush1.msra.mxu0 %v150
    %1435 = vmatprep.subr.mxu0 %v161
    %1436 = vmatpush1.msra.mxu0 %v160
    %1437 = vmatprep.subr.mxu0 %v171
    %1438 = vmatpush1.msra.mxu0 %v170
    %1439 = vmatprep.subr.mxu0 %v181
    %1440 = vmatpush1.msra.mxu0 %v180
    %1441 = vmatprep.subr.mxu0 %v191
    %1442 = vmatpush1.msra.mxu0 %v190
    %1443 = vmatprep.subr.mxu0 %v201
    %1444 = vmatpush1.msra.mxu0 %v200
    %1445 = vmatprep.subr.mxu0 %v211
    %1446 = vmatpush1.msra.mxu0 %v210
    %1447 = vmatprep.subr.mxu0 %v221
    %1448 = vmatpush1.msra.mxu0 %v220
    %1449 = vmatprep.subr.mxu0 %v231
    %1450 = vmatpush1.msra.mxu0 %v230
    %1451 = vmatprep.subr.mxu0 %v241
    %1452 = vmatpush1.msra.mxu0 %v240
    %1453 = vmatprep.subr.mxu0 %v251
    %1454 = vmatpush1.msra.mxu0 %v250
    %1455 = vmatprep.subr.mxu0 %v261
    %1456 = vmatpush1.msra.mxu0 %v260
    %1457 = vmatprep.subr.mxu0 %v271
    %1458 = vmatpush1.msra.mxu0 %v270
    %1459 = vmatprep.subr.mxu0 %v281
    %1460 = vmatpush1.msra.mxu0 %v280
    %1461 = vmatprep.subr.mxu0 %v291
    %1462 = vmatpush1.msra.mxu0 %v290
    %1463 = vmatprep.subr.mxu0 %v301
    %1464 = vmatpush1.msra.mxu0 %v300
    %1465 = vmatprep.subr.mxu0 %v311
    %1466 = vmatpush1.msra.mxu0 %v310
    %1467 = vmatprep.subr.mxu0 %v321
    %1468 = vmatpush1.msra.mxu0 %v320
    %1469 = vmatprep.subr.mxu0 %v331
    %1470 = vmatpush1.msra.mxu0 %v330
    %1471 = vmatprep.subr.mxu0 %v341
    %1472 = vmatpush1.msra.mxu0 %v340
    %1473 = vmatprep.subr.mxu0 %v351
    %1474 = vmatpush1.msra.mxu0 %v350
    %1475 = vmatprep.subr.mxu0 %v361
    %1476 = vmatpush1.msra.mxu0 %v360
    %1477 = vmatprep.subr.mxu0 %v371
    %1478 = vmatpush1.msra.mxu0 %v370
    %1479 = vmatprep.subr.mxu0 %v381
    %1480 = vmatpush1.msra.mxu0 %v380
    %1481 = vmatprep.subr.mxu0 %v391
    %1482 = vmatpush1.msra.mxu0 %v390
    %1483 = vmatprep.subr.mxu0 %v401
    %1484 = vmatpush1.msra.mxu0 %v400
    %1485 = vmatprep.subr.mxu0 %v411
    %1486 = vmatpush1.msra.mxu0 %v410
    %1487 = vmatprep.subr.mxu0 %v421
    %1488 = vmatpush1.msra.mxu0 %v420
    %1489 = vmatprep.subr.mxu0 %v431
    %1490 = vmatpush1.msra.mxu0 %v430
    %1491 = vmatprep.mubr.f32.mxu0 %v987
    %1492 = vmatmul.mubr.f32.gmra.mrb[0].mxu0 %v979
    %v1493 = vpop.f32.mrb[0].mxu0
    %v1494 = vadd.f32 %v939, %v1493
    %v1495 = vpop.f32.mrb[0].mxu0
    %v1496 = vadd.f32 %v943, %v1495
    %1497 = vdwg.mxu0
    %1498 = vmatprep.subr.mxu0 %v441
    %1499 = vmatpush1.msra.mxu0 %v440
    %1500 = vmatprep.subr.mxu0 %v451
    %1501 = vmatpush1.msra.mxu0 %v450
    %1502 = vmatprep.subr.mxu0 %v461
    %1503 = vmatpush1.msra.mxu0 %v460
    %1504 = vmatprep.subr.mxu0 %v471
    %1505 = vmatpush1.msra.mxu0 %v470
    %1506 = vmatprep.subr.mxu0 %v481
    %1507 = vmatpush1.msra.mxu0 %v480
    %1508 = vmatprep.subr.mxu0 %v491
    %1509 = vmatpush1.msra.mxu0 %v490
    %1510 = vmatprep.subr.mxu0 %v501
    %1511 = vmatpush1.msra.mxu0 %v500
    %1512 = vmatprep.subr.mxu0 %v511
    %1513 = vmatpush1.msra.mxu0 %v510
    %1514 = vmatprep.subr.mxu0 %v521
    %1515 = vmatpush1.msra.mxu0 %v520
    %1516 = vmatprep.subr.mxu0 %v531
    %1517 = vmatpush1.msra.mxu0 %v530
    %1518 = vmatprep.subr.mxu0 %v541
    %1519 = vmatpush1.msra.mxu0 %v540
    %1520 = vmatprep.subr.mxu0 %v551
    %1521 = vmatpush1.msra.mxu0 %v550
    %1522 = vmatprep.subr.mxu0 %v561
    %1523 = vmatpush1.msra.mxu0 %v560
    %1524 = vmatprep.subr.mxu0 %v571
    %1525 = vmatpush1.msra.mxu0 %v570
    %1526 = vmatprep.subr.mxu0 %v581
    %1527 = vmatpush1.msra.mxu0 %v580
    %1528 = vmatprep.subr.mxu0 %v591
    %1529 = vmatpush1.msra.mxu0 %v590
    %1530 = vmatprep.subr.mxu0 %v601
    %1531 = vmatpush1.msra.mxu0 %v600
    %1532 = vmatprep.subr.mxu0 %v611
    %1533 = vmatpush1.msra.mxu0 %v610
    %1534 = vmatprep.subr.mxu0 %v621
    %1535 = vmatpush1.msra.mxu0 %v620
    %1536 = vmatprep.subr.mxu0 %v631
    %1537 = vmatpush1.msra.mxu0 %v630
    %1538 = vmatprep.subr.mxu0 %v641
    %1539 = vmatpush1.msra.mxu0 %v640
    %1540 = vmatprep.subr.mxu0 %v651
    %1541 = vmatpush1.msra.mxu0 %v650
    %1542 = vmatprep.subr.mxu0 %v661
    %1543 = vmatpush1.msra.mxu0 %v660
    %1544 = vmatprep.subr.mxu0 %v671
    %1545 = vmatpush1.msra.mxu0 %v670
    %1546 = vmatprep.subr.mxu0 %v681
    %1547 = vmatpush1.msra.mxu0 %v680
    %1548 = vmatprep.subr.mxu0 %v691
    %1549 = vmatpush1.msra.mxu0 %v690
    %1550 = vmatprep.subr.mxu0 %v701
    %1551 = vmatpush1.msra.mxu0 %v700
    %1552 = vmatprep.subr.mxu0 %v711
    %1553 = vmatpush1.msra.mxu0 %v710
    %1554 = vmatprep.subr.mxu0 %v721
    %1555 = vmatpush1.msra.mxu0 %v720
    %1556 = vmatprep.subr.mxu0 %v731
    %1557 = vmatpush1.msra.mxu0 %v730
    %1558 = vmatprep.subr.mxu0 %v741
    %1559 = vmatpush1.msra.mxu0 %v740
    %1560 = vmatprep.subr.mxu0 %v751
    %1561 = vmatpush1.msra.mxu0 %v750
    %1562 = vmatprep.mubr.f32.mxu0 %v988
    %1563 = vmatmul.mubr.f32.gmra.mrb[0].mxu0 %v986
    %v1564 = vpop.f32.mrb[0].mxu0
    %v1565 = vadd.f32 %v1494, %v1564
    %v1566 = vpop.f32.mrb[0].mxu0
    %v1567 = vadd.f32 %v1496, %v1566
    %1568 = vdwg.mxu0
    %1569 = vmatprep.subr.mxu0 %v761
    %1570 = vmatpush1.msra.mxu0 %v760
    %1571 = vmatprep.subr.mxu0 %v771
    %1572 = vmatpush1.msra.mxu0 %v770
    %1573 = vmatprep.subr.mxu0 %v781
    %1574 = vmatpush1.msra.mxu0 %v780
    %1575 = vmatprep.subr.mxu0 %v791
    %1576 = vmatpush1.msra.mxu0 %v790
    %1577 = vmatprep.subr.mxu0 %v801
    %1578 = vmatpush1.msra.mxu0 %v800
    %1579 = vmatprep.subr.mxu0 %v811
    %1580 = vmatpush1.msra.mxu0 %v810
    %1581 = vmatprep.subr.mxu0 %v821
    %1582 = vmatpush1.msra.mxu0 %v820
    %1583 = vmatprep.subr.mxu0 %v831
    %1584 = vmatpush1.msra.mxu0 %v830
    %1585 = vmatprep.subr.mxu0 %v841
    %1586 = vmatpush1.msra.mxu0 %v840
    %1587 = vmatprep.subr.mxu0 %v851
    %1588 = vmatpush1.msra.mxu0 %v850
    %1589 = vmatprep.subr.mxu0 %v861
    %1590 = vmatpush1.msra.mxu0 %v860
    %1591 = vmatprep.subr.mxu0 %v871
    %1592 = vmatpush1.msra.mxu0 %v870
    %1593 = vmatprep.subr.mxu0 %v881
    %1594 = vmatpush1.msra.mxu0 %v880
    %1595 = vmatprep.subr.mxu0 %v891
    %1596 = vmatpush1.msra.mxu0 %v890
    %1597 = vmatprep.subr.mxu0 %v901
    %1598 = vmatpush1.msra.mxu0 %v900
    %1599 = vmatprep.subr.mxu0 %v911
    %1600 = vmatpush1.msra.mxu0 %v910
    %1601 = vmatprep.subr.mxu0 0.0
    %1602 = vmatpush1.msra.mxu0 0.0
    %1603 = vmatprep.subr.mxu0 0.0
    %1604 = vmatpush1.msra.mxu0 0.0
    %1605 = vmatprep.subr.mxu0 0.0
    %1606 = vmatpush1.msra.mxu0 0.0
    %1607 = vmatprep.subr.mxu0 0.0
    %1608 = vmatpush1.msra.mxu0 0.0
    %1609 = vmatprep.subr.mxu0 0.0
    %1610 = vmatpush1.msra.mxu0 0.0
    %1611 = vmatprep.subr.mxu0 0.0
    %1612 = vmatpush1.msra.mxu0 0.0
    %1613 = vmatprep.subr.mxu0 0.0
    %1614 = vmatpush1.msra.mxu0 0.0
    %1615 = vmatprep.subr.mxu0 0.0
    %1616 = vmatpush1.msra.mxu0 0.0
    %1617 = vmatprep.subr.mxu0 0.0
    %1618 = vmatpush1.msra.mxu0 0.0
    %1619 = vmatprep.subr.mxu0 0.0
    %1620 = vmatpush1.msra.mxu0 0.0
    %1621 = vmatprep.subr.mxu0 0.0
    %1622 = vmatpush1.msra.mxu0 0.0
    %1623 = vmatprep.subr.mxu0 0.0
    %1624 = vmatpush1.msra.mxu0 0.0
    %1625 = vmatprep.subr.mxu0 0.0
    %1626 = vmatpush1.msra.mxu0 0.0
    %1627 = vmatprep.subr.mxu0 0.0
    %1628 = vmatpush1.msra.mxu0 0.0
    %1629 = vmatprep.subr.mxu0 0.0
    %1630 = vmatpush1.msra.mxu0 0.0
    %1631 = vmatprep.subr.mxu0 0.0
    %1632 = vmatpush1.msra.mxu0 0.0
    %1633 = vmatprep.mubr.f32.mxu0 0.0
    %1634 = vmatmul.mubr.f32.gmra.mrb[0].mxu0 %v995
    %v1635 = vpop.f32.mrb[0].mxu0
    %v1636 = vadd.f32 %v1565, %v1635
    %v1637 = vpop.f32.mrb[0].mxu0
    %v1638 = vadd.f32 %v1567, %v1637
    %1639 = vdwg.mxu0
    %1640 = vmatprep.subr.mxu0 %v123
    %1641 = vmatpush1.msra.mxu0 %v122
    %1642 = vmatprep.subr.mxu0 %v133
    %1643 = vmatpush1.msra.mxu0 %v132
    %1644 = vmatprep.subr.mxu0 %v143
    %1645 = vmatpush1.msra.mxu0 %v142
    %1646 = vmatprep.subr.mxu0 %v153
    %1647 = vmatpush1.msra.mxu0 %v152
    %1648 = vmatprep.subr.mxu0 %v163
    %1649 = vmatpush1.msra.mxu0 %v162
    %1650 = vmatprep.subr.mxu0 %v173
    %1651 = vmatpush1.msra.mxu0 %v172
    %1652 = vmatprep.subr.mxu0 %v183
    %1653 = vmatpush1.msra.mxu0 %v182
    %1654 = vmatprep.subr.mxu0 %v193
    %1655 = vmatpush1.msra.mxu0 %v192
    %1656 = vmatprep.subr.mxu0 %v203
    %1657 = vmatpush1.msra.mxu0 %v202
    %1658 = vmatprep.subr.mxu0 %v213
    %1659 = vmatpush1.msra.mxu0 %v212
    %1660 = vmatprep.subr.mxu0 %v223
    %1661 = vmatpush1.msra.mxu0 %v222
    %1662 = vmatprep.subr.mxu0 %v233
    %1663 = vmatpush1.msra.mxu0 %v232
    %1664 = vmatprep.subr.mxu0 %v243
    %1665 = vmatpush1.msra.mxu0 %v242
    %1666 = vmatprep.subr.mxu0 %v253
    %1667 = vmatpush1.msra.mxu0 %v252
    %1668 = vmatprep.subr.mxu0 %v263
    %1669 = vmatpush1.msra.mxu0 %v262
    %1670 = vmatprep.subr.mxu0 %v273
    %1671 = vmatpush1.msra.mxu0 %v272
    %1672 = vmatprep.subr.mxu0 %v283
    %1673 = vmatpush1.msra.mxu0 %v282
    %1674 = vmatprep.subr.mxu0 %v293
    %1675 = vmatpush1.msra.mxu0 %v292
    %1676 = vmatprep.subr.mxu0 %v303
    %1677 = vmatpush1.msra.mxu0 %v302
    %1678 = vmatprep.subr.mxu0 %v313
    %1679 = vmatpush1.msra.mxu0 %v312
    %1680 = vmatprep.subr.mxu0 %v323
    %1681 = vmatpush1.msra.mxu0 %v322
    %1682 = vmatprep.subr.mxu0 %v333
    %1683 = vmatpush1.msra.mxu0 %v332
    %1684 = vmatprep.subr.mxu0 %v343
    %1685 = vmatpush1.msra.mxu0 %v342
    %1686 = vmatprep.subr.mxu0 %v353
    %1687 = vmatpush1.msra.mxu0 %v352
    %1688 = vmatprep.subr.mxu0 %v363
    %1689 = vmatpush1.msra.mxu0 %v362
    %1690 = vmatprep.subr.mxu0 %v373
    %1691 = vmatpush1.msra.mxu0 %v372
    %1692 = vmatprep.subr.mxu0 %v383
    %1693 = vmatpush1.msra.mxu0 %v382
    %1694 = vmatprep.subr.mxu0 %v393
    %1695 = vmatpush1.msra.mxu0 %v392
    %1696 = vmatprep.subr.mxu0 %v403
    %1697 = vmatpush1.msra.mxu0 %v402
    %1698 = vmatprep.subr.mxu0 %v413
    %1699 = vmatpush1.msra.mxu0 %v412
    %1700 = vmatprep.subr.mxu0 %v423
    %1701 = vmatpush1.msra.mxu0 %v422
    %1702 = vmatprep.subr.mxu0 %v433
    %1703 = vmatpush1.msra.mxu0 %v432
    %1704 = vmatprep.mubr.f32.mxu0 %v987
    %1705 = vmatmul.mubr.f32.gmra.mrb[0].mxu0 %v979
    %v1706 = vpop.f32.mrb[0].mxu0
    %v1707 = vadd.f32 %v947, %v1706
    %v1708 = vpop.f32.mrb[0].mxu0
    %v1709 = vadd.f32 %v951, %v1708
    %1710 = vdwg.mxu0
    %1711 = vmatprep.subr.mxu0 %v443
    %1712 = vmatpush1.msra.mxu0 %v442
    %1713 = vmatprep.subr.mxu0 %v453
    %1714 = vmatpush1.msra.mxu0 %v452
    %1715 = vmatprep.subr.mxu0 %v463
    %1716 = vmatpush1.msra.mxu0 %v462
    %1717 = vmatprep.subr.mxu0 %v473
    %1718 = vmatpush1.msra.mxu0 %v472
    %1719 = vmatprep.subr.mxu0 %v483
    %1720 = vmatpush1.msra.mxu0 %v482
    %1721 = vmatprep.subr.mxu0 %v493
    %1722 = vmatpush1.msra.mxu0 %v492
    %1723 = vmatprep.subr.mxu0 %v503
    %1724 = vmatpush1.msra.mxu0 %v502
    %1725 = vmatprep.subr.mxu0 %v513
    %1726 = vmatpush1.msra.mxu0 %v512
    %1727 = vmatprep.subr.mxu0 %v523
    %1728 = vmatpush1.msra.mxu0 %v522
    %1729 = vmatprep.subr.mxu0 %v533
    %1730 = vmatpush1.msra.mxu0 %v532
    %1731 = vmatprep.subr.mxu0 %v543
    %1732 = vmatpush1.msra.mxu0 %v542
    %1733 = vmatprep.subr.mxu0 %v553
    %1734 = vmatpush1.msra.mxu0 %v552
    %1735 = vmatprep.subr.mxu0 %v563
    %1736 = vmatpush1.msra.mxu0 %v562
    %1737 = vmatprep.subr.mxu0 %v573
    %1738 = vmatpush1.msra.mxu0 %v572
    %1739 = vmatprep.subr.mxu0 %v583
    %1740 = vmatpush1.msra.mxu0 %v582
    %1741 = vmatprep.subr.mxu0 %v593
    %1742 = vmatpush1.msra.mxu0 %v592
    %1743 = vmatprep.subr.mxu0 %v603
    %1744 = vmatpush1.msra.mxu0 %v602
    %1745 = vmatprep.subr.mxu0 %v613
    %1746 = vmatpush1.msra.mxu0 %v612
    %1747 = vmatprep.subr.mxu0 %v623
    %1748 = vmatpush1.msra.mxu0 %v622
    %1749 = vmatprep.subr.mxu0 %v633
    %1750 = vmatpush1.msra.mxu0 %v632
    %1751 = vmatprep.subr.mxu0 %v643
    %1752 = vmatpush1.msra.mxu0 %v642
    %1753 = vmatprep.subr.mxu0 %v653
    %1754 = vmatpush1.msra.mxu0 %v652
    %1755 = vmatprep.subr.mxu0 %v663
    %1756 = vmatpush1.msra.mxu0 %v662
    %1757 = vmatprep.subr.mxu0 %v673
    %1758 = vmatpush1.msra.mxu0 %v672
    %1759 = vmatprep.subr.mxu0 %v683
    %1760 = vmatpush1.msra.mxu0 %v682
    %1761 = vmatprep.subr.mxu0 %v693
    %1762 = vmatpush1.msra.mxu0 %v692
    %1763 = vmatprep.subr.mxu0 %v703
    %1764 = vmatpush1.msra.mxu0 %v702
    %1765 = vmatprep.subr.mxu0 %v713
    %1766 = vmatpush1.msra.mxu0 %v712
    %1767 = vmatprep.subr.mxu0 %v723
    %1768 = vmatpush1.msra.mxu0 %v722
    %1769 = vmatprep.subr.mxu0 %v733
    %1770 = vmatpush1.msra.mxu0 %v732
    %1771 = vmatprep.subr.mxu0 %v743
    %1772 = vmatpush1.msra.mxu0 %v742
    %1773 = vmatprep.subr.mxu0 %v753
    %1774 = vmatpush1.msra.mxu0 %v752
    %1775 = vmatprep.mubr.f32.mxu0 %v988
    %1776 = vmatmul.mubr.f32.gmra.mrb[0].mxu0 %v986
    %v1777 = vpop.f32.mrb[0].mxu0
    %v1778 = vadd.f32 %v1707, %v1777
    %v1779 = vpop.f32.mrb[0].mxu0
    %v1780 = vadd.f32 %v1709, %v1779
    %1781 = vdwg.mxu0
    %1782 = vmatprep.subr.mxu0 %v763
    %1783 = vmatpush1.msra.mxu0 %v762
    %1784 = vmatprep.subr.mxu0 %v773
    %1785 = vmatpush1.msra.mxu0 %v772
    %1786 = vmatprep.subr.mxu0 %v783
    %1787 = vmatpush1.msra.mxu0 %v782
    %1788 = vmatprep.subr.mxu0 %v793
    %1789 = vmatpush1.msra.mxu0 %v792
    %1790 = vmatprep.subr.mxu0 %v803
    %1791 = vmatpush1.msra.mxu0 %v802
    %1792 = vmatprep.subr.mxu0 %v813
    %1793 = vmatpush1.msra.mxu0 %v812
    %1794 = vmatprep.subr.mxu0 %v823
    %1795 = vmatpush1.msra.mxu0 %v822
    %1796 = vmatprep.subr.mxu0 %v833
    %1797 = vmatpush1.msra.mxu0 %v832
    %1798 = vmatprep.subr.mxu0 %v843
    %1799 = vmatpush1.msra.mxu0 %v842
    %1800 = vmatprep.subr.mxu0 %v853
    %1801 = vmatpush1.msra.mxu0 %v852
    %1802 = vmatprep.subr.mxu0 %v863
    %1803 = vmatpush1.msra.mxu0 %v862
    %1804 = vmatprep.subr.mxu0 %v873
    %1805 = vmatpush1.msra.mxu0 %v872
    %1806 = vmatprep.subr.mxu0 %v883
    %1807 = vmatpush1.msra.mxu0 %v882
    %1808 = vmatprep.subr.mxu0 %v893
    %1809 = vmatpush1.msra.mxu0 %v892
    %1810 = vmatprep.subr.mxu0 %v903
    %1811 = vmatpush1.msra.mxu0 %v902
    %1812 = vmatprep.subr.mxu0 %v913
    %1813 = vmatpush1.msra.mxu0 %v912
    %1814 = vmatprep.subr.mxu0 0.0
    %1815 = vmatpush1.msra.mxu0 0.0
    %1816 = vmatprep.subr.mxu0 0.0
    %1817 = vmatpush1.msra.mxu0 0.0
    %1818 = vmatprep.subr.mxu0 0.0
    %1819 = vmatpush1.msra.mxu0 0.0
    %1820 = vmatprep.subr.mxu0 0.0
    %1821 = vmatpush1.msra.mxu0 0.0
    %1822 = vmatprep.subr.mxu0 0.0
    %1823 = vmatpush1.msra.mxu0 0.0
    %1824 = vmatprep.subr.mxu0 0.0
    %1825 = vmatpush1.msra.mxu0 0.0
    %1826 = vmatprep.subr.mxu0 0.0
    %1827 = vmatpush1.msra.mxu0 0.0
    %1828 = vmatprep.subr.mxu0 0.0
    %1829 = vmatpush1.msra.mxu0 0.0
    %1830 = vmatprep.subr.mxu0 0.0
    %1831 = vmatpush1.msra.mxu0 0.0
    %1832 = vmatprep.subr.mxu0 0.0
    %1833 = vmatpush1.msra.mxu0 0.0
    %1834 = vmatprep.subr.mxu0 0.0
    %1835 = vmatpush1.msra.mxu0 0.0
    %1836 = vmatprep.subr.mxu0 0.0
    %1837 = vmatpush1.msra.mxu0 0.0
    %1838 = vmatprep.subr.mxu0 0.0
    %1839 = vmatpush1.msra.mxu0 0.0
    %1840 = vmatprep.subr.mxu0 0.0
    %1841 = vmatpush1.msra.mxu0 0.0
    %1842 = vmatprep.subr.mxu0 0.0
    %1843 = vmatpush1.msra.mxu0 0.0
    %1844 = vmatprep.subr.mxu0 0.0
    %1845 = vmatpush1.msra.mxu0 0.0
    %1846 = vmatprep.mubr.f32.mxu0 0.0
    %1847 = vmatmul.mubr.f32.gmra.mrb[0].mxu0 %v995
    %v1848 = vpop.f32.mrb[0].mxu0
    %v1849 = vadd.f32 %v1778, %v1848
    %v1850 = vpop.f32.mrb[0].mxu0
    %v1851 = vadd.f32 %v1780, %v1850
    %1852 = vdwg.mxu0
    %1853 = vmatprep.subr.mxu0 %v125
    %1854 = vmatpush1.msra.mxu0 %v124
    %1855 = vmatprep.subr.mxu0 %v135
    %1856 = vmatpush1.msra.mxu0 %v134
    %1857 = vmatprep.subr.mxu0 %v145
    %1858 = vmatpush1.msra.mxu0 %v144
    %1859 = vmatprep.subr.mxu0 %v155
    %1860 = vmatpush1.msra.mxu0 %v154
    %1861 = vmatprep.subr.mxu0 %v165
    %1862 = vmatpush1.msra.mxu0 %v164
    %1863 = vmatprep.subr.mxu0 %v175
    %1864 = vmatpush1.msra.mxu0 %v174
    %1865 = vmatprep.subr.mxu0 %v185
    %1866 = vmatpush1.msra.mxu0 %v184
    %1867 = vmatprep.subr.mxu0 %v195
    %1868 = vmatpush1.msra.mxu0 %v194
    %1869 = vmatprep.subr.mxu0 %v205
    %1870 = vmatpush1.msra.mxu0 %v204
    %1871 = vmatprep.subr.mxu0 %v215
    %1872 = vmatpush1.msra.mxu0 %v214
    %1873 = vmatprep.subr.mxu0 %v225
    %1874 = vmatpush1.msra.mxu0 %v224
    %1875 = vmatprep.subr.mxu0 %v235
    %1876 = vmatpush1.msra.mxu0 %v234
    %1877 = vmatprep.subr.mxu0 %v245
    %1878 = vmatpush1.msra.mxu0 %v244
    %1879 = vmatprep.subr.mxu0 %v255
    %1880 = vmatpush1.msra.mxu0 %v254
    %1881 = vmatprep.subr.mxu0 %v265
    %1882 = vmatpush1.msra.mxu0 %v264
    %1883 = vmatprep.subr.mxu0 %v275
    %1884 = vmatpush1.msra.mxu0 %v274
    %1885 = vmatprep.subr.mxu0 %v285
    %1886 = vmatpush1.msra.mxu0 %v284
    %1887 = vmatprep.subr.mxu0 %v295
    %1888 = vmatpush1.msra.mxu0 %v294
    %1889 = vmatprep.subr.mxu0 %v305
    %1890 = vmatpush1.msra.mxu0 %v304
    %1891 = vmatprep.subr.mxu0 %v315
    %1892 = vmatpush1.msra.mxu0 %v314
    %1893 = vmatprep.subr.mxu0 %v325
    %1894 = vmatpush1.msra.mxu0 %v324
    %1895 = vmatprep.subr.mxu0 %v335
    %1896 = vmatpush1.msra.mxu0 %v334
    %1897 = vmatprep.subr.mxu0 %v345
    %1898 = vmatpush1.msra.mxu0 %v344
    %1899 = vmatprep.subr.mxu0 %v355
    %1900 = vmatpush1.msra.mxu0 %v354
    %1901 = vmatprep.subr.mxu0 %v365
    %1902 = vmatpush1.msra.mxu0 %v364
    %1903 = vmatprep.subr.mxu0 %v375
    %1904 = vmatpush1.msra.mxu0 %v374
    %1905 = vmatprep.subr.mxu0 %v385
    %1906 = vmatpush1.msra.mxu0 %v384
    %1907 = vmatprep.subr.mxu0 %v395
    %1908 = vmatpush1.msra.mxu0 %v394
    %1909 = vmatprep.subr.mxu0 %v405
    %1910 = vmatpush1.msra.mxu0 %v404
    %1911 = vmatprep.subr.mxu0 %v415
    %1912 = vmatpush1.msra.mxu0 %v414
    %1913 = vmatprep.subr.mxu0 %v425
    %1914 = vmatpush1.msra.mxu0 %v424
    %1915 = vmatprep.subr.mxu0 %v435
    %1916 = vmatpush1.msra.mxu0 %v434
    %1917 = vmatprep.mubr.f32.mxu0 %v987
    %1918 = vmatmul.mubr.f32.gmra.mrb[0].mxu0 %v979
    %v1919 = vpop.f32.mrb[0].mxu0
    %v1920 = vadd.f32 %v955, %v1919
    %v1921 = vpop.f32.mrb[0].mxu0
    %v1922 = vadd.f32 %v959, %v1921
    %1923 = vdwg.mxu0
    %1924 = vmatprep.subr.mxu0 %v445
    %1925 = vmatpush1.msra.mxu0 %v444
    %1926 = vmatprep.subr.mxu0 %v455
    %1927 = vmatpush1.msra.mxu0 %v454
    %1928 = vmatprep.subr.mxu0 %v465
    %1929 = vmatpush1.msra.mxu0 %v464
    %1930 = vmatprep.subr.mxu0 %v475
    %1931 = vmatpush1.msra.mxu0 %v474
    %1932 = vmatprep.subr.mxu0 %v485
    %1933 = vmatpush1.msra.mxu0 %v484
    %1934 = vmatprep.subr.mxu0 %v495
    %1935 = vmatpush1.msra.mxu0 %v494
    %1936 = vmatprep.subr.mxu0 %v505
    %1937 = vmatpush1.msra.mxu0 %v504
    %1938 = vmatprep.subr.mxu0 %v515
    %1939 = vmatpush1.msra.mxu0 %v514
    %1940 = vmatprep.subr.mxu0 %v525
    %1941 = vmatpush1.msra.mxu0 %v524
    %1942 = vmatprep.subr.mxu0 %v535
    %1943 = vmatpush1.msra.mxu0 %v534
    %1944 = vmatprep.subr.mxu0 %v545
    %1945 = vmatpush1.msra.mxu0 %v544
    %1946 = vmatprep.subr.mxu0 %v555
    %1947 = vmatpush1.msra.mxu0 %v554
    %1948 = vmatprep.subr.mxu0 %v565
    %1949 = vmatpush1.msra.mxu0 %v564
    %1950 = vmatprep.subr.mxu0 %v575
    %1951 = vmatpush1.msra.mxu0 %v574
    %1952 = vmatprep.subr.mxu0 %v585
    %1953 = vmatpush1.msra.mxu0 %v584
    %1954 = vmatprep.subr.mxu0 %v595
    %1955 = vmatpush1.msra.mxu0 %v594
    %1956 = vmatprep.subr.mxu0 %v605
    %1957 = vmatpush1.msra.mxu0 %v604
    %1958 = vmatprep.subr.mxu0 %v615
    %1959 = vmatpush1.msra.mxu0 %v614
    %1960 = vmatprep.subr.mxu0 %v625
    %1961 = vmatpush1.msra.mxu0 %v624
    %1962 = vmatprep.subr.mxu0 %v635
    %1963 = vmatpush1.msra.mxu0 %v634
    %1964 = vmatprep.subr.mxu0 %v645
    %1965 = vmatpush1.msra.mxu0 %v644
    %1966 = vmatprep.subr.mxu0 %v655
    %1967 = vmatpush1.msra.mxu0 %v654
    %1968 = vmatprep.subr.mxu0 %v665
    %1969 = vmatpush1.msra.mxu0 %v664
    %1970 = vmatprep.subr.mxu0 %v675
    %1971 = vmatpush1.msra.mxu0 %v674
    %1972 = vmatprep.subr.mxu0 %v685
    %1973 = vmatpush1.msra.mxu0 %v684
    %1974 = vmatprep.subr.mxu0 %v695
    %1975 = vmatpush1.msra.mxu0 %v694
    %1976 = vmatprep.subr.mxu0 %v705
    %1977 = vmatpush1.msra.mxu0 %v704
    %1978 = vmatprep.subr.mxu0 %v715
    %1979 = vmatpush1.msra.mxu0 %v714
    %1980 = vmatprep.subr.mxu0 %v725
    %1981 = vmatpush1.msra.mxu0 %v724
    %1982 = vmatprep.subr.mxu0 %v735
    %1983 = vmatpush1.msra.mxu0 %v734
    %1984 = vmatprep.subr.mxu0 %v745
    %1985 = vmatpush1.msra.mxu0 %v744
    %1986 = vmatprep.subr.mxu0 %v755
    %1987 = vmatpush1.msra.mxu0 %v754
    %1988 = vmatprep.mubr.f32.mxu0 %v988
    %1989 = vmatmul.mubr.f32.gmra.mrb[0].mxu0 %v986
    %v1990 = vpop.f32.mrb[0].mxu0
    %v1991 = vadd.f32 %v1920, %v1990
    %v1992 = vpop.f32.mrb[0].mxu0
    %v1993 = vadd.f32 %v1922, %v1992
    %1994 = vdwg.mxu0
    %1995 = vmatprep.subr.mxu0 %v765
    %1996 = vmatpush1.msra.mxu0 %v764
    %1997 = vmatprep.subr.mxu0 %v775
    %1998 = vmatpush1.msra.mxu0 %v774
    %1999 = vmatprep.subr.mxu0 %v785
    %2000 = vmatpush1.msra.mxu0 %v784
    %2001 = vmatprep.subr.mxu0 %v795
    %2002 = vmatpush1.msra.mxu0 %v794
    %2003 = vmatprep.subr.mxu0 %v805
    %2004 = vmatpush1.msra.mxu0 %v804
    %2005 = vmatprep.subr.mxu0 %v815
    %2006 = vmatpush1.msra.mxu0 %v814
    %2007 = vmatprep.subr.mxu0 %v825
    %2008 = vmatpush1.msra.mxu0 %v824
    %2009 = vmatprep.subr.mxu0 %v835
    %2010 = vmatpush1.msra.mxu0 %v834
    %2011 = vmatprep.subr.mxu0 %v845
    %2012 = vmatpush1.msra.mxu0 %v844
    %2013 = vmatprep.subr.mxu0 %v855
    %2014 = vmatpush1.msra.mxu0 %v854
    %2015 = vmatprep.subr.mxu0 %v865
    %2016 = vmatpush1.msra.mxu0 %v864
    %2017 = vmatprep.subr.mxu0 %v875
    %2018 = vmatpush1.msra.mxu0 %v874
    %2019 = vmatprep.subr.mxu0 %v885
    %2020 = vmatpush1.msra.mxu0 %v884
    %2021 = vmatprep.subr.mxu0 %v895
    %2022 = vmatpush1.msra.mxu0 %v894
    %2023 = vmatprep.subr.mxu0 %v905
    %2024 = vmatpush1.msra.mxu0 %v904
    %2025 = vmatprep.subr.mxu0 %v915
    %2026 = vmatpush1.msra.mxu0 %v914
    %2027 = vmatprep.subr.mxu0 0.0
    %2028 = vmatpush1.msra.mxu0 0.0
    %2029 = vmatprep.subr.mxu0 0.0
    %2030 = vmatpush1.msra.mxu0 0.0
    %2031 = vmatprep.subr.mxu0 0.0
    %2032 = vmatpush1.msra.mxu0 0.0
    %2033 = vmatprep.subr.mxu0 0.0
    %2034 = vmatpush1.msra.mxu0 0.0
    %2035 = vmatprep.subr.mxu0 0.0
    %2036 = vmatpush1.msra.mxu0 0.0
    %2037 = vmatprep.subr.mxu0 0.0
    %2038 = vmatpush1.msra.mxu0 0.0
    %2039 = vmatprep.subr.mxu0 0.0
    %2040 = vmatpush1.msra.mxu0 0.0
    %2041 = vmatprep.subr.mxu0 0.0
    %2042 = vmatpush1.msra.mxu0 0.0
    %2043 = vmatprep.subr.mxu0 0.0
    %2044 = vmatpush1.msra.mxu0 0.0
    %2045 = vmatprep.subr.mxu0 0.0
    %2046 = vmatpush1.msra.mxu0 0.0
    %2047 = vmatprep.subr.mxu0 0.0
    %2048 = vmatpush1.msra.mxu0 0.0
    %2049 = vmatprep.subr.mxu0 0.0
    %2050 = vmatpush1.msra.mxu0 0.0
    %2051 = vmatprep.subr.mxu0 0.0
    %2052 = vmatpush1.msra.mxu0 0.0
    %2053 = vmatprep.subr.mxu0 0.0
    %2054 = vmatpush1.msra.mxu0 0.0
    %2055 = vmatprep.subr.mxu0 0.0
    %2056 = vmatpush1.msra.mxu0 0.0
    %2057 = vmatprep.subr.mxu0 0.0
    %2058 = vmatpush1.msra.mxu0 0.0
    %2059 = vmatprep.mubr.f32.mxu0 0.0
    %2060 = vmatmul.mubr.f32.gmra.mrb[0].mxu0 %v995
    %v2061 = vpop.f32.mrb[0].mxu0
    %v2062 = vadd.f32 %v1991, %v2061
    %v2063 = vpop.f32.mrb[0].mxu0
    %v2064 = vadd.f32 %v1993, %v2063
    %2065 = vdwg.mxu0
    %v2066 = vmax.f32 %v1210, 0.0
    %v2067 = vmax.f32 %v1212, 0.0
    %v2068 = vmax.f32 %v1423, 0.0
    %v2069 = vmax.f32 %v1425, 0.0
    %v2070 = vmax.f32 %v1636, 0.0
    %v2071 = vmax.f32 %v1638, 0.0
    %v2072 = vmax.f32 %v1849, 0.0
    %v2073 = vmax.f32 %v1851, 0.0
    %v2074 = vmax.f32 %v2062, 0.0
    %v2075 = vmax.f32 %v2064, 0.0
    %v2076 = vld [vmem:[#allocation8] sm:$0xff]
    %v2077 = vld [vmem:[#allocation8 + $0x8] sm:$0xff]
    %v2078 = vld [vmem:[#allocation8 + $0x10] sm:$0xff]
    %v2079 = vld [vmem:[#allocation8 + $0x18] sm:$0xff]
    %v2080 = vld [vmem:[#allocation8 + $0x20] sm:$0xff]
    %v2081 = vld [vmem:[#allocation8 + $0x28] sm:$0xff]
    %v2082 = vld [vmem:[#allocation8 + $0x30] sm:$0xff]
    %v2083 = vld [vmem:[#allocation8 + $0x38] sm:$0xff]
    %v2084 = vld [vmem:[#allocation8 + $0x40] sm:$0xff]
    %v2085 = vld [vmem:[#allocation8 + $0x48] sm:$0xff]
    %v2086 = vld [vmem:[#allocation8 + $0x50] sm:$0xff]
    %v2087 = vld [vmem:[#allocation8 + $0x58] sm:$0xff]
    %v2088 = vld [vmem:[#allocation8 + $0x60] sm:$0xff]
    %v2089 = vld [vmem:[#allocation8 + $0x68] sm:$0xff]
    %v2090 = vld [vmem:[#allocation8 + $0x70] sm:$0xff]
    %v2091 = vld [vmem:[#allocation8 + $0x78] sm:$0xff]
    %v2092 = vld [vmem:[#allocation8 + $0x80] sm:$0xff]
    %v2093 = vld [vmem:[#allocation8 + $0x88] sm:$0xff]
    %v2094 = vld [vmem:[#allocation8 + $0x90] sm:$0xff]
    %v2095 = vld [vmem:[#allocation8 + $0x98] sm:$0xff]
    %v2096 = vld [vmem:[#allocation8 + $0xa0] sm:$0xff]
    %v2097 = vld [vmem:[#allocation8 + $0xa8] sm:$0xff]
    %v2098 = vld [vmem:[#allocation8 + $0xb0] sm:$0xff]
    %v2099 = vld [vmem:[#allocation8 + $0xb8] sm:$0xff]
    %v2100 = vld [vmem:[#allocation8 + $0xc0] sm:$0xff]
    %v2101 = vld [vmem:[#allocation8 + $0xc8] sm:$0xff]
    %v2102 = vld [vmem:[#allocation8 + $0xd0] sm:$0xff]
    %v2103 = vld [vmem:[#allocation8 + $0xd8] sm:$0xff]
    %v2104 = vld [vmem:[#allocation8 + $0xe0] sm:$0xff]
    %v2105 = vld [vmem:[#allocation8 + $0xe8] sm:$0xff]
    %v2106 = vld [vmem:[#allocation8 + $0xf0] sm:$0xff]
    %v2107 = vld [vmem:[#allocation8 + $0xf8] sm:$0xff]
    %v2108 = vld [vmem:[#allocation8 + $0x100] sm:$0xff]
    %v2109 = vld [vmem:[#allocation8 + $0x108] sm:$0xff]
    %v2110 = vld [vmem:[#allocation8 + $0x110] sm:$0xff]
    %v2111 = vld [vmem:[#allocation8 + $0x118] sm:$0xff]
    %v2112 = vld [vmem:[#allocation8 + $0x120] sm:$0xff]
    %v2113 = vld [vmem:[#allocation8 + $0x128] sm:$0xff]
    %v2114 = vld [vmem:[#allocation8 + $0x130] sm:$0xff]
    %v2115 = vld [vmem:[#allocation8 + $0x138] sm:$0xff]
    %v2116 = vld [vmem:[#allocation8 + $0x140] sm:$0xff]
    %v2117 = vld [vmem:[#allocation8 + $0x148] sm:$0xff]
    %v2118 = vld [vmem:[#allocation8 + $0x150] sm:$0xff]
    %v2119 = vld [vmem:[#allocation8 + $0x158] sm:$0xff]
    %v2120 = vld [vmem:[#allocation8 + $0x160] sm:$0xff]
    %v2121 = vld [vmem:[#allocation8 + $0x168] sm:$0xff]
    %v2122 = vld [vmem:[#allocation8 + $0x170] sm:$0xff]
    %v2123 = vld [vmem:[#allocation8 + $0x178] sm:$0xff]
    %v2124 = vld [vmem:[#allocation8 + $0x180] sm:$0xff]
    %v2125 = vld [vmem:[#allocation8 + $0x188] sm:$0xff]
    %v2126 = vld [vmem:[#allocation8 + $0x190] sm:$0xff]
    %v2127 = vld [vmem:[#allocation8 + $0x198] sm:$0xff]
    %v2128 = vld [vmem:[#allocation8 + $0x1a0] sm:$0xff]
    %v2129 = vld [vmem:[#allocation8 + $0x1a8] sm:$0xff]
    %v2130 = vld [vmem:[#allocation8 + $0x1b0] sm:$0xff]
    %v2131 = vld [vmem:[#allocation8 + $0x1b8] sm:$0xff]
    %v2132 = vld [vmem:[#allocation8 + $0x1c0] sm:$0xff]
    %v2133 = vld [vmem:[#allocation8 + $0x1c8] sm:$0xff]
    %v2134 = vld [vmem:[#allocation8 + $0x1d0] sm:$0xff]
    %v2135 = vld [vmem:[#allocation8 + $0x1d8] sm:$0xff]
    %v2136 = vld [vmem:[#allocation8 + $0x1e0] sm:$0xff]
    %v2137 = vld [vmem:[#allocation8 + $0x1e8] sm:$0xff]
    %v2138 = vld [vmem:[#allocation8 + $0x1f0] sm:$0xff]
    %v2139 = vld [vmem:[#allocation8 + $0x1f8] sm:$0xff]
    %v2140 = vld [vmem:[#allocation8 + $0x200] sm:$0xff]
    %v2141 = vld [vmem:[#allocation8 + $0x208] sm:$0xff]
    %v2142 = vld [vmem:[#allocation8 + $0x210] sm:$0xff]
    %v2143 = vld [vmem:[#allocation8 + $0x218] sm:$0xff]
    %v2144 = vld [vmem:[#allocation8 + $0x220] sm:$0xff]
    %v2145 = vld [vmem:[#allocation8 + $0x228] sm:$0xff]
    %v2146 = vld [vmem:[#allocation8 + $0x230] sm:$0xff]
    %v2147 = vld [vmem:[#allocation8 + $0x238] sm:$0xff]
    %v2148 = vld [vmem:[#allocation8 + $0x240] sm:$0xff]
    %v2149 = vld [vmem:[#allocation8 + $0x248] sm:$0xff]
    %v2150 = vld [vmem:[#allocation8 + $0x250] sm:$0xff]
    %v2151 = vld [vmem:[#allocation8 + $0x258] sm:$0xff]
    %v2152 = vld [vmem:[#allocation8 + $0x260] sm:$0xff]
    %v2153 = vld [vmem:[#allocation8 + $0x268] sm:$0xff]
    %v2154 = vld [vmem:[#allocation8 + $0x270] sm:$0xff]
    %v2155 = vld [vmem:[#allocation8 + $0x278] sm:$0xff]
    %v2156 = vld [vmem:[#allocation8 + $0x280] sm:$0xff]
    %v2157 = vld [vmem:[#allocation8 + $0x288] sm:$0xff]
    %v2158 = vld [vmem:[#allocation8 + $0x290] sm:$0xff]
    %v2159 = vld [vmem:[#allocation8 + $0x298] sm:$0xff]
    %v2160 = vld [vmem:[#allocation8 + $0x2a0] sm:$0xff]
    %v2161 = vld [vmem:[#allocation8 + $0x2a8] sm:$0xff]
    %v2162 = vld [vmem:[#allocation8 + $0x2b0] sm:$0xff]
    %v2163 = vld [vmem:[#allocation8 + $0x2b8] sm:$0xff]
    %v2164 = vld [vmem:[#allocation8 + $0x2c0] sm:$0xff]
    %v2165 = vld [vmem:[#allocation8 + $0x2c8] sm:$0xff]
    %v2166 = vld [vmem:[#allocation8 + $0x2d0] sm:$0xff]
    %v2167 = vld [vmem:[#allocation8 + $0x2d8] sm:$0xff]
    %v2168 = vld [vmem:[#allocation8 + $0x2e0] sm:$0xff]
    %v2169 = vld [vmem:[#allocation8 + $0x2e8] sm:$0xff]
    %v2170 = vld [vmem:[#allocation8 + $0x2f0] sm:$0xff]
    %v2171 = vld [vmem:[#allocation8 + $0x2f8] sm:$0xff]
    %v2172 = vld [vmem:[#allocation8 + $0x300] sm:$0xff]
    %v2173 = vld [vmem:[#allocation8 + $0x308] sm:$0xff]
    %v2174 = vld [vmem:[#allocation8 + $0x310] sm:$0xff]
    %v2175 = vld [vmem:[#allocation8 + $0x318] sm:$0xff]
    %v2176 = vld [vmem:[#allocation8 + $0x320] sm:$0xff]
    %v2177 = vld [vmem:[#allocation8 + $0x328] sm:$0xff]
    %v2178 = vld [vmem:[#allocation8 + $0x330] sm:$0xff]
    %v2179 = vld [vmem:[#allocation8 + $0x338] sm:$0xff]
    %v2180 = vld [vmem:[#allocation8 + $0x340] sm:$0xff]
    %v2181 = vld [vmem:[#allocation8 + $0x348] sm:$0xff]
    %v2182 = vld [vmem:[#allocation8 + $0x350] sm:$0xff]
    %v2183 = vld [vmem:[#allocation8 + $0x358] sm:$0xff]
    %v2184 = vld [vmem:[#allocation8 + $0x360] sm:$0xff]
    %v2185 = vld [vmem:[#allocation8 + $0x368] sm:$0xff]
    %v2186 = vld [vmem:[#allocation8 + $0x370] sm:$0xff]
    %v2187 = vld [vmem:[#allocation8 + $0x378] sm:$0xff]
    %v2188 = vld [vmem:[#allocation8 + $0x380] sm:$0xff]
    %v2189 = vld [vmem:[#allocation8 + $0x388] sm:$0xff]
    %v2190 = vld [vmem:[#allocation8 + $0x390] sm:$0xff]
    %v2191 = vld [vmem:[#allocation8 + $0x398] sm:$0xff]
    %v2192 = vld [vmem:[#allocation8 + $0x3a0] sm:$0xff]
    %v2193 = vld [vmem:[#allocation8 + $0x3a8] sm:$0xff]
    %v2194 = vld [vmem:[#allocation8 + $0x3b0] sm:$0xff]
    %v2195 = vld [vmem:[#allocation8 + $0x3b8] sm:$0xff]
    %v2196 = vld [vmem:[#allocation8 + $0x3c0] sm:$0xff]
    %v2197 = vld [vmem:[#allocation8 + $0x3c8] sm:$0xff]
    %v2198 = vld [vmem:[#allocation8 + $0x3d0] sm:$0xff]
    %v2199 = vld [vmem:[#allocation8 + $0x3d8] sm:$0xff]
    %v2200 = vld [vmem:[#allocation8 + $0x3e0] sm:$0xff]
    %v2201 = vld [vmem:[#allocation8 + $0x3e8] sm:$0xff]
    %v2202 = vld [vmem:[#allocation8 + $0x3f0] sm:$0xff]
    %v2203 = vld [vmem:[#allocation8 + $0x3f8] sm:$0xff]
    %v2204 = vld [vmem:[#allocation8 + $0x400] sm:$0xff]
    %v2205 = vld [vmem:[#allocation8 + $0x408] sm:$0xff]
    %v2206 = vld [vmem:[#allocation8 + $0x410] sm:$0xff]
    %v2207 = vld [vmem:[#allocation8 + $0x418] sm:$0xff]
    %v2208 = vld [vmem:[#allocation8 + $0x420] sm:$0xff]
    %v2209 = vld [vmem:[#allocation8 + $0x428] sm:$0xff]
    %v2210 = vld [vmem:[#allocation8 + $0x430] sm:$0xff]
    %v2211 = vld [vmem:[#allocation8 + $0x438] sm:$0xff]
    %v2212 = vld [vmem:[#allocation8 + $0x440] sm:$0xff]
    %v2213 = vld [vmem:[#allocation8 + $0x448] sm:$0xff]
    %v2214 = vld [vmem:[#allocation8 + $0x450] sm:$0xff]
    %v2215 = vld [vmem:[#allocation8 + $0x458] sm:$0xff]
    %v2216 = vld [vmem:[#allocation8 + $0x460] sm:$0xff]
    %v2217 = vld [vmem:[#allocation8 + $0x468] sm:$0xff]
    %v2218 = vld [vmem:[#allocation8 + $0x470] sm:$0xff]
    %v2219 = vld [vmem:[#allocation8 + $0x478] sm:$0xff]
    %v2220 = vld [vmem:[#allocation8 + $0x480] sm:$0xff]
    %v2221 = vld [vmem:[#allocation8 + $0x488] sm:$0xff]
    %v2222 = vld [vmem:[#allocation8 + $0x490] sm:$0xff]
    %v2223 = vld [vmem:[#allocation8 + $0x498] sm:$0xff]
    %v2224 = vld [vmem:[#allocation8 + $0x4a0] sm:$0xff]
    %v2225 = vld [vmem:[#allocation8 + $0x4a8] sm:$0xff]
    %v2226 = vld [vmem:[#allocation8 + $0x4b0] sm:$0xff]
    %v2227 = vld [vmem:[#allocation8 + $0x4b8] sm:$0xff]
    %v2228 = vld [vmem:[#allocation8 + $0x4c0] sm:$0xff]
    %v2229 = vld [vmem:[#allocation8 + $0x4c8] sm:$0xff]
    %v2230 = vld [vmem:[#allocation8 + $0x4d0] sm:$0xff]
    %v2231 = vld [vmem:[#allocation8 + $0x4d8] sm:$0xff]
    %v2232 = vld [vmem:[#allocation8 + $0x4e0] sm:$0xff]
    %v2233 = vld [vmem:[#allocation8 + $0x4e8] sm:$0xff]
    %v2234 = vld [vmem:[#allocation8 + $0x4f0] sm:$0xff]
    %v2235 = vld [vmem:[#allocation8 + $0x4f8] sm:$0xff]
    %v2236 = vld [vmem:[#allocation8 + $0x500] sm:$0xff]
    %v2237 = vld [vmem:[#allocation8 + $0x508] sm:$0xff]
    %v2238 = vld [vmem:[#allocation8 + $0x510] sm:$0xff]
    %v2239 = vld [vmem:[#allocation8 + $0x518] sm:$0xff]
    %v2240 = vld [vmem:[#allocation8 + $0x520] sm:$0xff]
    %v2241 = vld [vmem:[#allocation8 + $0x528] sm:$0xff]
    %v2242 = vld [vmem:[#allocation8 + $0x530] sm:$0xff]
    %v2243 = vld [vmem:[#allocation8 + $0x538] sm:$0xff]
    %v2244 = vld [vmem:[#allocation8 + $0x540] sm:$0xff]
    %v2245 = vld [vmem:[#allocation8 + $0x548] sm:$0xff]
    %v2246 = vld [vmem:[#allocation8 + $0x550] sm:$0xff]
    %v2247 = vld [vmem:[#allocation8 + $0x558] sm:$0xff]
    %v2248 = vld [vmem:[#allocation8 + $0x560] sm:$0xff]
    %v2249 = vld [vmem:[#allocation8 + $0x568] sm:$0xff]
    %v2250 = vld [vmem:[#allocation8 + $0x570] sm:$0xff]
    %v2251 = vld [vmem:[#allocation8 + $0x578] sm:$0xff]
    %v2252 = vld [vmem:[#allocation8 + $0x580] sm:$0xff]
    %v2253 = vld [vmem:[#allocation8 + $0x588] sm:$0xff]
    %v2254 = vld [vmem:[#allocation8 + $0x590] sm:$0xff]
    %v2255 = vld [vmem:[#allocation8 + $0x598] sm:$0xff]
    %v2256 = vld [vmem:[#allocation8 + $0x5a0] sm:$0xff]
    %v2257 = vld [vmem:[#allocation8 + $0x5a8] sm:$0xff]
    %v2258 = vld [vmem:[#allocation8 + $0x5b0] sm:$0xff]
    %v2259 = vld [vmem:[#allocation8 + $0x5b8] sm:$0xff]
    %v2260 = vld [vmem:[#allocation8 + $0x5c0] sm:$0xff]
    %v2261 = vld [vmem:[#allocation8 + $0x5c8] sm:$0xff]
    %v2262 = vld [vmem:[#allocation8 + $0x5d0] sm:$0xff]
    %v2263 = vld [vmem:[#allocation8 + $0x5d8] sm:$0xff]
    %v2264 = vld [vmem:[#allocation8 + $0x5e0] sm:$0xff]
    %v2265 = vld [vmem:[#allocation8 + $0x5e8] sm:$0xff]
    %v2266 = vld [vmem:[#allocation8 + $0x5f0] sm:$0xff]
    %v2267 = vld [vmem:[#allocation8 + $0x5f8] sm:$0xff]
    %v2268 = vld [vmem:[#allocation8 + $0x600] sm:$0xff]
    %v2269 = vld [vmem:[#allocation8 + $0x608] sm:$0xff]
    %v2270 = vld [vmem:[#allocation8 + $0x610] sm:$0xff]
    %v2271 = vld [vmem:[#allocation8 + $0x618] sm:$0xff]
    %v2272 = vld [vmem:[#allocation8 + $0x620] sm:$0xff]
    %v2273 = vld [vmem:[#allocation8 + $0x628] sm:$0xff]
    %v2274 = vld [vmem:[#allocation8 + $0x630] sm:$0xff]
    %v2275 = vld [vmem:[#allocation8 + $0x638] sm:$0xff]
    %v2276 = vld [vmem:[#allocation8 + $0x640] sm:$0xff]
    %v2277 = vld [vmem:[#allocation8 + $0x648] sm:$0xff]
    %v2278 = vld [vmem:[#allocation8 + $0x650] sm:$0xff]
    %v2279 = vld [vmem:[#allocation8 + $0x658] sm:$0xff]
    %v2280 = vld [vmem:[#allocation8 + $0x660] sm:$0xff]
    %v2281 = vld [vmem:[#allocation8 + $0x668] sm:$0xff]
    %v2282 = vld [vmem:[#allocation8 + $0x670] sm:$0xff]
    %v2283 = vld [vmem:[#allocation8 + $0x678] sm:$0xff]
    %v2284 = vld [vmem:[#allocation8 + $0x680] sm:$0xff]
    %v2285 = vld [vmem:[#allocation8 + $0x688] sm:$0xff]
    %v2286 = vld [vmem:[#allocation8 + $0x690] sm:$0xff]
    %v2287 = vld [vmem:[#allocation8 + $0x698] sm:$0xff]
    %v2288 = vld [vmem:[#allocation8 + $0x6a0] sm:$0xff]
    %v2289 = vld [vmem:[#allocation8 + $0x6a8] sm:$0xff]
    %v2290 = vld [vmem:[#allocation8 + $0x6b0] sm:$0xff]
    %v2291 = vld [vmem:[#allocation8 + $0x6b8] sm:$0xff]
    %v2292 = vld [vmem:[#allocation8 + $0x6c0] sm:$0xff]
    %v2293 = vld [vmem:[#allocation8 + $0x6c8] sm:$0xff]
    %v2294 = vld [vmem:[#allocation8 + $0x6d0] sm:$0xff]
    %v2295 = vld [vmem:[#allocation8 + $0x6d8] sm:$0xff]
    %v2296 = vld [vmem:[#allocation8 + $0x6e0] sm:$0xff]
    %v2297 = vld [vmem:[#allocation8 + $0x6e8] sm:$0xff]
    %v2298 = vld [vmem:[#allocation8 + $0x6f0] sm:$0xff]
    %v2299 = vld [vmem:[#allocation8 + $0x6f8] sm:$0xff]
    %v2300 = vld [vmem:[#allocation8 + $0x700] sm:$0xff]
    %v2301 = vld [vmem:[#allocation8 + $0x708] sm:$0xff]
    %v2302 = vld [vmem:[#allocation8 + $0x710] sm:$0xff]
    %v2303 = vld [vmem:[#allocation8 + $0x718] sm:$0xff]
    %v2304 = vld [vmem:[#allocation8 + $0x720] sm:$0xff]
    %v2305 = vld [vmem:[#allocation8 + $0x728] sm:$0xff]
    %v2306 = vld [vmem:[#allocation8 + $0x730] sm:$0xff]
    %v2307 = vld [vmem:[#allocation8 + $0x738] sm:$0xff]
    %v2308 = vld [vmem:[#allocation8 + $0x740] sm:$0xff]
    %v2309 = vld [vmem:[#allocation8 + $0x748] sm:$0xff]
    %v2310 = vld [vmem:[#allocation8 + $0x750] sm:$0xff]
    %v2311 = vld [vmem:[#allocation8 + $0x758] sm:$0xff]
    %v2312 = vld [vmem:[#allocation8 + $0x760] sm:$0xff]
    %v2313 = vld [vmem:[#allocation8 + $0x768] sm:$0xff]
    %v2314 = vld [vmem:[#allocation8 + $0x770] sm:$0xff]
    %v2315 = vld [vmem:[#allocation8 + $0x778] sm:$0xff]
    %v2316 = vld [vmem:[#allocation8 + $0x780] sm:$0xff]
    %v2317 = vld [vmem:[#allocation8 + $0x788] sm:$0xff]
    %v2318 = vld [vmem:[#allocation8 + $0x790] sm:$0xff]
    %v2319 = vld [vmem:[#allocation8 + $0x798] sm:$0xff]
    %v2320 = vld [vmem:[#allocation8 + $0x7a0] sm:$0xff]
    %v2321 = vld [vmem:[#allocation8 + $0x7a8] sm:$0xff]
    %v2322 = vld [vmem:[#allocation8 + $0x7b0] sm:$0xff]
    %v2323 = vld [vmem:[#allocation8 + $0x7b8] sm:$0xff]
    %v2324 = vld [vmem:[#allocation8 + $0x7c0] sm:$0xff]
    %v2325 = vld [vmem:[#allocation8 + $0x7c8] sm:$0xff]
    %v2326 = vld [vmem:[#allocation8 + $0x7d0] sm:$0xff]
    %v2327 = vld [vmem:[#allocation8 + $0x7d8] sm:$0xff]
    %v2328 = vld [vmem:[#allocation8 + $0x7e0] sm:$0xff]
    %v2329 = vld [vmem:[#allocation8 + $0x7e8] sm:$0xff]
    %v2330 = vld [vmem:[#allocation8 + $0x7f0] sm:$0xff]
    %v2331 = vld [vmem:[#allocation8 + $0x7f8] sm:$0xff]
    %v2332 = vld [vmem:[#allocation8 + $0x800] sm:$0xff]
    %v2333 = vld [vmem:[#allocation8 + $0x808] sm:$0xff]
    %v2334 = vld [vmem:[#allocation8 + $0x810] sm:$0xff]
    %v2335 = vld [vmem:[#allocation8 + $0x818] sm:$0xff]
    %v2336 = vld [vmem:[#allocation8 + $0x820] sm:$0xff]
    %v2337 = vld [vmem:[#allocation8 + $0x828] sm:$0xff]
    %v2338 = vld [vmem:[#allocation8 + $0x830] sm:$0xff]
    %v2339 = vld [vmem:[#allocation8 + $0x838] sm:$0xff]
    %v2340 = vld [vmem:[#allocation8 + $0x840] sm:$0xff]
    %v2341 = vld [vmem:[#allocation8 + $0x848] sm:$0xff]
    %v2342 = vld [vmem:[#allocation8 + $0x850] sm:$0xff]
    %v2343 = vld [vmem:[#allocation8 + $0x858] sm:$0xff]
    %v2344 = vld [vmem:[#allocation8 + $0x860] sm:$0xff]
    %v2345 = vld [vmem:[#allocation8 + $0x868] sm:$0xff]
    %v2346 = vld [vmem:[#allocation8 + $0x870] sm:$0xff]
    %v2347 = vld [vmem:[#allocation8 + $0x878] sm:$0xff]
    %v2348 = vld [vmem:[#allocation8 + $0x880] sm:$0xff]
    %v2349 = vld [vmem:[#allocation8 + $0x888] sm:$0xff]
    %v2350 = vld [vmem:[#allocation8 + $0x890] sm:$0xff]
    %v2351 = vld [vmem:[#allocation8 + $0x898] sm:$0xff]
    %v2352 = vld [vmem:[#allocation8 + $0x8a0] sm:$0xff]
    %v2353 = vld [vmem:[#allocation8 + $0x8a8] sm:$0xff]
    %v2354 = vld [vmem:[#allocation8 + $0x8b0] sm:$0xff]
    %v2355 = vld [vmem:[#allocation8 + $0x8b8] sm:$0xff]
    %v2356 = vld [vmem:[#allocation8 + $0x8c0] sm:$0xff]
    %v2357 = vld [vmem:[#allocation8 + $0x8c8] sm:$0xff]
    %v2358 = vld [vmem:[#allocation8 + $0x8d0] sm:$0xff]
    %v2359 = vld [vmem:[#allocation8 + $0x8d8] sm:$0xff]
    %v2360 = vld [vmem:[#allocation8 + $0x8e0] sm:$0xff]
    %v2361 = vld [vmem:[#allocation8 + $0x8e8] sm:$0xff]
    %v2362 = vld [vmem:[#allocation8 + $0x8f0] sm:$0xff]
    %v2363 = vld [vmem:[#allocation8 + $0x8f8] sm:$0xff]
    %v2364 = vld [vmem:[#allocation8 + $0x900] sm:$0xff]
    %v2365 = vld [vmem:[#allocation8 + $0x908] sm:$0xff]
    %v2366 = vld [vmem:[#allocation8 + $0x910] sm:$0xff]
    %v2367 = vld [vmem:[#allocation8 + $0x918] sm:$0xff]
    %v2368 = vld [vmem:[#allocation8 + $0x920] sm:$0xff]
    %v2369 = vld [vmem:[#allocation8 + $0x928] sm:$0xff]
    %v2370 = vld [vmem:[#allocation8 + $0x930] sm:$0xff]
    %v2371 = vld [vmem:[#allocation8 + $0x938] sm:$0xff]
    %v2372 = vld [vmem:[#allocation8 + $0x940] sm:$0xff]
    %v2373 = vld [vmem:[#allocation8 + $0x948] sm:$0xff]
    %v2374 = vld [vmem:[#allocation8 + $0x950] sm:$0xff]
    %v2375 = vld [vmem:[#allocation8 + $0x958] sm:$0xff]
    %v2376 = vld [vmem:[#allocation8 + $0x960] sm:$0xff]
    %v2377 = vld [vmem:[#allocation8 + $0x968] sm:$0xff]
    %v2378 = vld [vmem:[#allocation8 + $0x970] sm:$0xff]
    %v2379 = vld [vmem:[#allocation8 + $0x978] sm:$0xff]
    %v2380 = vld [vmem:[#allocation8 + $0x980] sm:$0xff]
    %v2381 = vld [vmem:[#allocation8 + $0x988] sm:$0xff]
    %v2382 = vld [vmem:[#allocation8 + $0x990] sm:$0xff]
    %v2383 = vld [vmem:[#allocation8 + $0x998] sm:$0xff]
    %v2384 = vld [vmem:[#allocation8 + $0x9a0] sm:$0xff]
    %v2385 = vld [vmem:[#allocation8 + $0x9a8] sm:$0xff]
    %v2386 = vld [vmem:[#allocation8 + $0x9b0] sm:$0xff]
    %v2387 = vld [vmem:[#allocation8 + $0x9b8] sm:$0xff]
    %v2388 = vld [vmem:[#allocation8 + $0x9c0] sm:$0xff]
    %v2389 = vld [vmem:[#allocation8 + $0x9c8] sm:$0xff]
    %v2390 = vld [vmem:[#allocation8 + $0x9d0] sm:$0xff]
    %v2391 = vld [vmem:[#allocation8 + $0x9d8] sm:$0xff]
    %v2392 = vld [vmem:[#allocation8 + $0x9e0] sm:$0xff]
    %v2393 = vld [vmem:[#allocation8 + $0x9e8] sm:$0xff]
    %v2394 = vld [vmem:[#allocation8 + $0x9f0] sm:$0xff]
    %v2395 = vld [vmem:[#allocation8 + $0x9f8] sm:$0xff]
    %v2396 = vld [vmem:[#allocation8 + $0xa00] sm:$0xff]
    %v2397 = vld [vmem:[#allocation8 + $0xa08] sm:$0xff]
    %v2398 = vld [vmem:[#allocation8 + $0xa10] sm:$0xff]
    %v2399 = vld [vmem:[#allocation8 + $0xa18] sm:$0xff]
    %v2400 = vld [vmem:[#allocation8 + $0xa20] sm:$0xff]
    %v2401 = vld [vmem:[#allocation8 + $0xa28] sm:$0xff]
    %v2402 = vld [vmem:[#allocation8 + $0xa30] sm:$0xff]
    %v2403 = vld [vmem:[#allocation8 + $0xa38] sm:$0xff]
    %v2404 = vld [vmem:[#allocation8 + $0xa40] sm:$0xff]
    %v2405 = vld [vmem:[#allocation8 + $0xa48] sm:$0xff]
    %v2406 = vld [vmem:[#allocation8 + $0xa50] sm:$0xff]
    %v2407 = vld [vmem:[#allocation8 + $0xa58] sm:$0xff]
    %v2408 = vld [vmem:[#allocation8 + $0xa60] sm:$0xff]
    %v2409 = vld [vmem:[#allocation8 + $0xa68] sm:$0xff]
    %v2410 = vld [vmem:[#allocation8 + $0xa70] sm:$0xff]
    %v2411 = vld [vmem:[#allocation8 + $0xa78] sm:$0xff]
    %v2412 = vld [vmem:[#allocation8 + $0xa80] sm:$0xff]
    %v2413 = vld [vmem:[#allocation8 + $0xa88] sm:$0xff]
    %v2414 = vld [vmem:[#allocation8 + $0xa90] sm:$0xff]
    %v2415 = vld [vmem:[#allocation8 + $0xa98] sm:$0xff]
    %v2416 = vld [vmem:[#allocation8 + $0xaa0] sm:$0xff]
    %v2417 = vld [vmem:[#allocation8 + $0xaa8] sm:$0xff]
    %v2418 = vld [vmem:[#allocation8 + $0xab0] sm:$0xff]
    %v2419 = vld [vmem:[#allocation8 + $0xab8] sm:$0xff]
    %v2420 = vld [vmem:[#allocation8 + $0xac0] sm:$0xff]
    %v2421 = vld [vmem:[#allocation8 + $0xac8] sm:$0xff]
    %v2422 = vld [vmem:[#allocation8 + $0xad0] sm:$0xff]
    %v2423 = vld [vmem:[#allocation8 + $0xad8] sm:$0xff]
    %v2424 = vld [vmem:[#allocation8 + $0xae0] sm:$0xff]
    %v2425 = vld [vmem:[#allocation8 + $0xae8] sm:$0xff]
    %v2426 = vld [vmem:[#allocation8 + $0xaf0] sm:$0xff]
    %v2427 = vld [vmem:[#allocation8 + $0xaf8] sm:$0xff]
    %v2428 = vld [vmem:[#allocation8 + $0xb00] sm:$0xff]
    %v2429 = vld [vmem:[#allocation8 + $0xb08] sm:$0xff]
    %v2430 = vld [vmem:[#allocation8 + $0xb10] sm:$0xff]
    %v2431 = vld [vmem:[#allocation8 + $0xb18] sm:$0xff]
    %v2432 = vld [vmem:[#allocation8 + $0xb20] sm:$0xff]
    %v2433 = vld [vmem:[#allocation8 + $0xb28] sm:$0xff]
    %v2434 = vld [vmem:[#allocation8 + $0xb30] sm:$0xff]
    %v2435 = vld [vmem:[#allocation8 + $0xb38] sm:$0xff]
    %v2436 = vld [vmem:[#allocation8 + $0xb40] sm:$0xff]
    %v2437 = vld [vmem:[#allocation8 + $0xb48] sm:$0xff]
    %v2438 = vld [vmem:[#allocation8 + $0xb50] sm:$0xff]
    %v2439 = vld [vmem:[#allocation8 + $0xb58] sm:$0xff]
    %v2440 = vld [vmem:[#allocation8 + $0xb60] sm:$0xff]
    %v2441 = vld [vmem:[#allocation8 + $0xb68] sm:$0xff]
    %v2442 = vld [vmem:[#allocation8 + $0xb70] sm:$0xff]
    %v2443 = vld [vmem:[#allocation8 + $0xb78] sm:$0xff]
    %v2444 = vld [vmem:[#allocation8 + $0xb80] sm:$0xff]
    %v2445 = vld [vmem:[#allocation8 + $0xb88] sm:$0xff]
    %v2446 = vld [vmem:[#allocation8 + $0xb90] sm:$0xff]
    %v2447 = vld [vmem:[#allocation8 + $0xb98] sm:$0xff]
    %v2448 = vld [vmem:[#allocation8 + $0xba0] sm:$0xff]
    %v2449 = vld [vmem:[#allocation8 + $0xba8] sm:$0xff]
    %v2450 = vld [vmem:[#allocation8 + $0xbb0] sm:$0xff]
    %v2451 = vld [vmem:[#allocation8 + $0xbb8] sm:$0xff]
    %v2452 = vld [vmem:[#allocation8 + $0xbc0] sm:$0xff]
    %v2453 = vld [vmem:[#allocation8 + $0xbc8] sm:$0xff]
    %v2454 = vld [vmem:[#allocation8 + $0xbd0] sm:$0xff]
    %v2455 = vld [vmem:[#allocation8 + $0xbd8] sm:$0xff]
    %v2456 = vld [vmem:[#allocation8 + $0xbe0] sm:$0xff]
    %v2457 = vld [vmem:[#allocation8 + $0xbe8] sm:$0xff]
    %v2458 = vld [vmem:[#allocation8 + $0xbf0] sm:$0xff]
    %v2459 = vld [vmem:[#allocation8 + $0xbf8] sm:$0xff]
    %v2460 = vld [vmem:[#allocation8 + $0xc00] sm:$0xff]
    %v2461 = vld [vmem:[#allocation8 + $0xc08] sm:$0xff]
    %v2462 = vld [vmem:[#allocation8 + $0xc10] sm:$0xff]
    %v2463 = vld [vmem:[#allocation8 + $0xc18] sm:$0xff]
    %v2464 = vld [vmem:[#allocation8 + $0xc20] sm:$0xff]
    %v2465 = vld [vmem:[#allocation8 + $0xc28] sm:$0xff]
    %v2466 = vld [vmem:[#allocation8 + $0xc30] sm:$0xff]
    %v2467 = vld [vmem:[#allocation8 + $0xc38] sm:$0xff]
    %v2468 = vld [vmem:[#allocation8 + $0xc40] sm:$0xff]
    %v2469 = vld [vmem:[#allocation8 + $0xc48] sm:$0xff]
    %v2470 = vld [vmem:[#allocation8 + $0xc50] sm:$0xff]
    %v2471 = vld [vmem:[#allocation8 + $0xc58] sm:$0xff]
    %v2472 = vld [vmem:[#allocation8 + $0xc60] sm:$0xff]
    %v2473 = vld [vmem:[#allocation8 + $0xc68] sm:$0xff]
    %v2474 = vld [vmem:[#allocation8 + $0xc70] sm:$0xff]
    %v2475 = vld [vmem:[#allocation8 + $0xc78] sm:$0xff]
    %v2476 = vld [vmem:[#allocation8 + $0xc80] sm:$0xff]
    %v2477 = vld [vmem:[#allocation8 + $0xc88] sm:$0xff]
    %v2478 = vld [vmem:[#allocation8 + $0xc90] sm:$0xff]
    %v2479 = vld [vmem:[#allocation8 + $0xc98] sm:$0xff]
    %v2480 = vld [vmem:[#allocation8 + $0xca0] sm:$0xff]
    %v2481 = vld [vmem:[#allocation8 + $0xca8] sm:$0xff]
    %v2482 = vld [vmem:[#allocation8 + $0xcb0] sm:$0xff]
    %v2483 = vld [vmem:[#allocation8 + $0xcb8] sm:$0xff]
    %v2484 = vld [vmem:[#allocation8 + $0xcc0] sm:$0xff]
    %v2485 = vld [vmem:[#allocation8 + $0xcc8] sm:$0xff]
    %v2486 = vld [vmem:[#allocation8 + $0xcd0] sm:$0xff]
    %v2487 = vld [vmem:[#allocation8 + $0xcd8] sm:$0xff]
    %v2488 = vld [vmem:[#allocation8 + $0xce0] sm:$0xff]
    %v2489 = vld [vmem:[#allocation8 + $0xce8] sm:$0xff]
    %v2490 = vld [vmem:[#allocation8 + $0xcf0] sm:$0xff]
    %v2491 = vld [vmem:[#allocation8 + $0xcf8] sm:$0xff]
    %v2492 = vld [vmem:[#allocation8 + $0xd00] sm:$0xff]
    %v2493 = vld [vmem:[#allocation8 + $0xd08] sm:$0xff]
    %v2494 = vld [vmem:[#allocation8 + $0xd10] sm:$0xff]
    %v2495 = vld [vmem:[#allocation8 + $0xd18] sm:$0xff]
    %v2496 = vld [vmem:[#allocation8 + $0xd20] sm:$0xff]
    %v2497 = vld [vmem:[#allocation8 + $0xd28] sm:$0xff]
    %v2498 = vld [vmem:[#allocation8 + $0xd30] sm:$0xff]
    %v2499 = vld [vmem:[#allocation8 + $0xd38] sm:$0xff]
    %v2500 = vld [vmem:[#allocation8 + $0xd40] sm:$0xff]
    %v2501 = vld [vmem:[#allocation8 + $0xd48] sm:$0xff]
    %v2502 = vld [vmem:[#allocation8 + $0xd50] sm:$0xff]
    %v2503 = vld [vmem:[#allocation8 + $0xd58] sm:$0xff]
    %v2504 = vld [vmem:[#allocation8 + $0xd60] sm:$0xff]
    %v2505 = vld [vmem:[#allocation8 + $0xd68] sm:$0xff]
    %v2506 = vld [vmem:[#allocation8 + $0xd70] sm:$0xff]
    %v2507 = vld [vmem:[#allocation8 + $0xd78] sm:$0xff]
    %v2508 = vld [vmem:[#allocation8 + $0xd80] sm:$0xff]
    %v2509 = vld [vmem:[#allocation8 + $0xd88] sm:$0xff]
    %v2510 = vld [vmem:[#allocation8 + $0xd90] sm:$0xff]
    %v2511 = vld [vmem:[#allocation8 + $0xd98] sm:$0xff]
    %v2512 = vld [vmem:[#allocation8 + $0xda0] sm:$0xff]
    %v2513 = vld [vmem:[#allocation8 + $0xda8] sm:$0xff]
    %v2514 = vld [vmem:[#allocation8 + $0xdb0] sm:$0xff]
    %v2515 = vld [vmem:[#allocation8 + $0xdb8] sm:$0xff]
    %v2516 = vld [vmem:[#allocation8 + $0xdc0] sm:$0xff]
    %v2517 = vld [vmem:[#allocation8 + $0xdc8] sm:$0xff]
    %v2518 = vld [vmem:[#allocation8 + $0xdd0] sm:$0xff]
    %v2519 = vld [vmem:[#allocation8 + $0xdd8] sm:$0xff]
    %v2520 = vld [vmem:[#allocation8 + $0xde0] sm:$0xff]
    %v2521 = vld [vmem:[#allocation8 + $0xde8] sm:$0xff]
    %v2522 = vld [vmem:[#allocation8 + $0xdf0] sm:$0xff]
    %v2523 = vld [vmem:[#allocation8 + $0xdf8] sm:$0xff]
    %v2524 = vld [vmem:[#allocation8 + $0xe00] sm:$0xff]
    %v2525 = vld [vmem:[#allocation8 + $0xe08] sm:$0xff]
    %v2526 = vld [vmem:[#allocation8 + $0xe10] sm:$0xff]
    %v2527 = vld [vmem:[#allocation8 + $0xe18] sm:$0xff]
    %v2528 = vld [vmem:[#allocation8 + $0xe20] sm:$0xff]
    %v2529 = vld [vmem:[#allocation8 + $0xe28] sm:$0xff]
    %v2530 = vld [vmem:[#allocation8 + $0xe30] sm:$0xff]
    %v2531 = vld [vmem:[#allocation8 + $0xe38] sm:$0xff]
    %v2532 = vld [vmem:[#allocation8 + $0xe40] sm:$0xff]
    %v2533 = vld [vmem:[#allocation8 + $0xe48] sm:$0xff]
    %v2534 = vld [vmem:[#allocation8 + $0xe50] sm:$0xff]
    %v2535 = vld [vmem:[#allocation8 + $0xe58] sm:$0xff]
    %v2536 = vld [vmem:[#allocation8 + $0xe60] sm:$0xff]
    %v2537 = vld [vmem:[#allocation8 + $0xe68] sm:$0xff]
    %v2538 = vld [vmem:[#allocation8 + $0xe70] sm:$0xff]
    %v2539 = vld [vmem:[#allocation8 + $0xe78] sm:$0xff]
    %v2540 = vld [vmem:[#allocation8 + $0xe80] sm:$0xff]
    %v2541 = vld [vmem:[#allocation8 + $0xe88] sm:$0xff]
    %v2542 = vld [vmem:[#allocation8 + $0xe90] sm:$0xff]
    %v2543 = vld [vmem:[#allocation8 + $0xe98] sm:$0xff]
    %v2544 = vld [vmem:[#allocation8 + $0xea0] sm:$0xff]
    %v2545 = vld [vmem:[#allocation8 + $0xea8] sm:$0xff]
    %v2546 = vld [vmem:[#allocation8 + $0xeb0] sm:$0xff]
    %v2547 = vld [vmem:[#allocation8 + $0xeb8] sm:$0xff]
    %v2548 = vld [vmem:[#allocation8 + $0xec0] sm:$0xff]
    %v2549 = vld [vmem:[#allocation8 + $0xec8] sm:$0xff]
    %v2550 = vld [vmem:[#allocation8 + $0xed0] sm:$0xff]
    %v2551 = vld [vmem:[#allocation8 + $0xed8] sm:$0xff]
    %v2552 = vld [vmem:[#allocation8 + $0xee0] sm:$0xff]
    %v2553 = vld [vmem:[#allocation8 + $0xee8] sm:$0xff]
    %v2554 = vld [vmem:[#allocation8 + $0xef0] sm:$0xff]
    %v2555 = vld [vmem:[#allocation8 + $0xef8] sm:$0xff]
    %v2556 = vld [vmem:[#allocation8 + $0xf00] sm:$0xff]
    %v2557 = vld [vmem:[#allocation8 + $0xf08] sm:$0xff]
    %v2558 = vld [vmem:[#allocation8 + $0xf10] sm:$0xff]
    %v2559 = vld [vmem:[#allocation8 + $0xf18] sm:$0xff]
    %v2560 = vld [vmem:[#allocation8 + $0xf20] sm:$0xff]
    %v2561 = vld [vmem:[#allocation8 + $0xf28] sm:$0xff]
    %v2562 = vld [vmem:[#allocation8 + $0xf30] sm:$0xff]
    %v2563 = vld [vmem:[#allocation8 + $0xf38] sm:$0xff]
    %v2564 = vld [vmem:[#allocation8 + $0xf40] sm:$0xff]
    %v2565 = vld [vmem:[#allocation8 + $0xf48] sm:$0xff]
    %v2566 = vld [vmem:[#allocation8 + $0xf50] sm:$0xff]
    %v2567 = vld [vmem:[#allocation8 + $0xf58] sm:$0xff]
    %v2568 = vld [vmem:[#allocation8 + $0xf60] sm:$0xff]
    %v2569 = vld [vmem:[#allocation8 + $0xf68] sm:$0xff]
    %v2570 = vld [vmem:[#allocation8 + $0xf70] sm:$0xff]
    %v2571 = vld [vmem:[#allocation8 + $0xf78] sm:$0xff]
    %v2572 = vld [vmem:[#allocation8 + $0xf80] sm:$0xff]
    %v2573 = vld [vmem:[#allocation8 + $0xf88] sm:$0xff]
    %v2574 = vld [vmem:[#allocation8 + $0xf90] sm:$0xff]
    %v2575 = vld [vmem:[#allocation8 + $0xf98] sm:$0xff]
    %v2576 = vld [vmem:[#allocation8 + $0xfa0] sm:$0xff]
    %v2577 = vld [vmem:[#allocation8 + $0xfa8] sm:$0xff]
    %v2578 = vld [vmem:[#allocation8 + $0xfb0] sm:$0xff]
    %v2579 = vld [vmem:[#allocation8 + $0xfb8] sm:$0xff]
    %v2580 = vld [vmem:[#allocation8 + $0xfc0] sm:$0xff]
    %v2581 = vld [vmem:[#allocation8 + $0xfc8] sm:$0xff]
    %v2582 = vld [vmem:[#allocation8 + $0xfd0] sm:$0xff]
    %v2583 = vld [vmem:[#allocation8 + $0xfd8] sm:$0xff]
    %v2584 = vld [vmem:[#allocation8 + $0xfe0] sm:$0xff]
    %v2585 = vld [vmem:[#allocation8 + $0xfe8] sm:$0xff]
    %v2586 = vld [vmem:[#allocation8 + $0xff0] sm:$0xff]
    %v2587 = vld [vmem:[#allocation8 + $0xff8] sm:$0xff]
    %v2588 = vld [vmem:[#allocation8 + $0x1000] sm:$0xff]
    %v2589 = vld [vmem:[#allocation8 + $0x1008] sm:$0xff]
    %v2590 = vld [vmem:[#allocation8 + $0x1010] sm:$0xff]
    %v2591 = vld [vmem:[#allocation8 + $0x1018] sm:$0xff]
    %v2592 = vld [vmem:[#allocation8 + $0x1020] sm:$0xff]
    %v2593 = vld [vmem:[#allocation8 + $0x1028] sm:$0xff]
    %v2594 = vld [vmem:[#allocation8 + $0x1030] sm:$0xff]
    %v2595 = vld [vmem:[#allocation8 + $0x1038] sm:$0xff]
    %v2596 = vld [vmem:[#allocation8 + $0x1040] sm:$0xff]
    %v2597 = vld [vmem:[#allocation8 + $0x1048] sm:$0xff]
    %v2598 = vld [vmem:[#allocation8 + $0x1050] sm:$0xff]
    %v2599 = vld [vmem:[#allocation8 + $0x1058] sm:$0xff]
    %v2600 = vld [vmem:[#allocation8 + $0x1060] sm:$0xff]
    %v2601 = vld [vmem:[#allocation8 + $0x1068] sm:$0xff]
    %v2602 = vld [vmem:[#allocation8 + $0x1070] sm:$0xff]
    %v2603 = vld [vmem:[#allocation8 + $0x1078] sm:$0xff]
    %v2604 = vld [vmem:[#allocation8 + $0x1080] sm:$0xff]
    %v2605 = vld [vmem:[#allocation8 + $0x1088] sm:$0xff]
    %v2606 = vld [vmem:[#allocation8 + $0x1090] sm:$0xff]
    %v2607 = vld [vmem:[#allocation8 + $0x1098] sm:$0xff]
    %v2608 = vld [vmem:[#allocation8 + $0x10a0] sm:$0xff]
    %v2609 = vld [vmem:[#allocation8 + $0x10a8] sm:$0xff]
    %v2610 = vld [vmem:[#allocation8 + $0x10b0] sm:$0xff]
    %v2611 = vld [vmem:[#allocation8 + $0x10b8] sm:$0xff]
    %v2612 = vld [vmem:[#allocation8 + $0x10c0] sm:$0xff]
    %v2613 = vld [vmem:[#allocation8 + $0x10c8] sm:$0xff]
    %v2614 = vld [vmem:[#allocation8 + $0x10d0] sm:$0xff]
    %v2615 = vld [vmem:[#allocation8 + $0x10d8] sm:$0xff]
    %v2616 = vld [vmem:[#allocation8 + $0x10e0] sm:$0xff]
    %v2617 = vld [vmem:[#allocation8 + $0x10e8] sm:$0xff]
    %v2618 = vld [vmem:[#allocation8 + $0x10f0] sm:$0xff]
    %v2619 = vld [vmem:[#allocation8 + $0x10f8] sm:$0xff]
    %v2620 = vld [vmem:[#allocation8 + $0x1100] sm:$0xff]
    %v2621 = vld [vmem:[#allocation8 + $0x1108] sm:$0xff]
    %v2622 = vld [vmem:[#allocation8 + $0x1110] sm:$0xff]
    %v2623 = vld [vmem:[#allocation8 + $0x1118] sm:$0xff]
    %v2624 = vld [vmem:[#allocation8 + $0x1120] sm:$0xff]
    %v2625 = vld [vmem:[#allocation8 + $0x1128] sm:$0xff]
    %v2626 = vld [vmem:[#allocation8 + $0x1130] sm:$0xff]
    %v2627 = vld [vmem:[#allocation8 + $0x1138] sm:$0xff]
    %v2628 = vld [vmem:[#allocation8 + $0x1140] sm:$0xff]
    %v2629 = vld [vmem:[#allocation8 + $0x1148] sm:$0xff]
    %v2630 = vld [vmem:[#allocation8 + $0x1150] sm:$0xff]
    %v2631 = vld [vmem:[#allocation8 + $0x1158] sm:$0xff]
    %v2632 = vld [vmem:[#allocation8 + $0x1160] sm:$0xff]
    %v2633 = vld [vmem:[#allocation8 + $0x1168] sm:$0xff]
    %v2634 = vld [vmem:[#allocation8 + $0x1170] sm:$0xff]
    %v2635 = vld [vmem:[#allocation8 + $0x1178] sm:$0xff]
    %v2636 = vld [vmem:[#allocation8 + $0x1180] sm:$0xff]
    %v2637 = vld [vmem:[#allocation8 + $0x1188] sm:$0xff]
    %v2638 = vld [vmem:[#allocation8 + $0x1190] sm:$0xff]
    %v2639 = vld [vmem:[#allocation8 + $0x1198] sm:$0xff]
    %v2640 = vld [vmem:[#allocation8 + $0x11a0] sm:$0xff]
    %v2641 = vld [vmem:[#allocation8 + $0x11a8] sm:$0xff]
    %v2642 = vld [vmem:[#allocation8 + $0x11b0] sm:$0xff]
    %v2643 = vld [vmem:[#allocation8 + $0x11b8] sm:$0xff]
    %v2644 = vld [vmem:[#allocation8 + $0x11c0] sm:$0xff]
    %v2645 = vld [vmem:[#allocation8 + $0x11c8] sm:$0xff]
    %v2646 = vld [vmem:[#allocation8 + $0x11d0] sm:$0xff]
    %v2647 = vld [vmem:[#allocation8 + $0x11d8] sm:$0xff]
    %v2648 = vld [vmem:[#allocation8 + $0x11e0] sm:$0xff]
    %v2649 = vld [vmem:[#allocation8 + $0x11e8] sm:$0xff]
    %v2650 = vld [vmem:[#allocation8 + $0x11f0] sm:$0xff]
    %v2651 = vld [vmem:[#allocation8 + $0x11f8] sm:$0xff]
    %v2652 = vld [vmem:[#allocation8 + $0x1200] sm:$0xff]
    %v2653 = vld [vmem:[#allocation8 + $0x1208] sm:$0xff]
    %v2654 = vld [vmem:[#allocation8 + $0x1210] sm:$0xff]
    %v2655 = vld [vmem:[#allocation8 + $0x1218] sm:$0xff]
    %v2656 = vld [vmem:[#allocation8 + $0x1220] sm:$0xff]
    %v2657 = vld [vmem:[#allocation8 + $0x1228] sm:$0xff]
    %v2658 = vld [vmem:[#allocation8 + $0x1230] sm:$0xff]
    %v2659 = vld [vmem:[#allocation8 + $0x1238] sm:$0xff]
    %v2660 = vld [vmem:[#allocation8 + $0x1240] sm:$0xff]
    %v2661 = vld [vmem:[#allocation8 + $0x1248] sm:$0xff]
    %v2662 = vld [vmem:[#allocation8 + $0x1250] sm:$0xff]
    %v2663 = vld [vmem:[#allocation8 + $0x1258] sm:$0xff]
    %v2664 = vld [vmem:[#allocation8 + $0x1260] sm:$0xff]
    %v2665 = vld [vmem:[#allocation8 + $0x1268] sm:$0xff]
    %v2666 = vld [vmem:[#allocation8 + $0x1270] sm:$0xff]
    %v2667 = vld [vmem:[#allocation8 + $0x1278] sm:$0xff]
    %v2668 = vld [vmem:[#allocation8 + $0x1280] sm:$0xff]
    %v2669 = vld [vmem:[#allocation8 + $0x1288] sm:$0xff]
    %v2670 = vld [vmem:[#allocation8 + $0x1290] sm:$0xff]
    %v2671 = vld [vmem:[#allocation8 + $0x1298] sm:$0xff]
    %v2672 = vld [vmem:[#allocation8 + $0x12a0] sm:$0xff]
    %v2673 = vld [vmem:[#allocation8 + $0x12a8] sm:$0xff]
    %v2674 = vld [vmem:[#allocation8 + $0x12b0] sm:$0xff]
    %v2675 = vld [vmem:[#allocation8 + $0x12b8] sm:$0xff]
    %v2676 = vld [vmem:[#allocation8 + $0x12c0] sm:$0xff]
    %v2677 = vld [vmem:[#allocation8 + $0x12c8] sm:$0xff]
    %v2678 = vld [vmem:[#allocation8 + $0x12d0] sm:$0xff]
    %v2679 = vld [vmem:[#allocation8 + $0x12d8] sm:$0xff]
    %v2680 = vld [vmem:[#allocation8 + $0x12e0] sm:$0xff]
    %v2681 = vld [vmem:[#allocation8 + $0x12e8] sm:$0xff]
    %v2682 = vld [vmem:[#allocation8 + $0x12f0] sm:$0xff]
    %v2683 = vld [vmem:[#allocation8 + $0x12f8] sm:$0xff]
    %v2684 = vld [vmem:[#allocation8 + $0x1300] sm:$0xff]
    %v2685 = vld [vmem:[#allocation8 + $0x1308] sm:$0xff]
    %v2686 = vld [vmem:[#allocation8 + $0x1310] sm:$0xff]
    %v2687 = vld [vmem:[#allocation8 + $0x1318] sm:$0xff]
    %v2688 = vld [vmem:[#allocation8 + $0x1320] sm:$0xff]
    %v2689 = vld [vmem:[#allocation8 + $0x1328] sm:$0xff]
    %v2690 = vld [vmem:[#allocation8 + $0x1330] sm:$0xff]
    %v2691 = vld [vmem:[#allocation8 + $0x1338] sm:$0xff]
    %v2692 = vld [vmem:[#allocation8 + $0x1340] sm:$0xff]
    %v2693 = vld [vmem:[#allocation8 + $0x1348] sm:$0xff]
    %v2694 = vld [vmem:[#allocation8 + $0x1350] sm:$0xff]
    %v2695 = vld [vmem:[#allocation8 + $0x1358] sm:$0xff]
    %v2696 = vld [vmem:[#allocation8 + $0x1360] sm:$0xff]
    %v2697 = vld [vmem:[#allocation8 + $0x1368] sm:$0xff]
    %v2698 = vld [vmem:[#allocation8 + $0x1370] sm:$0xff]
    %v2699 = vld [vmem:[#allocation8 + $0x1378] sm:$0xff]
    %v2700 = vld [vmem:[#allocation8 + $0x1380] sm:$0xff]
    %v2701 = vld [vmem:[#allocation8 + $0x1388] sm:$0xff]
    %v2702 = vld [vmem:[#allocation8 + $0x1390] sm:$0xff]
    %v2703 = vld [vmem:[#allocation8 + $0x1398] sm:$0xff]
    %v2704 = vld [vmem:[#allocation8 + $0x13a0] sm:$0xff]
    %v2705 = vld [vmem:[#allocation8 + $0x13a8] sm:$0xff]
    %v2706 = vld [vmem:[#allocation8 + $0x13b0] sm:$0xff]
    %v2707 = vld [vmem:[#allocation8 + $0x13b8] sm:$0xff]
    %v2708 = vld [vmem:[#allocation8 + $0x13c0] sm:$0xff]
    %v2709 = vld [vmem:[#allocation8 + $0x13c8] sm:$0xff]
    %v2710 = vld [vmem:[#allocation8 + $0x13d0] sm:$0xff]
    %v2711 = vld [vmem:[#allocation8 + $0x13d8] sm:$0xff]
    %v2712 = vld [vmem:[#allocation8 + $0x13e0] sm:$0xff]
    %v2713 = vld [vmem:[#allocation8 + $0x13e8] sm:$0xff]
    %v2714 = vld [vmem:[#allocation8 + $0x13f0] sm:$0xff]
    %v2715 = vld [vmem:[#allocation8 + $0x13f8] sm:$0xff]
    %v2716 = vld [vmem:[#allocation8 + $0x1400] sm:$0xff]
    %v2717 = vld [vmem:[#allocation8 + $0x1408] sm:$0xff]
    %v2718 = vld [vmem:[#allocation8 + $0x1410] sm:$0xff]
    %v2719 = vld [vmem:[#allocation8 + $0x1418] sm:$0xff]
    %v2720 = vld [vmem:[#allocation8 + $0x1420] sm:$0xff]
    %v2721 = vld [vmem:[#allocation8 + $0x1428] sm:$0xff]
    %v2722 = vld [vmem:[#allocation8 + $0x1430] sm:$0xff]
    %v2723 = vld [vmem:[#allocation8 + $0x1438] sm:$0xff]
    %v2724 = vld [vmem:[#allocation8 + $0x1440] sm:$0xff]
    %v2725 = vld [vmem:[#allocation8 + $0x1448] sm:$0xff]
    %v2726 = vld [vmem:[#allocation8 + $0x1450] sm:$0xff]
    %v2727 = vld [vmem:[#allocation8 + $0x1458] sm:$0xff]
    %v2728 = vld [vmem:[#allocation8 + $0x1460] sm:$0xff]
    %v2729 = vld [vmem:[#allocation8 + $0x1468] sm:$0xff]
    %v2730 = vld [vmem:[#allocation8 + $0x1470] sm:$0xff]
    %v2731 = vld [vmem:[#allocation8 + $0x1478] sm:$0xff]
    %v2732 = vld [vmem:[#allocation8 + $0x1480] sm:$0xff]
    %v2733 = vld [vmem:[#allocation8 + $0x1488] sm:$0xff]
    %v2734 = vld [vmem:[#allocation8 + $0x1490] sm:$0xff]
    %v2735 = vld [vmem:[#allocation8 + $0x1498] sm:$0xff]
    %v2736 = vld [vmem:[#allocation8 + $0x14a0] sm:$0xff]
    %v2737 = vld [vmem:[#allocation8 + $0x14a8] sm:$0xff]
    %v2738 = vld [vmem:[#allocation8 + $0x14b0] sm:$0xff]
    %v2739 = vld [vmem:[#allocation8 + $0x14b8] sm:$0xff]
    %v2740 = vld [vmem:[#allocation8 + $0x14c0] sm:$0xff]
    %v2741 = vld [vmem:[#allocation8 + $0x14c8] sm:$0xff]
    %v2742 = vld [vmem:[#allocation8 + $0x14d0] sm:$0xff]
    %v2743 = vld [vmem:[#allocation8 + $0x14d8] sm:$0xff]
    %v2744 = vld [vmem:[#allocation8 + $0x14e0] sm:$0xff]
    %v2745 = vld [vmem:[#allocation8 + $0x14e8] sm:$0xff]
    %v2746 = vld [vmem:[#allocation8 + $0x14f0] sm:$0xff]
    %v2747 = vld [vmem:[#allocation8 + $0x14f8] sm:$0xff]
    %v2748 = vld [vmem:[#allocation8 + $0x1500] sm:$0xff]
    %v2749 = vld [vmem:[#allocation8 + $0x1508] sm:$0xff]
    %v2750 = vld [vmem:[#allocation8 + $0x1510] sm:$0xff]
    %v2751 = vld [vmem:[#allocation8 + $0x1518] sm:$0xff]
    %v2752 = vld [vmem:[#allocation8 + $0x1520] sm:$0xff]
    %v2753 = vld [vmem:[#allocation8 + $0x1528] sm:$0xff]
    %v2754 = vld [vmem:[#allocation8 + $0x1530] sm:$0xff]
    %v2755 = vld [vmem:[#allocation8 + $0x1538] sm:$0xff]
    %v2756 = vld [vmem:[#allocation8 + $0x1540] sm:$0xff]
    %v2757 = vld [vmem:[#allocation8 + $0x1548] sm:$0xff]
    %v2758 = vld [vmem:[#allocation8 + $0x1550] sm:$0xff]
    %v2759 = vld [vmem:[#allocation8 + $0x1558] sm:$0xff]
    %v2760 = vld [vmem:[#allocation8 + $0x1560] sm:$0xff]
    %v2761 = vld [vmem:[#allocation8 + $0x1568] sm:$0xff]
    %v2762 = vld [vmem:[#allocation8 + $0x1570] sm:$0xff]
    %v2763 = vld [vmem:[#allocation8 + $0x1578] sm:$0xff]
    %v2764 = vld [vmem:[#allocation8 + $0x1580] sm:$0xff]
    %v2765 = vld [vmem:[#allocation8 + $0x1588] sm:$0xff]
    %v2766 = vld [vmem:[#allocation8 + $0x1590] sm:$0xff]
    %v2767 = vld [vmem:[#allocation8 + $0x1598] sm:$0xff]
    %v2768 = vld [vmem:[#allocation8 + $0x15a0] sm:$0xff]
    %v2769 = vld [vmem:[#allocation8 + $0x15a8] sm:$0xff]
    %v2770 = vld [vmem:[#allocation8 + $0x15b0] sm:$0xff]
    %v2771 = vld [vmem:[#allocation8 + $0x15b8] sm:$0xff]
    %v2772 = vld [vmem:[#allocation8 + $0x15c0] sm:$0xff]
    %v2773 = vld [vmem:[#allocation8 + $0x15c8] sm:$0xff]
    %v2774 = vld [vmem:[#allocation8 + $0x15d0] sm:$0xff]
    %v2775 = vld [vmem:[#allocation8 + $0x15d8] sm:$0xff]
    %v2776 = vld [vmem:[#allocation8 + $0x15e0] sm:$0xff]
    %v2777 = vld [vmem:[#allocation8 + $0x15e8] sm:$0xff]
    %v2778 = vld [vmem:[#allocation8 + $0x15f0] sm:$0xff]
    %v2779 = vld [vmem:[#allocation8 + $0x15f8] sm:$0xff]
    %v2780 = vld [vmem:[#allocation8 + $0x1600] sm:$0xff]
    %v2781 = vld [vmem:[#allocation8 + $0x1608] sm:$0xff]
    %v2782 = vld [vmem:[#allocation8 + $0x1610] sm:$0xff]
    %v2783 = vld [vmem:[#allocation8 + $0x1618] sm:$0xff]
    %v2784 = vld [vmem:[#allocation8 + $0x1620] sm:$0xff]
    %v2785 = vld [vmem:[#allocation8 + $0x1628] sm:$0xff]
    %v2786 = vld [vmem:[#allocation8 + $0x1630] sm:$0xff]
    %v2787 = vld [vmem:[#allocation8 + $0x1638] sm:$0xff]
    %v2788 = vld [vmem:[#allocation8 + $0x1640] sm:$0xff]
    %v2789 = vld [vmem:[#allocation8 + $0x1648] sm:$0xff]
    %v2790 = vld [vmem:[#allocation8 + $0x1650] sm:$0xff]
    %v2791 = vld [vmem:[#allocation8 + $0x1658] sm:$0xff]
    %v2792 = vld [vmem:[#allocation8 + $0x1660] sm:$0xff]
    %v2793 = vld [vmem:[#allocation8 + $0x1668] sm:$0xff]
    %v2794 = vld [vmem:[#allocation8 + $0x1670] sm:$0xff]
    %v2795 = vld [vmem:[#allocation8 + $0x1678] sm:$0xff]
    %v2796 = vld [vmem:[#allocation8 + $0x1680] sm:$0xff]
    %v2797 = vld [vmem:[#allocation8 + $0x1688] sm:$0xff]
    %v2798 = vld [vmem:[#allocation8 + $0x1690] sm:$0xff]
    %v2799 = vld [vmem:[#allocation8 + $0x1698] sm:$0xff]
    %v2800 = vld [vmem:[#allocation8 + $0x16a0] sm:$0xff]
    %v2801 = vld [vmem:[#allocation8 + $0x16a8] sm:$0xff]
    %v2802 = vld [vmem:[#allocation8 + $0x16b0] sm:$0xff]
    %v2803 = vld [vmem:[#allocation8 + $0x16b8] sm:$0xff]
    %v2804 = vld [vmem:[#allocation8 + $0x16c0] sm:$0xff]
    %v2805 = vld [vmem:[#allocation8 + $0x16c8] sm:$0xff]
    %v2806 = vld [vmem:[#allocation8 + $0x16d0] sm:$0xff]
    %v2807 = vld [vmem:[#allocation8 + $0x16d8] sm:$0xff]
    %v2808 = vld [vmem:[#allocation8 + $0x16e0] sm:$0xff]
    %v2809 = vld [vmem:[#allocation8 + $0x16e8] sm:$0xff]
    %v2810 = vld [vmem:[#allocation8 + $0x16f0] sm:$0xff]
    %v2811 = vld [vmem:[#allocation8 + $0x16f8] sm:$0xff]
    %v2812 = vld [vmem:[#allocation8 + $0x1700] sm:$0xff]
    %v2813 = vld [vmem:[#allocation8 + $0x1708] sm:$0xff]
    %v2814 = vld [vmem:[#allocation8 + $0x1710] sm:$0xff]
    %v2815 = vld [vmem:[#allocation8 + $0x1718] sm:$0xff]
    %v2816 = vld [vmem:[#allocation8 + $0x1720] sm:$0xff]
    %v2817 = vld [vmem:[#allocation8 + $0x1728] sm:$0xff]
    %v2818 = vld [vmem:[#allocation8 + $0x1730] sm:$0xff]
    %v2819 = vld [vmem:[#allocation8 + $0x1738] sm:$0xff]
    %v2820 = vld [vmem:[#allocation8 + $0x1740] sm:$0xff]
    %v2821 = vld [vmem:[#allocation8 + $0x1748] sm:$0xff]
    %v2822 = vld [vmem:[#allocation8 + $0x1750] sm:$0xff]
    %v2823 = vld [vmem:[#allocation8 + $0x1758] sm:$0xff]
    %v2824 = vld [vmem:[#allocation8 + $0x1760] sm:$0xff]
    %v2825 = vld [vmem:[#allocation8 + $0x1768] sm:$0xff]
    %v2826 = vld [vmem:[#allocation8 + $0x1770] sm:$0xff]
    %v2827 = vld [vmem:[#allocation8 + $0x1778] sm:$0xff]
    %v2828 = vld [vmem:[#allocation8 + $0x1780] sm:$0xff]
    %v2829 = vld [vmem:[#allocation8 + $0x1788] sm:$0xff]
    %v2830 = vld [vmem:[#allocation8 + $0x1790] sm:$0xff]
    %v2831 = vld [vmem:[#allocation8 + $0x1798] sm:$0xff]
    %v2832 = vld [vmem:[#allocation8 + $0x17a0] sm:$0xff]
    %v2833 = vld [vmem:[#allocation8 + $0x17a8] sm:$0xff]
    %v2834 = vld [vmem:[#allocation8 + $0x17b0] sm:$0xff]
    %v2835 = vld [vmem:[#allocation8 + $0x17b8] sm:$0xff]
    %v2836 = vld [vmem:[#allocation8 + $0x17c0] sm:$0xff]
    %v2837 = vld [vmem:[#allocation8 + $0x17c8] sm:$0xff]
    %v2838 = vld [vmem:[#allocation8 + $0x17d0] sm:$0xff]
    %v2839 = vld [vmem:[#allocation8 + $0x17d8] sm:$0xff]
    %v2840 = vld [vmem:[#allocation8 + $0x17e0] sm:$0xff]
    %v2841 = vld [vmem:[#allocation8 + $0x17e8] sm:$0xff]
    %v2842 = vld [vmem:[#allocation8 + $0x17f0] sm:$0xff]
    %v2843 = vld [vmem:[#allocation8 + $0x17f8] sm:$0xff]
    %v2844 = vld [vmem:[#allocation8 + $0x1800] sm:$0xff]
    %v2845 = vld [vmem:[#allocation8 + $0x1808] sm:$0xff]
    %v2846 = vld [vmem:[#allocation8 + $0x1810] sm:$0xff]
    %v2847 = vld [vmem:[#allocation8 + $0x1818] sm:$0xff]
    %v2848 = vld [vmem:[#allocation8 + $0x1820] sm:$0xff]
    %v2849 = vld [vmem:[#allocation8 + $0x1828] sm:$0xff]
    %v2850 = vld [vmem:[#allocation8 + $0x1830] sm:$0xff]
    %v2851 = vld [vmem:[#allocation8 + $0x1838] sm:$0xff]
    %v2852 = vld [vmem:[#allocation8 + $0x1840] sm:$0xff]
    %v2853 = vld [vmem:[#allocation8 + $0x1848] sm:$0xff]
    %v2854 = vld [vmem:[#allocation8 + $0x1850] sm:$0xff]
    %v2855 = vld [vmem:[#allocation8 + $0x1858] sm:$0xff]
    %v2856 = vld [vmem:[#allocation8 + $0x1860] sm:$0xff]
    %v2857 = vld [vmem:[#allocation8 + $0x1868] sm:$0xff]
    %v2858 = vld [vmem:[#allocation8 + $0x1870] sm:$0xff]
    %v2859 = vld [vmem:[#allocation8 + $0x1878] sm:$0xff]
    %v2860 = vld [vmem:[#allocation8 + $0x1880] sm:$0xff]
    %v2861 = vld [vmem:[#allocation8 + $0x1888] sm:$0xff]
    %v2862 = vld [vmem:[#allocation8 + $0x1890] sm:$0xff]
    %v2863 = vld [vmem:[#allocation8 + $0x1898] sm:$0xff]
    %v2864 = vld [vmem:[#allocation8 + $0x18a0] sm:$0xff]
    %v2865 = vld [vmem:[#allocation8 + $0x18a8] sm:$0xff]
    %v2866 = vld [vmem:[#allocation8 + $0x18b0] sm:$0xff]
    %v2867 = vld [vmem:[#allocation8 + $0x18b8] sm:$0xff]
    %v2868 = vld [vmem:[#allocation8 + $0x18c0] sm:$0xff]
    %v2869 = vld [vmem:[#allocation8 + $0x18c8] sm:$0xff]
    %v2870 = vld [vmem:[#allocation8 + $0x18d0] sm:$0xff]
    %v2871 = vld [vmem:[#allocation8 + $0x18d8] sm:$0xff]
    %v2872 = vld [vmem:[#allocation8 + $0x18e0] sm:$0xff]
    %v2873 = vld [vmem:[#allocation8 + $0x18e8] sm:$0xff]
    %v2874 = vld [vmem:[#allocation8 + $0x18f0] sm:$0xff]
    %v2875 = vld [vmem:[#allocation8 + $0x18f8] sm:$0xff]
    %v2876 = vld [vmem:[#allocation8 + $0x1900] sm:$0xff]
    %v2877 = vld [vmem:[#allocation8 + $0x1908] sm:$0xff]
    %v2878 = vld [vmem:[#allocation8 + $0x1910] sm:$0xff]
    %v2879 = vld [vmem:[#allocation8 + $0x1918] sm:$0xff]
    %v2880 = vld [vmem:[#allocation8 + $0x1920] sm:$0xff]
    %v2881 = vld [vmem:[#allocation8 + $0x1928] sm:$0xff]
    %v2882 = vld [vmem:[#allocation8 + $0x1930] sm:$0xff]
    %v2883 = vld [vmem:[#allocation8 + $0x1938] sm:$0xff]
    %v2884 = vld [vmem:[#allocation8 + $0x1940] sm:$0xff]
    %v2885 = vld [vmem:[#allocation8 + $0x1948] sm:$0xff]
    %v2886 = vld [vmem:[#allocation8 + $0x1950] sm:$0xff]
    %v2887 = vld [vmem:[#allocation8 + $0x1958] sm:$0xff]
    %v2888 = vld [vmem:[#allocation8 + $0x1960] sm:$0xff]
    %v2889 = vld [vmem:[#allocation8 + $0x1968] sm:$0xff]
    %v2890 = vld [vmem:[#allocation8 + $0x1970] sm:$0xff]
    %v2891 = vld [vmem:[#allocation8 + $0x1978] sm:$0xff]
    %v2892 = vld [vmem:[#allocation8 + $0x1980] sm:$0xff]
    %v2893 = vld [vmem:[#allocation8 + $0x1988] sm:$0xff]
    %v2894 = vld [vmem:[#allocation8 + $0x1990] sm:$0xff]
    %v2895 = vld [vmem:[#allocation8 + $0x1998] sm:$0xff]
    %v2896 = vld [vmem:[#allocation8 + $0x19a0] sm:$0xff]
    %v2897 = vld [vmem:[#allocation8 + $0x19a8] sm:$0xff]
    %v2898 = vld [vmem:[#allocation8 + $0x19b0] sm:$0xff]
    %v2899 = vld [vmem:[#allocation8 + $0x19b8] sm:$0xff]
    %v2900 = vld [vmem:[#allocation8 + $0x19c0] sm:$0xff]
    %v2901 = vld [vmem:[#allocation8 + $0x19c8] sm:$0xff]
    %v2902 = vld [vmem:[#allocation8 + $0x19d0] sm:$0xff]
    %v2903 = vld [vmem:[#allocation8 + $0x19d8] sm:$0xff]
    %v2904 = vld [vmem:[#allocation8 + $0x19e0] sm:$0xff]
    %v2905 = vld [vmem:[#allocation8 + $0x19e8] sm:$0xff]
    %v2906 = vld [vmem:[#allocation8 + $0x19f0] sm:$0xff]
    %v2907 = vld [vmem:[#allocation8 + $0x19f8] sm:$0xff]
    %v2908 = vld [vmem:[#allocation8 + $0x1a00] sm:$0xff]
    %v2909 = vld [vmem:[#allocation8 + $0x1a08] sm:$0xff]
    %v2910 = vld [vmem:[#allocation8 + $0x1a10] sm:$0xff]
    %v2911 = vld [vmem:[#allocation8 + $0x1a18] sm:$0xff]
    %v2912 = vld [vmem:[#allocation8 + $0x1a20] sm:$0xff]
    %v2913 = vld [vmem:[#allocation8 + $0x1a28] sm:$0xff]
    %v2914 = vld [vmem:[#allocation8 + $0x1a30] sm:$0xff]
    %v2915 = vld [vmem:[#allocation8 + $0x1a38] sm:$0xff]
    %v2916 = vld [vmem:[#allocation8 + $0x1a40] sm:$0xff]
    %v2917 = vld [vmem:[#allocation8 + $0x1a48] sm:$0xff]
    %v2918 = vld [vmem:[#allocation8 + $0x1a50] sm:$0xff]
    %v2919 = vld [vmem:[#allocation8 + $0x1a58] sm:$0xff]
    %v2920 = vld [vmem:[#allocation8 + $0x1a60] sm:$0xff]
    %v2921 = vld [vmem:[#allocation8 + $0x1a68] sm:$0xff]
    %v2922 = vld [vmem:[#allocation8 + $0x1a70] sm:$0xff]
    %v2923 = vld [vmem:[#allocation8 + $0x1a78] sm:$0xff]
    %v2924 = vld [vmem:[#allocation8 + $0x1a80] sm:$0xff]
    %v2925 = vld [vmem:[#allocation8 + $0x1a88] sm:$0xff]
    %v2926 = vld [vmem:[#allocation8 + $0x1a90] sm:$0xff]
    %v2927 = vld [vmem:[#allocation8 + $0x1a98] sm:$0xff]
    %v2928 = vld [vmem:[#allocation8 + $0x1aa0] sm:$0xff]
    %v2929 = vld [vmem:[#allocation8 + $0x1aa8] sm:$0xff]
    %v2930 = vld [vmem:[#allocation8 + $0x1ab0] sm:$0xff]
    %v2931 = vld [vmem:[#allocation8 + $0x1ab8] sm:$0xff]
    %v2932 = vld [vmem:[#allocation8 + $0x1ac0] sm:$0xff]
    %v2933 = vld [vmem:[#allocation8 + $0x1ac8] sm:$0xff]
    %v2934 = vld [vmem:[#allocation8 + $0x1ad0] sm:$0xff]
    %v2935 = vld [vmem:[#allocation8 + $0x1ad8] sm:$0xff]
    %v2936 = vld [vmem:[#allocation8 + $0x1ae0] sm:$0xff]
    %v2937 = vld [vmem:[#allocation8 + $0x1ae8] sm:$0xff]
    %v2938 = vld [vmem:[#allocation8 + $0x1af0] sm:$0xff]
    %v2939 = vld [vmem:[#allocation8 + $0x1af8] sm:$0xff]
    %v2940 = vld [vmem:[#allocation8 + $0x1b00] sm:$0xff]
    %v2941 = vld [vmem:[#allocation8 + $0x1b08] sm:$0xff]
    %v2942 = vld [vmem:[#allocation8 + $0x1b10] sm:$0xff]
    %v2943 = vld [vmem:[#allocation8 + $0x1b18] sm:$0xff]
    %v2944 = vld [vmem:[#allocation8 + $0x1b20] sm:$0xff]
    %v2945 = vld [vmem:[#allocation8 + $0x1b28] sm:$0xff]
    %v2946 = vld [vmem:[#allocation8 + $0x1b30] sm:$0xff]
    %v2947 = vld [vmem:[#allocation8 + $0x1b38] sm:$0xff]
    %v2948 = vld [vmem:[#allocation8 + $0x1b40] sm:$0xff]
    %v2949 = vld [vmem:[#allocation8 + $0x1b48] sm:$0xff]
    %v2950 = vld [vmem:[#allocation8 + $0x1b50] sm:$0xff]
    %v2951 = vld [vmem:[#allocation8 + $0x1b58] sm:$0xff]
    %v2952 = vld [vmem:[#allocation8 + $0x1b60] sm:$0xff]
    %v2953 = vld [vmem:[#allocation8 + $0x1b68] sm:$0xff]
    %v2954 = vld [vmem:[#allocation8 + $0x1b70] sm:$0xff]
    %v2955 = vld [vmem:[#allocation8 + $0x1b78] sm:$0xff]
    %v2956 = vld [vmem:[#allocation8 + $0x1b80] sm:$0xff]
    %v2957 = vld [vmem:[#allocation8 + $0x1b88] sm:$0xff]
    %v2958 = vld [vmem:[#allocation8 + $0x1b90] sm:$0xff]
    %v2959 = vld [vmem:[#allocation8 + $0x1b98] sm:$0xff]
    %v2960 = vld [vmem:[#allocation8 + $0x1ba0] sm:$0xff]
    %v2961 = vld [vmem:[#allocation8 + $0x1ba8] sm:$0xff]
    %v2962 = vld [vmem:[#allocation8 + $0x1bb0] sm:$0xff]
    %v2963 = vld [vmem:[#allocation8 + $0x1bb8] sm:$0xff]
    %v2964 = vld [vmem:[#allocation8 + $0x1bc0] sm:$0xff]
    %v2965 = vld [vmem:[#allocation8 + $0x1bc8] sm:$0xff]
    %v2966 = vld [vmem:[#allocation8 + $0x1bd0] sm:$0xff]
    %v2967 = vld [vmem:[#allocation8 + $0x1bd8] sm:$0xff]
    %v2968 = vld [vmem:[#allocation8 + $0x1be0] sm:$0xff]
    %v2969 = vld [vmem:[#allocation8 + $0x1be8] sm:$0xff]
    %v2970 = vld [vmem:[#allocation8 + $0x1bf0] sm:$0xff]
    %v2971 = vld [vmem:[#allocation8 + $0x1bf8] sm:$0xff]
    %v2972 = vld [vmem:[#allocation8 + $0x1c00] sm:$0xff]
    %v2973 = vld [vmem:[#allocation8 + $0x1c08] sm:$0xff]
    %v2974 = vld [vmem:[#allocation8 + $0x1c10] sm:$0xff]
    %v2975 = vld [vmem:[#allocation8 + $0x1c18] sm:$0xff]
    %v2976 = vld [vmem:[#allocation8 + $0x1c20] sm:$0xff]
    %v2977 = vld [vmem:[#allocation8 + $0x1c28] sm:$0xff]
    %v2978 = vld [vmem:[#allocation8 + $0x1c30] sm:$0xff]
    %v2979 = vld [vmem:[#allocation8 + $0x1c38] sm:$0xff]
    %v2980 = vld [vmem:[#allocation8 + $0x1c40] sm:$0xff]
    %v2981 = vld [vmem:[#allocation8 + $0x1c48] sm:$0xff]
    %v2982 = vld [vmem:[#allocation8 + $0x1c50] sm:$0xff]
    %v2983 = vld [vmem:[#allocation8 + $0x1c58] sm:$0xff]
    %v2984 = vld [vmem:[#allocation8 + $0x1c60] sm:$0xff]
    %v2985 = vld [vmem:[#allocation8 + $0x1c68] sm:$0xff]
    %v2986 = vld [vmem:[#allocation8 + $0x1c70] sm:$0xff]
    %v2987 = vld [vmem:[#allocation8 + $0x1c78] sm:$0xff]
    %v2988 = vld [vmem:[#allocation8 + $0x1c80] sm:$0xff]
    %v2989 = vld [vmem:[#allocation8 + $0x1c88] sm:$0xff]
    %v2990 = vld [vmem:[#allocation8 + $0x1c90] sm:$0xff]
    %v2991 = vld [vmem:[#allocation8 + $0x1c98] sm:$0xff]
    %v2992 = vld [vmem:[#allocation8 + $0x1ca0] sm:$0xff]
    %v2993 = vld [vmem:[#allocation8 + $0x1ca8] sm:$0xff]
    %v2994 = vld [vmem:[#allocation8 + $0x1cb0] sm:$0xff]
    %v2995 = vld [vmem:[#allocation8 + $0x1cb8] sm:$0xff]
    %v2996 = vld [vmem:[#allocation8 + $0x1cc0] sm:$0xff]
    %v2997 = vld [vmem:[#allocation8 + $0x1cc8] sm:$0xff]
    %v2998 = vld [vmem:[#allocation8 + $0x1cd0] sm:$0xff]
    %v2999 = vld [vmem:[#allocation8 + $0x1cd8] sm:$0xff]
    %v3000 = vld [vmem:[#allocation8 + $0x1ce0] sm:$0xff]
    %v3001 = vld [vmem:[#allocation8 + $0x1ce8] sm:$0xff]
    %v3002 = vld [vmem:[#allocation8 + $0x1cf0] sm:$0xff]
    %v3003 = vld [vmem:[#allocation8 + $0x1cf8] sm:$0xff]
    %v3004 = vld [vmem:[#allocation8 + $0x1d00] sm:$0xff]
    %v3005 = vld [vmem:[#allocation8 + $0x1d08] sm:$0xff]
    %v3006 = vld [vmem:[#allocation8 + $0x1d10] sm:$0xff]
    %v3007 = vld [vmem:[#allocation8 + $0x1d18] sm:$0xff]
    %v3008 = vld [vmem:[#allocation8 + $0x1d20] sm:$0xff]
    %v3009 = vld [vmem:[#allocation8 + $0x1d28] sm:$0xff]
    %v3010 = vld [vmem:[#allocation8 + $0x1d30] sm:$0xff]
    %v3011 = vld [vmem:[#allocation8 + $0x1d38] sm:$0xff]
    %v3012 = vld [vmem:[#allocation8 + $0x1d40] sm:$0xff]
    %v3013 = vld [vmem:[#allocation8 + $0x1d48] sm:$0xff]
    %v3014 = vld [vmem:[#allocation8 + $0x1d50] sm:$0xff]
    %v3015 = vld [vmem:[#allocation8 + $0x1d58] sm:$0xff]
    %v3016 = vld [vmem:[#allocation8 + $0x1d60] sm:$0xff]
    %v3017 = vld [vmem:[#allocation8 + $0x1d68] sm:$0xff]
    %v3018 = vld [vmem:[#allocation8 + $0x1d70] sm:$0xff]
    %v3019 = vld [vmem:[#allocation8 + $0x1d78] sm:$0xff]
    %v3020 = vld [vmem:[#allocation8 + $0x1d80] sm:$0xff]
    %v3021 = vld [vmem:[#allocation8 + $0x1d88] sm:$0xff]
    %v3022 = vld [vmem:[#allocation8 + $0x1d90] sm:$0xff]
    %v3023 = vld [vmem:[#allocation8 + $0x1d98] sm:$0xff]
    %v3024 = vld [vmem:[#allocation8 + $0x1da0] sm:$0xff]
    %v3025 = vld [vmem:[#allocation8 + $0x1da8] sm:$0xff]
    %v3026 = vld [vmem:[#allocation8 + $0x1db0] sm:$0xff]
    %v3027 = vld [vmem:[#allocation8 + $0x1db8] sm:$0xff]
    %v3028 = vld [vmem:[#allocation8 + $0x1dc0] sm:$0xff]
    %v3029 = vld [vmem:[#allocation8 + $0x1dc8] sm:$0xff]
    %v3030 = vld [vmem:[#allocation8 + $0x1dd0] sm:$0xff]
    %v3031 = vld [vmem:[#allocation8 + $0x1dd8] sm:$0xff]
    %v3032 = vld [vmem:[#allocation8 + $0x1de0] sm:$0xff]
    %v3033 = vld [vmem:[#allocation8 + $0x1de8] sm:$0xff]
    %v3034 = vld [vmem:[#allocation8 + $0x1df0] sm:$0xff]
    %v3035 = vld [vmem:[#allocation8 + $0x1df8] sm:$0xff]
    %v3036 = vld [vmem:[#allocation8 + $0x1e00] sm:$0xff]
    %v3037 = vld [vmem:[#allocation8 + $0x1e08] sm:$0xff]
    %v3038 = vld [vmem:[#allocation8 + $0x1e10] sm:$0xff]
    %v3039 = vld [vmem:[#allocation8 + $0x1e18] sm:$0xff]
    %v3040 = vld [vmem:[#allocation8 + $0x1e20] sm:$0xff]
    %v3041 = vld [vmem:[#allocation8 + $0x1e28] sm:$0xff]
    %v3042 = vld [vmem:[#allocation8 + $0x1e30] sm:$0xff]
    %v3043 = vld [vmem:[#allocation8 + $0x1e38] sm:$0xff]
    %v3044 = vld [vmem:[#allocation8 + $0x1e40] sm:$0xff]
    %v3045 = vld [vmem:[#allocation8 + $0x1e48] sm:$0xff]
    %v3046 = vld [vmem:[#allocation8 + $0x1e50] sm:$0xff]
    %v3047 = vld [vmem:[#allocation8 + $0x1e58] sm:$0xff]
    %v3048 = vld [vmem:[#allocation8 + $0x1e60] sm:$0xff]
    %v3049 = vld [vmem:[#allocation8 + $0x1e68] sm:$0xff]
    %v3050 = vld [vmem:[#allocation8 + $0x1e70] sm:$0xff]
    %v3051 = vld [vmem:[#allocation8 + $0x1e78] sm:$0xff]
    %v3052 = vld [vmem:[#allocation8 + $0x1e80] sm:$0xff]
    %v3053 = vld [vmem:[#allocation8 + $0x1e88] sm:$0xff]
    %v3054 = vld [vmem:[#allocation8 + $0x1e90] sm:$0xff]
    %v3055 = vld [vmem:[#allocation8 + $0x1e98] sm:$0xff]
    %v3056 = vld [vmem:[#allocation8 + $0x1ea0] sm:$0xff]
    %v3057 = vld [vmem:[#allocation8 + $0x1ea8] sm:$0xff]
    %v3058 = vld [vmem:[#allocation8 + $0x1eb0] sm:$0xff]
    %v3059 = vld [vmem:[#allocation8 + $0x1eb8] sm:$0xff]
    %v3060 = vld [vmem:[#allocation8 + $0x1ec0] sm:$0xff]
    %v3061 = vld [vmem:[#allocation8 + $0x1ec8] sm:$0xff]
    %v3062 = vld [vmem:[#allocation8 + $0x1ed0] sm:$0xff]
    %v3063 = vld [vmem:[#allocation8 + $0x1ed8] sm:$0xff]
    %v3064 = vld [vmem:[#allocation8 + $0x1ee0] sm:$0xff]
    %v3065 = vld [vmem:[#allocation8 + $0x1ee8] sm:$0xff]
    %v3066 = vld [vmem:[#allocation8 + $0x1ef0] sm:$0xff]
    %v3067 = vld [vmem:[#allocation8 + $0x1ef8] sm:$0xff]
    %v3068 = vld [vmem:[#allocation8 + $0x1f00] sm:$0xff]
    %v3069 = vld [vmem:[#allocation8 + $0x1f08] sm:$0xff]
    %v3070 = vld [vmem:[#allocation8 + $0x1f10] sm:$0xff]
    %v3071 = vld [vmem:[#allocation8 + $0x1f18] sm:$0xff]
    %v3072 = vld [vmem:[#allocation8 + $0x1f20] sm:$0xff]
    %v3073 = vld [vmem:[#allocation8 + $0x1f28] sm:$0xff]
    %v3074 = vld [vmem:[#allocation8 + $0x1f30] sm:$0xff]
    %v3075 = vld [vmem:[#allocation8 + $0x1f38] sm:$0xff]
    %v3076 = vld [vmem:[#allocation8 + $0x1f40] sm:$0xff]
    %v3077 = vld [vmem:[#allocation8 + $0x1f48] sm:$0xff]
    %v3078 = vld [vmem:[#allocation8 + $0x1f50] sm:$0xff]
    %v3079 = vld [vmem:[#allocation8 + $0x1f58] sm:$0xff]
    %v3080 = vld [vmem:[#allocation8 + $0x1f60] sm:$0xff]
    %v3081 = vld [vmem:[#allocation8 + $0x1f68] sm:$0xff]
    %v3082 = vld [vmem:[#allocation8 + $0x1f70] sm:$0xff]
    %v3083 = vld [vmem:[#allocation8 + $0x1f78] sm:$0xff]
    %v3084 = vld [vmem:[#allocation8 + $0x1f80] sm:$0xff]
    %v3085 = vld [vmem:[#allocation8 + $0x1f88] sm:$0xff]
    %v3086 = vld [vmem:[#allocation8 + $0x1f90] sm:$0xff]
    %v3087 = vld [vmem:[#allocation8 + $0x1f98] sm:$0xff]
    %v3088 = vld [vmem:[#allocation8 + $0x1fa0] sm:$0xff]
    %v3089 = vld [vmem:[#allocation8 + $0x1fa8] sm:$0xff]
    %v3090 = vld [vmem:[#allocation8 + $0x1fb0] sm:$0xff]
    %v3091 = vld [vmem:[#allocation8 + $0x1fb8] sm:$0xff]
    %v3092 = vld [vmem:[#allocation8 + $0x1fc0] sm:$0xff]
    %v3093 = vld [vmem:[#allocation8 + $0x1fc8] sm:$0xff]
    %v3094 = vld [vmem:[#allocation8 + $0x1fd0] sm:$0xff]
    %v3095 = vld [vmem:[#allocation8 + $0x1fd8] sm:$0xff]
    %v3096 = vld [vmem:[#allocation8 + $0x1fe0] sm:$0xff]
    %v3097 = vld [vmem:[#allocation8 + $0x1fe8] sm:$0xff]
    %v3098 = vld [vmem:[#allocation8 + $0x1ff0] sm:$0xff]
    %v3099 = vld [vmem:[#allocation8 + $0x1ff8] sm:$0xff]
    %v3100 = vld [vmem:[#allocation8 + $0x2000] sm:$0xff]
    %v3101 = vld [vmem:[#allocation8 + $0x2008] sm:$0xff]
    %v3102 = vld [vmem:[#allocation8 + $0x2010] sm:$0xff]
    %v3103 = vld [vmem:[#allocation8 + $0x2018] sm:$0xff]
    %v3104 = vld [vmem:[#allocation8 + $0x2020] sm:$0xff]
    %v3105 = vld [vmem:[#allocation8 + $0x2028] sm:$0xff]
    %v3106 = vld [vmem:[#allocation8 + $0x2030] sm:$0xff]
    %v3107 = vld [vmem:[#allocation8 + $0x2038] sm:$0xff]
    %v3108 = vld [vmem:[#allocation8 + $0x2040] sm:$0xff]
    %v3109 = vld [vmem:[#allocation8 + $0x2048] sm:$0xff]
    %v3110 = vld [vmem:[#allocation8 + $0x2050] sm:$0xff]
    %v3111 = vld [vmem:[#allocation8 + $0x2058] sm:$0xff]
    %v3112 = vld [vmem:[#allocation8 + $0x2060] sm:$0xff]
    %v3113 = vld [vmem:[#allocation8 + $0x2068] sm:$0xff]
    %v3114 = vld [vmem:[#allocation8 + $0x2070] sm:$0xff]
    %v3115 = vld [vmem:[#allocation8 + $0x2078] sm:$0xff]
    %v3116 = vld [vmem:[#allocation8 + $0x2080] sm:$0xff]
    %v3117 = vld [vmem:[#allocation8 + $0x2088] sm:$0xff]
    %v3118 = vld [vmem:[#allocation8 + $0x2090] sm:$0xff]
    %v3119 = vld [vmem:[#allocation8 + $0x2098] sm:$0xff]
    %v3120 = vld [vmem:[#allocation8 + $0x20a0] sm:$0xff]
    %v3121 = vld [vmem:[#allocation8 + $0x20a8] sm:$0xff]
    %v3122 = vld [vmem:[#allocation8 + $0x20b0] sm:$0xff]
    %v3123 = vld [vmem:[#allocation8 + $0x20b8] sm:$0xff]
    %v3124 = vld [vmem:[#allocation8 + $0x20c0] sm:$0xff]
    %v3125 = vld [vmem:[#allocation8 + $0x20c8] sm:$0xff]
    %v3126 = vld [vmem:[#allocation8 + $0x20d0] sm:$0xff]
    %v3127 = vld [vmem:[#allocation8 + $0x20d8] sm:$0xff]
    %v3128 = vld [vmem:[#allocation8 + $0x20e0] sm:$0xff]
    %v3129 = vld [vmem:[#allocation8 + $0x20e8] sm:$0xff]
    %v3130 = vld [vmem:[#allocation8 + $0x20f0] sm:$0xff]
    %v3131 = vld [vmem:[#allocation8 + $0x20f8] sm:$0xff]
    %v3132 = vld [vmem:[#allocation8 + $0x2100] sm:$0xff]
    %v3133 = vld [vmem:[#allocation8 + $0x2108] sm:$0xff]
    %v3134 = vld [vmem:[#allocation8 + $0x2110] sm:$0xff]
    %v3135 = vld [vmem:[#allocation8 + $0x2118] sm:$0xff]
    %v3136 = vld [vmem:[#allocation8 + $0x2120] sm:$0xff]
    %v3137 = vld [vmem:[#allocation8 + $0x2128] sm:$0xff]
    %v3138 = vld [vmem:[#allocation8 + $0x2130] sm:$0xff]
    %v3139 = vld [vmem:[#allocation8 + $0x2138] sm:$0xff]
    %v3140 = vld [vmem:[#allocation8 + $0x2140] sm:$0xff]
    %v3141 = vld [vmem:[#allocation8 + $0x2148] sm:$0xff]
    %v3142 = vld [vmem:[#allocation8 + $0x2150] sm:$0xff]
    %v3143 = vld [vmem:[#allocation8 + $0x2158] sm:$0xff]
    %v3144 = vld [vmem:[#allocation8 + $0x2160] sm:$0xff]
    %v3145 = vld [vmem:[#allocation8 + $0x2168] sm:$0xff]
    %v3146 = vld [vmem:[#allocation8 + $0x2170] sm:$0xff]
    %v3147 = vld [vmem:[#allocation8 + $0x2178] sm:$0xff]
    %v3148 = vld [vmem:[#allocation8 + $0x2180] sm:$0xff]
    %v3149 = vld [vmem:[#allocation8 + $0x2188] sm:$0xff]
    %v3150 = vld [vmem:[#allocation8 + $0x2190] sm:$0xff]
    %v3151 = vld [vmem:[#allocation8 + $0x2198] sm:$0xff]
    %v3152 = vld [vmem:[#allocation8 + $0x21a0] sm:$0xff]
    %v3153 = vld [vmem:[#allocation8 + $0x21a8] sm:$0xff]
    %v3154 = vld [vmem:[#allocation8 + $0x21b0] sm:$0xff]
    %v3155 = vld [vmem:[#allocation8 + $0x21b8] sm:$0xff]
    %v3156 = vld [vmem:[#allocation8 + $0x21c0] sm:$0xff]
    %v3157 = vld [vmem:[#allocation8 + $0x21c8] sm:$0xff]
    %v3158 = vld [vmem:[#allocation8 + $0x21d0] sm:$0xff]
    %v3159 = vld [vmem:[#allocation8 + $0x21d8] sm:$0xff]
    %v3160 = vld [vmem:[#allocation8 + $0x21e0] sm:$0xff]
    %v3161 = vld [vmem:[#allocation8 + $0x21e8] sm:$0xff]
    %v3162 = vld [vmem:[#allocation8 + $0x21f0] sm:$0xff]
    %v3163 = vld [vmem:[#allocation8 + $0x21f8] sm:$0xff]
    %v3164 = vld [vmem:[#allocation8 + $0x2200] sm:$0xff]
    %v3165 = vld [vmem:[#allocation8 + $0x2208] sm:$0xff]
    %v3166 = vld [vmem:[#allocation8 + $0x2210] sm:$0xff]
    %v3167 = vld [vmem:[#allocation8 + $0x2218] sm:$0xff]
    %v3168 = vld [vmem:[#allocation8 + $0x2220] sm:$0xff]
    %v3169 = vld [vmem:[#allocation8 + $0x2228] sm:$0xff]
    %v3170 = vld [vmem:[#allocation8 + $0x2230] sm:$0xff]
    %v3171 = vld [vmem:[#allocation8 + $0x2238] sm:$0xff]
    %v3172 = vld [vmem:[#allocation8 + $0x2240] sm:$0xff]
    %v3173 = vld [vmem:[#allocation8 + $0x2248] sm:$0xff]
    %v3174 = vld [vmem:[#allocation8 + $0x2250] sm:$0xff]
    %v3175 = vld [vmem:[#allocation8 + $0x2258] sm:$0xff]
    %v3176 = vld [vmem:[#allocation8 + $0x2260] sm:$0xff]
    %v3177 = vld [vmem:[#allocation8 + $0x2268] sm:$0xff]
    %v3178 = vld [vmem:[#allocation8 + $0x2270] sm:$0xff]
    %v3179 = vld [vmem:[#allocation8 + $0x2278] sm:$0xff]
    %v3180 = vld [vmem:[#allocation8 + $0x2280] sm:$0xff]
    %v3181 = vld [vmem:[#allocation8 + $0x2288] sm:$0xff]
    %v3182 = vld [vmem:[#allocation8 + $0x2290] sm:$0xff]
    %v3183 = vld [vmem:[#allocation8 + $0x2298] sm:$0xff]
    %v3184 = vld [vmem:[#allocation8 + $0x22a0] sm:$0xff]
    %v3185 = vld [vmem:[#allocation8 + $0x22a8] sm:$0xff]
    %v3186 = vld [vmem:[#allocation8 + $0x22b0] sm:$0xff]
    %v3187 = vld [vmem:[#allocation8 + $0x22b8] sm:$0xff]
    %v3188 = vld [vmem:[#allocation8 + $0x22c0] sm:$0xff]
    %v3189 = vld [vmem:[#allocation8 + $0x22c8] sm:$0xff]
    %v3190 = vld [vmem:[#allocation8 + $0x22d0] sm:$0xff]
    %v3191 = vld [vmem:[#allocation8 + $0x22d8] sm:$0xff]
    %v3192 = vld [vmem:[#allocation8 + $0x22e0] sm:$0xff]
    %v3193 = vld [vmem:[#allocation8 + $0x22e8] sm:$0xff]
    %v3194 = vld [vmem:[#allocation8 + $0x22f0] sm:$0xff]
    %v3195 = vld [vmem:[#allocation8 + $0x22f8] sm:$0xff]
    %v3196 = vld [vmem:[#allocation8 + $0x2300] sm:$0xff]
    %v3197 = vld [vmem:[#allocation8 + $0x2308] sm:$0xff]
    %v3198 = vld [vmem:[#allocation8 + $0x2310] sm:$0xff]
    %v3199 = vld [vmem:[#allocation8 + $0x2318] sm:$0xff]
    %v3200 = vld [vmem:[#allocation8 + $0x2320] sm:$0xff]
    %v3201 = vld [vmem:[#allocation8 + $0x2328] sm:$0xff]
    %v3202 = vld [vmem:[#allocation8 + $0x2330] sm:$0xff]
    %v3203 = vld [vmem:[#allocation8 + $0x2338] sm:$0xff]
    %v3204 = vld [vmem:[#allocation8 + $0x2340] sm:$0xff]
    %v3205 = vld [vmem:[#allocation8 + $0x2348] sm:$0xff]
    %v3206 = vld [vmem:[#allocation8 + $0x2350] sm:$0xff]
    %v3207 = vld [vmem:[#allocation8 + $0x2358] sm:$0xff]
    %v3208 = vld [vmem:[#allocation8 + $0x2360] sm:$0xff]
    %v3209 = vld [vmem:[#allocation8 + $0x2368] sm:$0xff]
    %v3210 = vld [vmem:[#allocation8 + $0x2370] sm:$0xff]
    %v3211 = vld [vmem:[#allocation8 + $0x2378] sm:$0xff]
    %v3212 = vld [vmem:[#allocation8 + $0x2380] sm:$0xff]
    %v3213 = vld [vmem:[#allocation8 + $0x2388] sm:$0xff]
    %v3214 = vld [vmem:[#allocation8 + $0x2390] sm:$0xff]
    %v3215 = vld [vmem:[#allocation8 + $0x2398] sm:$0xff]
    %v3216 = vld [vmem:[#allocation8 + $0x23a0] sm:$0xff]
    %v3217 = vld [vmem:[#allocation8 + $0x23a8] sm:$0xff]
    %v3218 = vld [vmem:[#allocation8 + $0x23b0] sm:$0xff]
    %v3219 = vld [vmem:[#allocation8 + $0x23b8] sm:$0xff]
    %v3220 = vld [vmem:[#allocation8 + $0x23c0] sm:$0xff]
    %v3221 = vld [vmem:[#allocation8 + $0x23c8] sm:$0xff]
    %v3222 = vld [vmem:[#allocation8 + $0x23d0] sm:$0xff]
    %v3223 = vld [vmem:[#allocation8 + $0x23d8] sm:$0xff]
    %v3224 = vld [vmem:[#allocation8 + $0x23e0] sm:$0xff]
    %v3225 = vld [vmem:[#allocation8 + $0x23e8] sm:$0xff]
    %v3226 = vld [vmem:[#allocation8 + $0x23f0] sm:$0xff]
    %v3227 = vld [vmem:[#allocation8 + $0x23f8] sm:$0xff]
    %v3228 = vld [vmem:[#allocation8 + $0x2400] sm:$0xff]
    %v3229 = vld [vmem:[#allocation8 + $0x2408] sm:$0xff]
    %v3230 = vld [vmem:[#allocation8 + $0x2410] sm:$0xff]
    %v3231 = vld [vmem:[#allocation8 + $0x2418] sm:$0xff]
    %v3232 = vld [vmem:[#allocation8 + $0x2420] sm:$0xff]
    %v3233 = vld [vmem:[#allocation8 + $0x2428] sm:$0xff]
    %v3234 = vld [vmem:[#allocation8 + $0x2430] sm:$0xff]
    %v3235 = vld [vmem:[#allocation8 + $0x2438] sm:$0xff]
    %v3236 = vld [vmem:[#allocation8 + $0x2440] sm:$0xff]
    %v3237 = vld [vmem:[#allocation8 + $0x2448] sm:$0xff]
    %v3238 = vld [vmem:[#allocation8 + $0x2450] sm:$0xff]
    %v3239 = vld [vmem:[#allocation8 + $0x2458] sm:$0xff]
    %v3240 = vld [vmem:[#allocation8 + $0x2460] sm:$0xff]
    %v3241 = vld [vmem:[#allocation8 + $0x2468] sm:$0xff]
    %v3242 = vld [vmem:[#allocation8 + $0x2470] sm:$0xff]
    %v3243 = vld [vmem:[#allocation8 + $0x2478] sm:$0xff]
    %v3244 = vld [vmem:[#allocation8 + $0x2480] sm:$0xff]
    %v3245 = vld [vmem:[#allocation8 + $0x2488] sm:$0xff]
    %v3246 = vld [vmem:[#allocation8 + $0x2490] sm:$0xff]
    %v3247 = vld [vmem:[#allocation8 + $0x2498] sm:$0xff]
    %v3248 = vld [vmem:[#allocation8 + $0x24a0] sm:$0xff]
    %v3249 = vld [vmem:[#allocation8 + $0x24a8] sm:$0xff]
    %v3250 = vld [vmem:[#allocation8 + $0x24b0] sm:$0xff]
    %v3251 = vld [vmem:[#allocation8 + $0x24b8] sm:$0xff]
    %v3252 = vld [vmem:[#allocation8 + $0x24c0] sm:$0xff]
    %v3253 = vld [vmem:[#allocation8 + $0x24c8] sm:$0xff]
    %v3254 = vld [vmem:[#allocation8 + $0x24d0] sm:$0xff]
    %v3255 = vld [vmem:[#allocation8 + $0x24d8] sm:$0xff]
    %v3256 = vld [vmem:[#allocation8 + $0x24e0] sm:$0xff]
    %v3257 = vld [vmem:[#allocation8 + $0x24e8] sm:$0xff]
    %v3258 = vld [vmem:[#allocation8 + $0x24f0] sm:$0xff]
    %v3259 = vld [vmem:[#allocation8 + $0x24f8] sm:$0xff]
    %v3260 = vld [vmem:[#allocation8 + $0x2500] sm:$0xff]
    %v3261 = vld [vmem:[#allocation8 + $0x2508] sm:$0xff]
    %v3262 = vld [vmem:[#allocation8 + $0x2510] sm:$0xff]
    %v3263 = vld [vmem:[#allocation8 + $0x2518] sm:$0xff]
    %v3264 = vld [vmem:[#allocation8 + $0x2520] sm:$0xff]
    %v3265 = vld [vmem:[#allocation8 + $0x2528] sm:$0xff]
    %v3266 = vld [vmem:[#allocation8 + $0x2530] sm:$0xff]
    %v3267 = vld [vmem:[#allocation8 + $0x2538] sm:$0xff]
    %v3268 = vld [vmem:[#allocation8 + $0x2540] sm:$0xff]
    %v3269 = vld [vmem:[#allocation8 + $0x2548] sm:$0xff]
    %v3270 = vld [vmem:[#allocation8 + $0x2550] sm:$0xff]
    %v3271 = vld [vmem:[#allocation8 + $0x2558] sm:$0xff]
    %v3272 = vld [vmem:[#allocation8 + $0x2560] sm:$0xff]
    %v3273 = vld [vmem:[#allocation8 + $0x2568] sm:$0xff]
    %v3274 = vld [vmem:[#allocation8 + $0x2570] sm:$0xff]
    %v3275 = vld [vmem:[#allocation8 + $0x2578] sm:$0xff]
    %v3276 = vld [vmem:[#allocation8 + $0x2580] sm:$0xff]
    %v3277 = vld [vmem:[#allocation8 + $0x2588] sm:$0xff]
    %v3278 = vld [vmem:[#allocation8 + $0x2590] sm:$0xff]
    %v3279 = vld [vmem:[#allocation8 + $0x2598] sm:$0xff]
    %v3280 = vld [vmem:[#allocation8 + $0x25a0] sm:$0xff]
    %v3281 = vld [vmem:[#allocation8 + $0x25a8] sm:$0xff]
    %v3282 = vld [vmem:[#allocation8 + $0x25b0] sm:$0xff]
    %v3283 = vld [vmem:[#allocation8 + $0x25b8] sm:$0xff]
    %v3284 = vld [vmem:[#allocation8 + $0x25c0] sm:$0xff]
    %v3285 = vld [vmem:[#allocation8 + $0x25c8] sm:$0xff]
    %v3286 = vld [vmem:[#allocation8 + $0x25d0] sm:$0xff]
    %v3287 = vld [vmem:[#allocation8 + $0x25d8] sm:$0xff]
    %v3288 = vld [vmem:[#allocation8 + $0x25e0] sm:$0xff]
    %v3289 = vld [vmem:[#allocation8 + $0x25e8] sm:$0xff]
    %v3290 = vld [vmem:[#allocation8 + $0x25f0] sm:$0xff]
    %v3291 = vld [vmem:[#allocation8 + $0x25f8] sm:$0xff]
    %v3292 = vld [vmem:[#allocation8 + $0x2600] sm:$0xff]
    %v3293 = vld [vmem:[#allocation8 + $0x2608] sm:$0xff]
    %v3294 = vld [vmem:[#allocation8 + $0x2610] sm:$0xff]
    %v3295 = vld [vmem:[#allocation8 + $0x2618] sm:$0xff]
    %v3296 = vld [vmem:[#allocation8 + $0x2620] sm:$0xff]
    %v3297 = vld [vmem:[#allocation8 + $0x2628] sm:$0xff]
    %v3298 = vld [vmem:[#allocation8 + $0x2630] sm:$0xff]
    %v3299 = vld [vmem:[#allocation8 + $0x2638] sm:$0xff]
    %v3300 = vld [vmem:[#allocation8 + $0x2640] sm:$0xff]
    %v3301 = vld [vmem:[#allocation8 + $0x2648] sm:$0xff]
    %v3302 = vld [vmem:[#allocation8 + $0x2650] sm:$0xff]
    %v3303 = vld [vmem:[#allocation8 + $0x2658] sm:$0xff]
    %v3304 = vld [vmem:[#allocation8 + $0x2660] sm:$0xff]
    %v3305 = vld [vmem:[#allocation8 + $0x2668] sm:$0xff]
    %v3306 = vld [vmem:[#allocation8 + $0x2670] sm:$0xff]
    %v3307 = vld [vmem:[#allocation8 + $0x2678] sm:$0xff]
    %v3308 = vld [vmem:[#allocation8 + $0x2680] sm:$0xff]
    %v3309 = vld [vmem:[#allocation8 + $0x2688] sm:$0xff]
    %v3310 = vld [vmem:[#allocation8 + $0x2690] sm:$0xff]
    %v3311 = vld [vmem:[#allocation8 + $0x2698] sm:$0xff]
    %v3312 = vld [vmem:[#allocation8 + $0x26a0] sm:$0xff]
    %v3313 = vld [vmem:[#allocation8 + $0x26a8] sm:$0xff]
    %v3314 = vld [vmem:[#allocation8 + $0x26b0] sm:$0xff]
    %v3315 = vld [vmem:[#allocation8 + $0x26b8] sm:$0xff]
    %v3316 = vld [vmem:[#allocation8 + $0x26c0] sm:$0xff]
    %v3317 = vld [vmem:[#allocation8 + $0x26c8] sm:$0xff]
    %v3318 = vld [vmem:[#allocation8 + $0x26d0] sm:$0xff]
    %v3319 = vld [vmem:[#allocation8 + $0x26d8] sm:$0xff]
    %v3320 = vld [vmem:[#allocation8 + $0x26e0] sm:$0xff]
    %v3321 = vld [vmem:[#allocation8 + $0x26e8] sm:$0xff]
    %v3322 = vld [vmem:[#allocation8 + $0x26f0] sm:$0xff]
    %v3323 = vld [vmem:[#allocation8 + $0x26f8] sm:$0xff]
    %v3324 = vld [vmem:[#allocation8 + $0x2700] sm:$0xff]
    %v3325 = vld [vmem:[#allocation8 + $0x2708] sm:$0xff]
    %v3326 = vld [vmem:[#allocation8 + $0x2710] sm:$0xff]
    %v3327 = vld [vmem:[#allocation8 + $0x2718] sm:$0xff]
    %v3328 = vld [vmem:[#allocation8 + $0x2720] sm:$0xff]
    %v3329 = vld [vmem:[#allocation8 + $0x2728] sm:$0xff]
    %v3330 = vld [vmem:[#allocation8 + $0x2730] sm:$0xff]
    %v3331 = vld [vmem:[#allocation8 + $0x2738] sm:$0xff]
    %v3332 = vld [vmem:[#allocation8 + $0x2740] sm:$0xff]
    %v3333 = vld [vmem:[#allocation8 + $0x2748] sm:$0xff]
    %v3334 = vld [vmem:[#allocation8 + $0x2750] sm:$0xff]
    %v3335 = vld [vmem:[#allocation8 + $0x2758] sm:$0xff]
    %v3336 = vld [vmem:[#allocation8 + $0x2760] sm:$0xff]
    %v3337 = vld [vmem:[#allocation8 + $0x2768] sm:$0xff]
    %v3338 = vld [vmem:[#allocation8 + $0x2770] sm:$0xff]
    %v3339 = vld [vmem:[#allocation8 + $0x2778] sm:$0xff]
    %v3340 = vld [vmem:[#allocation8 + $0x2780] sm:$0xff]
    %v3341 = vld [vmem:[#allocation8 + $0x2788] sm:$0xff]
    %v3342 = vld [vmem:[#allocation8 + $0x2790] sm:$0xff]
    %v3343 = vld [vmem:[#allocation8 + $0x2798] sm:$0xff]
    %v3344 = vld [vmem:[#allocation8 + $0x27a0] sm:$0xff]
    %v3345 = vld [vmem:[#allocation8 + $0x27a8] sm:$0xff]
    %v3346 = vld [vmem:[#allocation8 + $0x27b0] sm:$0xff]
    %v3347 = vld [vmem:[#allocation8 + $0x27b8] sm:$0xff]
    %v3348 = vld [vmem:[#allocation8 + $0x27c0] sm:$0xff]
    %v3349 = vld [vmem:[#allocation8 + $0x27c8] sm:$0xff]
    %v3350 = vld [vmem:[#allocation8 + $0x27d0] sm:$0xff]
    %v3351 = vld [vmem:[#allocation8 + $0x27d8] sm:$0xff]
    %v3352 = vld [vmem:[#allocation8 + $0x27e0] sm:$0xff]
    %v3353 = vld [vmem:[#allocation8 + $0x27e8] sm:$0xff]
    %v3354 = vld [vmem:[#allocation8 + $0x27f0] sm:$0xff]
    %v3355 = vld [vmem:[#allocation8 + $0x27f8] sm:$0xff]
    %v3356 = vld [vmem:[#allocation8 + $0x2800] sm:$0xff]
    %v3357 = vld [vmem:[#allocation8 + $0x2808] sm:$0xff]
    %v3358 = vld [vmem:[#allocation8 + $0x2810] sm:$0xff]
    %v3359 = vld [vmem:[#allocation8 + $0x2818] sm:$0xff]
    %v3360 = vld [vmem:[#allocation8 + $0x2820] sm:$0xff]
    %v3361 = vld [vmem:[#allocation8 + $0x2828] sm:$0xff]
    %v3362 = vld [vmem:[#allocation8 + $0x2830] sm:$0xff]
    %v3363 = vld [vmem:[#allocation8 + $0x2838] sm:$0xff]
    %v3364 = vld [vmem:[#allocation8 + $0x2840] sm:$0xff]
    %v3365 = vld [vmem:[#allocation8 + $0x2848] sm:$0xff]
    %v3366 = vld [vmem:[#allocation8 + $0x2850] sm:$0xff]
    %v3367 = vld [vmem:[#allocation8 + $0x2858] sm:$0xff]
    %v3368 = vld [vmem:[#allocation8 + $0x2860] sm:$0xff]
    %v3369 = vld [vmem:[#allocation8 + $0x2868] sm:$0xff]
    %v3370 = vld [vmem:[#allocation8 + $0x2870] sm:$0xff]
    %v3371 = vld [vmem:[#allocation8 + $0x2878] sm:$0xff]
    %v3372 = vld [vmem:[#allocation8 + $0x2880] sm:$0xff]
    %v3373 = vld [vmem:[#allocation8 + $0x2888] sm:$0xff]
    %v3374 = vld [vmem:[#allocation8 + $0x2890] sm:$0xff]
    %v3375 = vld [vmem:[#allocation8 + $0x2898] sm:$0xff]
    %v3376 = vld [vmem:[#allocation8 + $0x28a0] sm:$0xff]
    %v3377 = vld [vmem:[#allocation8 + $0x28a8] sm:$0xff]
    %v3378 = vld [vmem:[#allocation8 + $0x28b0] sm:$0xff]
    %v3379 = vld [vmem:[#allocation8 + $0x28b8] sm:$0xff]
    %v3380 = vld [vmem:[#allocation8 + $0x28c0] sm:$0xff]
    %v3381 = vld [vmem:[#allocation8 + $0x28c8] sm:$0xff]
    %v3382 = vld [vmem:[#allocation8 + $0x28d0] sm:$0xff]
    %v3383 = vld [vmem:[#allocation8 + $0x28d8] sm:$0xff]
    %v3384 = vld [vmem:[#allocation8 + $0x28e0] sm:$0xff]
    %v3385 = vld [vmem:[#allocation8 + $0x28e8] sm:$0xff]
    %v3386 = vld [vmem:[#allocation8 + $0x28f0] sm:$0xff]
    %v3387 = vld [vmem:[#allocation8 + $0x28f8] sm:$0xff]
    %v3388 = vld [vmem:[#allocation8 + $0x2900] sm:$0xff]
    %v3389 = vld [vmem:[#allocation8 + $0x2908] sm:$0xff]
    %v3390 = vld [vmem:[#allocation8 + $0x2910] sm:$0xff]
    %v3391 = vld [vmem:[#allocation8 + $0x2918] sm:$0xff]
    %v3392 = vld [vmem:[#allocation8 + $0x2920] sm:$0xff]
    %v3393 = vld [vmem:[#allocation8 + $0x2928] sm:$0xff]
    %v3394 = vld [vmem:[#allocation8 + $0x2930] sm:$0xff]
    %v3395 = vld [vmem:[#allocation8 + $0x2938] sm:$0xff]
    %v3396 = vld [vmem:[#allocation8 + $0x2940] sm:$0xff]
    %v3397 = vld [vmem:[#allocation8 + $0x2948] sm:$0xff]
    %v3398 = vld [vmem:[#allocation8 + $0x2950] sm:$0xff]
    %v3399 = vld [vmem:[#allocation8 + $0x2958] sm:$0xff]
    %v3400 = vld [vmem:[#allocation8 + $0x2960] sm:$0xff]
    %v3401 = vld [vmem:[#allocation8 + $0x2968] sm:$0xff]
    %v3402 = vld [vmem:[#allocation8 + $0x2970] sm:$0xff]
    %v3403 = vld [vmem:[#allocation8 + $0x2978] sm:$0xff]
    %v3404 = vld [vmem:[#allocation8 + $0x2980] sm:$0xff]
    %v3405 = vld [vmem:[#allocation8 + $0x2988] sm:$0xff]
    %v3406 = vld [vmem:[#allocation8 + $0x2990] sm:$0xff]
    %v3407 = vld [vmem:[#allocation8 + $0x2998] sm:$0xff]
    %v3408 = vld [vmem:[#allocation8 + $0x29a0] sm:$0xff]
    %v3409 = vld [vmem:[#allocation8 + $0x29a8] sm:$0xff]
    %v3410 = vld [vmem:[#allocation8 + $0x29b0] sm:$0xff]
    %v3411 = vld [vmem:[#allocation8 + $0x29b8] sm:$0xff]
    %v3412 = vld [vmem:[#allocation8 + $0x29c0] sm:$0xff]
    %v3413 = vld [vmem:[#allocation8 + $0x29c8] sm:$0xff]
    %v3414 = vld [vmem:[#allocation8 + $0x29d0] sm:$0xff]
    %v3415 = vld [vmem:[#allocation8 + $0x29d8] sm:$0xff]
    %v3416 = vld [vmem:[#allocation8 + $0x29e0] sm:$0xff]
    %v3417 = vld [vmem:[#allocation8 + $0x29e8] sm:$0xff]
    %v3418 = vld [vmem:[#allocation8 + $0x29f0] sm:$0xff]
    %v3419 = vld [vmem:[#allocation8 + $0x29f8] sm:$0xff]
    %v3420 = vld [vmem:[#allocation8 + $0x2a00] sm:$0xff]
    %v3421 = vld [vmem:[#allocation8 + $0x2a08] sm:$0xff]
    %v3422 = vld [vmem:[#allocation8 + $0x2a10] sm:$0xff]
    %v3423 = vld [vmem:[#allocation8 + $0x2a18] sm:$0xff]
    %v3424 = vld [vmem:[#allocation8 + $0x2a20] sm:$0xff]
    %v3425 = vld [vmem:[#allocation8 + $0x2a28] sm:$0xff]
    %v3426 = vld [vmem:[#allocation8 + $0x2a30] sm:$0xff]
    %v3427 = vld [vmem:[#allocation8 + $0x2a38] sm:$0xff]
    %v3428 = vld [vmem:[#allocation8 + $0x2a40] sm:$0xff]
    %v3429 = vld [vmem:[#allocation8 + $0x2a48] sm:$0xff]
    %v3430 = vld [vmem:[#allocation8 + $0x2a50] sm:$0xff]
    %v3431 = vld [vmem:[#allocation8 + $0x2a58] sm:$0xff]
    %v3432 = vld [vmem:[#allocation8 + $0x2a60] sm:$0xff]
    %v3433 = vld [vmem:[#allocation8 + $0x2a68] sm:$0xff]
    %v3434 = vld [vmem:[#allocation8 + $0x2a70] sm:$0xff]
    %v3435 = vld [vmem:[#allocation8 + $0x2a78] sm:$0xff]
    %v3436 = vld [vmem:[#allocation8 + $0x2a80] sm:$0xff]
    %v3437 = vld [vmem:[#allocation8 + $0x2a88] sm:$0xff]
    %v3438 = vld [vmem:[#allocation8 + $0x2a90] sm:$0xff]
    %v3439 = vld [vmem:[#allocation8 + $0x2a98] sm:$0xff]
    %v3440 = vld [vmem:[#allocation8 + $0x2aa0] sm:$0xff]
    %v3441 = vld [vmem:[#allocation8 + $0x2aa8] sm:$0xff]
    %v3442 = vld [vmem:[#allocation8 + $0x2ab0] sm:$0xff]
    %v3443 = vld [vmem:[#allocation8 + $0x2ab8] sm:$0xff]
    %v3444 = vld [vmem:[#allocation8 + $0x2ac0] sm:$0xff]
    %v3445 = vld [vmem:[#allocation8 + $0x2ac8] sm:$0xff]
    %v3446 = vld [vmem:[#allocation8 + $0x2ad0] sm:$0xff]
    %v3447 = vld [vmem:[#allocation8 + $0x2ad8] sm:$0xff]
    %v3448 = vld [vmem:[#allocation8 + $0x2ae0] sm:$0xff]
    %v3449 = vld [vmem:[#allocation8 + $0x2ae8] sm:$0xff]
    %v3450 = vld [vmem:[#allocation8 + $0x2af0] sm:$0xff]
    %v3451 = vld [vmem:[#allocation8 + $0x2af8] sm:$0xff]
    %v3452 = vld [vmem:[#allocation8 + $0x2b00] sm:$0xff]
    %v3453 = vld [vmem:[#allocation8 + $0x2b08] sm:$0xff]
    %v3454 = vld [vmem:[#allocation8 + $0x2b10] sm:$0xff]
    %v3455 = vld [vmem:[#allocation8 + $0x2b18] sm:$0xff]
    %v3456 = vld [vmem:[#allocation8 + $0x2b20] sm:$0xff]
    %v3457 = vld [vmem:[#allocation8 + $0x2b28] sm:$0xff]
    %v3458 = vld [vmem:[#allocation8 + $0x2b30] sm:$0xff]
    %v3459 = vld [vmem:[#allocation8 + $0x2b38] sm:$0xff]
    %v3460 = vld [vmem:[#allocation8 + $0x2b40] sm:$0xff]
    %v3461 = vld [vmem:[#allocation8 + $0x2b48] sm:$0xff]
    %v3462 = vld [vmem:[#allocation8 + $0x2b50] sm:$0xff]
    %v3463 = vld [vmem:[#allocation8 + $0x2b58] sm:$0xff]
    %v3464 = vld [vmem:[#allocation8 + $0x2b60] sm:$0xff]
    %v3465 = vld [vmem:[#allocation8 + $0x2b68] sm:$0xff]
    %v3466 = vld [vmem:[#allocation8 + $0x2b70] sm:$0xff]
    %v3467 = vld [vmem:[#allocation8 + $0x2b78] sm:$0xff]
    %v3468 = vld [vmem:[#allocation8 + $0x2b80] sm:$0xff]
    %v3469 = vld [vmem:[#allocation8 + $0x2b88] sm:$0xff]
    %v3470 = vld [vmem:[#allocation8 + $0x2b90] sm:$0xff]
    %v3471 = vld [vmem:[#allocation8 + $0x2b98] sm:$0xff]
    %v3472 = vld [vmem:[#allocation8 + $0x2ba0] sm:$0xff]
    %v3473 = vld [vmem:[#allocation8 + $0x2ba8] sm:$0xff]
    %v3474 = vld [vmem:[#allocation8 + $0x2bb0] sm:$0xff]
    %v3475 = vld [vmem:[#allocation8 + $0x2bb8] sm:$0xff]
    %v3476 = vld [vmem:[#allocation8 + $0x2bc0] sm:$0xff]
    %v3477 = vld [vmem:[#allocation8 + $0x2bc8] sm:$0xff]
    %v3478 = vld [vmem:[#allocation8 + $0x2bd0] sm:$0xff]
    %v3479 = vld [vmem:[#allocation8 + $0x2bd8] sm:$0xff]
    %v3480 = vld [vmem:[#allocation8 + $0x2be0] sm:$0xff]
    %v3481 = vld [vmem:[#allocation8 + $0x2be8] sm:$0xff]
    %v3482 = vld [vmem:[#allocation8 + $0x2bf0] sm:$0xff]
    %v3483 = vld [vmem:[#allocation8 + $0x2bf8] sm:$0xff]
    %v3484 = vld [vmem:[#allocation8 + $0x2c00] sm:$0xff]
    %v3485 = vld [vmem:[#allocation8 + $0x2c08] sm:$0xff]
    %v3486 = vld [vmem:[#allocation8 + $0x2c10] sm:$0xff]
    %v3487 = vld [vmem:[#allocation8 + $0x2c18] sm:$0xff]
    %v3488 = vld [vmem:[#allocation8 + $0x2c20] sm:$0xff]
    %v3489 = vld [vmem:[#allocation8 + $0x2c28] sm:$0xff]
    %v3490 = vld [vmem:[#allocation8 + $0x2c30] sm:$0xff]
    %v3491 = vld [vmem:[#allocation8 + $0x2c38] sm:$0xff]
    %v3492 = vld [vmem:[#allocation8 + $0x2c40] sm:$0xff]
    %v3493 = vld [vmem:[#allocation8 + $0x2c48] sm:$0xff]
    %v3494 = vld [vmem:[#allocation8 + $0x2c50] sm:$0xff]
    %v3495 = vld [vmem:[#allocation8 + $0x2c58] sm:$0xff]
    %v3496 = vld [vmem:[#allocation8 + $0x2c60] sm:$0xff]
    %v3497 = vld [vmem:[#allocation8 + $0x2c68] sm:$0xff]
    %v3498 = vld [vmem:[#allocation8 + $0x2c70] sm:$0xff]
    %v3499 = vld [vmem:[#allocation8 + $0x2c78] sm:$0xff]
    %v3500 = vld [vmem:[#allocation8 + $0x2c80] sm:$0xff]
    %v3501 = vld [vmem:[#allocation8 + $0x2c88] sm:$0xff]
    %v3502 = vld [vmem:[#allocation8 + $0x2c90] sm:$0xff]
    %v3503 = vld [vmem:[#allocation8 + $0x2c98] sm:$0xff]
    %v3504 = vld [vmem:[#allocation8 + $0x2ca0] sm:$0xff]
    %v3505 = vld [vmem:[#allocation8 + $0x2ca8] sm:$0xff]
    %v3506 = vld [vmem:[#allocation8 + $0x2cb0] sm:$0xff]
    %v3507 = vld [vmem:[#allocation8 + $0x2cb8] sm:$0xff]
    %v3508 = vld [vmem:[#allocation8 + $0x2cc0] sm:$0xff]
    %v3509 = vld [vmem:[#allocation8 + $0x2cc8] sm:$0xff]
    %v3510 = vld [vmem:[#allocation8 + $0x2cd0] sm:$0xff]
    %v3511 = vld [vmem:[#allocation8 + $0x2cd8] sm:$0xff]
    %v3512 = vld [vmem:[#allocation8 + $0x2ce0] sm:$0xff]
    %v3513 = vld [vmem:[#allocation8 + $0x2ce8] sm:$0xff]
    %v3514 = vld [vmem:[#allocation8 + $0x2cf0] sm:$0xff]
    %v3515 = vld [vmem:[#allocation8 + $0x2cf8] sm:$0xff]
    %v3516 = vld [vmem:[#allocation8 + $0x2d00] sm:$0xff]
    %v3517 = vld [vmem:[#allocation8 + $0x2d08] sm:$0xff]
    %v3518 = vld [vmem:[#allocation8 + $0x2d10] sm:$0xff]
    %v3519 = vld [vmem:[#allocation8 + $0x2d18] sm:$0xff]
    %v3520 = vld [vmem:[#allocation8 + $0x2d20] sm:$0xff]
    %v3521 = vld [vmem:[#allocation8 + $0x2d28] sm:$0xff]
    %v3522 = vld [vmem:[#allocation8 + $0x2d30] sm:$0xff]
    %v3523 = vld [vmem:[#allocation8 + $0x2d38] sm:$0xff]
    %v3524 = vld [vmem:[#allocation8 + $0x2d40] sm:$0xff]
    %v3525 = vld [vmem:[#allocation8 + $0x2d48] sm:$0xff]
    %v3526 = vld [vmem:[#allocation8 + $0x2d50] sm:$0xff]
    %v3527 = vld [vmem:[#allocation8 + $0x2d58] sm:$0xff]
    %v3528 = vld [vmem:[#allocation8 + $0x2d60] sm:$0xff]
    %v3529 = vld [vmem:[#allocation8 + $0x2d68] sm:$0xff]
    %v3530 = vld [vmem:[#allocation8 + $0x2d70] sm:$0xff]
    %v3531 = vld [vmem:[#allocation8 + $0x2d78] sm:$0xff]
    %v3532 = vld [vmem:[#allocation8 + $0x2d80] sm:$0xff]
    %v3533 = vld [vmem:[#allocation8 + $0x2d88] sm:$0xff]
    %v3534 = vld [vmem:[#allocation8 + $0x2d90] sm:$0xff]
    %v3535 = vld [vmem:[#allocation8 + $0x2d98] sm:$0xff]
    %v3536 = vld [vmem:[#allocation8 + $0x2da0] sm:$0xff]
    %v3537 = vld [vmem:[#allocation8 + $0x2da8] sm:$0xff]
    %v3538 = vld [vmem:[#allocation8 + $0x2db0] sm:$0xff]
    %v3539 = vld [vmem:[#allocation8 + $0x2db8] sm:$0xff]
    %v3540 = vld [vmem:[#allocation8 + $0x2dc0] sm:$0xff]
    %v3541 = vld [vmem:[#allocation8 + $0x2dc8] sm:$0xff]
    %v3542 = vld [vmem:[#allocation8 + $0x2dd0] sm:$0xff]
    %v3543 = vld [vmem:[#allocation8 + $0x2dd8] sm:$0xff]
    %v3544 = vld [vmem:[#allocation8 + $0x2de0] sm:$0xff]
    %v3545 = vld [vmem:[#allocation8 + $0x2de8] sm:$0xff]
    %v3546 = vld [vmem:[#allocation8 + $0x2df0] sm:$0xff]
    %v3547 = vld [vmem:[#allocation8 + $0x2df8] sm:$0xff]
    %v3548 = vld [vmem:[#allocation8 + $0x2e00] sm:$0xff]
    %v3549 = vld [vmem:[#allocation8 + $0x2e08] sm:$0xff]
    %v3550 = vld [vmem:[#allocation8 + $0x2e10] sm:$0xff]
    %v3551 = vld [vmem:[#allocation8 + $0x2e18] sm:$0xff]
    %v3552 = vld [vmem:[#allocation8 + $0x2e20] sm:$0xff]
    %v3553 = vld [vmem:[#allocation8 + $0x2e28] sm:$0xff]
    %v3554 = vld [vmem:[#allocation8 + $0x2e30] sm:$0xff]
    %v3555 = vld [vmem:[#allocation8 + $0x2e38] sm:$0xff]
    %v3556 = vld [vmem:[#allocation8 + $0x2e40] sm:$0xff]
    %v3557 = vld [vmem:[#allocation8 + $0x2e48] sm:$0xff]
    %v3558 = vld [vmem:[#allocation8 + $0x2e50] sm:$0xff]
    %v3559 = vld [vmem:[#allocation8 + $0x2e58] sm:$0xff]
    %v3560 = vld [vmem:[#allocation8 + $0x2e60] sm:$0xff]
    %v3561 = vld [vmem:[#allocation8 + $0x2e68] sm:$0xff]
    %v3562 = vld [vmem:[#allocation8 + $0x2e70] sm:$0xff]
    %v3563 = vld [vmem:[#allocation8 + $0x2e78] sm:$0xff]
    %v3564 = vld [vmem:[#allocation8 + $0x2e80] sm:$0xff]
    %v3565 = vld [vmem:[#allocation8 + $0x2e88] sm:$0xff]
    %v3566 = vld [vmem:[#allocation8 + $0x2e90] sm:$0xff]
    %v3567 = vld [vmem:[#allocation8 + $0x2e98] sm:$0xff]
    %v3568 = vld [vmem:[#allocation8 + $0x2ea0] sm:$0xff]
    %v3569 = vld [vmem:[#allocation8 + $0x2ea8] sm:$0xff]
    %v3570 = vld [vmem:[#allocation8 + $0x2eb0] sm:$0xff]
    %v3571 = vld [vmem:[#allocation8 + $0x2eb8] sm:$0xff]
    %v3572 = vld [vmem:[#allocation8 + $0x2ec0] sm:$0xff]
    %v3573 = vld [vmem:[#allocation8 + $0x2ec8] sm:$0xff]
    %v3574 = vld [vmem:[#allocation8 + $0x2ed0] sm:$0xff]
    %v3575 = vld [vmem:[#allocation8 + $0x2ed8] sm:$0xff]
    %v3576 = vld [vmem:[#allocation8 + $0x2ee0] sm:$0xff]
    %v3577 = vld [vmem:[#allocation8 + $0x2ee8] sm:$0xff]
    %v3578 = vld [vmem:[#allocation8 + $0x2ef0] sm:$0xff]
    %v3579 = vld [vmem:[#allocation8 + $0x2ef8] sm:$0xff]
    %v3580 = vld [vmem:[#allocation8 + $0x2f00] sm:$0xff]
    %v3581 = vld [vmem:[#allocation8 + $0x2f08] sm:$0xff]
    %v3582 = vld [vmem:[#allocation8 + $0x2f10] sm:$0xff]
    %v3583 = vld [vmem:[#allocation8 + $0x2f18] sm:$0xff]
    %v3584 = vld [vmem:[#allocation8 + $0x2f20] sm:$0xff]
    %v3585 = vld [vmem:[#allocation8 + $0x2f28] sm:$0xff]
    %v3586 = vld [vmem:[#allocation8 + $0x2f30] sm:$0xff]
    %v3587 = vld [vmem:[#allocation8 + $0x2f38] sm:$0xff]
    %v3588 = vld [vmem:[#allocation8 + $0x2f40] sm:$0xff]
    %v3589 = vld [vmem:[#allocation8 + $0x2f48] sm:$0xff]
    %v3590 = vld [vmem:[#allocation8 + $0x2f50] sm:$0xff]
    %v3591 = vld [vmem:[#allocation8 + $0x2f58] sm:$0xff]
    %v3592 = vld [vmem:[#allocation8 + $0x2f60] sm:$0xff]
    %v3593 = vld [vmem:[#allocation8 + $0x2f68] sm:$0xff]
    %v3594 = vld [vmem:[#allocation8 + $0x2f70] sm:$0xff]
    %v3595 = vld [vmem:[#allocation8 + $0x2f78] sm:$0xff]
    %v3596 = vld [vmem:[#allocation8 + $0x2f80] sm:$0xff]
    %v3597 = vld [vmem:[#allocation8 + $0x2f88] sm:$0xff]
    %v3598 = vld [vmem:[#allocation8 + $0x2f90] sm:$0xff]
    %v3599 = vld [vmem:[#allocation8 + $0x2f98] sm:$0xff]
    %v3600 = vld [vmem:[#allocation8 + $0x2fa0] sm:$0xff]
    %v3601 = vld [vmem:[#allocation8 + $0x2fa8] sm:$0xff]
    %v3602 = vld [vmem:[#allocation8 + $0x2fb0] sm:$0xff]
    %v3603 = vld [vmem:[#allocation8 + $0x2fb8] sm:$0xff]
    %v3604 = vld [vmem:[#allocation8 + $0x2fc0] sm:$0xff]
    %v3605 = vld [vmem:[#allocation8 + $0x2fc8] sm:$0xff]
    %v3606 = vld [vmem:[#allocation8 + $0x2fd0] sm:$0xff]
    %v3607 = vld [vmem:[#allocation8 + $0x2fd8] sm:$0xff]
    %v3608 = vld [vmem:[#allocation8 + $0x2fe0] sm:$0xff]
    %v3609 = vld [vmem:[#allocation8 + $0x2fe8] sm:$0xff]
    %v3610 = vld [vmem:[#allocation8 + $0x2ff0] sm:$0xff]
    %v3611 = vld [vmem:[#allocation8 + $0x2ff8] sm:$0xff]
    %v3612 = vld [vmem:[#allocation8 + $0x3000] sm:$0xff]
    %v3613 = vld [vmem:[#allocation8 + $0x3008] sm:$0xff]
    %v3614 = vld [vmem:[#allocation8 + $0x3010] sm:$0xff]
    %v3615 = vld [vmem:[#allocation8 + $0x3018] sm:$0xff]
    %v3616 = vld [vmem:[#allocation8 + $0x3020] sm:$0xff]
    %v3617 = vld [vmem:[#allocation8 + $0x3028] sm:$0xff]
    %v3618 = vld [vmem:[#allocation8 + $0x3030] sm:$0xff]
    %v3619 = vld [vmem:[#allocation8 + $0x3038] sm:$0xff]
    %v3620 = vld [vmem:[#allocation8 + $0x3040] sm:$0xff]
    %v3621 = vld [vmem:[#allocation8 + $0x3048] sm:$0xff]
    %v3622 = vld [vmem:[#allocation8 + $0x3050] sm:$0xff]
    %v3623 = vld [vmem:[#allocation8 + $0x3058] sm:$0xff]
    %v3624 = vld [vmem:[#allocation8 + $0x3060] sm:$0xff]
    %v3625 = vld [vmem:[#allocation8 + $0x3068] sm:$0xff]
    %v3626 = vld [vmem:[#allocation8 + $0x3070] sm:$0xff]
    %v3627 = vld [vmem:[#allocation8 + $0x3078] sm:$0xff]
    %v3628 = vld [vmem:[#allocation8 + $0x3080] sm:$0xff]
    %v3629 = vld [vmem:[#allocation8 + $0x3088] sm:$0xff]
    %v3630 = vld [vmem:[#allocation8 + $0x3090] sm:$0xff]
    %v3631 = vld [vmem:[#allocation8 + $0x3098] sm:$0xff]
    %v3632 = vld [vmem:[#allocation8 + $0x30a0] sm:$0xff]
    %v3633 = vld [vmem:[#allocation8 + $0x30a8] sm:$0xff]
    %v3634 = vld [vmem:[#allocation8 + $0x30b0] sm:$0xff]
    %v3635 = vld [vmem:[#allocation8 + $0x30b8] sm:$0xff]
    %v3636 = vld [vmem:[#allocation8 + $0x30c0] sm:$0xff]
    %v3637 = vld [vmem:[#allocation8 + $0x30c8] sm:$0xff]
    %v3638 = vld [vmem:[#allocation8 + $0x30d0] sm:$0xff]
    %v3639 = vld [vmem:[#allocation8 + $0x30d8] sm:$0xff]
    %v3640 = vld [vmem:[#allocation8 + $0x30e0] sm:$0xff]
    %v3641 = vld [vmem:[#allocation8 + $0x30e8] sm:$0xff]
    %v3642 = vld [vmem:[#allocation8 + $0x30f0] sm:$0xff]
    %v3643 = vld [vmem:[#allocation8 + $0x30f8] sm:$0xff]
    %v3644 = vld [vmem:[#allocation8 + $0x3100] sm:$0xff]
    %v3645 = vld [vmem:[#allocation8 + $0x3108] sm:$0xff]
    %v3646 = vld [vmem:[#allocation8 + $0x3110] sm:$0xff]
    %v3647 = vld [vmem:[#allocation8 + $0x3118] sm:$0xff]
    %v3648 = vld [vmem:[#allocation8 + $0x3120] sm:$0xff]
    %v3649 = vld [vmem:[#allocation8 + $0x3128] sm:$0xff]
    %v3650 = vld [vmem:[#allocation8 + $0x3130] sm:$0xff]
    %v3651 = vld [vmem:[#allocation8 + $0x3138] sm:$0xff]
    %v3652 = vld [vmem:[#allocation8 + $0x3140] sm:$0xff]
    %v3653 = vld [vmem:[#allocation8 + $0x3148] sm:$0xff]
    %v3654 = vld [vmem:[#allocation8 + $0x3150] sm:$0xff]
    %v3655 = vld [vmem:[#allocation8 + $0x3158] sm:$0xff]
    %v3656 = vld [vmem:[#allocation8 + $0x3160] sm:$0xff]
    %v3657 = vld [vmem:[#allocation8 + $0x3168] sm:$0xff]
    %v3658 = vld [vmem:[#allocation8 + $0x3170] sm:$0xff]
    %v3659 = vld [vmem:[#allocation8 + $0x3178] sm:$0xff]
    %v3660 = vld [vmem:[#allocation8 + $0x3180] sm:$0xff]
    %v3661 = vld [vmem:[#allocation8 + $0x3188] sm:$0xff]
    %v3662 = vld [vmem:[#allocation8 + $0x3190] sm:$0xff]
    %v3663 = vld [vmem:[#allocation8 + $0x3198] sm:$0xff]
    %v3664 = vld [vmem:[#allocation8 + $0x31a0] sm:$0xff]
    %v3665 = vld [vmem:[#allocation8 + $0x31a8] sm:$0xff]
    %v3666 = vld [vmem:[#allocation8 + $0x31b0] sm:$0xff]
    %v3667 = vld [vmem:[#allocation8 + $0x31b8] sm:$0xff]
    %v3668 = vld [vmem:[#allocation8 + $0x31c0] sm:$0xff]
    %v3669 = vld [vmem:[#allocation8 + $0x31c8] sm:$0xff]
    %v3670 = vld [vmem:[#allocation8 + $0x31d0] sm:$0xff]
    %v3671 = vld [vmem:[#allocation8 + $0x31d8] sm:$0xff]
    %v3672 = vld [vmem:[#allocation8 + $0x31e0] sm:$0xff]
    %v3673 = vld [vmem:[#allocation8 + $0x31e8] sm:$0xff]
    %v3674 = vld [vmem:[#allocation8 + $0x31f0] sm:$0xff]
    %v3675 = vld [vmem:[#allocation8 + $0x31f8] sm:$0xff]
    %v3676 = vld [vmem:[#allocation10] sm:$0xff]
    %v3677 = vld [vmem:[#allocation10 + $0x8] sm:$0x3]
    %v3680 = vlaneseq
    %v3681 = vshrl.u32 %v3680, 7
    %v3682 = vsub.s32 0, %v3681
    %v3683 = vrot.slane %v3676, %v3682
    %v3684 = vlaneseq
    %v3685 = vshrl.u32 %v3684, 7
    %v3686 = vsub.s32 1, %v3685
    %v3687 = vrot.slane %v3676, %v3686
    %v3688 = vlaneseq
    %v3689 = vshrl.u32 %v3688, 7
    %v3690 = vsub.s32 2, %v3689
    %v3691 = vrot.slane %v3676, %v3690
    %v3692 = vlaneseq
    %v3693 = vshrl.u32 %v3692, 7
    %v3694 = vsub.s32 3, %v3693
    %v3695 = vrot.slane %v3676, %v3694
    %v3696 = vlaneseq
    %v3697 = vshrl.u32 %v3696, 7
    %v3698 = vsub.s32 4, %v3697
    %v3699 = vrot.slane %v3676, %v3698
    %v3700 = vlaneseq
    %v3701 = vshrl.u32 %v3700, 7
    %v3702 = vsub.s32 5, %v3701
    %v3703 = vrot.slane %v3676, %v3702
    %v3704 = vlaneseq
    %v3705 = vshrl.u32 %v3704, 7
    %v3706 = vsub.s32 6, %v3705
    %v3707 = vrot.slane %v3676, %v3706
    %v3708 = vlaneseq
    %v3709 = vshrl.u32 %v3708, 7
    %v3710 = vsub.s32 7, %v3709
    %v3711 = vrot.slane %v3676, %v3710
    %v3712 = vlaneseq
    %v3713 = vshrl.u32 %v3712, 7
    %v3714 = vsub.s32 0, %v3713
    %v3715 = vrot.slane %v3677, %v3714
    %v3716 = vlaneseq
    %v3717 = vshrl.u32 %v3716, 7
    %v3718 = vsub.s32 1, %v3717
    %v3719 = vrot.slane %v3677, %v3718
    %3730 = vmatprep.subr.mxu0 %v2077
    %3731 = vmatpush1.msra.mxu0 %v2076
    %3732 = vmatprep.subr.mxu0 %v2087
    %3733 = vmatpush1.msra.mxu0 %v2086
    %3734 = vmatprep.subr.mxu0 %v2097
    %3735 = vmatpush1.msra.mxu0 %v2096
    %3736 = vmatprep.subr.mxu0 %v2107
    %3737 = vmatpush1.msra.mxu0 %v2106
    %3738 = vmatprep.subr.mxu0 %v2117
    %3739 = vmatpush1.msra.mxu0 %v2116
    %3740 = vmatprep.subr.mxu0 %v2127
    %3741 = vmatpush1.msra.mxu0 %v2126
    %3742 = vmatprep.subr.mxu0 %v2137
    %3743 = vmatpush1.msra.mxu0 %v2136
    %3744 = vmatprep.subr.mxu0 %v2147
    %3745 = vmatpush1.msra.mxu0 %v2146
    %3746 = vmatprep.subr.mxu0 %v2157
    %3747 = vmatpush1.msra.mxu0 %v2156
    %3748 = vmatprep.subr.mxu0 %v2167
    %3749 = vmatpush1.msra.mxu0 %v2166
    %3750 = vmatprep.subr.mxu0 %v2177
    %3751 = vmatpush1.msra.mxu0 %v2176
    %3752 = vmatprep.subr.mxu0 %v2187
    %3753 = vmatpush1.msra.mxu0 %v2186
    %3754 = vmatprep.subr.mxu0 %v2197
    %3755 = vmatpush1.msra.mxu0 %v2196
    %3756 = vmatprep.subr.mxu0 %v2207
    %3757 = vmatpush1.msra.mxu0 %v2206
    %3758 = vmatprep.subr.mxu0 %v2217
    %3759 = vmatpush1.msra.mxu0 %v2216
    %3760 = vmatprep.subr.mxu0 %v2227
    %3761 = vmatpush1.msra.mxu0 %v2226
    %3762 = vmatprep.subr.mxu0 %v2237
    %3763 = vmatpush1.msra.mxu0 %v2236
    %3764 = vmatprep.subr.mxu0 %v2247
    %3765 = vmatpush1.msra.mxu0 %v2246
    %3766 = vmatprep.subr.mxu0 %v2257
    %3767 = vmatpush1.msra.mxu0 %v2256
    %3768 = vmatprep.subr.mxu0 %v2267
    %3769 = vmatpush1.msra.mxu0 %v2266
    %3770 = vmatprep.subr.mxu0 %v2277
    %3771 = vmatpush1.msra.mxu0 %v2276
    %3772 = vmatprep.subr.mxu0 %v2287
    %3773 = vmatpush1.msra.mxu0 %v2286
    %3774 = vmatprep.subr.mxu0 %v2297
    %3775 = vmatpush1.msra.mxu0 %v2296
    %3776 = vmatprep.subr.mxu0 %v2307
    %3777 = vmatpush1.msra.mxu0 %v2306
    %3778 = vmatprep.subr.mxu0 %v2317
    %3779 = vmatpush1.msra.mxu0 %v2316
    %3780 = vmatprep.subr.mxu0 %v2327
    %3781 = vmatpush1.msra.mxu0 %v2326
    %3782 = vmatprep.subr.mxu0 %v2337
    %3783 = vmatpush1.msra.mxu0 %v2336
    %3784 = vmatprep.subr.mxu0 %v2347
    %3785 = vmatpush1.msra.mxu0 %v2346
    %3786 = vmatprep.subr.mxu0 %v2357
    %3787 = vmatpush1.msra.mxu0 %v2356
    %3788 = vmatprep.subr.mxu0 %v2367
    %3789 = vmatpush1.msra.mxu0 %v2366
    %3790 = vmatprep.subr.mxu0 %v2377
    %3791 = vmatpush1.msra.mxu0 %v2376
    %3792 = vmatprep.subr.mxu0 %v2387
    %3793 = vmatpush1.msra.mxu0 %v2386
    %3794 = vmatprep.mubr.f32.mxu0 %v2067
    %3795 = vmatmul.mubr.f32.gmra.mrb[0].mxu0 %v2066
    %v3796 = vpop.f32.mrb[0].mxu0
    %v3797 = vadd.f32 %v3683, %v3796
    %v3798 = vpop.f32.mrb[0].mxu0
    %v3799 = vadd.f32 %v3687, %v3798
    %3800 = vdwg.mxu0
    %3801 = vmatprep.subr.mxu0 %v2397
    %3802 = vmatpush1.msra.mxu0 %v2396
    %3803 = vmatprep.subr.mxu0 %v2407
    %3804 = vmatpush1.msra.mxu0 %v2406
    %3805 = vmatprep.subr.mxu0 %v2417
    %3806 = vmatpush1.msra.mxu0 %v2416
    %3807 = vmatprep.subr.mxu0 %v2427
    %3808 = vmatpush1.msra.mxu0 %v2426
    %3809 = vmatprep.subr.mxu0 %v2437
    %3810 = vmatpush1.msra.mxu0 %v2436
    %3811 = vmatprep.subr.mxu0 %v2447
    %3812 = vmatpush1.msra.mxu0 %v2446
    %3813 = vmatprep.subr.mxu0 %v2457
    %3814 = vmatpush1.msra.mxu0 %v2456
    %3815 = vmatprep.subr.mxu0 %v2467
    %3816 = vmatpush1.msra.mxu0 %v2466
    %3817 = vmatprep.subr.mxu0 %v2477
    %3818 = vmatpush1.msra.mxu0 %v2476
    %3819 = vmatprep.subr.mxu0 %v2487
    %3820 = vmatpush1.msra.mxu0 %v2486
    %3821 = vmatprep.subr.mxu0 %v2497
    %3822 = vmatpush1.msra.mxu0 %v2496
    %3823 = vmatprep.subr.mxu0 %v2507
    %3824 = vmatpush1.msra.mxu0 %v2506
    %3825 = vmatprep.subr.mxu0 %v2517
    %3826 = vmatpush1.msra.mxu0 %v2516
    %3827 = vmatprep.subr.mxu0 %v2527
    %3828 = vmatpush1.msra.mxu0 %v2526
    %3829 = vmatprep.subr.mxu0 %v2537
    %3830 = vmatpush1.msra.mxu0 %v2536
    %3831 = vmatprep.subr.mxu0 %v2547
    %3832 = vmatpush1.msra.mxu0 %v2546
    %3833 = vmatprep.subr.mxu0 %v2557
    %3834 = vmatpush1.msra.mxu0 %v2556
    %3835 = vmatprep.subr.mxu0 %v2567
    %3836 = vmatpush1.msra.mxu0 %v2566
    %3837 = vmatprep.subr.mxu0 %v2577
    %3838 = vmatpush1.msra.mxu0 %v2576
    %3839 = vmatprep.subr.mxu0 %v2587
    %3840 = vmatpush1.msra.mxu0 %v2586
    %3841 = vmatprep.subr.mxu0 %v2597
    %3842 = vmatpush1.msra.mxu0 %v2596
    %3843 = vmatprep.subr.mxu0 %v2607
    %3844 = vmatpush1.msra.mxu0 %v2606
    %3845 = vmatprep.subr.mxu0 %v2617
    %3846 = vmatpush1.msra.mxu0 %v2616
    %3847 = vmatprep.subr.mxu0 %v2627
    %3848 = vmatpush1.msra.mxu0 %v2626
    %3849 = vmatprep.subr.mxu0 %v2637
    %3850 = vmatpush1.msra.mxu0 %v2636
    %3851 = vmatprep.subr.mxu0 %v2647
    %3852 = vmatpush1.msra.mxu0 %v2646
    %3853 = vmatprep.subr.mxu0 %v2657
    %3854 = vmatpush1.msra.mxu0 %v2656
    %3855 = vmatprep.subr.mxu0 %v2667
    %3856 = vmatpush1.msra.mxu0 %v2666
    %3857 = vmatprep.subr.mxu0 %v2677
    %3858 = vmatpush1.msra.mxu0 %v2676
    %3859 = vmatprep.subr.mxu0 %v2687
    %3860 = vmatpush1.msra.mxu0 %v2686
    %3861 = vmatprep.subr.mxu0 %v2697
    %3862 = vmatpush1.msra.mxu0 %v2696
    %3863 = vmatprep.subr.mxu0 %v2707
    %3864 = vmatpush1.msra.mxu0 %v2706
    %3865 = vmatprep.mubr.f32.mxu0 %v2069
    %3866 = vmatmul.mubr.f32.gmra.mrb[0].mxu0 %v2068
    %v3867 = vpop.f32.mrb[0].mxu0
    %v3868 = vadd.f32 %v3797, %v3867
    %v3869 = vpop.f32.mrb[0].mxu0
    %v3870 = vadd.f32 %v3799, %v3869
    %3871 = vdwg.mxu0
    %3872 = vmatprep.subr.mxu0 %v2717
    %3873 = vmatpush1.msra.mxu0 %v2716
    %3874 = vmatprep.subr.mxu0 %v2727
    %3875 = vmatpush1.msra.mxu0 %v2726
    %3876 = vmatprep.subr.mxu0 %v2737
    %3877 = vmatpush1.msra.mxu0 %v2736
    %3878 = vmatprep.subr.mxu0 %v2747
    %3879 = vmatpush1.msra.mxu0 %v2746
    %3880 = vmatprep.subr.mxu0 %v2757
    %3881 = vmatpush1.msra.mxu0 %v2756
    %3882 = vmatprep.subr.mxu0 %v2767
    %3883 = vmatpush1.msra.mxu0 %v2766
    %3884 = vmatprep.subr.mxu0 %v2777
    %3885 = vmatpush1.msra.mxu0 %v2776
    %3886 = vmatprep.subr.mxu0 %v2787
    %3887 = vmatpush1.msra.mxu0 %v2786
    %3888 = vmatprep.subr.mxu0 %v2797
    %3889 = vmatpush1.msra.mxu0 %v2796
    %3890 = vmatprep.subr.mxu0 %v2807
    %3891 = vmatpush1.msra.mxu0 %v2806
    %3892 = vmatprep.subr.mxu0 %v2817
    %3893 = vmatpush1.msra.mxu0 %v2816
    %3894 = vmatprep.subr.mxu0 %v2827
    %3895 = vmatpush1.msra.mxu0 %v2826
    %3896 = vmatprep.subr.mxu0 %v2837
    %3897 = vmatpush1.msra.mxu0 %v2836
    %3898 = vmatprep.subr.mxu0 %v2847
    %3899 = vmatpush1.msra.mxu0 %v2846
    %3900 = vmatprep.subr.mxu0 %v2857
    %3901 = vmatpush1.msra.mxu0 %v2856
    %3902 = vmatprep.subr.mxu0 %v2867
    %3903 = vmatpush1.msra.mxu0 %v2866
    %3904 = vmatprep.subr.mxu0 %v2877
    %3905 = vmatpush1.msra.mxu0 %v2876
    %3906 = vmatprep.subr.mxu0 %v2887
    %3907 = vmatpush1.msra.mxu0 %v2886
    %3908 = vmatprep.subr.mxu0 %v2897
    %3909 = vmatpush1.msra.mxu0 %v2896
    %3910 = vmatprep.subr.mxu0 %v2907
    %3911 = vmatpush1.msra.mxu0 %v2906
    %3912 = vmatprep.subr.mxu0 %v2917
    %3913 = vmatpush1.msra.mxu0 %v2916
    %3914 = vmatprep.subr.mxu0 %v2927
    %3915 = vmatpush1.msra.mxu0 %v2926
    %3916 = vmatprep.subr.mxu0 %v2937
    %3917 = vmatpush1.msra.mxu0 %v2936
    %3918 = vmatprep.subr.mxu0 %v2947
    %3919 = vmatpush1.msra.mxu0 %v2946
    %3920 = vmatprep.subr.mxu0 %v2957
    %3921 = vmatpush1.msra.mxu0 %v2956
    %3922 = vmatprep.subr.mxu0 %v2967
    %3923 = vmatpush1.msra.mxu0 %v2966
    %3924 = vmatprep.subr.mxu0 %v2977
    %3925 = vmatpush1.msra.mxu0 %v2976
    %3926 = vmatprep.subr.mxu0 %v2987
    %3927 = vmatpush1.msra.mxu0 %v2986
    %3928 = vmatprep.subr.mxu0 %v2997
    %3929 = vmatpush1.msra.mxu0 %v2996
    %3930 = vmatprep.subr.mxu0 %v3007
    %3931 = vmatpush1.msra.mxu0 %v3006
    %3932 = vmatprep.subr.mxu0 %v3017
    %3933 = vmatpush1.msra.mxu0 %v3016
    %3934 = vmatprep.subr.mxu0 %v3027
    %3935 = vmatpush1.msra.mxu0 %v3026
    %3936 = vmatprep.mubr.f32.mxu0 %v2071
    %3937 = vmatmul.mubr.f32.gmra.mrb[0].mxu0 %v2070
    %v3938 = vpop.f32.mrb[0].mxu0
    %v3939 = vadd.f32 %v3868, %v3938
    %v3940 = vpop.f32.mrb[0].mxu0
    %v3941 = vadd.f32 %v3870, %v3940
    %3942 = vdwg.mxu0
    %3943 = vmatprep.subr.mxu0 %v3037
    %3944 = vmatpush1.msra.mxu0 %v3036
    %3945 = vmatprep.subr.mxu0 %v3047
    %3946 = vmatpush1.msra.mxu0 %v3046
    %3947 = vmatprep.subr.mxu0 %v3057
    %3948 = vmatpush1.msra.mxu0 %v3056
    %3949 = vmatprep.subr.mxu0 %v3067
    %3950 = vmatpush1.msra.mxu0 %v3066
    %3951 = vmatprep.subr.mxu0 %v3077
    %3952 = vmatpush1.msra.mxu0 %v3076
    %3953 = vmatprep.subr.mxu0 %v3087
    %3954 = vmatpush1.msra.mxu0 %v3086
    %3955 = vmatprep.subr.mxu0 %v3097
    %3956 = vmatpush1.msra.mxu0 %v3096
    %3957 = vmatprep.subr.mxu0 %v3107
    %3958 = vmatpush1.msra.mxu0 %v3106
    %3959 = vmatprep.subr.mxu0 %v3117
    %3960 = vmatpush1.msra.mxu0 %v3116
    %3961 = vmatprep.subr.mxu0 %v3127
    %3962 = vmatpush1.msra.mxu0 %v3126
    %3963 = vmatprep.subr.mxu0 %v3137
    %3964 = vmatpush1.msra.mxu0 %v3136
    %3965 = vmatprep.subr.mxu0 %v3147
    %3966 = vmatpush1.msra.mxu0 %v3146
    %3967 = vmatprep.subr.mxu0 %v3157
    %3968 = vmatpush1.msra.mxu0 %v3156
    %3969 = vmatprep.subr.mxu0 %v3167
    %3970 = vmatpush1.msra.mxu0 %v3166
    %3971 = vmatprep.subr.mxu0 %v3177
    %3972 = vmatpush1.msra.mxu0 %v3176
    %3973 = vmatprep.subr.mxu0 %v3187
    %3974 = vmatpush1.msra.mxu0 %v3186
    %3975 = vmatprep.subr.mxu0 %v3197
    %3976 = vmatpush1.msra.mxu0 %v3196
    %3977 = vmatprep.subr.mxu0 %v3207
    %3978 = vmatpush1.msra.mxu0 %v3206
    %3979 = vmatprep.subr.mxu0 %v3217
    %3980 = vmatpush1.msra.mxu0 %v3216
    %3981 = vmatprep.subr.mxu0 %v3227
    %3982 = vmatpush1.msra.mxu0 %v3226
    %3983 = vmatprep.subr.mxu0 %v3237
    %3984 = vmatpush1.msra.mxu0 %v3236
    %3985 = vmatprep.subr.mxu0 %v3247
    %3986 = vmatpush1.msra.mxu0 %v3246
    %3987 = vmatprep.subr.mxu0 %v3257
    %3988 = vmatpush1.msra.mxu0 %v3256
    %3989 = vmatprep.subr.mxu0 %v3267
    %3990 = vmatpush1.msra.mxu0 %v3266
    %3991 = vmatprep.subr.mxu0 %v3277
    %3992 = vmatpush1.msra.mxu0 %v3276
    %3993 = vmatprep.subr.mxu0 %v3287
    %3994 = vmatpush1.msra.mxu0 %v3286
    %3995 = vmatprep.subr.mxu0 %v3297
    %3996 = vmatpush1.msra.mxu0 %v3296
    %3997 = vmatprep.subr.mxu0 %v3307
    %3998 = vmatpush1.msra.mxu0 %v3306
    %3999 = vmatprep.subr.mxu0 %v3317
    %4000 = vmatpush1.msra.mxu0 %v3316
    %4001 = vmatprep.subr.mxu0 %v3327
    %4002 = vmatpush1.msra.mxu0 %v3326
    %4003 = vmatprep.subr.mxu0 %v3337
    %4004 = vmatpush1.msra.mxu0 %v3336
    %4005 = vmatprep.subr.mxu0 %v3347
    %4006 = vmatpush1.msra.mxu0 %v3346
    %4007 = vmatprep.mubr.f32.mxu0 %v2073
    %4008 = vmatmul.mubr.f32.gmra.mrb[0].mxu0 %v2072
    %v4009 = vpop.f32.mrb[0].mxu0
    %v4010 = vadd.f32 %v3939, %v4009
    %v4011 = vpop.f32.mrb[0].mxu0
    %v4012 = vadd.f32 %v3941, %v4011
    %4013 = vdwg.mxu0
    %4014 = vmatprep.subr.mxu0 %v3357
    %4015 = vmatpush1.msra.mxu0 %v3356
    %4016 = vmatprep.subr.mxu0 %v3367
    %4017 = vmatpush1.msra.mxu0 %v3366
    %4018 = vmatprep.subr.mxu0 %v3377
    %4019 = vmatpush1.msra.mxu0 %v3376
    %4020 = vmatprep.subr.mxu0 %v3387
    %4021 = vmatpush1.msra.mxu0 %v3386
    %4022 = vmatprep.subr.mxu0 %v3397
    %4023 = vmatpush1.msra.mxu0 %v3396
    %4024 = vmatprep.subr.mxu0 %v3407
    %4025 = vmatpush1.msra.mxu0 %v3406
    %4026 = vmatprep.subr.mxu0 %v3417
    %4027 = vmatpush1.msra.mxu0 %v3416
    %4028 = vmatprep.subr.mxu0 %v3427
    %4029 = vmatpush1.msra.mxu0 %v3426
    %4030 = vmatprep.subr.mxu0 %v3437
    %4031 = vmatpush1.msra.mxu0 %v3436
    %4032 = vmatprep.subr.mxu0 %v3447
    %4033 = vmatpush1.msra.mxu0 %v3446
    %4034 = vmatprep.subr.mxu0 %v3457
    %4035 = vmatpush1.msra.mxu0 %v3456
    %4036 = vmatprep.subr.mxu0 %v3467
    %4037 = vmatpush1.msra.mxu0 %v3466
    %4038 = vmatprep.subr.mxu0 %v3477
    %4039 = vmatpush1.msra.mxu0 %v3476
    %4040 = vmatprep.subr.mxu0 %v3487
    %4041 = vmatpush1.msra.mxu0 %v3486
    %4042 = vmatprep.subr.mxu0 %v3497
    %4043 = vmatpush1.msra.mxu0 %v3496
    %4044 = vmatprep.subr.mxu0 %v3507
    %4045 = vmatpush1.msra.mxu0 %v3506
    %4046 = vmatprep.subr.mxu0 %v3517
    %4047 = vmatpush1.msra.mxu0 %v3516
    %4048 = vmatprep.subr.mxu0 %v3527
    %4049 = vmatpush1.msra.mxu0 %v3526
    %4050 = vmatprep.subr.mxu0 %v3537
    %4051 = vmatpush1.msra.mxu0 %v3536
    %4052 = vmatprep.subr.mxu0 %v3547
    %4053 = vmatpush1.msra.mxu0 %v3546
    %4054 = vmatprep.subr.mxu0 %v3557
    %4055 = vmatpush1.msra.mxu0 %v3556
    %4056 = vmatprep.subr.mxu0 %v3567
    %4057 = vmatpush1.msra.mxu0 %v3566
    %4058 = vmatprep.subr.mxu0 %v3577
    %4059 = vmatpush1.msra.mxu0 %v3576
    %4060 = vmatprep.subr.mxu0 %v3587
    %4061 = vmatpush1.msra.mxu0 %v3586
    %4062 = vmatprep.subr.mxu0 %v3597
    %4063 = vmatpush1.msra.mxu0 %v3596
    %4064 = vmatprep.subr.mxu0 %v3607
    %4065 = vmatpush1.msra.mxu0 %v3606
    %4066 = vmatprep.subr.mxu0 %v3617
    %4067 = vmatpush1.msra.mxu0 %v3616
    %4068 = vmatprep.subr.mxu0 %v3627
    %4069 = vmatpush1.msra.mxu0 %v3626
    %4070 = vmatprep.subr.mxu0 %v3637
    %4071 = vmatpush1.msra.mxu0 %v3636
    %4072 = vmatprep.subr.mxu0 %v3647
    %4073 = vmatpush1.msra.mxu0 %v3646
    %4074 = vmatprep.subr.mxu0 %v3657
    %4075 = vmatpush1.msra.mxu0 %v3656
    %4076 = vmatprep.subr.mxu0 %v3667
    %4077 = vmatpush1.msra.mxu0 %v3666
    %4078 = vmatprep.mubr.f32.mxu0 %v2075
    %4079 = vmatmul.mubr.f32.gmra.mrb[0].mxu0 %v2074
    %v4080 = vpop.f32.mrb[0].mxu0
    %v4081 = vadd.f32 %v4010, %v4080
    %v4082 = vpop.f32.mrb[0].mxu0
    %v4083 = vadd.f32 %v4012, %v4082
    %4084 = vdwg.mxu0
    %4085 = vmatprep.subr.mxu0 %v2079
    %4086 = vmatpush1.msra.mxu0 %v2078
    %4087 = vmatprep.subr.mxu0 %v2089
    %4088 = vmatpush1.msra.mxu0 %v2088
    %4089 = vmatprep.subr.mxu0 %v2099
    %4090 = vmatpush1.msra.mxu0 %v2098
    %4091 = vmatprep.subr.mxu0 %v2109
    %4092 = vmatpush1.msra.mxu0 %v2108
    %4093 = vmatprep.subr.mxu0 %v2119
    %4094 = vmatpush1.msra.mxu0 %v2118
    %4095 = vmatprep.subr.mxu0 %v2129
    %4096 = vmatpush1.msra.mxu0 %v2128
    %4097 = vmatprep.subr.mxu0 %v2139
    %4098 = vmatpush1.msra.mxu0 %v2138
    %4099 = vmatprep.subr.mxu0 %v2149
    %4100 = vmatpush1.msra.mxu0 %v2148
    %4101 = vmatprep.subr.mxu0 %v2159
    %4102 = vmatpush1.msra.mxu0 %v2158
    %4103 = vmatprep.subr.mxu0 %v2169
    %4104 = vmatpush1.msra.mxu0 %v2168
    %4105 = vmatprep.subr.mxu0 %v2179
    %4106 = vmatpush1.msra.mxu0 %v2178
    %4107 = vmatprep.subr.mxu0 %v2189
    %4108 = vmatpush1.msra.mxu0 %v2188
    %4109 = vmatprep.subr.mxu0 %v2199
    %4110 = vmatpush1.msra.mxu0 %v2198
    %4111 = vmatprep.subr.mxu0 %v2209
    %4112 = vmatpush1.msra.mxu0 %v2208
    %4113 = vmatprep.subr.mxu0 %v2219
    %4114 = vmatpush1.msra.mxu0 %v2218
    %4115 = vmatprep.subr.mxu0 %v2229
    %4116 = vmatpush1.msra.mxu0 %v2228
    %4117 = vmatprep.subr.mxu0 %v2239
    %4118 = vmatpush1.msra.mxu0 %v2238
    %4119 = vmatprep.subr.mxu0 %v2249
    %4120 = vmatpush1.msra.mxu0 %v2248
    %4121 = vmatprep.subr.mxu0 %v2259
    %4122 = vmatpush1.msra.mxu0 %v2258
    %4123 = vmatprep.subr.mxu0 %v2269
    %4124 = vmatpush1.msra.mxu0 %v2268
    %4125 = vmatprep.subr.mxu0 %v2279
    %4126 = vmatpush1.msra.mxu0 %v2278
    %4127 = vmatprep.subr.mxu0 %v2289
    %4128 = vmatpush1.msra.mxu0 %v2288
    %4129 = vmatprep.subr.mxu0 %v2299
    %4130 = vmatpush1.msra.mxu0 %v2298
    %4131 = vmatprep.subr.mxu0 %v2309
    %4132 = vmatpush1.msra.mxu0 %v2308
    %4133 = vmatprep.subr.mxu0 %v2319
    %4134 = vmatpush1.msra.mxu0 %v2318
    %4135 = vmatprep.subr.mxu0 %v2329
    %4136 = vmatpush1.msra.mxu0 %v2328
    %4137 = vmatprep.subr.mxu0 %v2339
    %4138 = vmatpush1.msra.mxu0 %v2338
    %4139 = vmatprep.subr.mxu0 %v2349
    %4140 = vmatpush1.msra.mxu0 %v2348
    %4141 = vmatprep.subr.mxu0 %v2359
    %4142 = vmatpush1.msra.mxu0 %v2358
    %4143 = vmatprep.subr.mxu0 %v2369
    %4144 = vmatpush1.msra.mxu0 %v2368
    %4145 = vmatprep.subr.mxu0 %v2379
    %4146 = vmatpush1.msra.mxu0 %v2378
    %4147 = vmatprep.subr.mxu0 %v2389
    %4148 = vmatpush1.msra.mxu0 %v2388
    %4149 = vmatprep.mubr.f32.mxu0 %v2067
    %4150 = vmatmul.mubr.f32.gmra.mrb[0].mxu0 %v2066
    %v4151 = vpop.f32.mrb[0].mxu0
    %v4152 = vadd.f32 %v3691, %v4151
    %v4153 = vpop.f32.mrb[0].mxu0
    %v4154 = vadd.f32 %v3695, %v4153
    %4155 = vdwg.mxu0
    %4156 = vmatprep.subr.mxu0 %v2399
    %4157 = vmatpush1.msra.mxu0 %v2398
    %4158 = vmatprep.subr.mxu0 %v2409
    %4159 = vmatpush1.msra.mxu0 %v2408
    %4160 = vmatprep.subr.mxu0 %v2419
    %4161 = vmatpush1.msra.mxu0 %v2418
    %4162 = vmatprep.subr.mxu0 %v2429
    %4163 = vmatpush1.msra.mxu0 %v2428
    %4164 = vmatprep.subr.mxu0 %v2439
    %4165 = vmatpush1.msra.mxu0 %v2438
    %4166 = vmatprep.subr.mxu0 %v2449
    %4167 = vmatpush1.msra.mxu0 %v2448
    %4168 = vmatprep.subr.mxu0 %v2459
    %4169 = vmatpush1.msra.mxu0 %v2458
    %4170 = vmatprep.subr.mxu0 %v2469
    %4171 = vmatpush1.msra.mxu0 %v2468
    %4172 = vmatprep.subr.mxu0 %v2479
    %4173 = vmatpush1.msra.mxu0 %v2478
    %4174 = vmatprep.subr.mxu0 %v2489
    %4175 = vmatpush1.msra.mxu0 %v2488
    %4176 = vmatprep.subr.mxu0 %v2499
    %4177 = vmatpush1.msra.mxu0 %v2498
    %4178 = vmatprep.subr.mxu0 %v2509
    %4179 = vmatpush1.msra.mxu0 %v2508
    %4180 = vmatprep.subr.mxu0 %v2519
    %4181 = vmatpush1.msra.mxu0 %v2518
    %4182 = vmatprep.subr.mxu0 %v2529
    %4183 = vmatpush1.msra.mxu0 %v2528
    %4184 = vmatprep.subr.mxu0 %v2539
    %4185 = vmatpush1.msra.mxu0 %v2538
    %4186 = vmatprep.subr.mxu0 %v2549
    %4187 = vmatpush1.msra.mxu0 %v2548
    %4188 = vmatprep.subr.mxu0 %v2559
    %4189 = vmatpush1.msra.mxu0 %v2558
    %4190 = vmatprep.subr.mxu0 %v2569
    %4191 = vmatpush1.msra.mxu0 %v2568
    %4192 = vmatprep.subr.mxu0 %v2579
    %4193 = vmatpush1.msra.mxu0 %v2578
    %4194 = vmatprep.subr.mxu0 %v2589
    %4195 = vmatpush1.msra.mxu0 %v2588
    %4196 = vmatprep.subr.mxu0 %v2599
    %4197 = vmatpush1.msra.mxu0 %v2598
    %4198 = vmatprep.subr.mxu0 %v2609
    %4199 = vmatpush1.msra.mxu0 %v2608
    %4200 = vmatprep.subr.mxu0 %v2619
    %4201 = vmatpush1.msra.mxu0 %v2618
    %4202 = vmatprep.subr.mxu0 %v2629
    %4203 = vmatpush1.msra.mxu0 %v2628
    %4204 = vmatprep.subr.mxu0 %v2639
    %4205 = vmatpush1.msra.mxu0 %v2638
    %4206 = vmatprep.subr.mxu0 %v2649
    %4207 = vmatpush1.msra.mxu0 %v2648
    %4208 = vmatprep.subr.mxu0 %v2659
    %4209 = vmatpush1.msra.mxu0 %v2658
    %4210 = vmatprep.subr.mxu0 %v2669
    %4211 = vmatpush1.msra.mxu0 %v2668
    %4212 = vmatprep.subr.mxu0 %v2679
    %4213 = vmatpush1.msra.mxu0 %v2678
    %4214 = vmatprep.subr.mxu0 %v2689
    %4215 = vmatpush1.msra.mxu0 %v2688
    %4216 = vmatprep.subr.mxu0 %v2699
    %4217 = vmatpush1.msra.mxu0 %v2698
    %4218 = vmatprep.subr.mxu0 %v2709
    %4219 = vmatpush1.msra.mxu0 %v2708
    %4220 = vmatprep.mubr.f32.mxu0 %v2069
    %4221 = vmatmul.mubr.f32.gmra.mrb[0].mxu0 %v2068
    %v4222 = vpop.f32.mrb[0].mxu0
    %v4223 = vadd.f32 %v4152, %v4222
    %v4224 = vpop.f32.mrb[0].mxu0
    %v4225 = vadd.f32 %v4154, %v4224
    %4226 = vdwg.mxu0
    %4227 = vmatprep.subr.mxu0 %v2719
    %4228 = vmatpush1.msra.mxu0 %v2718
    %4229 = vmatprep.subr.mxu0 %v2729
    %4230 = vmatpush1.msra.mxu0 %v2728
    %4231 = vmatprep.subr.mxu0 %v2739
    %4232 = vmatpush1.msra.mxu0 %v2738
    %4233 = vmatprep.subr.mxu0 %v2749
    %4234 = vmatpush1.msra.mxu0 %v2748
    %4235 = vmatprep.subr.mxu0 %v2759
    %4236 = vmatpush1.msra.mxu0 %v2758
    %4237 = vmatprep.subr.mxu0 %v2769
    %4238 = vmatpush1.msra.mxu0 %v2768
    %4239 = vmatprep.subr.mxu0 %v2779
    %4240 = vmatpush1.msra.mxu0 %v2778
    %4241 = vmatprep.subr.mxu0 %v2789
    %4242 = vmatpush1.msra.mxu0 %v2788
    %4243 = vmatprep.subr.mxu0 %v2799
    %4244 = vmatpush1.msra.mxu0 %v2798
    %4245 = vmatprep.subr.mxu0 %v2809
    %4246 = vmatpush1.msra.mxu0 %v2808
    %4247 = vmatprep.subr.mxu0 %v2819
    %4248 = vmatpush1.msra.mxu0 %v2818
    %4249 = vmatprep.subr.mxu0 %v2829
    %4250 = vmatpush1.msra.mxu0 %v2828
    %4251 = vmatprep.subr.mxu0 %v2839
    %4252 = vmatpush1.msra.mxu0 %v2838
    %4253 = vmatprep.subr.mxu0 %v2849
    %4254 = vmatpush1.msra.mxu0 %v2848
    %4255 = vmatprep.subr.mxu0 %v2859
    %4256 = vmatpush1.msra.mxu0 %v2858
    %4257 = vmatprep.subr.mxu0 %v2869
    %4258 = vmatpush1.msra.mxu0 %v2868
    %4259 = vmatprep.subr.mxu0 %v2879
    %4260 = vmatpush1.msra.mxu0 %v2878
    %4261 = vmatprep.subr.mxu0 %v2889
    %4262 = vmatpush1.msra.mxu0 %v2888
    %4263 = vmatprep.subr.mxu0 %v2899
    %4264 = vmatpush1.msra.mxu0 %v2898
    %4265 = vmatprep.subr.mxu0 %v2909
    %4266 = vmatpush1.msra.mxu0 %v2908
    %4267 = vmatprep.subr.mxu0 %v2919
    %4268 = vmatpush1.msra.mxu0 %v2918
    %4269 = vmatprep.subr.mxu0 %v2929
    %4270 = vmatpush1.msra.mxu0 %v2928
    %4271 = vmatprep.subr.mxu0 %v2939
    %4272 = vmatpush1.msra.mxu0 %v2938
    %4273 = vmatprep.subr.mxu0 %v2949
    %4274 = vmatpush1.msra.mxu0 %v2948
    %4275 = vmatprep.subr.mxu0 %v2959
    %4276 = vmatpush1.msra.mxu0 %v2958
    %4277 = vmatprep.subr.mxu0 %v2969
    %4278 = vmatpush1.msra.mxu0 %v2968
    %4279 = vmatprep.subr.mxu0 %v2979
    %4280 = vmatpush1.msra.mxu0 %v2978
    %4281 = vmatprep.subr.mxu0 %v2989
    %4282 = vmatpush1.msra.mxu0 %v2988
    %4283 = vmatprep.subr.mxu0 %v2999
    %4284 = vmatpush1.msra.mxu0 %v2998
    %4285 = vmatprep.subr.mxu0 %v3009
    %4286 = vmatpush1.msra.mxu0 %v3008
    %4287 = vmatprep.subr.mxu0 %v3019
    %4288 = vmatpush1.msra.mxu0 %v3018
    %4289 = vmatprep.subr.mxu0 %v3029
    %4290 = vmatpush1.msra.mxu0 %v3028
    %4291 = vmatprep.mubr.f32.mxu0 %v2071
    %4292 = vmatmul.mubr.f32.gmra.mrb[0].mxu0 %v2070
    %v4293 = vpop.f32.mrb[0].mxu0
    %v4294 = vadd.f32 %v4223, %v4293
    %v4295 = vpop.f32.mrb[0].mxu0
    %v4296 = vadd.f32 %v4225, %v4295
    %4297 = vdwg.mxu0
    %4298 = vmatprep.subr.mxu0 %v3039
    %4299 = vmatpush1.msra.mxu0 %v3038
    %4300 = vmatprep.subr.mxu0 %v3049
    %4301 = vmatpush1.msra.mxu0 %v3048
    %4302 = vmatprep.subr.mxu0 %v3059
    %4303 = vmatpush1.msra.mxu0 %v3058
    %4304 = vmatprep.subr.mxu0 %v3069
    %4305 = vmatpush1.msra.mxu0 %v3068
    %4306 = vmatprep.subr.mxu0 %v3079
    %4307 = vmatpush1.msra.mxu0 %v3078
    %4308 = vmatprep.subr.mxu0 %v3089
    %4309 = vmatpush1.msra.mxu0 %v3088
    %4310 = vmatprep.subr.mxu0 %v3099
    %4311 = vmatpush1.msra.mxu0 %v3098
    %4312 = vmatprep.subr.mxu0 %v3109
    %4313 = vmatpush1.msra.mxu0 %v3108
    %4314 = vmatprep.subr.mxu0 %v3119
    %4315 = vmatpush1.msra.mxu0 %v3118
    %4316 = vmatprep.subr.mxu0 %v3129
    %4317 = vmatpush1.msra.mxu0 %v3128
    %4318 = vmatprep.subr.mxu0 %v3139
    %4319 = vmatpush1.msra.mxu0 %v3138
    %4320 = vmatprep.subr.mxu0 %v3149
    %4321 = vmatpush1.msra.mxu0 %v3148
    %4322 = vmatprep.subr.mxu0 %v3159
    %4323 = vmatpush1.msra.mxu0 %v3158
    %4324 = vmatprep.subr.mxu0 %v3169
    %4325 = vmatpush1.msra.mxu0 %v3168
    %4326 = vmatprep.subr.mxu0 %v3179
    %4327 = vmatpush1.msra.mxu0 %v3178
    %4328 = vmatprep.subr.mxu0 %v3189
    %4329 = vmatpush1.msra.mxu0 %v3188
    %4330 = vmatprep.subr.mxu0 %v3199
    %4331 = vmatpush1.msra.mxu0 %v3198
    %4332 = vmatprep.subr.mxu0 %v3209
    %4333 = vmatpush1.msra.mxu0 %v3208
    %4334 = vmatprep.subr.mxu0 %v3219
    %4335 = vmatpush1.msra.mxu0 %v3218
    %4336 = vmatprep.subr.mxu0 %v3229
    %4337 = vmatpush1.msra.mxu0 %v3228
    %4338 = vmatprep.subr.mxu0 %v3239
    %4339 = vmatpush1.msra.mxu0 %v3238
    %4340 = vmatprep.subr.mxu0 %v3249
    %4341 = vmatpush1.msra.mxu0 %v3248
    %4342 = vmatprep.subr.mxu0 %v3259
    %4343 = vmatpush1.msra.mxu0 %v3258
    %4344 = vmatprep.subr.mxu0 %v3269
    %4345 = vmatpush1.msra.mxu0 %v3268
    %4346 = vmatprep.subr.mxu0 %v3279
    %4347 = vmatpush1.msra.mxu0 %v3278
    %4348 = vmatprep.subr.mxu0 %v3289
    %4349 = vmatpush1.msra.mxu0 %v3288
    %4350 = vmatprep.subr.mxu0 %v3299
    %4351 = vmatpush1.msra.mxu0 %v3298
    %4352 = vmatprep.subr.mxu0 %v3309
    %4353 = vmatpush1.msra.mxu0 %v3308
    %4354 = vmatprep.subr.mxu0 %v3319
    %4355 = vmatpush1.msra.mxu0 %v3318
    %4356 = vmatprep.subr.mxu0 %v3329
    %4357 = vmatpush1.msra.mxu0 %v3328
    %4358 = vmatprep.subr.mxu0 %v3339
    %4359 = vmatpush1.msra.mxu0 %v3338
    %4360 = vmatprep.subr.mxu0 %v3349
    %4361 = vmatpush1.msra.mxu0 %v3348
    %4362 = vmatprep.mubr.f32.mxu0 %v2073
    %4363 = vmatmul.mubr.f32.gmra.mrb[0].mxu0 %v2072
    %v4364 = vpop.f32.mrb[0].mxu0
    %v4365 = vadd.f32 %v4294, %v4364
    %v4366 = vpop.f32.mrb[0].mxu0
    %v4367 = vadd.f32 %v4296, %v4366
    %4368 = vdwg.mxu0
    %4369 = vmatprep.subr.mxu0 %v3359
    %4370 = vmatpush1.msra.mxu0 %v3358
    %4371 = vmatprep.subr.mxu0 %v3369
    %4372 = vmatpush1.msra.mxu0 %v3368
    %4373 = vmatprep.subr.mxu0 %v3379
    %4374 = vmatpush1.msra.mxu0 %v3378
    %4375 = vmatprep.subr.mxu0 %v3389
    %4376 = vmatpush1.msra.mxu0 %v3388
    %4377 = vmatprep.subr.mxu0 %v3399
    %4378 = vmatpush1.msra.mxu0 %v3398
    %4379 = vmatprep.subr.mxu0 %v3409
    %4380 = vmatpush1.msra.mxu0 %v3408
    %4381 = vmatprep.subr.mxu0 %v3419
    %4382 = vmatpush1.msra.mxu0 %v3418
    %4383 = vmatprep.subr.mxu0 %v3429
    %4384 = vmatpush1.msra.mxu0 %v3428
    %4385 = vmatprep.subr.mxu0 %v3439
    %4386 = vmatpush1.msra.mxu0 %v3438
    %4387 = vmatprep.subr.mxu0 %v3449
    %4388 = vmatpush1.msra.mxu0 %v3448
    %4389 = vmatprep.subr.mxu0 %v3459
    %4390 = vmatpush1.msra.mxu0 %v3458
    %4391 = vmatprep.subr.mxu0 %v3469
    %4392 = vmatpush1.msra.mxu0 %v3468
    %4393 = vmatprep.subr.mxu0 %v3479
    %4394 = vmatpush1.msra.mxu0 %v3478
    %4395 = vmatprep.subr.mxu0 %v3489
    %4396 = vmatpush1.msra.mxu0 %v3488
    %4397 = vmatprep.subr.mxu0 %v3499
    %4398 = vmatpush1.msra.mxu0 %v3498
    %4399 = vmatprep.subr.mxu0 %v3509
    %4400 = vmatpush1.msra.mxu0 %v3508
    %4401 = vmatprep.subr.mxu0 %v3519
    %4402 = vmatpush1.msra.mxu0 %v3518
    %4403 = vmatprep.subr.mxu0 %v3529
    %4404 = vmatpush1.msra.mxu0 %v3528
    %4405 = vmatprep.subr.mxu0 %v3539
    %4406 = vmatpush1.msra.mxu0 %v3538
    %4407 = vmatprep.subr.mxu0 %v3549
    %4408 = vmatpush1.msra.mxu0 %v3548
    %4409 = vmatprep.subr.mxu0 %v3559
    %4410 = vmatpush1.msra.mxu0 %v3558
    %4411 = vmatprep.subr.mxu0 %v3569
    %4412 = vmatpush1.msra.mxu0 %v3568
    %4413 = vmatprep.subr.mxu0 %v3579
    %4414 = vmatpush1.msra.mxu0 %v3578
    %4415 = vmatprep.subr.mxu0 %v3589
    %4416 = vmatpush1.msra.mxu0 %v3588
    %4417 = vmatprep.subr.mxu0 %v3599
    %4418 = vmatpush1.msra.mxu0 %v3598
    %4419 = vmatprep.subr.mxu0 %v3609
    %4420 = vmatpush1.msra.mxu0 %v3608
    %4421 = vmatprep.subr.mxu0 %v3619
    %4422 = vmatpush1.msra.mxu0 %v3618
    %4423 = vmatprep.subr.mxu0 %v3629
    %4424 = vmatpush1.msra.mxu0 %v3628
    %4425 = vmatprep.subr.mxu0 %v3639
    %4426 = vmatpush1.msra.mxu0 %v3638
    %4427 = vmatprep.subr.mxu0 %v3649
    %4428 = vmatpush1.msra.mxu0 %v3648
    %4429 = vmatprep.subr.mxu0 %v3659
    %4430 = vmatpush1.msra.mxu0 %v3658
    %4431 = vmatprep.subr.mxu0 %v3669
    %4432 = vmatpush1.msra.mxu0 %v3668
    %4433 = vmatprep.mubr.f32.mxu0 %v2075
    %4434 = vmatmul.mubr.f32.gmra.mrb[0].mxu0 %v2074
    %v4435 = vpop.f32.mrb[0].mxu0
    %v4436 = vadd.f32 %v4365, %v4435
    %v4437 = vpop.f32.mrb[0].mxu0
    %v4438 = vadd.f32 %v4367, %v4437
    %4439 = vdwg.mxu0
    %4440 = vmatprep.subr.mxu0 %v2081
    %4441 = vmatpush1.msra.mxu0 %v2080
    %4442 = vmatprep.subr.mxu0 %v2091
    %4443 = vmatpush1.msra.mxu0 %v2090
    %4444 = vmatprep.subr.mxu0 %v2101
    %4445 = vmatpush1.msra.mxu0 %v2100
    %4446 = vmatprep.subr.mxu0 %v2111
    %4447 = vmatpush1.msra.mxu0 %v2110
    %4448 = vmatprep.subr.mxu0 %v2121
    %4449 = vmatpush1.msra.mxu0 %v2120
    %4450 = vmatprep.subr.mxu0 %v2131
    %4451 = vmatpush1.msra.mxu0 %v2130
    %4452 = vmatprep.subr.mxu0 %v2141
    %4453 = vmatpush1.msra.mxu0 %v2140
    %4454 = vmatprep.subr.mxu0 %v2151
    %4455 = vmatpush1.msra.mxu0 %v2150
    %4456 = vmatprep.subr.mxu0 %v2161
    %4457 = vmatpush1.msra.mxu0 %v2160
    %4458 = vmatprep.subr.mxu0 %v2171
    %4459 = vmatpush1.msra.mxu0 %v2170
    %4460 = vmatprep.subr.mxu0 %v2181
    %4461 = vmatpush1.msra.mxu0 %v2180
    %4462 = vmatprep.subr.mxu0 %v2191
    %4463 = vmatpush1.msra.mxu0 %v2190
    %4464 = vmatprep.subr.mxu0 %v2201
    %4465 = vmatpush1.msra.mxu0 %v2200
    %4466 = vmatprep.subr.mxu0 %v2211
    %4467 = vmatpush1.msra.mxu0 %v2210
    %4468 = vmatprep.subr.mxu0 %v2221
    %4469 = vmatpush1.msra.mxu0 %v2220
    %4470 = vmatprep.subr.mxu0 %v2231
    %4471 = vmatpush1.msra.mxu0 %v2230
    %4472 = vmatprep.subr.mxu0 %v2241
    %4473 = vmatpush1.msra.mxu0 %v2240
    %4474 = vmatprep.subr.mxu0 %v2251
    %4475 = vmatpush1.msra.mxu0 %v2250
    %4476 = vmatprep.subr.mxu0 %v2261
    %4477 = vmatpush1.msra.mxu0 %v2260
    %4478 = vmatprep.subr.mxu0 %v2271
    %4479 = vmatpush1.msra.mxu0 %v2270
    %4480 = vmatprep.subr.mxu0 %v2281
    %4481 = vmatpush1.msra.mxu0 %v2280
    %4482 = vmatprep.subr.mxu0 %v2291
    %4483 = vmatpush1.msra.mxu0 %v2290
    %4484 = vmatprep.subr.mxu0 %v2301
    %4485 = vmatpush1.msra.mxu0 %v2300
    %4486 = vmatprep.subr.mxu0 %v2311
    %4487 = vmatpush1.msra.mxu0 %v2310
    %4488 = vmatprep.subr.mxu0 %v2321
    %4489 = vmatpush1.msra.mxu0 %v2320
    %4490 = vmatprep.subr.mxu0 %v2331
    %4491 = vmatpush1.msra.mxu0 %v2330
    %4492 = vmatprep.subr.mxu0 %v2341
    %4493 = vmatpush1.msra.mxu0 %v2340
    %4494 = vmatprep.subr.mxu0 %v2351
    %4495 = vmatpush1.msra.mxu0 %v2350
    %4496 = vmatprep.subr.mxu0 %v2361
    %4497 = vmatpush1.msra.mxu0 %v2360
    %4498 = vmatprep.subr.mxu0 %v2371
    %4499 = vmatpush1.msra.mxu0 %v2370
    %4500 = vmatprep.subr.mxu0 %v2381
    %4501 = vmatpush1.msra.mxu0 %v2380
    %4502 = vmatprep.subr.mxu0 %v2391
    %4503 = vmatpush1.msra.mxu0 %v2390
    %4504 = vmatprep.mubr.f32.mxu0 %v2067
    %4505 = vmatmul.mubr.f32.gmra.mrb[0].mxu0 %v2066
    %v4506 = vpop.f32.mrb[0].mxu0
    %v4507 = vadd.f32 %v3699, %v4506
    %v4508 = vpop.f32.mrb[0].mxu0
    %v4509 = vadd.f32 %v3703, %v4508
    %4510 = vdwg.mxu0
    %4511 = vmatprep.subr.mxu0 %v2401
    %4512 = vmatpush1.msra.mxu0 %v2400
    %4513 = vmatprep.subr.mxu0 %v2411
    %4514 = vmatpush1.msra.mxu0 %v2410
    %4515 = vmatprep.subr.mxu0 %v2421
    %4516 = vmatpush1.msra.mxu0 %v2420
    %4517 = vmatprep.subr.mxu0 %v2431
    %4518 = vmatpush1.msra.mxu0 %v2430
    %4519 = vmatprep.subr.mxu0 %v2441
    %4520 = vmatpush1.msra.mxu0 %v2440
    %4521 = vmatprep.subr.mxu0 %v2451
    %4522 = vmatpush1.msra.mxu0 %v2450
    %4523 = vmatprep.subr.mxu0 %v2461
    %4524 = vmatpush1.msra.mxu0 %v2460
    %4525 = vmatprep.subr.mxu0 %v2471
    %4526 = vmatpush1.msra.mxu0 %v2470
    %4527 = vmatprep.subr.mxu0 %v2481
    %4528 = vmatpush1.msra.mxu0 %v2480
    %4529 = vmatprep.subr.mxu0 %v2491
    %4530 = vmatpush1.msra.mxu0 %v2490
    %4531 = vmatprep.subr.mxu0 %v2501
    %4532 = vmatpush1.msra.mxu0 %v2500
    %4533 = vmatprep.subr.mxu0 %v2511
    %4534 = vmatpush1.msra.mxu0 %v2510
    %4535 = vmatprep.subr.mxu0 %v2521
    %4536 = vmatpush1.msra.mxu0 %v2520
    %4537 = vmatprep.subr.mxu0 %v2531
    %4538 = vmatpush1.msra.mxu0 %v2530
    %4539 = vmatprep.subr.mxu0 %v2541
    %4540 = vmatpush1.msra.mxu0 %v2540
    %4541 = vmatprep.subr.mxu0 %v2551
    %4542 = vmatpush1.msra.mxu0 %v2550
    %4543 = vmatprep.subr.mxu0 %v2561
    %4544 = vmatpush1.msra.mxu0 %v2560
    %4545 = vmatprep.subr.mxu0 %v2571
    %4546 = vmatpush1.msra.mxu0 %v2570
    %4547 = vmatprep.subr.mxu0 %v2581
    %4548 = vmatpush1.msra.mxu0 %v2580
    %4549 = vmatprep.subr.mxu0 %v2591
    %4550 = vmatpush1.msra.mxu0 %v2590
    %4551 = vmatprep.subr.mxu0 %v2601
    %4552 = vmatpush1.msra.mxu0 %v2600
    %4553 = vmatprep.subr.mxu0 %v2611
    %4554 = vmatpush1.msra.mxu0 %v2610
    %4555 = vmatprep.subr.mxu0 %v2621
    %4556 = vmatpush1.msra.mxu0 %v2620
    %4557 = vmatprep.subr.mxu0 %v2631
    %4558 = vmatpush1.msra.mxu0 %v2630
    %4559 = vmatprep.subr.mxu0 %v2641
    %4560 = vmatpush1.msra.mxu0 %v2640
    %4561 = vmatprep.subr.mxu0 %v2651
    %4562 = vmatpush1.msra.mxu0 %v2650
    %4563 = vmatprep.subr.mxu0 %v2661
    %4564 = vmatpush1.msra.mxu0 %v2660
    %4565 = vmatprep.subr.mxu0 %v2671
    %4566 = vmatpush1.msra.mxu0 %v2670
    %4567 = vmatprep.subr.mxu0 %v2681
    %4568 = vmatpush1.msra.mxu0 %v2680
    %4569 = vmatprep.subr.mxu0 %v2691
    %4570 = vmatpush1.msra.mxu0 %v2690
    %4571 = vmatprep.subr.mxu0 %v2701
    %4572 = vmatpush1.msra.mxu0 %v2700
    %4573 = vmatprep.subr.mxu0 %v2711
    %4574 = vmatpush1.msra.mxu0 %v2710
    %4575 = vmatprep.mubr.f32.mxu0 %v2069
    %4576 = vmatmul.mubr.f32.gmra.mrb[0].mxu0 %v2068
    %v4577 = vpop.f32.mrb[0].mxu0
    %v4578 = vadd.f32 %v4507, %v4577
    %v4579 = vpop.f32.mrb[0].mxu0
    %v4580 = vadd.f32 %v4509, %v4579
    %4581 = vdwg.mxu0
    %4582 = vmatprep.subr.mxu0 %v2721
    %4583 = vmatpush1.msra.mxu0 %v2720
    %4584 = vmatprep.subr.mxu0 %v2731
    %4585 = vmatpush1.msra.mxu0 %v2730
    %4586 = vmatprep.subr.mxu0 %v2741
    %4587 = vmatpush1.msra.mxu0 %v2740
    %4588 = vmatprep.subr.mxu0 %v2751
    %4589 = vmatpush1.msra.mxu0 %v2750
    %4590 = vmatprep.subr.mxu0 %v2761
    %4591 = vmatpush1.msra.mxu0 %v2760
    %4592 = vmatprep.subr.mxu0 %v2771
    %4593 = vmatpush1.msra.mxu0 %v2770
    %4594 = vmatprep.subr.mxu0 %v2781
    %4595 = vmatpush1.msra.mxu0 %v2780
    %4596 = vmatprep.subr.mxu0 %v2791
    %4597 = vmatpush1.msra.mxu0 %v2790
    %4598 = vmatprep.subr.mxu0 %v2801
    %4599 = vmatpush1.msra.mxu0 %v2800
    %4600 = vmatprep.subr.mxu0 %v2811
    %4601 = vmatpush1.msra.mxu0 %v2810
    %4602 = vmatprep.subr.mxu0 %v2821
    %4603 = vmatpush1.msra.mxu0 %v2820
    %4604 = vmatprep.subr.mxu0 %v2831
    %4605 = vmatpush1.msra.mxu0 %v2830
    %4606 = vmatprep.subr.mxu0 %v2841
    %4607 = vmatpush1.msra.mxu0 %v2840
    %4608 = vmatprep.subr.mxu0 %v2851
    %4609 = vmatpush1.msra.mxu0 %v2850
    %4610 = vmatprep.subr.mxu0 %v2861
    %4611 = vmatpush1.msra.mxu0 %v2860
    %4612 = vmatprep.subr.mxu0 %v2871
    %4613 = vmatpush1.msra.mxu0 %v2870
    %4614 = vmatprep.subr.mxu0 %v2881
    %4615 = vmatpush1.msra.mxu0 %v2880
    %4616 = vmatprep.subr.mxu0 %v2891
    %4617 = vmatpush1.msra.mxu0 %v2890
    %4618 = vmatprep.subr.mxu0 %v2901
    %4619 = vmatpush1.msra.mxu0 %v2900
    %4620 = vmatprep.subr.mxu0 %v2911
    %4621 = vmatpush1.msra.mxu0 %v2910
    %4622 = vmatprep.subr.mxu0 %v2921
    %4623 = vmatpush1.msra.mxu0 %v2920
    %4624 = vmatprep.subr.mxu0 %v2931
    %4625 = vmatpush1.msra.mxu0 %v2930
    %4626 = vmatprep.subr.mxu0 %v2941
    %4627 = vmatpush1.msra.mxu0 %v2940
    %4628 = vmatprep.subr.mxu0 %v2951
    %4629 = vmatpush1.msra.mxu0 %v2950
    %4630 = vmatprep.subr.mxu0 %v2961
    %4631 = vmatpush1.msra.mxu0 %v2960
    %4632 = vmatprep.subr.mxu0 %v2971
    %4633 = vmatpush1.msra.mxu0 %v2970
    %4634 = vmatprep.subr.mxu0 %v2981
    %4635 = vmatpush1.msra.mxu0 %v2980
    %4636 = vmatprep.subr.mxu0 %v2991
    %4637 = vmatpush1.msra.mxu0 %v2990
    %4638 = vmatprep.subr.mxu0 %v3001
    %4639 = vmatpush1.msra.mxu0 %v3000
    %4640 = vmatprep.subr.mxu0 %v3011
    %4641 = vmatpush1.msra.mxu0 %v3010
    %4642 = vmatprep.subr.mxu0 %v3021
    %4643 = vmatpush1.msra.mxu0 %v3020
    %4644 = vmatprep.subr.mxu0 %v3031
    %4645 = vmatpush1.msra.mxu0 %v3030
    %4646 = vmatprep.mubr.f32.mxu0 %v2071
    %4647 = vmatmul.mubr.f32.gmra.mrb[0].mxu0 %v2070
    %v4648 = vpop.f32.mrb[0].mxu0
    %v4649 = vadd.f32 %v4578, %v4648
    %v4650 = vpop.f32.mrb[0].mxu0
    %v4651 = vadd.f32 %v4580, %v4650
    %4652 = vdwg.mxu0
    %4653 = vmatprep.subr.mxu0 %v3041
    %4654 = vmatpush1.msra.mxu0 %v3040
    %4655 = vmatprep.subr.mxu0 %v3051
    %4656 = vmatpush1.msra.mxu0 %v3050
    %4657 = vmatprep.subr.mxu0 %v3061
    %4658 = vmatpush1.msra.mxu0 %v3060
    %4659 = vmatprep.subr.mxu0 %v3071
    %4660 = vmatpush1.msra.mxu0 %v3070
    %4661 = vmatprep.subr.mxu0 %v3081
    %4662 = vmatpush1.msra.mxu0 %v3080
    %4663 = vmatprep.subr.mxu0 %v3091
    %4664 = vmatpush1.msra.mxu0 %v3090
    %4665 = vmatprep.subr.mxu0 %v3101
    %4666 = vmatpush1.msra.mxu0 %v3100
    %4667 = vmatprep.subr.mxu0 %v3111
    %4668 = vmatpush1.msra.mxu0 %v3110
    %4669 = vmatprep.subr.mxu0 %v3121
    %4670 = vmatpush1.msra.mxu0 %v3120
    %4671 = vmatprep.subr.mxu0 %v3131
    %4672 = vmatpush1.msra.mxu0 %v3130
    %4673 = vmatprep.subr.mxu0 %v3141
    %4674 = vmatpush1.msra.mxu0 %v3140
    %4675 = vmatprep.subr.mxu0 %v3151
    %4676 = vmatpush1.msra.mxu0 %v3150
    %4677 = vmatprep.subr.mxu0 %v3161
    %4678 = vmatpush1.msra.mxu0 %v3160
    %4679 = vmatprep.subr.mxu0 %v3171
    %4680 = vmatpush1.msra.mxu0 %v3170
    %4681 = vmatprep.subr.mxu0 %v3181
    %4682 = vmatpush1.msra.mxu0 %v3180
    %4683 = vmatprep.subr.mxu0 %v3191
    %4684 = vmatpush1.msra.mxu0 %v3190
    %4685 = vmatprep.subr.mxu0 %v3201
    %4686 = vmatpush1.msra.mxu0 %v3200
    %4687 = vmatprep.subr.mxu0 %v3211
    %4688 = vmatpush1.msra.mxu0 %v3210
    %4689 = vmatprep.subr.mxu0 %v3221
    %4690 = vmatpush1.msra.mxu0 %v3220
    %4691 = vmatprep.subr.mxu0 %v3231
    %4692 = vmatpush1.msra.mxu0 %v3230
    %4693 = vmatprep.subr.mxu0 %v3241
    %4694 = vmatpush1.msra.mxu0 %v3240
    %4695 = vmatprep.subr.mxu0 %v3251
    %4696 = vmatpush1.msra.mxu0 %v3250
    %4697 = vmatprep.subr.mxu0 %v3261
    %4698 = vmatpush1.msra.mxu0 %v3260
    %4699 = vmatprep.subr.mxu0 %v3271
    %4700 = vmatpush1.msra.mxu0 %v3270
    %4701 = vmatprep.subr.mxu0 %v3281
    %4702 = vmatpush1.msra.mxu0 %v3280
    %4703 = vmatprep.subr.mxu0 %v3291
    %4704 = vmatpush1.msra.mxu0 %v3290
    %4705 = vmatprep.subr.mxu0 %v3301
    %4706 = vmatpush1.msra.mxu0 %v3300
    %4707 = vmatprep.subr.mxu0 %v3311
    %4708 = vmatpush1.msra.mxu0 %v3310
    %4709 = vmatprep.subr.mxu0 %v3321
    %4710 = vmatpush1.msra.mxu0 %v3320
    %4711 = vmatprep.subr.mxu0 %v3331
    %4712 = vmatpush1.msra.mxu0 %v3330
    %4713 = vmatprep.subr.mxu0 %v3341
    %4714 = vmatpush1.msra.mxu0 %v3340
    %4715 = vmatprep.subr.mxu0 %v3351
    %4716 = vmatpush1.msra.mxu0 %v3350
    %4717 = vmatprep.mubr.f32.mxu0 %v2073
    %4718 = vmatmul.mubr.f32.gmra.mrb[0].mxu0 %v2072
    %v4719 = vpop.f32.mrb[0].mxu0
    %v4720 = vadd.f32 %v4649, %v4719
    %v4721 = vpop.f32.mrb[0].mxu0
    %v4722 = vadd.f32 %v4651, %v4721
    %4723 = vdwg.mxu0
    %4724 = vmatprep.subr.mxu0 %v3361
    %4725 = vmatpush1.msra.mxu0 %v3360
    %4726 = vmatprep.subr.mxu0 %v3371
    %4727 = vmatpush1.msra.mxu0 %v3370
    %4728 = vmatprep.subr.mxu0 %v3381
    %4729 = vmatpush1.msra.mxu0 %v3380
    %4730 = vmatprep.subr.mxu0 %v3391
    %4731 = vmatpush1.msra.mxu0 %v3390
    %4732 = vmatprep.subr.mxu0 %v3401
    %4733 = vmatpush1.msra.mxu0 %v3400
    %4734 = vmatprep.subr.mxu0 %v3411
    %4735 = vmatpush1.msra.mxu0 %v3410
    %4736 = vmatprep.subr.mxu0 %v3421
    %4737 = vmatpush1.msra.mxu0 %v3420
    %4738 = vmatprep.subr.mxu0 %v3431
    %4739 = vmatpush1.msra.mxu0 %v3430
    %4740 = vmatprep.subr.mxu0 %v3441
    %4741 = vmatpush1.msra.mxu0 %v3440
    %4742 = vmatprep.subr.mxu0 %v3451
    %4743 = vmatpush1.msra.mxu0 %v3450
    %4744 = vmatprep.subr.mxu0 %v3461
    %4745 = vmatpush1.msra.mxu0 %v3460
    %4746 = vmatprep.subr.mxu0 %v3471
    %4747 = vmatpush1.msra.mxu0 %v3470
    %4748 = vmatprep.subr.mxu0 %v3481
    %4749 = vmatpush1.msra.mxu0 %v3480
    %4750 = vmatprep.subr.mxu0 %v3491
    %4751 = vmatpush1.msra.mxu0 %v3490
    %4752 = vmatprep.subr.mxu0 %v3501
    %4753 = vmatpush1.msra.mxu0 %v3500
    %4754 = vmatprep.subr.mxu0 %v3511
    %4755 = vmatpush1.msra.mxu0 %v3510
    %4756 = vmatprep.subr.mxu0 %v3521
    %4757 = vmatpush1.msra.mxu0 %v3520
    %4758 = vmatprep.subr.mxu0 %v3531
    %4759 = vmatpush1.msra.mxu0 %v3530
    %4760 = vmatprep.subr.mxu0 %v3541
    %4761 = vmatpush1.msra.mxu0 %v3540
    %4762 = vmatprep.subr.mxu0 %v3551
    %4763 = vmatpush1.msra.mxu0 %v3550
    %4764 = vmatprep.subr.mxu0 %v3561
    %4765 = vmatpush1.msra.mxu0 %v3560
    %4766 = vmatprep.subr.mxu0 %v3571
    %4767 = vmatpush1.msra.mxu0 %v3570
    %4768 = vmatprep.subr.mxu0 %v3581
    %4769 = vmatpush1.msra.mxu0 %v3580
    %4770 = vmatprep.subr.mxu0 %v3591
    %4771 = vmatpush1.msra.mxu0 %v3590
    %4772 = vmatprep.subr.mxu0 %v3601
    %4773 = vmatpush1.msra.mxu0 %v3600
    %4774 = vmatprep.subr.mxu0 %v3611
    %4775 = vmatpush1.msra.mxu0 %v3610
    %4776 = vmatprep.subr.mxu0 %v3621
    %4777 = vmatpush1.msra.mxu0 %v3620
    %4778 = vmatprep.subr.mxu0 %v3631
    %4779 = vmatpush1.msra.mxu0 %v3630
    %4780 = vmatprep.subr.mxu0 %v3641
    %4781 = vmatpush1.msra.mxu0 %v3640
    %4782 = vmatprep.subr.mxu0 %v3651
    %4783 = vmatpush1.msra.mxu0 %v3650
    %4784 = vmatprep.subr.mxu0 %v3661
    %4785 = vmatpush1.msra.mxu0 %v3660
    %4786 = vmatprep.subr.mxu0 %v3671
    %4787 = vmatpush1.msra.mxu0 %v3670
    %4788 = vmatprep.mubr.f32.mxu0 %v2075
    %4789 = vmatmul.mubr.f32.gmra.mrb[0].mxu0 %v2074
    %v4790 = vpop.f32.mrb[0].mxu0
    %v4791 = vadd.f32 %v4720, %v4790
    %v4792 = vpop.f32.mrb[0].mxu0
    %v4793 = vadd.f32 %v4722, %v4792
    %4794 = vdwg.mxu0
    %4795 = vmatprep.subr.mxu0 %v2083
    %4796 = vmatpush1.msra.mxu0 %v2082
    %4797 = vmatprep.subr.mxu0 %v2093
    %4798 = vmatpush1.msra.mxu0 %v2092
    %4799 = vmatprep.subr.mxu0 %v2103
    %4800 = vmatpush1.msra.mxu0 %v2102
    %4801 = vmatprep.subr.mxu0 %v2113
    %4802 = vmatpush1.msra.mxu0 %v2112
    %4803 = vmatprep.subr.mxu0 %v2123
    %4804 = vmatpush1.msra.mxu0 %v2122
    %4805 = vmatprep.subr.mxu0 %v2133
    %4806 = vmatpush1.msra.mxu0 %v2132
    %4807 = vmatprep.subr.mxu0 %v2143
    %4808 = vmatpush1.msra.mxu0 %v2142
    %4809 = vmatprep.subr.mxu0 %v2153
    %4810 = vmatpush1.msra.mxu0 %v2152
    %4811 = vmatprep.subr.mxu0 %v2163
    %4812 = vmatpush1.msra.mxu0 %v2162
    %4813 = vmatprep.subr.mxu0 %v2173
    %4814 = vmatpush1.msra.mxu0 %v2172
    %4815 = vmatprep.subr.mxu0 %v2183
    %4816 = vmatpush1.msra.mxu0 %v2182
    %4817 = vmatprep.subr.mxu0 %v2193
    %4818 = vmatpush1.msra.mxu0 %v2192
    %4819 = vmatprep.subr.mxu0 %v2203
    %4820 = vmatpush1.msra.mxu0 %v2202
    %4821 = vmatprep.subr.mxu0 %v2213
    %4822 = vmatpush1.msra.mxu0 %v2212
    %4823 = vmatprep.subr.mxu0 %v2223
    %4824 = vmatpush1.msra.mxu0 %v2222
    %4825 = vmatprep.subr.mxu0 %v2233
    %4826 = vmatpush1.msra.mxu0 %v2232
    %4827 = vmatprep.subr.mxu0 %v2243
    %4828 = vmatpush1.msra.mxu0 %v2242
    %4829 = vmatprep.subr.mxu0 %v2253
    %4830 = vmatpush1.msra.mxu0 %v2252
    %4831 = vmatprep.subr.mxu0 %v2263
    %4832 = vmatpush1.msra.mxu0 %v2262
    %4833 = vmatprep.subr.mxu0 %v2273
    %4834 = vmatpush1.msra.mxu0 %v2272
    %4835 = vmatprep.subr.mxu0 %v2283
    %4836 = vmatpush1.msra.mxu0 %v2282
    %4837 = vmatprep.subr.mxu0 %v2293
    %4838 = vmatpush1.msra.mxu0 %v2292
    %4839 = vmatprep.subr.mxu0 %v2303
    %4840 = vmatpush1.msra.mxu0 %v2302
    %4841 = vmatprep.subr.mxu0 %v2313
    %4842 = vmatpush1.msra.mxu0 %v2312
    %4843 = vmatprep.subr.mxu0 %v2323
    %4844 = vmatpush1.msra.mxu0 %v2322
    %4845 = vmatprep.subr.mxu0 %v2333
    %4846 = vmatpush1.msra.mxu0 %v2332
    %4847 = vmatprep.subr.mxu0 %v2343
    %4848 = vmatpush1.msra.mxu0 %v2342
    %4849 = vmatprep.subr.mxu0 %v2353
    %4850 = vmatpush1.msra.mxu0 %v2352
    %4851 = vmatprep.subr.mxu0 %v2363
    %4852 = vmatpush1.msra.mxu0 %v2362
    %4853 = vmatprep.subr.mxu0 %v2373
    %4854 = vmatpush1.msra.mxu0 %v2372
    %4855 = vmatprep.subr.mxu0 %v2383
    %4856 = vmatpush1.msra.mxu0 %v2382
    %4857 = vmatprep.subr.mxu0 %v2393
    %4858 = vmatpush1.msra.mxu0 %v2392
    %4859 = vmatprep.mubr.f32.mxu0 %v2067
    %4860 = vmatmul.mubr.f32.gmra.mrb[0].mxu0 %v2066
    %v4861 = vpop.f32.mrb[0].mxu0
    %v4862 = vadd.f32 %v3707, %v4861
    %v4863 = vpop.f32.mrb[0].mxu0
    %v4864 = vadd.f32 %v3711, %v4863
    %4865 = vdwg.mxu0
    %4866 = vmatprep.subr.mxu0 %v2403
    %4867 = vmatpush1.msra.mxu0 %v2402
    %4868 = vmatprep.subr.mxu0 %v2413
    %4869 = vmatpush1.msra.mxu0 %v2412
    %4870 = vmatprep.subr.mxu0 %v2423
    %4871 = vmatpush1.msra.mxu0 %v2422
    %4872 = vmatprep.subr.mxu0 %v2433
    %4873 = vmatpush1.msra.mxu0 %v2432
    %4874 = vmatprep.subr.mxu0 %v2443
    %4875 = vmatpush1.msra.mxu0 %v2442
    %4876 = vmatprep.subr.mxu0 %v2453
    %4877 = vmatpush1.msra.mxu0 %v2452
    %4878 = vmatprep.subr.mxu0 %v2463
    %4879 = vmatpush1.msra.mxu0 %v2462
    %4880 = vmatprep.subr.mxu0 %v2473
    %4881 = vmatpush1.msra.mxu0 %v2472
    %4882 = vmatprep.subr.mxu0 %v2483
    %4883 = vmatpush1.msra.mxu0 %v2482
    %4884 = vmatprep.subr.mxu0 %v2493
    %4885 = vmatpush1.msra.mxu0 %v2492
    %4886 = vmatprep.subr.mxu0 %v2503
    %4887 = vmatpush1.msra.mxu0 %v2502
    %4888 = vmatprep.subr.mxu0 %v2513
    %4889 = vmatpush1.msra.mxu0 %v2512
    %4890 = vmatprep.subr.mxu0 %v2523
    %4891 = vmatpush1.msra.mxu0 %v2522
    %4892 = vmatprep.subr.mxu0 %v2533
    %4893 = vmatpush1.msra.mxu0 %v2532
    %4894 = vmatprep.subr.mxu0 %v2543
    %4895 = vmatpush1.msra.mxu0 %v2542
    %4896 = vmatprep.subr.mxu0 %v2553
    %4897 = vmatpush1.msra.mxu0 %v2552
    %4898 = vmatprep.subr.mxu0 %v2563
    %4899 = vmatpush1.msra.mxu0 %v2562
    %4900 = vmatprep.subr.mxu0 %v2573
    %4901 = vmatpush1.msra.mxu0 %v2572
    %4902 = vmatprep.subr.mxu0 %v2583
    %4903 = vmatpush1.msra.mxu0 %v2582
    %4904 = vmatprep.subr.mxu0 %v2593
    %4905 = vmatpush1.msra.mxu0 %v2592
    %4906 = vmatprep.subr.mxu0 %v2603
    %4907 = vmatpush1.msra.mxu0 %v2602
    %4908 = vmatprep.subr.mxu0 %v2613
    %4909 = vmatpush1.msra.mxu0 %v2612
    %4910 = vmatprep.subr.mxu0 %v2623
    %4911 = vmatpush1.msra.mxu0 %v2622
    %4912 = vmatprep.subr.mxu0 %v2633
    %4913 = vmatpush1.msra.mxu0 %v2632
    %4914 = vmatprep.subr.mxu0 %v2643
    %4915 = vmatpush1.msra.mxu0 %v2642
    %4916 = vmatprep.subr.mxu0 %v2653
    %4917 = vmatpush1.msra.mxu0 %v2652
    %4918 = vmatprep.subr.mxu0 %v2663
    %4919 = vmatpush1.msra.mxu0 %v2662
    %4920 = vmatprep.subr.mxu0 %v2673
    %4921 = vmatpush1.msra.mxu0 %v2672
    %4922 = vmatprep.subr.mxu0 %v2683
    %4923 = vmatpush1.msra.mxu0 %v2682
    %4924 = vmatprep.subr.mxu0 %v2693
    %4925 = vmatpush1.msra.mxu0 %v2692
    %4926 = vmatprep.subr.mxu0 %v2703
    %4927 = vmatpush1.msra.mxu0 %v2702
    %4928 = vmatprep.subr.mxu0 %v2713
    %4929 = vmatpush1.msra.mxu0 %v2712
    %4930 = vmatprep.mubr.f32.mxu0 %v2069
    %4931 = vmatmul.mubr.f32.gmra.mrb[0].mxu0 %v2068
    %v4932 = vpop.f32.mrb[0].mxu0
    %v4933 = vadd.f32 %v4862, %v4932
    %v4934 = vpop.f32.mrb[0].mxu0
    %v4935 = vadd.f32 %v4864, %v4934
    %4936 = vdwg.mxu0
    %4937 = vmatprep.subr.mxu0 %v2723
    %4938 = vmatpush1.msra.mxu0 %v2722
    %4939 = vmatprep.subr.mxu0 %v2733
    %4940 = vmatpush1.msra.mxu0 %v2732
    %4941 = vmatprep.subr.mxu0 %v2743
    %4942 = vmatpush1.msra.mxu0 %v2742
    %4943 = vmatprep.subr.mxu0 %v2753
    %4944 = vmatpush1.msra.mxu0 %v2752
    %4945 = vmatprep.subr.mxu0 %v2763
    %4946 = vmatpush1.msra.mxu0 %v2762
    %4947 = vmatprep.subr.mxu0 %v2773
    %4948 = vmatpush1.msra.mxu0 %v2772
    %4949 = vmatprep.subr.mxu0 %v2783
    %4950 = vmatpush1.msra.mxu0 %v2782
    %4951 = vmatprep.subr.mxu0 %v2793
    %4952 = vmatpush1.msra.mxu0 %v2792
    %4953 = vmatprep.subr.mxu0 %v2803
    %4954 = vmatpush1.msra.mxu0 %v2802
    %4955 = vmatprep.subr.mxu0 %v2813
    %4956 = vmatpush1.msra.mxu0 %v2812
    %4957 = vmatprep.subr.mxu0 %v2823
    %4958 = vmatpush1.msra.mxu0 %v2822
    %4959 = vmatprep.subr.mxu0 %v2833
    %4960 = vmatpush1.msra.mxu0 %v2832
    %4961 = vmatprep.subr.mxu0 %v2843
    %4962 = vmatpush1.msra.mxu0 %v2842
    %4963 = vmatprep.subr.mxu0 %v2853
    %4964 = vmatpush1.msra.mxu0 %v2852
    %4965 = vmatprep.subr.mxu0 %v2863
    %4966 = vmatpush1.msra.mxu0 %v2862
    %4967 = vmatprep.subr.mxu0 %v2873
    %4968 = vmatpush1.msra.mxu0 %v2872
    %4969 = vmatprep.subr.mxu0 %v2883
    %4970 = vmatpush1.msra.mxu0 %v2882
    %4971 = vmatprep.subr.mxu0 %v2893
    %4972 = vmatpush1.msra.mxu0 %v2892
    %4973 = vmatprep.subr.mxu0 %v2903
    %4974 = vmatpush1.msra.mxu0 %v2902
    %4975 = vmatprep.subr.mxu0 %v2913
    %4976 = vmatpush1.msra.mxu0 %v2912
    %4977 = vmatprep.subr.mxu0 %v2923
    %4978 = vmatpush1.msra.mxu0 %v2922
    %4979 = vmatprep.subr.mxu0 %v2933
    %4980 = vmatpush1.msra.mxu0 %v2932
    %4981 = vmatprep.subr.mxu0 %v2943
    %4982 = vmatpush1.msra.mxu0 %v2942
    %4983 = vmatprep.subr.mxu0 %v2953
    %4984 = vmatpush1.msra.mxu0 %v2952
    %4985 = vmatprep.subr.mxu0 %v2963
    %4986 = vmatpush1.msra.mxu0 %v2962
    %4987 = vmatprep.subr.mxu0 %v2973
    %4988 = vmatpush1.msra.mxu0 %v2972
    %4989 = vmatprep.subr.mxu0 %v2983
    %4990 = vmatpush1.msra.mxu0 %v2982
    %4991 = vmatprep.subr.mxu0 %v2993
    %4992 = vmatpush1.msra.mxu0 %v2992
    %4993 = vmatprep.subr.mxu0 %v3003
    %4994 = vmatpush1.msra.mxu0 %v3002
    %4995 = vmatprep.subr.mxu0 %v3013
    %4996 = vmatpush1.msra.mxu0 %v3012
    %4997 = vmatprep.subr.mxu0 %v3023
    %4998 = vmatpush1.msra.mxu0 %v3022
    %4999 = vmatprep.subr.mxu0 %v3033
    %5000 = vmatpush1.msra.mxu0 %v3032
    %5001 = vmatprep.mubr.f32.mxu0 %v2071
    %5002 = vmatmul.mubr.f32.gmra.mrb[0].mxu0 %v2070
    %v5003 = vpop.f32.mrb[0].mxu0
    %v5004 = vadd.f32 %v4933, %v5003
    %v5005 = vpop.f32.mrb[0].mxu0
    %v5006 = vadd.f32 %v4935, %v5005
    %5007 = vdwg.mxu0
    %5008 = vmatprep.subr.mxu0 %v3043
    %5009 = vmatpush1.msra.mxu0 %v3042
    %5010 = vmatprep.subr.mxu0 %v3053
    %5011 = vmatpush1.msra.mxu0 %v3052
    %5012 = vmatprep.subr.mxu0 %v3063
    %5013 = vmatpush1.msra.mxu0 %v3062
    %5014 = vmatprep.subr.mxu0 %v3073
    %5015 = vmatpush1.msra.mxu0 %v3072
    %5016 = vmatprep.subr.mxu0 %v3083
    %5017 = vmatpush1.msra.mxu0 %v3082
    %5018 = vmatprep.subr.mxu0 %v3093
    %5019 = vmatpush1.msra.mxu0 %v3092
    %5020 = vmatprep.subr.mxu0 %v3103
    %5021 = vmatpush1.msra.mxu0 %v3102
    %5022 = vmatprep.subr.mxu0 %v3113
    %5023 = vmatpush1.msra.mxu0 %v3112
    %5024 = vmatprep.subr.mxu0 %v3123
    %5025 = vmatpush1.msra.mxu0 %v3122
    %5026 = vmatprep.subr.mxu0 %v3133
    %5027 = vmatpush1.msra.mxu0 %v3132
    %5028 = vmatprep.subr.mxu0 %v3143
    %5029 = vmatpush1.msra.mxu0 %v3142
    %5030 = vmatprep.subr.mxu0 %v3153
    %5031 = vmatpush1.msra.mxu0 %v3152
    %5032 = vmatprep.subr.mxu0 %v3163
    %5033 = vmatpush1.msra.mxu0 %v3162
    %5034 = vmatprep.subr.mxu0 %v3173
    %5035 = vmatpush1.msra.mxu0 %v3172
    %5036 = vmatprep.subr.mxu0 %v3183
    %5037 = vmatpush1.msra.mxu0 %v3182
    %5038 = vmatprep.subr.mxu0 %v3193
    %5039 = vmatpush1.msra.mxu0 %v3192
    %5040 = vmatprep.subr.mxu0 %v3203
    %5041 = vmatpush1.msra.mxu0 %v3202
    %5042 = vmatprep.subr.mxu0 %v3213
    %5043 = vmatpush1.msra.mxu0 %v3212
    %5044 = vmatprep.subr.mxu0 %v3223
    %5045 = vmatpush1.msra.mxu0 %v3222
    %5046 = vmatprep.subr.mxu0 %v3233
    %5047 = vmatpush1.msra.mxu0 %v3232
    %5048 = vmatprep.subr.mxu0 %v3243
    %5049 = vmatpush1.msra.mxu0 %v3242
    %5050 = vmatprep.subr.mxu0 %v3253
    %5051 = vmatpush1.msra.mxu0 %v3252
    %5052 = vmatprep.subr.mxu0 %v3263
    %5053 = vmatpush1.msra.mxu0 %v3262
    %5054 = vmatprep.subr.mxu0 %v3273
    %5055 = vmatpush1.msra.mxu0 %v3272
    %5056 = vmatprep.subr.mxu0 %v3283
    %5057 = vmatpush1.msra.mxu0 %v3282
    %5058 = vmatprep.subr.mxu0 %v3293
    %5059 = vmatpush1.msra.mxu0 %v3292
    %5060 = vmatprep.subr.mxu0 %v3303
    %5061 = vmatpush1.msra.mxu0 %v3302
    %5062 = vmatprep.subr.mxu0 %v3313
    %5063 = vmatpush1.msra.mxu0 %v3312
    %5064 = vmatprep.subr.mxu0 %v3323
    %5065 = vmatpush1.msra.mxu0 %v3322
    %5066 = vmatprep.subr.mxu0 %v3333
    %5067 = vmatpush1.msra.mxu0 %v3332
    %5068 = vmatprep.subr.mxu0 %v3343
    %5069 = vmatpush1.msra.mxu0 %v3342
    %5070 = vmatprep.subr.mxu0 %v3353
    %5071 = vmatpush1.msra.mxu0 %v3352
    %5072 = vmatprep.mubr.f32.mxu0 %v2073
    %5073 = vmatmul.mubr.f32.gmra.mrb[0].mxu0 %v2072
    %v5074 = vpop.f32.mrb[0].mxu0
    %v5075 = vadd.f32 %v5004, %v5074
    %v5076 = vpop.f32.mrb[0].mxu0
    %v5077 = vadd.f32 %v5006, %v5076
    %5078 = vdwg.mxu0
    %5079 = vmatprep.subr.mxu0 %v3363
    %5080 = vmatpush1.msra.mxu0 %v3362
    %5081 = vmatprep.subr.mxu0 %v3373
    %5082 = vmatpush1.msra.mxu0 %v3372
    %5083 = vmatprep.subr.mxu0 %v3383
    %5084 = vmatpush1.msra.mxu0 %v3382
    %5085 = vmatprep.subr.mxu0 %v3393
    %5086 = vmatpush1.msra.mxu0 %v3392
    %5087 = vmatprep.subr.mxu0 %v3403
    %5088 = vmatpush1.msra.mxu0 %v3402
    %5089 = vmatprep.subr.mxu0 %v3413
    %5090 = vmatpush1.msra.mxu0 %v3412
    %5091 = vmatprep.subr.mxu0 %v3423
    %5092 = vmatpush1.msra.mxu0 %v3422
    %5093 = vmatprep.subr.mxu0 %v3433
    %5094 = vmatpush1.msra.mxu0 %v3432
    %5095 = vmatprep.subr.mxu0 %v3443
    %5096 = vmatpush1.msra.mxu0 %v3442
    %5097 = vmatprep.subr.mxu0 %v3453
    %5098 = vmatpush1.msra.mxu0 %v3452
    %5099 = vmatprep.subr.mxu0 %v3463
    %5100 = vmatpush1.msra.mxu0 %v3462
    %5101 = vmatprep.subr.mxu0 %v3473
    %5102 = vmatpush1.msra.mxu0 %v3472
    %5103 = vmatprep.subr.mxu0 %v3483
    %5104 = vmatpush1.msra.mxu0 %v3482
    %5105 = vmatprep.subr.mxu0 %v3493
    %5106 = vmatpush1.msra.mxu0 %v3492
    %5107 = vmatprep.subr.mxu0 %v3503
    %5108 = vmatpush1.msra.mxu0 %v3502
    %5109 = vmatprep.subr.mxu0 %v3513
    %5110 = vmatpush1.msra.mxu0 %v3512
    %5111 = vmatprep.subr.mxu0 %v3523
    %5112 = vmatpush1.msra.mxu0 %v3522
    %5113 = vmatprep.subr.mxu0 %v3533
    %5114 = vmatpush1.msra.mxu0 %v3532
    %5115 = vmatprep.subr.mxu0 %v3543
    %5116 = vmatpush1.msra.mxu0 %v3542
    %5117 = vmatprep.subr.mxu0 %v3553
    %5118 = vmatpush1.msra.mxu0 %v3552
    %5119 = vmatprep.subr.mxu0 %v3563
    %5120 = vmatpush1.msra.mxu0 %v3562
    %5121 = vmatprep.subr.mxu0 %v3573
    %5122 = vmatpush1.msra.mxu0 %v3572
    %5123 = vmatprep.subr.mxu0 %v3583
    %5124 = vmatpush1.msra.mxu0 %v3582
    %5125 = vmatprep.subr.mxu0 %v3593
    %5126 = vmatpush1.msra.mxu0 %v3592
    %5127 = vmatprep.subr.mxu0 %v3603
    %5128 = vmatpush1.msra.mxu0 %v3602
    %5129 = vmatprep.subr.mxu0 %v3613
    %5130 = vmatpush1.msra.mxu0 %v3612
    %5131 = vmatprep.subr.mxu0 %v3623
    %5132 = vmatpush1.msra.mxu0 %v3622
    %5133 = vmatprep.subr.mxu0 %v3633
    %5134 = vmatpush1.msra.mxu0 %v3632
    %5135 = vmatprep.subr.mxu0 %v3643
    %5136 = vmatpush1.msra.mxu0 %v3642
    %5137 = vmatprep.subr.mxu0 %v3653
    %5138 = vmatpush1.msra.mxu0 %v3652
    %5139 = vmatprep.subr.mxu0 %v3663
    %5140 = vmatpush1.msra.mxu0 %v3662
    %5141 = vmatprep.subr.mxu0 %v3673
    %5142 = vmatpush1.msra.mxu0 %v3672
    %5143 = vmatprep.mubr.f32.mxu0 %v2075
    %5144 = vmatmul.mubr.f32.gmra.mrb[0].mxu0 %v2074
    %v5145 = vpop.f32.mrb[0].mxu0
    %v5146 = vadd.f32 %v5075, %v5145
    %v5147 = vpop.f32.mrb[0].mxu0
    %v5148 = vadd.f32 %v5077, %v5147
    %5149 = vdwg.mxu0
    %5150 = vmatprep.subr.mxu0 %v2085
    %5151 = vmatpush1.msra.mxu0 %v2084
    %5152 = vmatprep.subr.mxu0 %v2095
    %5153 = vmatpush1.msra.mxu0 %v2094
    %5154 = vmatprep.subr.mxu0 %v2105
    %5155 = vmatpush1.msra.mxu0 %v2104
    %5156 = vmatprep.subr.mxu0 %v2115
    %5157 = vmatpush1.msra.mxu0 %v2114
    %5158 = vmatprep.subr.mxu0 %v2125
    %5159 = vmatpush1.msra.mxu0 %v2124
    %5160 = vmatprep.subr.mxu0 %v2135
    %5161 = vmatpush1.msra.mxu0 %v2134
    %5162 = vmatprep.subr.mxu0 %v2145
    %5163 = vmatpush1.msra.mxu0 %v2144
    %5164 = vmatprep.subr.mxu0 %v2155
    %5165 = vmatpush1.msra.mxu0 %v2154
    %5166 = vmatprep.subr.mxu0 %v2165
    %5167 = vmatpush1.msra.mxu0 %v2164
    %5168 = vmatprep.subr.mxu0 %v2175
    %5169 = vmatpush1.msra.mxu0 %v2174
    %5170 = vmatprep.subr.mxu0 %v2185
    %5171 = vmatpush1.msra.mxu0 %v2184
    %5172 = vmatprep.subr.mxu0 %v2195
    %5173 = vmatpush1.msra.mxu0 %v2194
    %5174 = vmatprep.subr.mxu0 %v2205
    %5175 = vmatpush1.msra.mxu0 %v2204
    %5176 = vmatprep.subr.mxu0 %v2215
    %5177 = vmatpush1.msra.mxu0 %v2214
    %5178 = vmatprep.subr.mxu0 %v2225
    %5179 = vmatpush1.msra.mxu0 %v2224
    %5180 = vmatprep.subr.mxu0 %v2235
    %5181 = vmatpush1.msra.mxu0 %v2234
    %5182 = vmatprep.subr.mxu0 %v2245
    %5183 = vmatpush1.msra.mxu0 %v2244
    %5184 = vmatprep.subr.mxu0 %v2255
    %5185 = vmatpush1.msra.mxu0 %v2254
    %5186 = vmatprep.subr.mxu0 %v2265
    %5187 = vmatpush1.msra.mxu0 %v2264
    %5188 = vmatprep.subr.mxu0 %v2275
    %5189 = vmatpush1.msra.mxu0 %v2274
    %5190 = vmatprep.subr.mxu0 %v2285
    %5191 = vmatpush1.msra.mxu0 %v2284
    %5192 = vmatprep.subr.mxu0 %v2295
    %5193 = vmatpush1.msra.mxu0 %v2294
    %5194 = vmatprep.subr.mxu0 %v2305
    %5195 = vmatpush1.msra.mxu0 %v2304
    %5196 = vmatprep.subr.mxu0 %v2315
    %5197 = vmatpush1.msra.mxu0 %v2314
    %5198 = vmatprep.subr.mxu0 %v2325
    %5199 = vmatpush1.msra.mxu0 %v2324
    %5200 = vmatprep.subr.mxu0 %v2335
    %5201 = vmatpush1.msra.mxu0 %v2334
    %5202 = vmatprep.subr.mxu0 %v2345
    %5203 = vmatpush1.msra.mxu0 %v2344
    %5204 = vmatprep.subr.mxu0 %v2355
    %5205 = vmatpush1.msra.mxu0 %v2354
    %5206 = vmatprep.subr.mxu0 %v2365
    %5207 = vmatpush1.msra.mxu0 %v2364
    %5208 = vmatprep.subr.mxu0 %v2375
    %5209 = vmatpush1.msra.mxu0 %v2374
    %5210 = vmatprep.subr.mxu0 %v2385
    %5211 = vmatpush1.msra.mxu0 %v2384
    %5212 = vmatprep.subr.mxu0 %v2395
    %5213 = vmatpush1.msra.mxu0 %v2394
    %5214 = vmatprep.mubr.f32.mxu0 %v2067
    %5215 = vmatmul.mubr.f32.gmra.mrb[0].mxu0 %v2066
    %v5216 = vpop.f32.mrb[0].mxu0
    %v5217 = vadd.f32 %v3715, %v5216
    %v5218 = vpop.f32.mrb[0].mxu0
    %v5219 = vadd.f32 %v3719, %v5218
    %5220 = vdwg.mxu0
    %5221 = vmatprep.subr.mxu0 %v2405
    %5222 = vmatpush1.msra.mxu0 %v2404
    %5223 = vmatprep.subr.mxu0 %v2415
    %5224 = vmatpush1.msra.mxu0 %v2414
    %5225 = vmatprep.subr.mxu0 %v2425
    %5226 = vmatpush1.msra.mxu0 %v2424
    %5227 = vmatprep.subr.mxu0 %v2435
    %5228 = vmatpush1.msra.mxu0 %v2434
    %5229 = vmatprep.subr.mxu0 %v2445
    %5230 = vmatpush1.msra.mxu0 %v2444
    %5231 = vmatprep.subr.mxu0 %v2455
    %5232 = vmatpush1.msra.mxu0 %v2454
    %5233 = vmatprep.subr.mxu0 %v2465
    %5234 = vmatpush1.msra.mxu0 %v2464
    %5235 = vmatprep.subr.mxu0 %v2475
    %5236 = vmatpush1.msra.mxu0 %v2474
    %5237 = vmatprep.subr.mxu0 %v2485
    %5238 = vmatpush1.msra.mxu0 %v2484
    %5239 = vmatprep.subr.mxu0 %v2495
    %5240 = vmatpush1.msra.mxu0 %v2494
    %5241 = vmatprep.subr.mxu0 %v2505
    %5242 = vmatpush1.msra.mxu0 %v2504
    %5243 = vmatprep.subr.mxu0 %v2515
    %5244 = vmatpush1.msra.mxu0 %v2514
    %5245 = vmatprep.subr.mxu0 %v2525
    %5246 = vmatpush1.msra.mxu0 %v2524
    %5247 = vmatprep.subr.mxu0 %v2535
    %5248 = vmatpush1.msra.mxu0 %v2534
    %5249 = vmatprep.subr.mxu0 %v2545
    %5250 = vmatpush1.msra.mxu0 %v2544
    %5251 = vmatprep.subr.mxu0 %v2555
    %5252 = vmatpush1.msra.mxu0 %v2554
    %5253 = vmatprep.subr.mxu0 %v2565
    %5254 = vmatpush1.msra.mxu0 %v2564
    %5255 = vmatprep.subr.mxu0 %v2575
    %5256 = vmatpush1.msra.mxu0 %v2574
    %5257 = vmatprep.subr.mxu0 %v2585
    %5258 = vmatpush1.msra.mxu0 %v2584
    %5259 = vmatprep.subr.mxu0 %v2595
    %5260 = vmatpush1.msra.mxu0 %v2594
    %5261 = vmatprep.subr.mxu0 %v2605
    %5262 = vmatpush1.msra.mxu0 %v2604
    %5263 = vmatprep.subr.mxu0 %v2615
    %5264 = vmatpush1.msra.mxu0 %v2614
    %5265 = vmatprep.subr.mxu0 %v2625
    %5266 = vmatpush1.msra.mxu0 %v2624
    %5267 = vmatprep.subr.mxu0 %v2635
    %5268 = vmatpush1.msra.mxu0 %v2634
    %5269 = vmatprep.subr.mxu0 %v2645
    %5270 = vmatpush1.msra.mxu0 %v2644
    %5271 = vmatprep.subr.mxu0 %v2655
    %5272 = vmatpush1.msra.mxu0 %v2654
    %5273 = vmatprep.subr.mxu0 %v2665
    %5274 = vmatpush1.msra.mxu0 %v2664
    %5275 = vmatprep.subr.mxu0 %v2675
    %5276 = vmatpush1.msra.mxu0 %v2674
    %5277 = vmatprep.subr.mxu0 %v2685
    %5278 = vmatpush1.msra.mxu0 %v2684
    %5279 = vmatprep.subr.mxu0 %v2695
    %5280 = vmatpush1.msra.mxu0 %v2694
    %5281 = vmatprep.subr.mxu0 %v2705
    %5282 = vmatpush1.msra.mxu0 %v2704
    %5283 = vmatprep.subr.mxu0 %v2715
    %5284 = vmatpush1.msra.mxu0 %v2714
    %5285 = vmatprep.mubr.f32.mxu0 %v2069
    %5286 = vmatmul.mubr.f32.gmra.mrb[0].mxu0 %v2068
    %v5287 = vpop.f32.mrb[0].mxu0
    %v5288 = vadd.f32 %v5217, %v5287
    %v5289 = vpop.f32.mrb[0].mxu0
    %v5290 = vadd.f32 %v5219, %v5289
    %5291 = vdwg.mxu0
    %5292 = vmatprep.subr.mxu0 %v2725
    %5293 = vmatpush1.msra.mxu0 %v2724
    %5294 = vmatprep.subr.mxu0 %v2735
    %5295 = vmatpush1.msra.mxu0 %v2734
    %5296 = vmatprep.subr.mxu0 %v2745
    %5297 = vmatpush1.msra.mxu0 %v2744
    %5298 = vmatprep.subr.mxu0 %v2755
    %5299 = vmatpush1.msra.mxu0 %v2754
    %5300 = vmatprep.subr.mxu0 %v2765
    %5301 = vmatpush1.msra.mxu0 %v2764
    %5302 = vmatprep.subr.mxu0 %v2775
    %5303 = vmatpush1.msra.mxu0 %v2774
    %5304 = vmatprep.subr.mxu0 %v2785
    %5305 = vmatpush1.msra.mxu0 %v2784
    %5306 = vmatprep.subr.mxu0 %v2795
    %5307 = vmatpush1.msra.mxu0 %v2794
    %5308 = vmatprep.subr.mxu0 %v2805
    %5309 = vmatpush1.msra.mxu0 %v2804
    %5310 = vmatprep.subr.mxu0 %v2815
    %5311 = vmatpush1.msra.mxu0 %v2814
    %5312 = vmatprep.subr.mxu0 %v2825
    %5313 = vmatpush1.msra.mxu0 %v2824
    %5314 = vmatprep.subr.mxu0 %v2835
    %5315 = vmatpush1.msra.mxu0 %v2834
    %5316 = vmatprep.subr.mxu0 %v2845
    %5317 = vmatpush1.msra.mxu0 %v2844
    %5318 = vmatprep.subr.mxu0 %v2855
    %5319 = vmatpush1.msra.mxu0 %v2854
    %5320 = vmatprep.subr.mxu0 %v2865
    %5321 = vmatpush1.msra.mxu0 %v2864
    %5322 = vmatprep.subr.mxu0 %v2875
    %5323 = vmatpush1.msra.mxu0 %v2874
    %5324 = vmatprep.subr.mxu0 %v2885
    %5325 = vmatpush1.msra.mxu0 %v2884
    %5326 = vmatprep.subr.mxu0 %v2895
    %5327 = vmatpush1.msra.mxu0 %v2894
    %5328 = vmatprep.subr.mxu0 %v2905
    %5329 = vmatpush1.msra.mxu0 %v2904
    %5330 = vmatprep.subr.mxu0 %v2915
    %5331 = vmatpush1.msra.mxu0 %v2914
    %5332 = vmatprep.subr.mxu0 %v2925
    %5333 = vmatpush1.msra.mxu0 %v2924
    %5334 = vmatprep.subr.mxu0 %v2935
    %5335 = vmatpush1.msra.mxu0 %v2934
    %5336 = vmatprep.subr.mxu0 %v2945
    %5337 = vmatpush1.msra.mxu0 %v2944
    %5338 = vmatprep.subr.mxu0 %v2955
    %5339 = vmatpush1.msra.mxu0 %v2954
    %5340 = vmatprep.subr.mxu0 %v2965
    %5341 = vmatpush1.msra.mxu0 %v2964
    %5342 = vmatprep.subr.mxu0 %v2975
    %5343 = vmatpush1.msra.mxu0 %v2974
    %5344 = vmatprep.subr.mxu0 %v2985
    %5345 = vmatpush1.msra.mxu0 %v2984
    %5346 = vmatprep.subr.mxu0 %v2995
    %5347 = vmatpush1.msra.mxu0 %v2994
    %5348 = vmatprep.subr.mxu0 %v3005
    %5349 = vmatpush1.msra.mxu0 %v3004
    %5350 = vmatprep.subr.mxu0 %v3015
    %5351 = vmatpush1.msra.mxu0 %v3014
    %5352 = vmatprep.subr.mxu0 %v3025
    %5353 = vmatpush1.msra.mxu0 %v3024
    %5354 = vmatprep.subr.mxu0 %v3035
    %5355 = vmatpush1.msra.mxu0 %v3034
    %5356 = vmatprep.mubr.f32.mxu0 %v2071
    %5357 = vmatmul.mubr.f32.gmra.mrb[0].mxu0 %v2070
    %v5358 = vpop.f32.mrb[0].mxu0
    %v5359 = vadd.f32 %v5288, %v5358
    %v5360 = vpop.f32.mrb[0].mxu0
    %v5361 = vadd.f32 %v5290, %v5360
    %5362 = vdwg.mxu0
    %5363 = vmatprep.subr.mxu0 %v3045
    %5364 = vmatpush1.msra.mxu0 %v3044
    %5365 = vmatprep.subr.mxu0 %v3055
    %5366 = vmatpush1.msra.mxu0 %v3054
    %5367 = vmatprep.subr.mxu0 %v3065
    %5368 = vmatpush1.msra.mxu0 %v3064
    %5369 = vmatprep.subr.mxu0 %v3075
    %5370 = vmatpush1.msra.mxu0 %v3074
    %5371 = vmatprep.subr.mxu0 %v3085
    %5372 = vmatpush1.msra.mxu0 %v3084
    %5373 = vmatprep.subr.mxu0 %v3095
    %5374 = vmatpush1.msra.mxu0 %v3094
    %5375 = vmatprep.subr.mxu0 %v3105
    %5376 = vmatpush1.msra.mxu0 %v3104
    %5377 = vmatprep.subr.mxu0 %v3115
    %5378 = vmatpush1.msra.mxu0 %v3114
    %5379 = vmatprep.subr.mxu0 %v3125
    %5380 = vmatpush1.msra.mxu0 %v3124
    %5381 = vmatprep.subr.mxu0 %v3135
    %5382 = vmatpush1.msra.mxu0 %v3134
    %5383 = vmatprep.subr.mxu0 %v3145
    %5384 = vmatpush1.msra.mxu0 %v3144
    %5385 = vmatprep.subr.mxu0 %v3155
    %5386 = vmatpush1.msra.mxu0 %v3154
    %5387 = vmatprep.subr.mxu0 %v3165
    %5388 = vmatpush1.msra.mxu0 %v3164
    %5389 = vmatprep.subr.mxu0 %v3175
    %5390 = vmatpush1.msra.mxu0 %v3174
    %5391 = vmatprep.subr.mxu0 %v3185
    %5392 = vmatpush1.msra.mxu0 %v3184
    %5393 = vmatprep.subr.mxu0 %v3195
    %5394 = vmatpush1.msra.mxu0 %v3194
    %5395 = vmatprep.subr.mxu0 %v3205
    %5396 = vmatpush1.msra.mxu0 %v3204
    %5397 = vmatprep.subr.mxu0 %v3215
    %5398 = vmatpush1.msra.mxu0 %v3214
    %5399 = vmatprep.subr.mxu0 %v3225
    %5400 = vmatpush1.msra.mxu0 %v3224
    %5401 = vmatprep.subr.mxu0 %v3235
    %5402 = vmatpush1.msra.mxu0 %v3234
    %5403 = vmatprep.subr.mxu0 %v3245
    %5404 = vmatpush1.msra.mxu0 %v3244
    %5405 = vmatprep.subr.mxu0 %v3255
    %5406 = vmatpush1.msra.mxu0 %v3254
    %5407 = vmatprep.subr.mxu0 %v3265
    %5408 = vmatpush1.msra.mxu0 %v3264
    %5409 = vmatprep.subr.mxu0 %v3275
    %5410 = vmatpush1.msra.mxu0 %v3274
    %5411 = vmatprep.subr.mxu0 %v3285
    %5412 = vmatpush1.msra.mxu0 %v3284
    %5413 = vmatprep.subr.mxu0 %v3295
    %5414 = vmatpush1.msra.mxu0 %v3294
    %5415 = vmatprep.subr.mxu0 %v3305
    %5416 = vmatpush1.msra.mxu0 %v3304
    %5417 = vmatprep.subr.mxu0 %v3315
    %5418 = vmatpush1.msra.mxu0 %v3314
    %5419 = vmatprep.subr.mxu0 %v3325
    %5420 = vmatpush1.msra.mxu0 %v3324
    %5421 = vmatprep.subr.mxu0 %v3335
    %5422 = vmatpush1.msra.mxu0 %v3334
    %5423 = vmatprep.subr.mxu0 %v3345
    %5424 = vmatpush1.msra.mxu0 %v3344
    %5425 = vmatprep.subr.mxu0 %v3355
    %5426 = vmatpush1.msra.mxu0 %v3354
    %5427 = vmatprep.mubr.f32.mxu0 %v2073
    %5428 = vmatmul.mubr.f32.gmra.mrb[0].mxu0 %v2072
    %v5429 = vpop.f32.mrb[0].mxu0
    %v5430 = vadd.f32 %v5359, %v5429
    %v5431 = vpop.f32.mrb[0].mxu0
    %v5432 = vadd.f32 %v5361, %v5431
    %5433 = vdwg.mxu0
    %5434 = vmatprep.subr.mxu0 %v3365
    %5435 = vmatpush1.msra.mxu0 %v3364
    %5436 = vmatprep.subr.mxu0 %v3375
    %5437 = vmatpush1.msra.mxu0 %v3374
    %5438 = vmatprep.subr.mxu0 %v3385
    %5439 = vmatpush1.msra.mxu0 %v3384
    %5440 = vmatprep.subr.mxu0 %v3395
    %5441 = vmatpush1.msra.mxu0 %v3394
    %5442 = vmatprep.subr.mxu0 %v3405
    %5443 = vmatpush1.msra.mxu0 %v3404
    %5444 = vmatprep.subr.mxu0 %v3415
    %5445 = vmatpush1.msra.mxu0 %v3414
    %5446 = vmatprep.subr.mxu0 %v3425
    %5447 = vmatpush1.msra.mxu0 %v3424
    %5448 = vmatprep.subr.mxu0 %v3435
    %5449 = vmatpush1.msra.mxu0 %v3434
    %5450 = vmatprep.subr.mxu0 %v3445
    %5451 = vmatpush1.msra.mxu0 %v3444
    %5452 = vmatprep.subr.mxu0 %v3455
    %5453 = vmatpush1.msra.mxu0 %v3454
    %5454 = vmatprep.subr.mxu0 %v3465
    %5455 = vmatpush1.msra.mxu0 %v3464
    %5456 = vmatprep.subr.mxu0 %v3475
    %5457 = vmatpush1.msra.mxu0 %v3474
    %5458 = vmatprep.subr.mxu0 %v3485
    %5459 = vmatpush1.msra.mxu0 %v3484
    %5460 = vmatprep.subr.mxu0 %v3495
    %5461 = vmatpush1.msra.mxu0 %v3494
    %5462 = vmatprep.subr.mxu0 %v3505
    %5463 = vmatpush1.msra.mxu0 %v3504
    %5464 = vmatprep.subr.mxu0 %v3515
    %5465 = vmatpush1.msra.mxu0 %v3514
    %5466 = vmatprep.subr.mxu0 %v3525
    %5467 = vmatpush1.msra.mxu0 %v3524
    %5468 = vmatprep.subr.mxu0 %v3535
    %5469 = vmatpush1.msra.mxu0 %v3534
    %5470 = vmatprep.subr.mxu0 %v3545
    %5471 = vmatpush1.msra.mxu0 %v3544
    %5472 = vmatprep.subr.mxu0 %v3555
    %5473 = vmatpush1.msra.mxu0 %v3554
    %5474 = vmatprep.subr.mxu0 %v3565
    %5475 = vmatpush1.msra.mxu0 %v3564
    %5476 = vmatprep.subr.mxu0 %v3575
    %5477 = vmatpush1.msra.mxu0 %v3574
    %5478 = vmatprep.subr.mxu0 %v3585
    %5479 = vmatpush1.msra.mxu0 %v3584
    %5480 = vmatprep.subr.mxu0 %v3595
    %5481 = vmatpush1.msra.mxu0 %v3594
    %5482 = vmatprep.subr.mxu0 %v3605
    %5483 = vmatpush1.msra.mxu0 %v3604
    %5484 = vmatprep.subr.mxu0 %v3615
    %5485 = vmatpush1.msra.mxu0 %v3614
    %5486 = vmatprep.subr.mxu0 %v3625
    %5487 = vmatpush1.msra.mxu0 %v3624
    %5488 = vmatprep.subr.mxu0 %v3635
    %5489 = vmatpush1.msra.mxu0 %v3634
    %5490 = vmatprep.subr.mxu0 %v3645
    %5491 = vmatpush1.msra.mxu0 %v3644
    %5492 = vmatprep.subr.mxu0 %v3655
    %5493 = vmatpush1.msra.mxu0 %v3654
    %5494 = vmatprep.subr.mxu0 %v3665
    %5495 = vmatpush1.msra.mxu0 %v3664
    %5496 = vmatprep.subr.mxu0 %v3675
    %5497 = vmatpush1.msra.mxu0 %v3674
    %5498 = vmatprep.mubr.f32.mxu0 %v2075
    %5499 = vmatmul.mubr.f32.gmra.mrb[0].mxu0 %v2074
    %v5500 = vpop.f32.mrb[0].mxu0
    %v5501 = vadd.f32 %v5430, %v5500
    %v5502 = vpop.f32.mrb[0].mxu0
    %v5503 = vadd.f32 %v5432, %v5502
    %5504 = vdwg.mxu0
    %v5505 = vmax.f32 %v4081, 0.0
    %v5506 = vmax.f32 %v4083, 0.0
    %v5507 = vmax.f32 %v4436, 0.0
    %v5508 = vmax.f32 %v4438, 0.0
    %v5509 = vmax.f32 %v4791, 0.0
    %v5510 = vmax.f32 %v4793, 0.0
    %v5511 = vmax.f32 %v5146, 0.0
    %v5512 = vmax.f32 %v5148, 0.0
    %v5513 = vmax.f32 %v5501, 0.0
    %v5514 = vmax.f32 %v5503, 0.0
    %v5515 = vld [vmem:[#allocation11] sm:$0xff]
    %v5516 = vld [vmem:[#allocation11 + $0x8] sm:$0xff]
    %v5517 = vld [vmem:[#allocation11 + $0x10] sm:$0xff]
    %v5518 = vld [vmem:[#allocation11 + $0x18] sm:$0xff]
    %v5519 = vld [vmem:[#allocation11 + $0x20] sm:$0xff]
    %v5520 = vld [vmem:[#allocation11 + $0x28] sm:$0xff]
    %v5521 = vld [vmem:[#allocation11 + $0x30] sm:$0xff]
    %v5522 = vld [vmem:[#allocation11 + $0x38] sm:$0xff]
    %v5523 = vld [vmem:[#allocation11 + $0x40] sm:$0xff]
    %v5524 = vld [vmem:[#allocation11 + $0x48] sm:$0xff]
    %v5525 = vld [vmem:[#allocation11 + $0x50] sm:$0xff]
    %v5526 = vld [vmem:[#allocation11 + $0x58] sm:$0xff]
    %v5527 = vld [vmem:[#allocation11 + $0x60] sm:$0xff]
    %v5528 = vld [vmem:[#allocation11 + $0x68] sm:$0xff]
    %v5529 = vld [vmem:[#allocation11 + $0x70] sm:$0xff]
    %v5530 = vld [vmem:[#allocation11 + $0x78] sm:$0xff]
    %v5531 = vld [vmem:[#allocation11 + $0x80] sm:$0xff]
    %v5532 = vld [vmem:[#allocation11 + $0x88] sm:$0xff]
    %v5533 = vld [vmem:[#allocation11 + $0x90] sm:$0xff]
    %v5534 = vld [vmem:[#allocation11 + $0x98] sm:$0xff]
    %v5535 = vld [vmem:[#allocation11 + $0xa0] sm:$0xff]
    %v5536 = vld [vmem:[#allocation11 + $0xa8] sm:$0xff]
    %v5537 = vld [vmem:[#allocation11 + $0xb0] sm:$0xff]
    %v5538 = vld [vmem:[#allocation11 + $0xb8] sm:$0xff]
    %v5539 = vld [vmem:[#allocation11 + $0xc0] sm:$0xff]
    %v5540 = vld [vmem:[#allocation11 + $0xc8] sm:$0xff]
    %v5541 = vld [vmem:[#allocation11 + $0xd0] sm:$0xff]
    %v5542 = vld [vmem:[#allocation11 + $0xd8] sm:$0xff]
    %v5543 = vld [vmem:[#allocation11 + $0xe0] sm:$0xff]
    %v5544 = vld [vmem:[#allocation11 + $0xe8] sm:$0xff]
    %v5545 = vld [vmem:[#allocation11 + $0xf0] sm:$0xff]
    %v5546 = vld [vmem:[#allocation11 + $0xf8] sm:$0xff]
    %v5547 = vld [vmem:[#allocation11 + $0x100] sm:$0xff]
    %v5548 = vld [vmem:[#allocation11 + $0x108] sm:$0xff]
    %v5549 = vld [vmem:[#allocation11 + $0x110] sm:$0xff]
    %v5550 = vld [vmem:[#allocation11 + $0x118] sm:$0xff]
    %v5551 = vld [vmem:[#allocation11 + $0x120] sm:$0xff]
    %v5552 = vld [vmem:[#allocation11 + $0x128] sm:$0xff]
    %v5553 = vld [vmem:[#allocation11 + $0x130] sm:$0xff]
    %v5554 = vld [vmem:[#allocation11 + $0x138] sm:$0xff]
    %v5555 = vld [vmem:[#allocation11 + $0x140] sm:$0xff]
    %v5556 = vld [vmem:[#allocation11 + $0x148] sm:$0xff]
    %v5557 = vld [vmem:[#allocation11 + $0x150] sm:$0xff]
    %v5558 = vld [vmem:[#allocation11 + $0x158] sm:$0xff]
    %v5559 = vld [vmem:[#allocation11 + $0x160] sm:$0xff]
    %v5560 = vld [vmem:[#allocation11 + $0x168] sm:$0xff]
    %v5561 = vld [vmem:[#allocation11 + $0x170] sm:$0xff]
    %v5562 = vld [vmem:[#allocation11 + $0x178] sm:$0xff]
    %v5563 = vld [vmem:[#allocation11 + $0x180] sm:$0xff]
    %v5564 = vld [vmem:[#allocation11 + $0x188] sm:$0xff]
    %v5565 = vld [vmem:[#allocation11 + $0x190] sm:$0xff]
    %v5566 = vld [vmem:[#allocation11 + $0x198] sm:$0xff]
    %v5567 = vld [vmem:[#allocation11 + $0x1a0] sm:$0xff]
    %v5568 = vld [vmem:[#allocation11 + $0x1a8] sm:$0xff]
    %v5569 = vld [vmem:[#allocation11 + $0x1b0] sm:$0xff]
    %v5570 = vld [vmem:[#allocation11 + $0x1b8] sm:$0xff]
    %v5571 = vld [vmem:[#allocation11 + $0x1c0] sm:$0xff]
    %v5572 = vld [vmem:[#allocation11 + $0x1c8] sm:$0xff]
    %v5573 = vld [vmem:[#allocation11 + $0x1d0] sm:$0xff]
    %v5574 = vld [vmem:[#allocation11 + $0x1d8] sm:$0xff]
    %v5575 = vld [vmem:[#allocation11 + $0x1e0] sm:$0xff]
    %v5576 = vld [vmem:[#allocation11 + $0x1e8] sm:$0xff]
    %v5577 = vld [vmem:[#allocation11 + $0x1f0] sm:$0xff]
    %v5578 = vld [vmem:[#allocation11 + $0x1f8] sm:$0xff]
    %v5579 = vld [vmem:[#allocation11 + $0x200] sm:$0xff]
    %v5580 = vld [vmem:[#allocation11 + $0x208] sm:$0xff]
    %v5581 = vld [vmem:[#allocation11 + $0x210] sm:$0xff]
    %v5582 = vld [vmem:[#allocation11 + $0x218] sm:$0xff]
    %v5583 = vld [vmem:[#allocation11 + $0x220] sm:$0xff]
    %v5584 = vld [vmem:[#allocation11 + $0x228] sm:$0xff]
    %v5585 = vld [vmem:[#allocation11 + $0x230] sm:$0xff]
    %v5586 = vld [vmem:[#allocation11 + $0x238] sm:$0xff]
    %v5587 = vld [vmem:[#allocation11 + $0x240] sm:$0xff]
    %v5588 = vld [vmem:[#allocation11 + $0x248] sm:$0xff]
    %v5589 = vld [vmem:[#allocation11 + $0x250] sm:$0xff]
    %v5590 = vld [vmem:[#allocation11 + $0x258] sm:$0xff]
    %v5591 = vld [vmem:[#allocation11 + $0x260] sm:$0xff]
    %v5592 = vld [vmem:[#allocation11 + $0x268] sm:$0xff]
    %v5593 = vld [vmem:[#allocation11 + $0x270] sm:$0xff]
    %v5594 = vld [vmem:[#allocation11 + $0x278] sm:$0xff]
    %v5595 = vld [vmem:[#allocation11 + $0x280] sm:$0xff]
    %v5596 = vld [vmem:[#allocation11 + $0x288] sm:$0xff]
    %v5597 = vld [vmem:[#allocation11 + $0x290] sm:$0xff]
    %v5598 = vld [vmem:[#allocation11 + $0x298] sm:$0xff]
    %v5599 = vld [vmem:[#allocation11 + $0x2a0] sm:$0xff]
    %v5600 = vld [vmem:[#allocation11 + $0x2a8] sm:$0xff]
    %v5601 = vld [vmem:[#allocation11 + $0x2b0] sm:$0xff]
    %v5602 = vld [vmem:[#allocation11 + $0x2b8] sm:$0xff]
    %v5603 = vld [vmem:[#allocation11 + $0x2c0] sm:$0xff]
    %v5604 = vld [vmem:[#allocation11 + $0x2c8] sm:$0xff]
    %v5605 = vld [vmem:[#allocation11 + $0x2d0] sm:$0xff]
    %v5606 = vld [vmem:[#allocation11 + $0x2d8] sm:$0xff]
    %v5607 = vld [vmem:[#allocation11 + $0x2e0] sm:$0xff]
    %v5608 = vld [vmem:[#allocation11 + $0x2e8] sm:$0xff]
    %v5609 = vld [vmem:[#allocation11 + $0x2f0] sm:$0xff]
    %v5610 = vld [vmem:[#allocation11 + $0x2f8] sm:$0xff]
    %v5611 = vld [vmem:[#allocation11 + $0x300] sm:$0xff]
    %v5612 = vld [vmem:[#allocation11 + $0x308] sm:$0xff]
    %v5613 = vld [vmem:[#allocation11 + $0x310] sm:$0xff]
    %v5614 = vld [vmem:[#allocation11 + $0x318] sm:$0xff]
    %v5615 = vld [vmem:[#allocation11 + $0x320] sm:$0xff]
    %v5616 = vld [vmem:[#allocation11 + $0x328] sm:$0xff]
    %v5617 = vld [vmem:[#allocation11 + $0x330] sm:$0xff]
    %v5618 = vld [vmem:[#allocation11 + $0x338] sm:$0xff]
    %v5619 = vld [vmem:[#allocation11 + $0x340] sm:$0xff]
    %v5620 = vld [vmem:[#allocation11 + $0x348] sm:$0xff]
    %v5621 = vld [vmem:[#allocation11 + $0x350] sm:$0xff]
    %v5622 = vld [vmem:[#allocation11 + $0x358] sm:$0xff]
    %v5623 = vld [vmem:[#allocation11 + $0x360] sm:$0xff]
    %v5624 = vld [vmem:[#allocation11 + $0x368] sm:$0xff]
    %v5625 = vld [vmem:[#allocation11 + $0x370] sm:$0xff]
    %v5626 = vld [vmem:[#allocation11 + $0x378] sm:$0xff]
    %v5627 = vld [vmem:[#allocation11 + $0x380] sm:$0xff]
    %v5628 = vld [vmem:[#allocation11 + $0x388] sm:$0xff]
    %v5629 = vld [vmem:[#allocation11 + $0x390] sm:$0xff]
    %v5630 = vld [vmem:[#allocation11 + $0x398] sm:$0xff]
    %v5631 = vld [vmem:[#allocation11 + $0x3a0] sm:$0xff]
    %v5632 = vld [vmem:[#allocation11 + $0x3a8] sm:$0xff]
    %v5633 = vld [vmem:[#allocation11 + $0x3b0] sm:$0xff]
    %v5634 = vld [vmem:[#allocation11 + $0x3b8] sm:$0xff]
    %v5635 = vld [vmem:[#allocation11 + $0x3c0] sm:$0xff]
    %v5636 = vld [vmem:[#allocation11 + $0x3c8] sm:$0xff]
    %v5637 = vld [vmem:[#allocation11 + $0x3d0] sm:$0xff]
    %v5638 = vld [vmem:[#allocation11 + $0x3d8] sm:$0xff]
    %v5639 = vld [vmem:[#allocation11 + $0x3e0] sm:$0xff]
    %v5640 = vld [vmem:[#allocation11 + $0x3e8] sm:$0xff]
    %v5641 = vld [vmem:[#allocation11 + $0x3f0] sm:$0xff]
    %v5642 = vld [vmem:[#allocation11 + $0x3f8] sm:$0xff]
    %v5643 = vld [vmem:[#allocation11 + $0x400] sm:$0xff]
    %v5644 = vld [vmem:[#allocation11 + $0x408] sm:$0xff]
    %v5645 = vld [vmem:[#allocation11 + $0x410] sm:$0xff]
    %v5646 = vld [vmem:[#allocation11 + $0x418] sm:$0xff]
    %v5647 = vld [vmem:[#allocation11 + $0x420] sm:$0xff]
    %v5648 = vld [vmem:[#allocation11 + $0x428] sm:$0xff]
    %v5649 = vld [vmem:[#allocation11 + $0x430] sm:$0xff]
    %v5650 = vld [vmem:[#allocation11 + $0x438] sm:$0xff]
    %v5651 = vld [vmem:[#allocation11 + $0x440] sm:$0xff]
    %v5652 = vld [vmem:[#allocation11 + $0x448] sm:$0xff]
    %v5653 = vld [vmem:[#allocation11 + $0x450] sm:$0xff]
    %v5654 = vld [vmem:[#allocation11 + $0x458] sm:$0xff]
    %v5655 = vld [vmem:[#allocation11 + $0x460] sm:$0xff]
    %v5656 = vld [vmem:[#allocation11 + $0x468] sm:$0xff]
    %v5657 = vld [vmem:[#allocation11 + $0x470] sm:$0xff]
    %v5658 = vld [vmem:[#allocation11 + $0x478] sm:$0xff]
    %v5659 = vld [vmem:[#allocation11 + $0x480] sm:$0xff]
    %v5660 = vld [vmem:[#allocation11 + $0x488] sm:$0xff]
    %v5661 = vld [vmem:[#allocation11 + $0x490] sm:$0xff]
    %v5662 = vld [vmem:[#allocation11 + $0x498] sm:$0xff]
    %v5663 = vld [vmem:[#allocation11 + $0x4a0] sm:$0xff]
    %v5664 = vld [vmem:[#allocation11 + $0x4a8] sm:$0xff]
    %v5665 = vld [vmem:[#allocation11 + $0x4b0] sm:$0xff]
    %v5666 = vld [vmem:[#allocation11 + $0x4b8] sm:$0xff]
    %v5667 = vld [vmem:[#allocation11 + $0x4c0] sm:$0xff]
    %v5668 = vld [vmem:[#allocation11 + $0x4c8] sm:$0xff]
    %v5669 = vld [vmem:[#allocation11 + $0x4d0] sm:$0xff]
    %v5670 = vld [vmem:[#allocation11 + $0x4d8] sm:$0xff]
    %v5671 = vld [vmem:[#allocation11 + $0x4e0] sm:$0xff]
    %v5672 = vld [vmem:[#allocation11 + $0x4e8] sm:$0xff]
    %v5673 = vld [vmem:[#allocation11 + $0x4f0] sm:$0xff]
    %v5674 = vld [vmem:[#allocation11 + $0x4f8] sm:$0xff]
    %v5675 = vld [vmem:[#allocation11 + $0x500] sm:$0xff]
    %v5676 = vld [vmem:[#allocation11 + $0x508] sm:$0xff]
    %v5677 = vld [vmem:[#allocation11 + $0x510] sm:$0xff]
    %v5678 = vld [vmem:[#allocation11 + $0x518] sm:$0xff]
    %v5679 = vld [vmem:[#allocation11 + $0x520] sm:$0xff]
    %v5680 = vld [vmem:[#allocation11 + $0x528] sm:$0xff]
    %v5681 = vld [vmem:[#allocation11 + $0x530] sm:$0xff]
    %v5682 = vld [vmem:[#allocation11 + $0x538] sm:$0xff]
    %v5683 = vld [vmem:[#allocation11 + $0x540] sm:$0xff]
    %v5684 = vld [vmem:[#allocation11 + $0x548] sm:$0xff]
    %v5685 = vld [vmem:[#allocation11 + $0x550] sm:$0xff]
    %v5686 = vld [vmem:[#allocation11 + $0x558] sm:$0xff]
    %v5687 = vld [vmem:[#allocation11 + $0x560] sm:$0xff]
    %v5688 = vld [vmem:[#allocation11 + $0x568] sm:$0xff]
    %v5689 = vld [vmem:[#allocation11 + $0x570] sm:$0xff]
    %v5690 = vld [vmem:[#allocation11 + $0x578] sm:$0xff]
    %v5691 = vld [vmem:[#allocation11 + $0x580] sm:$0xff]
    %v5692 = vld [vmem:[#allocation11 + $0x588] sm:$0xff]
    %v5693 = vld [vmem:[#allocation11 + $0x590] sm:$0xff]
    %v5694 = vld [vmem:[#allocation11 + $0x598] sm:$0xff]
    %v5695 = vld [vmem:[#allocation11 + $0x5a0] sm:$0xff]
    %v5696 = vld [vmem:[#allocation11 + $0x5a8] sm:$0xff]
    %v5697 = vld [vmem:[#allocation11 + $0x5b0] sm:$0xff]
    %v5698 = vld [vmem:[#allocation11 + $0x5b8] sm:$0xff]
    %v5699 = vld [vmem:[#allocation11 + $0x5c0] sm:$0xff]
    %v5700 = vld [vmem:[#allocation11 + $0x5c8] sm:$0xff]
    %v5701 = vld [vmem:[#allocation11 + $0x5d0] sm:$0xff]
    %v5702 = vld [vmem:[#allocation11 + $0x5d8] sm:$0xff]
    %v5703 = vld [vmem:[#allocation11 + $0x5e0] sm:$0xff]
    %v5704 = vld [vmem:[#allocation11 + $0x5e8] sm:$0xff]
    %v5705 = vld [vmem:[#allocation11 + $0x5f0] sm:$0xff]
    %v5706 = vld [vmem:[#allocation11 + $0x5f8] sm:$0xff]
    %v5707 = vld [vmem:[#allocation11 + $0x600] sm:$0xff]
    %v5708 = vld [vmem:[#allocation11 + $0x608] sm:$0xff]
    %v5709 = vld [vmem:[#allocation11 + $0x610] sm:$0xff]
    %v5710 = vld [vmem:[#allocation11 + $0x618] sm:$0xff]
    %v5711 = vld [vmem:[#allocation11 + $0x620] sm:$0xff]
    %v5712 = vld [vmem:[#allocation11 + $0x628] sm:$0xff]
    %v5713 = vld [vmem:[#allocation11 + $0x630] sm:$0xff]
    %v5714 = vld [vmem:[#allocation11 + $0x638] sm:$0xff]
    %v5715 = vld [vmem:[#allocation11 + $0x640] sm:$0xff]
    %v5716 = vld [vmem:[#allocation11 + $0x648] sm:$0xff]
    %v5717 = vld [vmem:[#allocation11 + $0x650] sm:$0xff]
    %v5718 = vld [vmem:[#allocation11 + $0x658] sm:$0xff]
    %v5719 = vld [vmem:[#allocation11 + $0x660] sm:$0xff]
    %v5720 = vld [vmem:[#allocation11 + $0x668] sm:$0xff]
    %v5721 = vld [vmem:[#allocation11 + $0x670] sm:$0xff]
    %v5722 = vld [vmem:[#allocation11 + $0x678] sm:$0xff]
    %v5723 = vld [vmem:[#allocation11 + $0x680] sm:$0xff]
    %v5724 = vld [vmem:[#allocation11 + $0x688] sm:$0xff]
    %v5725 = vld [vmem:[#allocation11 + $0x690] sm:$0xff]
    %v5726 = vld [vmem:[#allocation11 + $0x698] sm:$0xff]
    %v5727 = vld [vmem:[#allocation11 + $0x6a0] sm:$0xff]
    %v5728 = vld [vmem:[#allocation11 + $0x6a8] sm:$0xff]
    %v5729 = vld [vmem:[#allocation11 + $0x6b0] sm:$0xff]
    %v5730 = vld [vmem:[#allocation11 + $0x6b8] sm:$0xff]
    %v5731 = vld [vmem:[#allocation11 + $0x6c0] sm:$0xff]
    %v5732 = vld [vmem:[#allocation11 + $0x6c8] sm:$0xff]
    %v5733 = vld [vmem:[#allocation11 + $0x6d0] sm:$0xff]
    %v5734 = vld [vmem:[#allocation11 + $0x6d8] sm:$0xff]
    %v5735 = vld [vmem:[#allocation11 + $0x6e0] sm:$0xff]
    %v5736 = vld [vmem:[#allocation11 + $0x6e8] sm:$0xff]
    %v5737 = vld [vmem:[#allocation11 + $0x6f0] sm:$0xff]
    %v5738 = vld [vmem:[#allocation11 + $0x6f8] sm:$0xff]
    %v5739 = vld [vmem:[#allocation11 + $0x700] sm:$0xff]
    %v5740 = vld [vmem:[#allocation11 + $0x708] sm:$0xff]
    %v5741 = vld [vmem:[#allocation11 + $0x710] sm:$0xff]
    %v5742 = vld [vmem:[#allocation11 + $0x718] sm:$0xff]
    %v5743 = vld [vmem:[#allocation11 + $0x720] sm:$0xff]
    %v5744 = vld [vmem:[#allocation11 + $0x728] sm:$0xff]
    %v5745 = vld [vmem:[#allocation11 + $0x730] sm:$0xff]
    %v5746 = vld [vmem:[#allocation11 + $0x738] sm:$0xff]
    %v5747 = vld [vmem:[#allocation11 + $0x740] sm:$0xff]
    %v5748 = vld [vmem:[#allocation11 + $0x748] sm:$0xff]
    %v5749 = vld [vmem:[#allocation11 + $0x750] sm:$0xff]
    %v5750 = vld [vmem:[#allocation11 + $0x758] sm:$0xff]
    %v5751 = vld [vmem:[#allocation11 + $0x760] sm:$0xff]
    %v5752 = vld [vmem:[#allocation11 + $0x768] sm:$0xff]
    %v5753 = vld [vmem:[#allocation11 + $0x770] sm:$0xff]
    %v5754 = vld [vmem:[#allocation11 + $0x778] sm:$0xff]
    %v5755 = vld [vmem:[#allocation11 + $0x780] sm:$0xff]
    %v5756 = vld [vmem:[#allocation11 + $0x788] sm:$0xff]
    %v5757 = vld [vmem:[#allocation11 + $0x790] sm:$0xff]
    %v5758 = vld [vmem:[#allocation11 + $0x798] sm:$0xff]
    %v5759 = vld [vmem:[#allocation11 + $0x7a0] sm:$0xff]
    %v5760 = vld [vmem:[#allocation11 + $0x7a8] sm:$0xff]
    %v5761 = vld [vmem:[#allocation11 + $0x7b0] sm:$0xff]
    %v5762 = vld [vmem:[#allocation11 + $0x7b8] sm:$0xff]
    %v5763 = vld [vmem:[#allocation11 + $0x7c0] sm:$0xff]
    %v5764 = vld [vmem:[#allocation11 + $0x7c8] sm:$0xff]
    %v5765 = vld [vmem:[#allocation11 + $0x7d0] sm:$0xff]
    %v5766 = vld [vmem:[#allocation11 + $0x7d8] sm:$0xff]
    %v5767 = vld [vmem:[#allocation11 + $0x7e0] sm:$0xff]
    %v5768 = vld [vmem:[#allocation11 + $0x7e8] sm:$0xff]
    %v5769 = vld [vmem:[#allocation11 + $0x7f0] sm:$0xff]
    %v5770 = vld [vmem:[#allocation11 + $0x7f8] sm:$0xff]
    %v5771 = vld [vmem:[#allocation11 + $0x800] sm:$0xff]
    %v5772 = vld [vmem:[#allocation11 + $0x808] sm:$0xff]
    %v5773 = vld [vmem:[#allocation11 + $0x810] sm:$0xff]
    %v5774 = vld [vmem:[#allocation11 + $0x818] sm:$0xff]
    %v5775 = vld [vmem:[#allocation11 + $0x820] sm:$0xff]
    %v5776 = vld [vmem:[#allocation11 + $0x828] sm:$0xff]
    %v5777 = vld [vmem:[#allocation11 + $0x830] sm:$0xff]
    %v5778 = vld [vmem:[#allocation11 + $0x838] sm:$0xff]
    %v5779 = vld [vmem:[#allocation11 + $0x840] sm:$0xff]
    %v5780 = vld [vmem:[#allocation11 + $0x848] sm:$0xff]
    %v5781 = vld [vmem:[#allocation11 + $0x850] sm:$0xff]
    %v5782 = vld [vmem:[#allocation11 + $0x858] sm:$0xff]
    %v5783 = vld [vmem:[#allocation11 + $0x860] sm:$0xff]
    %v5784 = vld [vmem:[#allocation11 + $0x868] sm:$0xff]
    %v5785 = vld [vmem:[#allocation11 + $0x870] sm:$0xff]
    %v5786 = vld [vmem:[#allocation11 + $0x878] sm:$0xff]
    %v5787 = vld [vmem:[#allocation11 + $0x880] sm:$0xff]
    %v5788 = vld [vmem:[#allocation11 + $0x888] sm:$0xff]
    %v5789 = vld [vmem:[#allocation11 + $0x890] sm:$0xff]
    %v5790 = vld [vmem:[#allocation11 + $0x898] sm:$0xff]
    %v5791 = vld [vmem:[#allocation11 + $0x8a0] sm:$0xff]
    %v5792 = vld [vmem:[#allocation11 + $0x8a8] sm:$0xff]
    %v5793 = vld [vmem:[#allocation11 + $0x8b0] sm:$0xff]
    %v5794 = vld [vmem:[#allocation11 + $0x8b8] sm:$0xff]
    %v5795 = vld [vmem:[#allocation11 + $0x8c0] sm:$0xff]
    %v5796 = vld [vmem:[#allocation11 + $0x8c8] sm:$0xff]
    %v5797 = vld [vmem:[#allocation11 + $0x8d0] sm:$0xff]
    %v5798 = vld [vmem:[#allocation11 + $0x8d8] sm:$0xff]
    %v5799 = vld [vmem:[#allocation11 + $0x8e0] sm:$0xff]
    %v5800 = vld [vmem:[#allocation11 + $0x8e8] sm:$0xff]
    %v5801 = vld [vmem:[#allocation11 + $0x8f0] sm:$0xff]
    %v5802 = vld [vmem:[#allocation11 + $0x8f8] sm:$0xff]
    %v5803 = vld [vmem:[#allocation11 + $0x900] sm:$0xff]
    %v5804 = vld [vmem:[#allocation11 + $0x908] sm:$0xff]
    %v5805 = vld [vmem:[#allocation11 + $0x910] sm:$0xff]
    %v5806 = vld [vmem:[#allocation11 + $0x918] sm:$0xff]
    %v5807 = vld [vmem:[#allocation11 + $0x920] sm:$0xff]
    %v5808 = vld [vmem:[#allocation11 + $0x928] sm:$0xff]
    %v5809 = vld [vmem:[#allocation11 + $0x930] sm:$0xff]
    %v5810 = vld [vmem:[#allocation11 + $0x938] sm:$0xff]
    %v5811 = vld [vmem:[#allocation11 + $0x940] sm:$0xff]
    %v5812 = vld [vmem:[#allocation11 + $0x948] sm:$0xff]
    %v5813 = vld [vmem:[#allocation11 + $0x950] sm:$0xff]
    %v5814 = vld [vmem:[#allocation11 + $0x958] sm:$0xff]
    %v5815 = vld [vmem:[#allocation11 + $0x960] sm:$0xff]
    %v5816 = vld [vmem:[#allocation11 + $0x968] sm:$0xff]
    %v5817 = vld [vmem:[#allocation11 + $0x970] sm:$0xff]
    %v5818 = vld [vmem:[#allocation11 + $0x978] sm:$0xff]
    %v5819 = vld [vmem:[#allocation11 + $0x980] sm:$0xff]
    %v5820 = vld [vmem:[#allocation11 + $0x988] sm:$0xff]
    %v5821 = vld [vmem:[#allocation11 + $0x990] sm:$0xff]
    %v5822 = vld [vmem:[#allocation11 + $0x998] sm:$0xff]
    %v5823 = vld [vmem:[#allocation11 + $0x9a0] sm:$0xff]
    %v5824 = vld [vmem:[#allocation11 + $0x9a8] sm:$0xff]
    %v5825 = vld [vmem:[#allocation11 + $0x9b0] sm:$0xff]
    %v5826 = vld [vmem:[#allocation11 + $0x9b8] sm:$0xff]
    %v5827 = vld [vmem:[#allocation11 + $0x9c0] sm:$0xff]
    %v5828 = vld [vmem:[#allocation11 + $0x9c8] sm:$0xff]
    %v5829 = vld [vmem:[#allocation11 + $0x9d0] sm:$0xff]
    %v5830 = vld [vmem:[#allocation11 + $0x9d8] sm:$0xff]
    %v5831 = vld [vmem:[#allocation11 + $0x9e0] sm:$0xff]
    %v5832 = vld [vmem:[#allocation11 + $0x9e8] sm:$0xff]
    %v5833 = vld [vmem:[#allocation11 + $0x9f0] sm:$0xff]
    %v5834 = vld [vmem:[#allocation11 + $0x9f8] sm:$0xff]
    %v5835 = vld [vmem:[#allocation11 + $0xa00] sm:$0xff]
    %v5836 = vld [vmem:[#allocation11 + $0xa08] sm:$0xff]
    %v5837 = vld [vmem:[#allocation11 + $0xa10] sm:$0xff]
    %v5838 = vld [vmem:[#allocation11 + $0xa18] sm:$0xff]
    %v5839 = vld [vmem:[#allocation11 + $0xa20] sm:$0xff]
    %v5840 = vld [vmem:[#allocation11 + $0xa28] sm:$0xff]
    %v5841 = vld [vmem:[#allocation11 + $0xa30] sm:$0xff]
    %v5842 = vld [vmem:[#allocation11 + $0xa38] sm:$0xff]
    %v5843 = vld [vmem:[#allocation11 + $0xa40] sm:$0xff]
    %v5844 = vld [vmem:[#allocation11 + $0xa48] sm:$0xff]
    %v5845 = vld [vmem:[#allocation11 + $0xa50] sm:$0xff]
    %v5846 = vld [vmem:[#allocation11 + $0xa58] sm:$0xff]
    %v5847 = vld [vmem:[#allocation11 + $0xa60] sm:$0xff]
    %v5848 = vld [vmem:[#allocation11 + $0xa68] sm:$0xff]
    %v5849 = vld [vmem:[#allocation11 + $0xa70] sm:$0xff]
    %v5850 = vld [vmem:[#allocation11 + $0xa78] sm:$0xff]
    %v5851 = vld [vmem:[#allocation11 + $0xa80] sm:$0xff]
    %v5852 = vld [vmem:[#allocation11 + $0xa88] sm:$0xff]
    %v5853 = vld [vmem:[#allocation11 + $0xa90] sm:$0xff]
    %v5854 = vld [vmem:[#allocation11 + $0xa98] sm:$0xff]
    %v5855 = vld [vmem:[#allocation11 + $0xaa0] sm:$0xff]
    %v5856 = vld [vmem:[#allocation11 + $0xaa8] sm:$0xff]
    %v5857 = vld [vmem:[#allocation11 + $0xab0] sm:$0xff]
    %v5858 = vld [vmem:[#allocation11 + $0xab8] sm:$0xff]
    %v5859 = vld [vmem:[#allocation11 + $0xac0] sm:$0xff]
    %v5860 = vld [vmem:[#allocation11 + $0xac8] sm:$0xff]
    %v5861 = vld [vmem:[#allocation11 + $0xad0] sm:$0xff]
    %v5862 = vld [vmem:[#allocation11 + $0xad8] sm:$0xff]
    %v5863 = vld [vmem:[#allocation11 + $0xae0] sm:$0xff]
    %v5864 = vld [vmem:[#allocation11 + $0xae8] sm:$0xff]
    %v5865 = vld [vmem:[#allocation11 + $0xaf0] sm:$0xff]
    %v5866 = vld [vmem:[#allocation11 + $0xaf8] sm:$0xff]
    %v5867 = vld [vmem:[#allocation11 + $0xb00] sm:$0xff]
    %v5868 = vld [vmem:[#allocation11 + $0xb08] sm:$0xff]
    %v5869 = vld [vmem:[#allocation11 + $0xb10] sm:$0xff]
    %v5870 = vld [vmem:[#allocation11 + $0xb18] sm:$0xff]
    %v5871 = vld [vmem:[#allocation11 + $0xb20] sm:$0xff]
    %v5872 = vld [vmem:[#allocation11 + $0xb28] sm:$0xff]
    %v5873 = vld [vmem:[#allocation11 + $0xb30] sm:$0xff]
    %v5874 = vld [vmem:[#allocation11 + $0xb38] sm:$0xff]
    %v5875 = vld [vmem:[#allocation11 + $0xb40] sm:$0xff]
    %v5876 = vld [vmem:[#allocation11 + $0xb48] sm:$0xff]
    %v5877 = vld [vmem:[#allocation11 + $0xb50] sm:$0xff]
    %v5878 = vld [vmem:[#allocation11 + $0xb58] sm:$0xff]
    %v5879 = vld [vmem:[#allocation11 + $0xb60] sm:$0xff]
    %v5880 = vld [vmem:[#allocation11 + $0xb68] sm:$0xff]
    %v5881 = vld [vmem:[#allocation11 + $0xb70] sm:$0xff]
    %v5882 = vld [vmem:[#allocation11 + $0xb78] sm:$0xff]
    %v5883 = vld [vmem:[#allocation11 + $0xb80] sm:$0xff]
    %v5884 = vld [vmem:[#allocation11 + $0xb88] sm:$0xff]
    %v5885 = vld [vmem:[#allocation11 + $0xb90] sm:$0xff]
    %v5886 = vld [vmem:[#allocation11 + $0xb98] sm:$0xff]
    %v5887 = vld [vmem:[#allocation11 + $0xba0] sm:$0xff]
    %v5888 = vld [vmem:[#allocation11 + $0xba8] sm:$0xff]
    %v5889 = vld [vmem:[#allocation11 + $0xbb0] sm:$0xff]
    %v5890 = vld [vmem:[#allocation11 + $0xbb8] sm:$0xff]
    %v5891 = vld [vmem:[#allocation11 + $0xbc0] sm:$0xff]
    %v5892 = vld [vmem:[#allocation11 + $0xbc8] sm:$0xff]
    %v5893 = vld [vmem:[#allocation11 + $0xbd0] sm:$0xff]
    %v5894 = vld [vmem:[#allocation11 + $0xbd8] sm:$0xff]
    %v5895 = vld [vmem:[#allocation11 + $0xbe0] sm:$0xff]
    %v5896 = vld [vmem:[#allocation11 + $0xbe8] sm:$0xff]
    %v5897 = vld [vmem:[#allocation11 + $0xbf0] sm:$0xff]
    %v5898 = vld [vmem:[#allocation11 + $0xbf8] sm:$0xff]
    %v5899 = vld [vmem:[#allocation11 + $0xc00] sm:$0xff]
    %v5900 = vld [vmem:[#allocation11 + $0xc08] sm:$0xff]
    %v5901 = vld [vmem:[#allocation11 + $0xc10] sm:$0xff]
    %v5902 = vld [vmem:[#allocation11 + $0xc18] sm:$0xff]
    %v5903 = vld [vmem:[#allocation11 + $0xc20] sm:$0xff]
    %v5904 = vld [vmem:[#allocation11 + $0xc28] sm:$0xff]
    %v5905 = vld [vmem:[#allocation11 + $0xc30] sm:$0xff]
    %v5906 = vld [vmem:[#allocation11 + $0xc38] sm:$0xff]
    %v5907 = vld [vmem:[#allocation11 + $0xc40] sm:$0xff]
    %v5908 = vld [vmem:[#allocation11 + $0xc48] sm:$0xff]
    %v5909 = vld [vmem:[#allocation11 + $0xc50] sm:$0xff]
    %v5910 = vld [vmem:[#allocation11 + $0xc58] sm:$0xff]
    %v5911 = vld [vmem:[#allocation11 + $0xc60] sm:$0xff]
    %v5912 = vld [vmem:[#allocation11 + $0xc68] sm:$0xff]
    %v5913 = vld [vmem:[#allocation11 + $0xc70] sm:$0xff]
    %v5914 = vld [vmem:[#allocation11 + $0xc78] sm:$0xff]
    %v5915 = vld [vmem:[#allocation11 + $0xc80] sm:$0xff]
    %v5916 = vld [vmem:[#allocation11 + $0xc88] sm:$0xff]
    %v5917 = vld [vmem:[#allocation11 + $0xc90] sm:$0xff]
    %v5918 = vld [vmem:[#allocation11 + $0xc98] sm:$0xff]
    %v5919 = vld [vmem:[#allocation11 + $0xca0] sm:$0xff]
    %v5920 = vld [vmem:[#allocation11 + $0xca8] sm:$0xff]
    %v5921 = vld [vmem:[#allocation11 + $0xcb0] sm:$0xff]
    %v5922 = vld [vmem:[#allocation11 + $0xcb8] sm:$0xff]
    %v5923 = vld [vmem:[#allocation11 + $0xcc0] sm:$0xff]
    %v5924 = vld [vmem:[#allocation11 + $0xcc8] sm:$0xff]
    %v5925 = vld [vmem:[#allocation11 + $0xcd0] sm:$0xff]
    %v5926 = vld [vmem:[#allocation11 + $0xcd8] sm:$0xff]
    %v5927 = vld [vmem:[#allocation11 + $0xce0] sm:$0xff]
    %v5928 = vld [vmem:[#allocation11 + $0xce8] sm:$0xff]
    %v5929 = vld [vmem:[#allocation11 + $0xcf0] sm:$0xff]
    %v5930 = vld [vmem:[#allocation11 + $0xcf8] sm:$0xff]
    %v5931 = vld [vmem:[#allocation11 + $0xd00] sm:$0xff]
    %v5932 = vld [vmem:[#allocation11 + $0xd08] sm:$0xff]
    %v5933 = vld [vmem:[#allocation11 + $0xd10] sm:$0xff]
    %v5934 = vld [vmem:[#allocation11 + $0xd18] sm:$0xff]
    %v5935 = vld [vmem:[#allocation11 + $0xd20] sm:$0xff]
    %v5936 = vld [vmem:[#allocation11 + $0xd28] sm:$0xff]
    %v5937 = vld [vmem:[#allocation11 + $0xd30] sm:$0xff]
    %v5938 = vld [vmem:[#allocation11 + $0xd38] sm:$0xff]
    %v5939 = vld [vmem:[#allocation11 + $0xd40] sm:$0xff]
    %v5940 = vld [vmem:[#allocation11 + $0xd48] sm:$0xff]
    %v5941 = vld [vmem:[#allocation11 + $0xd50] sm:$0xff]
    %v5942 = vld [vmem:[#allocation11 + $0xd58] sm:$0xff]
    %v5943 = vld [vmem:[#allocation11 + $0xd60] sm:$0xff]
    %v5944 = vld [vmem:[#allocation11 + $0xd68] sm:$0xff]
    %v5945 = vld [vmem:[#allocation11 + $0xd70] sm:$0xff]
    %v5946 = vld [vmem:[#allocation11 + $0xd78] sm:$0xff]
    %v5947 = vld [vmem:[#allocation11 + $0xd80] sm:$0xff]
    %v5948 = vld [vmem:[#allocation11 + $0xd88] sm:$0xff]
    %v5949 = vld [vmem:[#allocation11 + $0xd90] sm:$0xff]
    %v5950 = vld [vmem:[#allocation11 + $0xd98] sm:$0xff]
    %v5951 = vld [vmem:[#allocation11 + $0xda0] sm:$0xff]
    %v5952 = vld [vmem:[#allocation11 + $0xda8] sm:$0xff]
    %v5953 = vld [vmem:[#allocation11 + $0xdb0] sm:$0xff]
    %v5954 = vld [vmem:[#allocation11 + $0xdb8] sm:$0xff]
    %v5955 = vld [vmem:[#allocation11 + $0xdc0] sm:$0xff]
    %v5956 = vld [vmem:[#allocation11 + $0xdc8] sm:$0xff]
    %v5957 = vld [vmem:[#allocation11 + $0xdd0] sm:$0xff]
    %v5958 = vld [vmem:[#allocation11 + $0xdd8] sm:$0xff]
    %v5959 = vld [vmem:[#allocation11 + $0xde0] sm:$0xff]
    %v5960 = vld [vmem:[#allocation11 + $0xde8] sm:$0xff]
    %v5961 = vld [vmem:[#allocation11 + $0xdf0] sm:$0xff]
    %v5962 = vld [vmem:[#allocation11 + $0xdf8] sm:$0xff]
    %v5963 = vld [vmem:[#allocation11 + $0xe00] sm:$0xff]
    %v5964 = vld [vmem:[#allocation11 + $0xe08] sm:$0xff]
    %v5965 = vld [vmem:[#allocation11 + $0xe10] sm:$0xff]
    %v5966 = vld [vmem:[#allocation11 + $0xe18] sm:$0xff]
    %v5967 = vld [vmem:[#allocation11 + $0xe20] sm:$0xff]
    %v5968 = vld [vmem:[#allocation11 + $0xe28] sm:$0xff]
    %v5969 = vld [vmem:[#allocation11 + $0xe30] sm:$0xff]
    %v5970 = vld [vmem:[#allocation11 + $0xe38] sm:$0xff]
    %v5971 = vld [vmem:[#allocation11 + $0xe40] sm:$0xff]
    %v5972 = vld [vmem:[#allocation11 + $0xe48] sm:$0xff]
    %v5973 = vld [vmem:[#allocation11 + $0xe50] sm:$0xff]
    %v5974 = vld [vmem:[#allocation11 + $0xe58] sm:$0xff]
    %v5975 = vld [vmem:[#allocation11 + $0xe60] sm:$0xff]
    %v5976 = vld [vmem:[#allocation11 + $0xe68] sm:$0xff]
    %v5977 = vld [vmem:[#allocation11 + $0xe70] sm:$0xff]
    %v5978 = vld [vmem:[#allocation11 + $0xe78] sm:$0xff]
    %v5979 = vld [vmem:[#allocation11 + $0xe80] sm:$0xff]
    %v5980 = vld [vmem:[#allocation11 + $0xe88] sm:$0xff]
    %v5981 = vld [vmem:[#allocation11 + $0xe90] sm:$0xff]
    %v5982 = vld [vmem:[#allocation11 + $0xe98] sm:$0xff]
    %v5983 = vld [vmem:[#allocation11 + $0xea0] sm:$0xff]
    %v5984 = vld [vmem:[#allocation11 + $0xea8] sm:$0xff]
    %v5985 = vld [vmem:[#allocation11 + $0xeb0] sm:$0xff]
    %v5986 = vld [vmem:[#allocation11 + $0xeb8] sm:$0xff]
    %v5987 = vld [vmem:[#allocation11 + $0xec0] sm:$0xff]
    %v5988 = vld [vmem:[#allocation11 + $0xec8] sm:$0xff]
    %v5989 = vld [vmem:[#allocation11 + $0xed0] sm:$0xff]
    %v5990 = vld [vmem:[#allocation11 + $0xed8] sm:$0xff]
    %v5991 = vld [vmem:[#allocation11 + $0xee0] sm:$0xff]
    %v5992 = vld [vmem:[#allocation11 + $0xee8] sm:$0xff]
    %v5993 = vld [vmem:[#allocation11 + $0xef0] sm:$0xff]
    %v5994 = vld [vmem:[#allocation11 + $0xef8] sm:$0xff]
    %v5995 = vld [vmem:[#allocation11 + $0xf00] sm:$0xff]
    %v5996 = vld [vmem:[#allocation11 + $0xf08] sm:$0xff]
    %v5997 = vld [vmem:[#allocation11 + $0xf10] sm:$0xff]
    %v5998 = vld [vmem:[#allocation11 + $0xf18] sm:$0xff]
    %v5999 = vld [vmem:[#allocation11 + $0xf20] sm:$0xff]
    %v6000 = vld [vmem:[#allocation11 + $0xf28] sm:$0xff]
    %v6001 = vld [vmem:[#allocation11 + $0xf30] sm:$0xff]
    %v6002 = vld [vmem:[#allocation11 + $0xf38] sm:$0xff]
    %v6003 = vld [vmem:[#allocation11 + $0xf40] sm:$0xff]
    %v6004 = vld [vmem:[#allocation11 + $0xf48] sm:$0xff]
    %v6005 = vld [vmem:[#allocation11 + $0xf50] sm:$0xff]
    %v6006 = vld [vmem:[#allocation11 + $0xf58] sm:$0xff]
    %v6007 = vld [vmem:[#allocation11 + $0xf60] sm:$0xff]
    %v6008 = vld [vmem:[#allocation11 + $0xf68] sm:$0xff]
    %v6009 = vld [vmem:[#allocation11 + $0xf70] sm:$0xff]
    %v6010 = vld [vmem:[#allocation11 + $0xf78] sm:$0xff]
    %v6011 = vld [vmem:[#allocation11 + $0xf80] sm:$0xff]
    %v6012 = vld [vmem:[#allocation11 + $0xf88] sm:$0xff]
    %v6013 = vld [vmem:[#allocation11 + $0xf90] sm:$0xff]
    %v6014 = vld [vmem:[#allocation11 + $0xf98] sm:$0xff]
    %v6015 = vld [vmem:[#allocation11 + $0xfa0] sm:$0xff]
    %v6016 = vld [vmem:[#allocation11 + $0xfa8] sm:$0xff]
    %v6017 = vld [vmem:[#allocation11 + $0xfb0] sm:$0xff]
    %v6018 = vld [vmem:[#allocation11 + $0xfb8] sm:$0xff]
    %v6019 = vld [vmem:[#allocation11 + $0xfc0] sm:$0xff]
    %v6020 = vld [vmem:[#allocation11 + $0xfc8] sm:$0xff]
    %v6021 = vld [vmem:[#allocation11 + $0xfd0] sm:$0xff]
    %v6022 = vld [vmem:[#allocation11 + $0xfd8] sm:$0xff]
    %v6023 = vld [vmem:[#allocation11 + $0xfe0] sm:$0xff]
    %v6024 = vld [vmem:[#allocation11 + $0xfe8] sm:$0xff]
    %v6025 = vld [vmem:[#allocation11 + $0xff0] sm:$0xff]
    %v6026 = vld [vmem:[#allocation11 + $0xff8] sm:$0xff]
    %v6027 = vld [vmem:[#allocation11 + $0x1000] sm:$0xff]
    %v6028 = vld [vmem:[#allocation11 + $0x1008] sm:$0xff]
    %v6029 = vld [vmem:[#allocation11 + $0x1010] sm:$0xff]
    %v6030 = vld [vmem:[#allocation11 + $0x1018] sm:$0xff]
    %v6031 = vld [vmem:[#allocation11 + $0x1020] sm:$0xff]
    %v6032 = vld [vmem:[#allocation11 + $0x1028] sm:$0xff]
    %v6033 = vld [vmem:[#allocation11 + $0x1030] sm:$0xff]
    %v6034 = vld [vmem:[#allocation11 + $0x1038] sm:$0xff]
    %v6035 = vld [vmem:[#allocation11 + $0x1040] sm:$0xff]
    %v6036 = vld [vmem:[#allocation11 + $0x1048] sm:$0xff]
    %v6037 = vld [vmem:[#allocation11 + $0x1050] sm:$0xff]
    %v6038 = vld [vmem:[#allocation11 + $0x1058] sm:$0xff]
    %v6039 = vld [vmem:[#allocation11 + $0x1060] sm:$0xff]
    %v6040 = vld [vmem:[#allocation11 + $0x1068] sm:$0xff]
    %v6041 = vld [vmem:[#allocation11 + $0x1070] sm:$0xff]
    %v6042 = vld [vmem:[#allocation11 + $0x1078] sm:$0xff]
    %v6043 = vld [vmem:[#allocation11 + $0x1080] sm:$0xff]
    %v6044 = vld [vmem:[#allocation11 + $0x1088] sm:$0xff]
    %v6045 = vld [vmem:[#allocation11 + $0x1090] sm:$0xff]
    %v6046 = vld [vmem:[#allocation11 + $0x1098] sm:$0xff]
    %v6047 = vld [vmem:[#allocation11 + $0x10a0] sm:$0xff]
    %v6048 = vld [vmem:[#allocation11 + $0x10a8] sm:$0xff]
    %v6049 = vld [vmem:[#allocation11 + $0x10b0] sm:$0xff]
    %v6050 = vld [vmem:[#allocation11 + $0x10b8] sm:$0xff]
    %v6051 = vld [vmem:[#allocation11 + $0x10c0] sm:$0xff]
    %v6052 = vld [vmem:[#allocation11 + $0x10c8] sm:$0xff]
    %v6053 = vld [vmem:[#allocation11 + $0x10d0] sm:$0xff]
    %v6054 = vld [vmem:[#allocation11 + $0x10d8] sm:$0xff]
    %v6055 = vld [vmem:[#allocation11 + $0x10e0] sm:$0xff]
    %v6056 = vld [vmem:[#allocation11 + $0x10e8] sm:$0xff]
    %v6057 = vld [vmem:[#allocation11 + $0x10f0] sm:$0xff]
    %v6058 = vld [vmem:[#allocation11 + $0x10f8] sm:$0xff]
    %v6059 = vld [vmem:[#allocation11 + $0x1100] sm:$0xff]
    %v6060 = vld [vmem:[#allocation11 + $0x1108] sm:$0xff]
    %v6061 = vld [vmem:[#allocation11 + $0x1110] sm:$0xff]
    %v6062 = vld [vmem:[#allocation11 + $0x1118] sm:$0xff]
    %v6063 = vld [vmem:[#allocation11 + $0x1120] sm:$0xff]
    %v6064 = vld [vmem:[#allocation11 + $0x1128] sm:$0xff]
    %v6065 = vld [vmem:[#allocation11 + $0x1130] sm:$0xff]
    %v6066 = vld [vmem:[#allocation11 + $0x1138] sm:$0xff]
    %v6067 = vld [vmem:[#allocation11 + $0x1140] sm:$0xff]
    %v6068 = vld [vmem:[#allocation11 + $0x1148] sm:$0xff]
    %v6069 = vld [vmem:[#allocation11 + $0x1150] sm:$0xff]
    %v6070 = vld [vmem:[#allocation11 + $0x1158] sm:$0xff]
    %v6071 = vld [vmem:[#allocation11 + $0x1160] sm:$0xff]
    %v6072 = vld [vmem:[#allocation11 + $0x1168] sm:$0xff]
    %v6073 = vld [vmem:[#allocation11 + $0x1170] sm:$0xff]
    %v6074 = vld [vmem:[#allocation11 + $0x1178] sm:$0xff]
    %v6075 = vld [vmem:[#allocation11 + $0x1180] sm:$0xff]
    %v6076 = vld [vmem:[#allocation11 + $0x1188] sm:$0xff]
    %v6077 = vld [vmem:[#allocation11 + $0x1190] sm:$0xff]
    %v6078 = vld [vmem:[#allocation11 + $0x1198] sm:$0xff]
    %v6079 = vld [vmem:[#allocation11 + $0x11a0] sm:$0xff]
    %v6080 = vld [vmem:[#allocation11 + $0x11a8] sm:$0xff]
    %v6081 = vld [vmem:[#allocation11 + $0x11b0] sm:$0xff]
    %v6082 = vld [vmem:[#allocation11 + $0x11b8] sm:$0xff]
    %v6083 = vld [vmem:[#allocation11 + $0x11c0] sm:$0xff]
    %v6084 = vld [vmem:[#allocation11 + $0x11c8] sm:$0xff]
    %v6085 = vld [vmem:[#allocation11 + $0x11d0] sm:$0xff]
    %v6086 = vld [vmem:[#allocation11 + $0x11d8] sm:$0xff]
    %v6087 = vld [vmem:[#allocation11 + $0x11e0] sm:$0xff]
    %v6088 = vld [vmem:[#allocation11 + $0x11e8] sm:$0xff]
    %v6089 = vld [vmem:[#allocation11 + $0x11f0] sm:$0xff]
    %v6090 = vld [vmem:[#allocation11 + $0x11f8] sm:$0xff]
    %v6091 = vld [vmem:[#allocation11 + $0x1200] sm:$0xff]
    %v6092 = vld [vmem:[#allocation11 + $0x1208] sm:$0xff]
    %v6093 = vld [vmem:[#allocation11 + $0x1210] sm:$0xff]
    %v6094 = vld [vmem:[#allocation11 + $0x1218] sm:$0xff]
    %v6095 = vld [vmem:[#allocation11 + $0x1220] sm:$0xff]
    %v6096 = vld [vmem:[#allocation11 + $0x1228] sm:$0xff]
    %v6097 = vld [vmem:[#allocation11 + $0x1230] sm:$0xff]
    %v6098 = vld [vmem:[#allocation11 + $0x1238] sm:$0xff]
    %v6099 = vld [vmem:[#allocation11 + $0x1240] sm:$0xff]
    %v6100 = vld [vmem:[#allocation11 + $0x1248] sm:$0xff]
    %v6101 = vld [vmem:[#allocation11 + $0x1250] sm:$0xff]
    %v6102 = vld [vmem:[#allocation11 + $0x1258] sm:$0xff]
    %v6103 = vld [vmem:[#allocation11 + $0x1260] sm:$0xff]
    %v6104 = vld [vmem:[#allocation11 + $0x1268] sm:$0xff]
    %v6105 = vld [vmem:[#allocation11 + $0x1270] sm:$0xff]
    %v6106 = vld [vmem:[#allocation11 + $0x1278] sm:$0xff]
    %v6107 = vld [vmem:[#allocation11 + $0x1280] sm:$0xff]
    %v6108 = vld [vmem:[#allocation11 + $0x1288] sm:$0xff]
    %v6109 = vld [vmem:[#allocation11 + $0x1290] sm:$0xff]
    %v6110 = vld [vmem:[#allocation11 + $0x1298] sm:$0xff]
    %v6111 = vld [vmem:[#allocation11 + $0x12a0] sm:$0xff]
    %v6112 = vld [vmem:[#allocation11 + $0x12a8] sm:$0xff]
    %v6113 = vld [vmem:[#allocation11 + $0x12b0] sm:$0xff]
    %v6114 = vld [vmem:[#allocation11 + $0x12b8] sm:$0xff]
    %v6115 = vld [vmem:[#allocation11 + $0x12c0] sm:$0xff]
    %v6116 = vld [vmem:[#allocation11 + $0x12c8] sm:$0xff]
    %v6117 = vld [vmem:[#allocation11 + $0x12d0] sm:$0xff]
    %v6118 = vld [vmem:[#allocation11 + $0x12d8] sm:$0xff]
    %v6119 = vld [vmem:[#allocation11 + $0x12e0] sm:$0xff]
    %v6120 = vld [vmem:[#allocation11 + $0x12e8] sm:$0xff]
    %v6121 = vld [vmem:[#allocation11 + $0x12f0] sm:$0xff]
    %v6122 = vld [vmem:[#allocation11 + $0x12f8] sm:$0xff]
    %v6123 = vld [vmem:[#allocation11 + $0x1300] sm:$0xff]
    %v6124 = vld [vmem:[#allocation11 + $0x1308] sm:$0xff]
    %v6125 = vld [vmem:[#allocation11 + $0x1310] sm:$0xff]
    %v6126 = vld [vmem:[#allocation11 + $0x1318] sm:$0xff]
    %v6127 = vld [vmem:[#allocation11 + $0x1320] sm:$0xff]
    %v6128 = vld [vmem:[#allocation11 + $0x1328] sm:$0xff]
    %v6129 = vld [vmem:[#allocation11 + $0x1330] sm:$0xff]
    %v6130 = vld [vmem:[#allocation11 + $0x1338] sm:$0xff]
    %v6131 = vld [vmem:[#allocation11 + $0x1340] sm:$0xff]
    %v6132 = vld [vmem:[#allocation11 + $0x1348] sm:$0xff]
    %v6133 = vld [vmem:[#allocation11 + $0x1350] sm:$0xff]
    %v6134 = vld [vmem:[#allocation11 + $0x1358] sm:$0xff]
    %v6135 = vld [vmem:[#allocation11 + $0x1360] sm:$0xff]
    %v6136 = vld [vmem:[#allocation11 + $0x1368] sm:$0xff]
    %v6137 = vld [vmem:[#allocation11 + $0x1370] sm:$0xff]
    %v6138 = vld [vmem:[#allocation11 + $0x1378] sm:$0xff]
    %v6139 = vld [vmem:[#allocation11 + $0x1380] sm:$0xff]
    %v6140 = vld [vmem:[#allocation11 + $0x1388] sm:$0xff]
    %v6141 = vld [vmem:[#allocation11 + $0x1390] sm:$0xff]
    %v6142 = vld [vmem:[#allocation11 + $0x1398] sm:$0xff]
    %v6143 = vld [vmem:[#allocation11 + $0x13a0] sm:$0xff]
    %v6144 = vld [vmem:[#allocation11 + $0x13a8] sm:$0xff]
    %v6145 = vld [vmem:[#allocation11 + $0x13b0] sm:$0xff]
    %v6146 = vld [vmem:[#allocation11 + $0x13b8] sm:$0xff]
    %v6147 = vld [vmem:[#allocation11 + $0x13c0] sm:$0xff]
    %v6148 = vld [vmem:[#allocation11 + $0x13c8] sm:$0xff]
    %v6149 = vld [vmem:[#allocation11 + $0x13d0] sm:$0xff]
    %v6150 = vld [vmem:[#allocation11 + $0x13d8] sm:$0xff]
    %v6151 = vld [vmem:[#allocation11 + $0x13e0] sm:$0xff]
    %v6152 = vld [vmem:[#allocation11 + $0x13e8] sm:$0xff]
    %v6153 = vld [vmem:[#allocation11 + $0x13f0] sm:$0xff]
    %v6154 = vld [vmem:[#allocation11 + $0x13f8] sm:$0xff]
    %v6155 = vld [vmem:[#allocation11 + $0x1400] sm:$0xff]
    %v6156 = vld [vmem:[#allocation11 + $0x1408] sm:$0xff]
    %v6157 = vld [vmem:[#allocation11 + $0x1410] sm:$0xff]
    %v6158 = vld [vmem:[#allocation11 + $0x1418] sm:$0xff]
    %v6159 = vld [vmem:[#allocation11 + $0x1420] sm:$0xff]
    %v6160 = vld [vmem:[#allocation11 + $0x1428] sm:$0xff]
    %v6161 = vld [vmem:[#allocation11 + $0x1430] sm:$0xff]
    %v6162 = vld [vmem:[#allocation11 + $0x1438] sm:$0xff]
    %v6163 = vld [vmem:[#allocation11 + $0x1440] sm:$0xff]
    %v6164 = vld [vmem:[#allocation11 + $0x1448] sm:$0xff]
    %v6165 = vld [vmem:[#allocation11 + $0x1450] sm:$0xff]
    %v6166 = vld [vmem:[#allocation11 + $0x1458] sm:$0xff]
    %v6167 = vld [vmem:[#allocation11 + $0x1460] sm:$0xff]
    %v6168 = vld [vmem:[#allocation11 + $0x1468] sm:$0xff]
    %v6169 = vld [vmem:[#allocation11 + $0x1470] sm:$0xff]
    %v6170 = vld [vmem:[#allocation11 + $0x1478] sm:$0xff]
    %v6171 = vld [vmem:[#allocation11 + $0x1480] sm:$0xff]
    %v6172 = vld [vmem:[#allocation11 + $0x1488] sm:$0xff]
    %v6173 = vld [vmem:[#allocation11 + $0x1490] sm:$0xff]
    %v6174 = vld [vmem:[#allocation11 + $0x1498] sm:$0xff]
    %v6175 = vld [vmem:[#allocation11 + $0x14a0] sm:$0xff]
    %v6176 = vld [vmem:[#allocation11 + $0x14a8] sm:$0xff]
    %v6177 = vld [vmem:[#allocation11 + $0x14b0] sm:$0xff]
    %v6178 = vld [vmem:[#allocation11 + $0x14b8] sm:$0xff]
    %v6179 = vld [vmem:[#allocation11 + $0x14c0] sm:$0xff]
    %v6180 = vld [vmem:[#allocation11 + $0x14c8] sm:$0xff]
    %v6181 = vld [vmem:[#allocation11 + $0x14d0] sm:$0xff]
    %v6182 = vld [vmem:[#allocation11 + $0x14d8] sm:$0xff]
    %v6183 = vld [vmem:[#allocation11 + $0x14e0] sm:$0xff]
    %v6184 = vld [vmem:[#allocation11 + $0x14e8] sm:$0xff]
    %v6185 = vld [vmem:[#allocation11 + $0x14f0] sm:$0xff]
    %v6186 = vld [vmem:[#allocation11 + $0x14f8] sm:$0xff]
    %v6187 = vld [vmem:[#allocation11 + $0x1500] sm:$0xff]
    %v6188 = vld [vmem:[#allocation11 + $0x1508] sm:$0xff]
    %v6189 = vld [vmem:[#allocation11 + $0x1510] sm:$0xff]
    %v6190 = vld [vmem:[#allocation11 + $0x1518] sm:$0xff]
    %v6191 = vld [vmem:[#allocation11 + $0x1520] sm:$0xff]
    %v6192 = vld [vmem:[#allocation11 + $0x1528] sm:$0xff]
    %v6193 = vld [vmem:[#allocation11 + $0x1530] sm:$0xff]
    %v6194 = vld [vmem:[#allocation11 + $0x1538] sm:$0xff]
    %v6195 = vld [vmem:[#allocation11 + $0x1540] sm:$0xff]
    %v6196 = vld [vmem:[#allocation11 + $0x1548] sm:$0xff]
    %v6197 = vld [vmem:[#allocation11 + $0x1550] sm:$0xff]
    %v6198 = vld [vmem:[#allocation11 + $0x1558] sm:$0xff]
    %v6199 = vld [vmem:[#allocation11 + $0x1560] sm:$0xff]
    %v6200 = vld [vmem:[#allocation11 + $0x1568] sm:$0xff]
    %v6201 = vld [vmem:[#allocation11 + $0x1570] sm:$0xff]
    %v6202 = vld [vmem:[#allocation11 + $0x1578] sm:$0xff]
    %v6203 = vld [vmem:[#allocation11 + $0x1580] sm:$0xff]
    %v6204 = vld [vmem:[#allocation11 + $0x1588] sm:$0xff]
    %v6205 = vld [vmem:[#allocation11 + $0x1590] sm:$0xff]
    %v6206 = vld [vmem:[#allocation11 + $0x1598] sm:$0xff]
    %v6207 = vld [vmem:[#allocation11 + $0x15a0] sm:$0xff]
    %v6208 = vld [vmem:[#allocation11 + $0x15a8] sm:$0xff]
    %v6209 = vld [vmem:[#allocation11 + $0x15b0] sm:$0xff]
    %v6210 = vld [vmem:[#allocation11 + $0x15b8] sm:$0xff]
    %v6211 = vld [vmem:[#allocation11 + $0x15c0] sm:$0xff]
    %v6212 = vld [vmem:[#allocation11 + $0x15c8] sm:$0xff]
    %v6213 = vld [vmem:[#allocation11 + $0x15d0] sm:$0xff]
    %v6214 = vld [vmem:[#allocation11 + $0x15d8] sm:$0xff]
    %v6215 = vld [vmem:[#allocation11 + $0x15e0] sm:$0xff]
    %v6216 = vld [vmem:[#allocation11 + $0x15e8] sm:$0xff]
    %v6217 = vld [vmem:[#allocation11 + $0x15f0] sm:$0xff]
    %v6218 = vld [vmem:[#allocation11 + $0x15f8] sm:$0xff]
    %v6219 = vld [vmem:[#allocation11 + $0x1600] sm:$0xff]
    %v6220 = vld [vmem:[#allocation11 + $0x1608] sm:$0xff]
    %v6221 = vld [vmem:[#allocation11 + $0x1610] sm:$0xff]
    %v6222 = vld [vmem:[#allocation11 + $0x1618] sm:$0xff]
    %v6223 = vld [vmem:[#allocation11 + $0x1620] sm:$0xff]
    %v6224 = vld [vmem:[#allocation11 + $0x1628] sm:$0xff]
    %v6225 = vld [vmem:[#allocation11 + $0x1630] sm:$0xff]
    %v6226 = vld [vmem:[#allocation11 + $0x1638] sm:$0xff]
    %v6227 = vld [vmem:[#allocation11 + $0x1640] sm:$0xff]
    %v6228 = vld [vmem:[#allocation11 + $0x1648] sm:$0xff]
    %v6229 = vld [vmem:[#allocation11 + $0x1650] sm:$0xff]
    %v6230 = vld [vmem:[#allocation11 + $0x1658] sm:$0xff]
    %v6231 = vld [vmem:[#allocation11 + $0x1660] sm:$0xff]
    %v6232 = vld [vmem:[#allocation11 + $0x1668] sm:$0xff]
    %v6233 = vld [vmem:[#allocation11 + $0x1670] sm:$0xff]
    %v6234 = vld [vmem:[#allocation11 + $0x1678] sm:$0xff]
    %v6235 = vld [vmem:[#allocation11 + $0x1680] sm:$0xff]
    %v6236 = vld [vmem:[#allocation11 + $0x1688] sm:$0xff]
    %v6237 = vld [vmem:[#allocation11 + $0x1690] sm:$0xff]
    %v6238 = vld [vmem:[#allocation11 + $0x1698] sm:$0xff]
    %v6239 = vld [vmem:[#allocation11 + $0x16a0] sm:$0xff]
    %v6240 = vld [vmem:[#allocation11 + $0x16a8] sm:$0xff]
    %v6241 = vld [vmem:[#allocation11 + $0x16b0] sm:$0xff]
    %v6242 = vld [vmem:[#allocation11 + $0x16b8] sm:$0xff]
    %v6243 = vld [vmem:[#allocation11 + $0x16c0] sm:$0xff]
    %v6244 = vld [vmem:[#allocation11 + $0x16c8] sm:$0xff]
    %v6245 = vld [vmem:[#allocation11 + $0x16d0] sm:$0xff]
    %v6246 = vld [vmem:[#allocation11 + $0x16d8] sm:$0xff]
    %v6247 = vld [vmem:[#allocation11 + $0x16e0] sm:$0xff]
    %v6248 = vld [vmem:[#allocation11 + $0x16e8] sm:$0xff]
    %v6249 = vld [vmem:[#allocation11 + $0x16f0] sm:$0xff]
    %v6250 = vld [vmem:[#allocation11 + $0x16f8] sm:$0xff]
    %v6251 = vld [vmem:[#allocation11 + $0x1700] sm:$0xff]
    %v6252 = vld [vmem:[#allocation11 + $0x1708] sm:$0xff]
    %v6253 = vld [vmem:[#allocation11 + $0x1710] sm:$0xff]
    %v6254 = vld [vmem:[#allocation11 + $0x1718] sm:$0xff]
    %v6255 = vld [vmem:[#allocation11 + $0x1720] sm:$0xff]
    %v6256 = vld [vmem:[#allocation11 + $0x1728] sm:$0xff]
    %v6257 = vld [vmem:[#allocation11 + $0x1730] sm:$0xff]
    %v6258 = vld [vmem:[#allocation11 + $0x1738] sm:$0xff]
    %v6259 = vld [vmem:[#allocation11 + $0x1740] sm:$0xff]
    %v6260 = vld [vmem:[#allocation11 + $0x1748] sm:$0xff]
    %v6261 = vld [vmem:[#allocation11 + $0x1750] sm:$0xff]
    %v6262 = vld [vmem:[#allocation11 + $0x1758] sm:$0xff]
    %v6263 = vld [vmem:[#allocation11 + $0x1760] sm:$0xff]
    %v6264 = vld [vmem:[#allocation11 + $0x1768] sm:$0xff]
    %v6265 = vld [vmem:[#allocation11 + $0x1770] sm:$0xff]
    %v6266 = vld [vmem:[#allocation11 + $0x1778] sm:$0xff]
    %v6267 = vld [vmem:[#allocation11 + $0x1780] sm:$0xff]
    %v6268 = vld [vmem:[#allocation11 + $0x1788] sm:$0xff]
    %v6269 = vld [vmem:[#allocation11 + $0x1790] sm:$0xff]
    %v6270 = vld [vmem:[#allocation11 + $0x1798] sm:$0xff]
    %v6271 = vld [vmem:[#allocation11 + $0x17a0] sm:$0xff]
    %v6272 = vld [vmem:[#allocation11 + $0x17a8] sm:$0xff]
    %v6273 = vld [vmem:[#allocation11 + $0x17b0] sm:$0xff]
    %v6274 = vld [vmem:[#allocation11 + $0x17b8] sm:$0xff]
    %v6275 = vld [vmem:[#allocation11 + $0x17c0] sm:$0xff]
    %v6276 = vld [vmem:[#allocation11 + $0x17c8] sm:$0xff]
    %v6277 = vld [vmem:[#allocation11 + $0x17d0] sm:$0xff]
    %v6278 = vld [vmem:[#allocation11 + $0x17d8] sm:$0xff]
    %v6279 = vld [vmem:[#allocation11 + $0x17e0] sm:$0xff]
    %v6280 = vld [vmem:[#allocation11 + $0x17e8] sm:$0xff]
    %v6281 = vld [vmem:[#allocation11 + $0x17f0] sm:$0xff]
    %v6282 = vld [vmem:[#allocation11 + $0x17f8] sm:$0xff]
    %v6283 = vld [vmem:[#allocation11 + $0x1800] sm:$0xff]
    %v6284 = vld [vmem:[#allocation11 + $0x1808] sm:$0xff]
    %v6285 = vld [vmem:[#allocation11 + $0x1810] sm:$0xff]
    %v6286 = vld [vmem:[#allocation11 + $0x1818] sm:$0xff]
    %v6287 = vld [vmem:[#allocation11 + $0x1820] sm:$0xff]
    %v6288 = vld [vmem:[#allocation11 + $0x1828] sm:$0xff]
    %v6289 = vld [vmem:[#allocation11 + $0x1830] sm:$0xff]
    %v6290 = vld [vmem:[#allocation11 + $0x1838] sm:$0xff]
    %v6291 = vld [vmem:[#allocation11 + $0x1840] sm:$0xff]
    %v6292 = vld [vmem:[#allocation11 + $0x1848] sm:$0xff]
    %v6293 = vld [vmem:[#allocation11 + $0x1850] sm:$0xff]
    %v6294 = vld [vmem:[#allocation11 + $0x1858] sm:$0xff]
    %v6295 = vld [vmem:[#allocation11 + $0x1860] sm:$0xff]
    %v6296 = vld [vmem:[#allocation11 + $0x1868] sm:$0xff]
    %v6297 = vld [vmem:[#allocation11 + $0x1870] sm:$0xff]
    %v6298 = vld [vmem:[#allocation11 + $0x1878] sm:$0xff]
    %v6299 = vld [vmem:[#allocation11 + $0x1880] sm:$0xff]
    %v6300 = vld [vmem:[#allocation11 + $0x1888] sm:$0xff]
    %v6301 = vld [vmem:[#allocation11 + $0x1890] sm:$0xff]
    %v6302 = vld [vmem:[#allocation11 + $0x1898] sm:$0xff]
    %v6303 = vld [vmem:[#allocation11 + $0x18a0] sm:$0xff]
    %v6304 = vld [vmem:[#allocation11 + $0x18a8] sm:$0xff]
    %v6305 = vld [vmem:[#allocation11 + $0x18b0] sm:$0xff]
    %v6306 = vld [vmem:[#allocation11 + $0x18b8] sm:$0xff]
    %v6307 = vld [vmem:[#allocation11 + $0x18c0] sm:$0xff]
    %v6308 = vld [vmem:[#allocation11 + $0x18c8] sm:$0xff]
    %v6309 = vld [vmem:[#allocation11 + $0x18d0] sm:$0xff]
    %v6310 = vld [vmem:[#allocation11 + $0x18d8] sm:$0xff]
    %v6311 = vld [vmem:[#allocation11 + $0x18e0] sm:$0xff]
    %v6312 = vld [vmem:[#allocation11 + $0x18e8] sm:$0xff]
    %v6313 = vld [vmem:[#allocation11 + $0x18f0] sm:$0xff]
    %v6314 = vld [vmem:[#allocation11 + $0x18f8] sm:$0xff]
    %v6315 = vld [vmem:[#allocation13] sm:$0x1f]
    %v6317 = vlaneseq
    %v6318 = vshrl.u32 %v6317, 7
    %v6319 = vsub.s32 0, %v6318
    %v6320 = vrot.slane %v6315, %v6319
    %v6321 = vlaneseq
    %v6322 = vshrl.u32 %v6321, 7
    %v6323 = vsub.s32 1, %v6322
    %v6324 = vrot.slane %v6315, %v6323
    %v6325 = vlaneseq
    %v6326 = vshrl.u32 %v6325, 7
    %v6327 = vsub.s32 2, %v6326
    %v6328 = vrot.slane %v6315, %v6327
    %v6329 = vlaneseq
    %v6330 = vshrl.u32 %v6329, 7
    %v6331 = vsub.s32 3, %v6330
    %v6332 = vrot.slane %v6315, %v6331
    %v6333 = vlaneseq
    %v6334 = vshrl.u32 %v6333, 7
    %v6335 = vsub.s32 4, %v6334
    %v6336 = vrot.slane %v6315, %v6335
    %6342 = vmatprep.subr.mxu0 %v5516
    %6343 = vmatpush1.msra.mxu0 %v5515
    %6344 = vmatprep.subr.mxu0 %v5521
    %6345 = vmatpush1.msra.mxu0 %v5520
    %6346 = vmatprep.subr.mxu0 %v5526
    %6347 = vmatpush1.msra.mxu0 %v5525
    %6348 = vmatprep.subr.mxu0 %v5531
    %6349 = vmatpush1.msra.mxu0 %v5530
    %6350 = vmatprep.subr.mxu0 %v5536
    %6351 = vmatpush1.msra.mxu0 %v5535
    %6352 = vmatprep.subr.mxu0 %v5541
    %6353 = vmatpush1.msra.mxu0 %v5540
    %6354 = vmatprep.subr.mxu0 %v5546
    %6355 = vmatpush1.msra.mxu0 %v5545
    %6356 = vmatprep.subr.mxu0 %v5551
    %6357 = vmatpush1.msra.mxu0 %v5550
    %6358 = vmatprep.subr.mxu0 %v5556
    %6359 = vmatpush1.msra.mxu0 %v5555
    %6360 = vmatprep.subr.mxu0 %v5561
    %6361 = vmatpush1.msra.mxu0 %v5560
    %6362 = vmatprep.subr.mxu0 %v5566
    %6363 = vmatpush1.msra.mxu0 %v5565
    %6364 = vmatprep.subr.mxu0 %v5571
    %6365 = vmatpush1.msra.mxu0 %v5570
    %6366 = vmatprep.subr.mxu0 %v5576
    %6367 = vmatpush1.msra.mxu0 %v5575
    %6368 = vmatprep.subr.mxu0 %v5581
    %6369 = vmatpush1.msra.mxu0 %v5580
    %6370 = vmatprep.subr.mxu0 %v5586
    %6371 = vmatpush1.msra.mxu0 %v5585
    %6372 = vmatprep.subr.mxu0 %v5591
    %6373 = vmatpush1.msra.mxu0 %v5590
    %6374 = vmatprep.subr.mxu0 %v5596
    %6375 = vmatpush1.msra.mxu0 %v5595
    %6376 = vmatprep.subr.mxu0 %v5601
    %6377 = vmatpush1.msra.mxu0 %v5600
    %6378 = vmatprep.subr.mxu0 %v5606
    %6379 = vmatpush1.msra.mxu0 %v5605
    %6380 = vmatprep.subr.mxu0 %v5611
    %6381 = vmatpush1.msra.mxu0 %v5610
    %6382 = vmatprep.subr.mxu0 %v5616
    %6383 = vmatpush1.msra.mxu0 %v5615
    %6384 = vmatprep.subr.mxu0 %v5621
    %6385 = vmatpush1.msra.mxu0 %v5620
    %6386 = vmatprep.subr.mxu0 %v5626
    %6387 = vmatpush1.msra.mxu0 %v5625
    %6388 = vmatprep.subr.mxu0 %v5631
    %6389 = vmatpush1.msra.mxu0 %v5630
    %6390 = vmatprep.subr.mxu0 %v5636
    %6391 = vmatpush1.msra.mxu0 %v5635
    %6392 = vmatprep.subr.mxu0 %v5641
    %6393 = vmatpush1.msra.mxu0 %v5640
    %6394 = vmatprep.subr.mxu0 %v5646
    %6395 = vmatpush1.msra.mxu0 %v5645
    %6396 = vmatprep.subr.mxu0 %v5651
    %6397 = vmatpush1.msra.mxu0 %v5650
    %6398 = vmatprep.subr.mxu0 %v5656
    %6399 = vmatpush1.msra.mxu0 %v5655
    %6400 = vmatprep.subr.mxu0 %v5661
    %6401 = vmatpush1.msra.mxu0 %v5660
    %6402 = vmatprep.subr.mxu0 %v5666
    %6403 = vmatpush1.msra.mxu0 %v5665
    %6404 = vmatprep.subr.mxu0 %v5671
    %6405 = vmatpush1.msra.mxu0 %v5670
    %6406 = vmatprep.mubr.f32.mxu0 %v5506
    %6407 = vmatmul.mubr.f32.gmra.mrb[0].mxu0 %v5505
    %v6408 = vpop.f32.mrb[0].mxu0
    %v6409 = vadd.f32 %v6320, %v6408
    %v6410 = vpop.f32.mrb[0].mxu0
    %v6411 = vadd.f32 %v6324, %v6410
    %6412 = vdwg.mxu0
    %6413 = vmatprep.subr.mxu0 %v5676
    %6414 = vmatpush1.msra.mxu0 %v5675
    %6415 = vmatprep.subr.mxu0 %v5681
    %6416 = vmatpush1.msra.mxu0 %v5680
    %6417 = vmatprep.subr.mxu0 %v5686
    %6418 = vmatpush1.msra.mxu0 %v5685
    %6419 = vmatprep.subr.mxu0 %v5691
    %6420 = vmatpush1.msra.mxu0 %v5690
    %6421 = vmatprep.subr.mxu0 %v5696
    %6422 = vmatpush1.msra.mxu0 %v5695
    %6423 = vmatprep.subr.mxu0 %v5701
    %6424 = vmatpush1.msra.mxu0 %v5700
    %6425 = vmatprep.subr.mxu0 %v5706
    %6426 = vmatpush1.msra.mxu0 %v5705
    %6427 = vmatprep.subr.mxu0 %v5711
    %6428 = vmatpush1.msra.mxu0 %v5710
    %6429 = vmatprep.subr.mxu0 %v5716
    %6430 = vmatpush1.msra.mxu0 %v5715
    %6431 = vmatprep.subr.mxu0 %v5721
    %6432 = vmatpush1.msra.mxu0 %v5720
    %6433 = vmatprep.subr.mxu0 %v5726
    %6434 = vmatpush1.msra.mxu0 %v5725
    %6435 = vmatprep.subr.mxu0 %v5731
    %6436 = vmatpush1.msra.mxu0 %v5730
    %6437 = vmatprep.subr.mxu0 %v5736
    %6438 = vmatpush1.msra.mxu0 %v5735
    %6439 = vmatprep.subr.mxu0 %v5741
    %6440 = vmatpush1.msra.mxu0 %v5740
    %6441 = vmatprep.subr.mxu0 %v5746
    %6442 = vmatpush1.msra.mxu0 %v5745
    %6443 = vmatprep.subr.mxu0 %v5751
    %6444 = vmatpush1.msra.mxu0 %v5750
    %6445 = vmatprep.subr.mxu0 %v5756
    %6446 = vmatpush1.msra.mxu0 %v5755
    %6447 = vmatprep.subr.mxu0 %v5761
    %6448 = vmatpush1.msra.mxu0 %v5760
    %6449 = vmatprep.subr.mxu0 %v5766
    %6450 = vmatpush1.msra.mxu0 %v5765
    %6451 = vmatprep.subr.mxu0 %v5771
    %6452 = vmatpush1.msra.mxu0 %v5770
    %6453 = vmatprep.subr.mxu0 %v5776
    %6454 = vmatpush1.msra.mxu0 %v5775
    %6455 = vmatprep.subr.mxu0 %v5781
    %6456 = vmatpush1.msra.mxu0 %v5780
    %6457 = vmatprep.subr.mxu0 %v5786
    %6458 = vmatpush1.msra.mxu0 %v5785
    %6459 = vmatprep.subr.mxu0 %v5791
    %6460 = vmatpush1.msra.mxu0 %v5790
    %6461 = vmatprep.subr.mxu0 %v5796
    %6462 = vmatpush1.msra.mxu0 %v5795
    %6463 = vmatprep.subr.mxu0 %v5801
    %6464 = vmatpush1.msra.mxu0 %v5800
    %6465 = vmatprep.subr.mxu0 %v5806
    %6466 = vmatpush1.msra.mxu0 %v5805
    %6467 = vmatprep.subr.mxu0 %v5811
    %6468 = vmatpush1.msra.mxu0 %v5810
    %6469 = vmatprep.subr.mxu0 %v5816
    %6470 = vmatpush1.msra.mxu0 %v5815
    %6471 = vmatprep.subr.mxu0 %v5821
    %6472 = vmatpush1.msra.mxu0 %v5820
    %6473 = vmatprep.subr.mxu0 %v5826
    %6474 = vmatpush1.msra.mxu0 %v5825
    %6475 = vmatprep.subr.mxu0 %v5831
    %6476 = vmatpush1.msra.mxu0 %v5830
    %6477 = vmatprep.mubr.f32.mxu0 %v5508
    %6478 = vmatmul.mubr.f32.gmra.mrb[0].mxu0 %v5507
    %v6479 = vpop.f32.mrb[0].mxu0
    %v6480 = vadd.f32 %v6409, %v6479
    %v6481 = vpop.f32.mrb[0].mxu0
    %v6482 = vadd.f32 %v6411, %v6481
    %6483 = vdwg.mxu0
    %6484 = vmatprep.subr.mxu0 %v5836
    %6485 = vmatpush1.msra.mxu0 %v5835
    %6486 = vmatprep.subr.mxu0 %v5841
    %6487 = vmatpush1.msra.mxu0 %v5840
    %6488 = vmatprep.subr.mxu0 %v5846
    %6489 = vmatpush1.msra.mxu0 %v5845
    %6490 = vmatprep.subr.mxu0 %v5851
    %6491 = vmatpush1.msra.mxu0 %v5850
    %6492 = vmatprep.subr.mxu0 %v5856
    %6493 = vmatpush1.msra.mxu0 %v5855
    %6494 = vmatprep.subr.mxu0 %v5861
    %6495 = vmatpush1.msra.mxu0 %v5860
    %6496 = vmatprep.subr.mxu0 %v5866
    %6497 = vmatpush1.msra.mxu0 %v5865
    %6498 = vmatprep.subr.mxu0 %v5871
    %6499 = vmatpush1.msra.mxu0 %v5870
    %6500 = vmatprep.subr.mxu0 %v5876
    %6501 = vmatpush1.msra.mxu0 %v5875
    %6502 = vmatprep.subr.mxu0 %v5881
    %6503 = vmatpush1.msra.mxu0 %v5880
    %6504 = vmatprep.subr.mxu0 %v5886
    %6505 = vmatpush1.msra.mxu0 %v5885
    %6506 = vmatprep.subr.mxu0 %v5891
    %6507 = vmatpush1.msra.mxu0 %v5890
    %6508 = vmatprep.subr.mxu0 %v5896
    %6509 = vmatpush1.msra.mxu0 %v5895
    %6510 = vmatprep.subr.mxu0 %v5901
    %6511 = vmatpush1.msra.mxu0 %v5900
    %6512 = vmatprep.subr.mxu0 %v5906
    %6513 = vmatpush1.msra.mxu0 %v5905
    %6514 = vmatprep.subr.mxu0 %v5911
    %6515 = vmatpush1.msra.mxu0 %v5910
    %6516 = vmatprep.subr.mxu0 %v5916
    %6517 = vmatpush1.msra.mxu0 %v5915
    %6518 = vmatprep.subr.mxu0 %v5921
    %6519 = vmatpush1.msra.mxu0 %v5920
    %6520 = vmatprep.subr.mxu0 %v5926
    %6521 = vmatpush1.msra.mxu0 %v5925
    %6522 = vmatprep.subr.mxu0 %v5931
    %6523 = vmatpush1.msra.mxu0 %v5930
    %6524 = vmatprep.subr.mxu0 %v5936
    %6525 = vmatpush1.msra.mxu0 %v5935
    %6526 = vmatprep.subr.mxu0 %v5941
    %6527 = vmatpush1.msra.mxu0 %v5940
    %6528 = vmatprep.subr.mxu0 %v5946
    %6529 = vmatpush1.msra.mxu0 %v5945
    %6530 = vmatprep.subr.mxu0 %v5951
    %6531 = vmatpush1.msra.mxu0 %v5950
    %6532 = vmatprep.subr.mxu0 %v5956
    %6533 = vmatpush1.msra.mxu0 %v5955
    %6534 = vmatprep.subr.mxu0 %v5961
    %6535 = vmatpush1.msra.mxu0 %v5960
    %6536 = vmatprep.subr.mxu0 %v5966
    %6537 = vmatpush1.msra.mxu0 %v5965
    %6538 = vmatprep.subr.mxu0 %v5971
    %6539 = vmatpush1.msra.mxu0 %v5970
    %6540 = vmatprep.subr.mxu0 %v5976
    %6541 = vmatpush1.msra.mxu0 %v5975
    %6542 = vmatprep.subr.mxu0 %v5981
    %6543 = vmatpush1.msra.mxu0 %v5980
    %6544 = vmatprep.subr.mxu0 %v5986
    %6545 = vmatpush1.msra.mxu0 %v5985
    %6546 = vmatprep.subr.mxu0 %v5991
    %6547 = vmatpush1.msra.mxu0 %v5990
    %6548 = vmatprep.mubr.f32.mxu0 %v5510
    %6549 = vmatmul.mubr.f32.gmra.mrb[0].mxu0 %v5509
    %v6550 = vpop.f32.mrb[0].mxu0
    %v6551 = vadd.f32 %v6480, %v6550
    %v6552 = vpop.f32.mrb[0].mxu0
    %v6553 = vadd.f32 %v6482, %v6552
    %6554 = vdwg.mxu0
    %6555 = vmatprep.subr.mxu0 %v5996
    %6556 = vmatpush1.msra.mxu0 %v5995
    %6557 = vmatprep.subr.mxu0 %v6001
    %6558 = vmatpush1.msra.mxu0 %v6000
    %6559 = vmatprep.subr.mxu0 %v6006
    %6560 = vmatpush1.msra.mxu0 %v6005
    %6561 = vmatprep.subr.mxu0 %v6011
    %6562 = vmatpush1.msra.mxu0 %v6010
    %6563 = vmatprep.subr.mxu0 %v6016
    %6564 = vmatpush1.msra.mxu0 %v6015
    %6565 = vmatprep.subr.mxu0 %v6021
    %6566 = vmatpush1.msra.mxu0 %v6020
    %6567 = vmatprep.subr.mxu0 %v6026
    %6568 = vmatpush1.msra.mxu0 %v6025
    %6569 = vmatprep.subr.mxu0 %v6031
    %6570 = vmatpush1.msra.mxu0 %v6030
    %6571 = vmatprep.subr.mxu0 %v6036
    %6572 = vmatpush1.msra.mxu0 %v6035
    %6573 = vmatprep.subr.mxu0 %v6041
    %6574 = vmatpush1.msra.mxu0 %v6040
    %6575 = vmatprep.subr.mxu0 %v6046
    %6576 = vmatpush1.msra.mxu0 %v6045
    %6577 = vmatprep.subr.mxu0 %v6051
    %6578 = vmatpush1.msra.mxu0 %v6050
    %6579 = vmatprep.subr.mxu0 %v6056
    %6580 = vmatpush1.msra.mxu0 %v6055
    %6581 = vmatprep.subr.mxu0 %v6061
    %6582 = vmatpush1.msra.mxu0 %v6060
    %6583 = vmatprep.subr.mxu0 %v6066
    %6584 = vmatpush1.msra.mxu0 %v6065
    %6585 = vmatprep.subr.mxu0 %v6071
    %6586 = vmatpush1.msra.mxu0 %v6070
    %6587 = vmatprep.subr.mxu0 %v6076
    %6588 = vmatpush1.msra.mxu0 %v6075
    %6589 = vmatprep.subr.mxu0 %v6081
    %6590 = vmatpush1.msra.mxu0 %v6080
    %6591 = vmatprep.subr.mxu0 %v6086
    %6592 = vmatpush1.msra.mxu0 %v6085
    %6593 = vmatprep.subr.mxu0 %v6091
    %6594 = vmatpush1.msra.mxu0 %v6090
    %6595 = vmatprep.subr.mxu0 %v6096
    %6596 = vmatpush1.msra.mxu0 %v6095
    %6597 = vmatprep.subr.mxu0 %v6101
    %6598 = vmatpush1.msra.mxu0 %v6100
    %6599 = vmatprep.subr.mxu0 %v6106
    %6600 = vmatpush1.msra.mxu0 %v6105
    %6601 = vmatprep.subr.mxu0 %v6111
    %6602 = vmatpush1.msra.mxu0 %v6110
    %6603 = vmatprep.subr.mxu0 %v6116
    %6604 = vmatpush1.msra.mxu0 %v6115
    %6605 = vmatprep.subr.mxu0 %v6121
    %6606 = vmatpush1.msra.mxu0 %v6120
    %6607 = vmatprep.subr.mxu0 %v6126
    %6608 = vmatpush1.msra.mxu0 %v6125
    %6609 = vmatprep.subr.mxu0 %v6131
    %6610 = vmatpush1.msra.mxu0 %v6130
    %6611 = vmatprep.subr.mxu0 %v6136
    %6612 = vmatpush1.msra.mxu0 %v6135
    %6613 = vmatprep.subr.mxu0 %v6141
    %6614 = vmatpush1.msra.mxu0 %v6140
    %6615 = vmatprep.subr.mxu0 %v6146
    %6616 = vmatpush1.msra.mxu0 %v6145
    %6617 = vmatprep.subr.mxu0 %v6151
    %6618 = vmatpush1.msra.mxu0 %v6150
    %6619 = vmatprep.mubr.f32.mxu0 %v5512
    %6620 = vmatmul.mubr.f32.gmra.mrb[0].mxu0 %v5511
    %v6621 = vpop.f32.mrb[0].mxu0
    %v6622 = vadd.f32 %v6551, %v6621
    %v6623 = vpop.f32.mrb[0].mxu0
    %v6624 = vadd.f32 %v6553, %v6623
    %6625 = vdwg.mxu0
    %6626 = vmatprep.subr.mxu0 %v6156
    %6627 = vmatpush1.msra.mxu0 %v6155
    %6628 = vmatprep.subr.mxu0 %v6161
    %6629 = vmatpush1.msra.mxu0 %v6160
    %6630 = vmatprep.subr.mxu0 %v6166
    %6631 = vmatpush1.msra.mxu0 %v6165
    %6632 = vmatprep.subr.mxu0 %v6171
    %6633 = vmatpush1.msra.mxu0 %v6170
    %6634 = vmatprep.subr.mxu0 %v6176
    %6635 = vmatpush1.msra.mxu0 %v6175
    %6636 = vmatprep.subr.mxu0 %v6181
    %6637 = vmatpush1.msra.mxu0 %v6180
    %6638 = vmatprep.subr.mxu0 %v6186
    %6639 = vmatpush1.msra.mxu0 %v6185
    %6640 = vmatprep.subr.mxu0 %v6191
    %6641 = vmatpush1.msra.mxu0 %v6190
    %6642 = vmatprep.subr.mxu0 %v6196
    %6643 = vmatpush1.msra.mxu0 %v6195
    %6644 = vmatprep.subr.mxu0 %v6201
    %6645 = vmatpush1.msra.mxu0 %v6200
    %6646 = vmatprep.subr.mxu0 %v6206
    %6647 = vmatpush1.msra.mxu0 %v6205
    %6648 = vmatprep.subr.mxu0 %v6211
    %6649 = vmatpush1.msra.mxu0 %v6210
    %6650 = vmatprep.subr.mxu0 %v6216
    %6651 = vmatpush1.msra.mxu0 %v6215
    %6652 = vmatprep.subr.mxu0 %v6221
    %6653 = vmatpush1.msra.mxu0 %v6220
    %6654 = vmatprep.subr.mxu0 %v6226
    %6655 = vmatpush1.msra.mxu0 %v6225
    %6656 = vmatprep.subr.mxu0 %v6231
    %6657 = vmatpush1.msra.mxu0 %v6230
    %6658 = vmatprep.subr.mxu0 %v6236
    %6659 = vmatpush1.msra.mxu0 %v6235
    %6660 = vmatprep.subr.mxu0 %v6241
    %6661 = vmatpush1.msra.mxu0 %v6240
    %6662 = vmatprep.subr.mxu0 %v6246
    %6663 = vmatpush1.msra.mxu0 %v6245
    %6664 = vmatprep.subr.mxu0 %v6251
    %6665 = vmatpush1.msra.mxu0 %v6250
    %6666 = vmatprep.subr.mxu0 %v6256
    %6667 = vmatpush1.msra.mxu0 %v6255
    %6668 = vmatprep.subr.mxu0 %v6261
    %6669 = vmatpush1.msra.mxu0 %v6260
    %6670 = vmatprep.subr.mxu0 %v6266
    %6671 = vmatpush1.msra.mxu0 %v6265
    %6672 = vmatprep.subr.mxu0 %v6271
    %6673 = vmatpush1.msra.mxu0 %v6270
    %6674 = vmatprep.subr.mxu0 %v6276
    %6675 = vmatpush1.msra.mxu0 %v6275
    %6676 = vmatprep.subr.mxu0 %v6281
    %6677 = vmatpush1.msra.mxu0 %v6280
    %6678 = vmatprep.subr.mxu0 %v6286
    %6679 = vmatpush1.msra.mxu0 %v6285
    %6680 = vmatprep.subr.mxu0 %v6291
    %6681 = vmatpush1.msra.mxu0 %v6290
    %6682 = vmatprep.subr.mxu0 %v6296
    %6683 = vmatpush1.msra.mxu0 %v6295
    %6684 = vmatprep.subr.mxu0 %v6301
    %6685 = vmatpush1.msra.mxu0 %v6300
    %6686 = vmatprep.subr.mxu0 %v6306
    %6687 = vmatpush1.msra.mxu0 %v6305
    %6688 = vmatprep.subr.mxu0 %v6311
    %6689 = vmatpush1.msra.mxu0 %v6310
    %6690 = vmatprep.mubr.f32.mxu0 %v5514
    %6691 = vmatmul.mubr.f32.gmra.mrb[0].mxu0 %v5513
    %v6692 = vpop.f32.mrb[0].mxu0
    %v6693 = vadd.f32 %v6622, %v6692
    %v6694 = vpop.f32.mrb[0].mxu0
    %v6695 = vadd.f32 %v6624, %v6694
    %6696 = vdwg.mxu0
    %6697 = vmatprep.subr.mxu0 %v5518
    %6698 = vmatpush1.msra.mxu0 %v5517
    %6699 = vmatprep.subr.mxu0 %v5523
    %6700 = vmatpush1.msra.mxu0 %v5522
    %6701 = vmatprep.subr.mxu0 %v5528
    %6702 = vmatpush1.msra.mxu0 %v5527
    %6703 = vmatprep.subr.mxu0 %v5533
    %6704 = vmatpush1.msra.mxu0 %v5532
    %6705 = vmatprep.subr.mxu0 %v5538
    %6706 = vmatpush1.msra.mxu0 %v5537
    %6707 = vmatprep.subr.mxu0 %v5543
    %6708 = vmatpush1.msra.mxu0 %v5542
    %6709 = vmatprep.subr.mxu0 %v5548
    %6710 = vmatpush1.msra.mxu0 %v5547
    %6711 = vmatprep.subr.mxu0 %v5553
    %6712 = vmatpush1.msra.mxu0 %v5552
    %6713 = vmatprep.subr.mxu0 %v5558
    %6714 = vmatpush1.msra.mxu0 %v5557
    %6715 = vmatprep.subr.mxu0 %v5563
    %6716 = vmatpush1.msra.mxu0 %v5562
    %6717 = vmatprep.subr.mxu0 %v5568
    %6718 = vmatpush1.msra.mxu0 %v5567
    %6719 = vmatprep.subr.mxu0 %v5573
    %6720 = vmatpush1.msra.mxu0 %v5572
    %6721 = vmatprep.subr.mxu0 %v5578
    %6722 = vmatpush1.msra.mxu0 %v5577
    %6723 = vmatprep.subr.mxu0 %v5583
    %6724 = vmatpush1.msra.mxu0 %v5582
    %6725 = vmatprep.subr.mxu0 %v5588
    %6726 = vmatpush1.msra.mxu0 %v5587
    %6727 = vmatprep.subr.mxu0 %v5593
    %6728 = vmatpush1.msra.mxu0 %v5592
    %6729 = vmatprep.subr.mxu0 %v5598
    %6730 = vmatpush1.msra.mxu0 %v5597
    %6731 = vmatprep.subr.mxu0 %v5603
    %6732 = vmatpush1.msra.mxu0 %v5602
    %6733 = vmatprep.subr.mxu0 %v5608
    %6734 = vmatpush1.msra.mxu0 %v5607
    %6735 = vmatprep.subr.mxu0 %v5613
    %6736 = vmatpush1.msra.mxu0 %v5612
    %6737 = vmatprep.subr.mxu0 %v5618
    %6738 = vmatpush1.msra.mxu0 %v5617
    %6739 = vmatprep.subr.mxu0 %v5623
    %6740 = vmatpush1.msra.mxu0 %v5622
    %6741 = vmatprep.subr.mxu0 %v5628
    %6742 = vmatpush1.msra.mxu0 %v5627
    %6743 = vmatprep.subr.mxu0 %v5633
    %6744 = vmatpush1.msra.mxu0 %v5632
    %6745 = vmatprep.subr.mxu0 %v5638
    %6746 = vmatpush1.msra.mxu0 %v5637
    %6747 = vmatprep.subr.mxu0 %v5643
    %6748 = vmatpush1.msra.mxu0 %v5642
    %6749 = vmatprep.subr.mxu0 %v5648
    %6750 = vmatpush1.msra.mxu0 %v5647
    %6751 = vmatprep.subr.mxu0 %v5653
    %6752 = vmatpush1.msra.mxu0 %v5652
    %6753 = vmatprep.subr.mxu0 %v5658
    %6754 = vmatpush1.msra.mxu0 %v5657
    %6755 = vmatprep.subr.mxu0 %v5663
    %6756 = vmatpush1.msra.mxu0 %v5662
    %6757 = vmatprep.subr.mxu0 %v5668
    %6758 = vmatpush1.msra.mxu0 %v5667
    %6759 = vmatprep.subr.mxu0 %v5673
    %6760 = vmatpush1.msra.mxu0 %v5672
    %6761 = vmatprep.mubr.f32.mxu0 %v5506
    %6762 = vmatmul.mubr.f32.gmra.mrb[0].mxu0 %v5505
    %v6763 = vpop.f32.mrb[0].mxu0
    %v6764 = vadd.f32 %v6328, %v6763
    %v6765 = vpop.f32.mrb[0].mxu0
    %v6766 = vadd.f32 %v6332, %v6765
    %6767 = vdwg.mxu0
    %6768 = vmatprep.subr.mxu0 %v5678
    %6769 = vmatpush1.msra.mxu0 %v5677
    %6770 = vmatprep.subr.mxu0 %v5683
    %6771 = vmatpush1.msra.mxu0 %v5682
    %6772 = vmatprep.subr.mxu0 %v5688
    %6773 = vmatpush1.msra.mxu0 %v5687
    %6774 = vmatprep.subr.mxu0 %v5693
    %6775 = vmatpush1.msra.mxu0 %v5692
    %6776 = vmatprep.subr.mxu0 %v5698
    %6777 = vmatpush1.msra.mxu0 %v5697
    %6778 = vmatprep.subr.mxu0 %v5703
    %6779 = vmatpush1.msra.mxu0 %v5702
    %6780 = vmatprep.subr.mxu0 %v5708
    %6781 = vmatpush1.msra.mxu0 %v5707
    %6782 = vmatprep.subr.mxu0 %v5713
    %6783 = vmatpush1.msra.mxu0 %v5712
    %6784 = vmatprep.subr.mxu0 %v5718
    %6785 = vmatpush1.msra.mxu0 %v5717
    %6786 = vmatprep.subr.mxu0 %v5723
    %6787 = vmatpush1.msra.mxu0 %v5722
    %6788 = vmatprep.subr.mxu0 %v5728
    %6789 = vmatpush1.msra.mxu0 %v5727
    %6790 = vmatprep.subr.mxu0 %v5733
    %6791 = vmatpush1.msra.mxu0 %v5732
    %6792 = vmatprep.subr.mxu0 %v5738
    %6793 = vmatpush1.msra.mxu0 %v5737
    %6794 = vmatprep.subr.mxu0 %v5743
    %6795 = vmatpush1.msra.mxu0 %v5742
    %6796 = vmatprep.subr.mxu0 %v5748
    %6797 = vmatpush1.msra.mxu0 %v5747
    %6798 = vmatprep.subr.mxu0 %v5753
    %6799 = vmatpush1.msra.mxu0 %v5752
    %6800 = vmatprep.subr.mxu0 %v5758
    %6801 = vmatpush1.msra.mxu0 %v5757
    %6802 = vmatprep.subr.mxu0 %v5763
    %6803 = vmatpush1.msra.mxu0 %v5762
    %6804 = vmatprep.subr.mxu0 %v5768
    %6805 = vmatpush1.msra.mxu0 %v5767
    %6806 = vmatprep.subr.mxu0 %v5773
    %6807 = vmatpush1.msra.mxu0 %v5772
    %6808 = vmatprep.subr.mxu0 %v5778
    %6809 = vmatpush1.msra.mxu0 %v5777
    %6810 = vmatprep.subr.mxu0 %v5783
    %6811 = vmatpush1.msra.mxu0 %v5782
    %6812 = vmatprep.subr.mxu0 %v5788
    %6813 = vmatpush1.msra.mxu0 %v5787
    %6814 = vmatprep.subr.mxu0 %v5793
    %6815 = vmatpush1.msra.mxu0 %v5792
    %6816 = vmatprep.subr.mxu0 %v5798
    %6817 = vmatpush1.msra.mxu0 %v5797
    %6818 = vmatprep.subr.mxu0 %v5803
    %6819 = vmatpush1.msra.mxu0 %v5802
    %6820 = vmatprep.subr.mxu0 %v5808
    %6821 = vmatpush1.msra.mxu0 %v5807
    %6822 = vmatprep.subr.mxu0 %v5813
    %6823 = vmatpush1.msra.mxu0 %v5812
    %6824 = vmatprep.subr.mxu0 %v5818
    %6825 = vmatpush1.msra.mxu0 %v5817
    %6826 = vmatprep.subr.mxu0 %v5823
    %6827 = vmatpush1.msra.mxu0 %v5822
    %6828 = vmatprep.subr.mxu0 %v5828
    %6829 = vmatpush1.msra.mxu0 %v5827
    %6830 = vmatprep.subr.mxu0 %v5833
    %6831 = vmatpush1.msra.mxu0 %v5832
    %6832 = vmatprep.mubr.f32.mxu0 %v5508
    %6833 = vmatmul.mubr.f32.gmra.mrb[0].mxu0 %v5507
    %v6834 = vpop.f32.mrb[0].mxu0
    %v6835 = vadd.f32 %v6764, %v6834
    %v6836 = vpop.f32.mrb[0].mxu0
    %v6837 = vadd.f32 %v6766, %v6836
    %6838 = vdwg.mxu0
    %6839 = vmatprep.subr.mxu0 %v5838
    %6840 = vmatpush1.msra.mxu0 %v5837
    %6841 = vmatprep.subr.mxu0 %v5843
    %6842 = vmatpush1.msra.mxu0 %v5842
    %6843 = vmatprep.subr.mxu0 %v5848
    %6844 = vmatpush1.msra.mxu0 %v5847
    %6845 = vmatprep.subr.mxu0 %v5853
    %6846 = vmatpush1.msra.mxu0 %v5852
    %6847 = vmatprep.subr.mxu0 %v5858
    %6848 = vmatpush1.msra.mxu0 %v5857
    %6849 = vmatprep.subr.mxu0 %v5863
    %6850 = vmatpush1.msra.mxu0 %v5862
    %6851 = vmatprep.subr.mxu0 %v5868
    %6852 = vmatpush1.msra.mxu0 %v5867
    %6853 = vmatprep.subr.mxu0 %v5873
    %6854 = vmatpush1.msra.mxu0 %v5872
    %6855 = vmatprep.subr.mxu0 %v5878
    %6856 = vmatpush1.msra.mxu0 %v5877
    %6857 = vmatprep.subr.mxu0 %v5883
    %6858 = vmatpush1.msra.mxu0 %v5882
    %6859 = vmatprep.subr.mxu0 %v5888
    %6860 = vmatpush1.msra.mxu0 %v5887
    %6861 = vmatprep.subr.mxu0 %v5893
    %6862 = vmatpush1.msra.mxu0 %v5892
    %6863 = vmatprep.subr.mxu0 %v5898
    %6864 = vmatpush1.msra.mxu0 %v5897
    %6865 = vmatprep.subr.mxu0 %v5903
    %6866 = vmatpush1.msra.mxu0 %v5902
    %6867 = vmatprep.subr.mxu0 %v5908
    %6868 = vmatpush1.msra.mxu0 %v5907
    %6869 = vmatprep.subr.mxu0 %v5913
    %6870 = vmatpush1.msra.mxu0 %v5912
    %6871 = vmatprep.subr.mxu0 %v5918
    %6872 = vmatpush1.msra.mxu0 %v5917
    %6873 = vmatprep.subr.mxu0 %v5923
    %6874 = vmatpush1.msra.mxu0 %v5922
    %6875 = vmatprep.subr.mxu0 %v5928
    %6876 = vmatpush1.msra.mxu0 %v5927
    %6877 = vmatprep.subr.mxu0 %v5933
    %6878 = vmatpush1.msra.mxu0 %v5932
    %6879 = vmatprep.subr.mxu0 %v5938
    %6880 = vmatpush1.msra.mxu0 %v5937
    %6881 = vmatprep.subr.mxu0 %v5943
    %6882 = vmatpush1.msra.mxu0 %v5942
    %6883 = vmatprep.subr.mxu0 %v5948
    %6884 = vmatpush1.msra.mxu0 %v5947
    %6885 = vmatprep.subr.mxu0 %v5953
    %6886 = vmatpush1.msra.mxu0 %v5952
    %6887 = vmatprep.subr.mxu0 %v5958
    %6888 = vmatpush1.msra.mxu0 %v5957
    %6889 = vmatprep.subr.mxu0 %v5963
    %6890 = vmatpush1.msra.mxu0 %v5962
    %6891 = vmatprep.subr.mxu0 %v5968
    %6892 = vmatpush1.msra.mxu0 %v5967
    %6893 = vmatprep.subr.mxu0 %v5973
    %6894 = vmatpush1.msra.mxu0 %v5972
    %6895 = vmatprep.subr.mxu0 %v5978
    %6896 = vmatpush1.msra.mxu0 %v5977
    %6897 = vmatprep.subr.mxu0 %v5983
    %6898 = vmatpush1.msra.mxu0 %v5982
    %6899 = vmatprep.subr.mxu0 %v5988
    %6900 = vmatpush1.msra.mxu0 %v5987
    %6901 = vmatprep.subr.mxu0 %v5993
    %6902 = vmatpush1.msra.mxu0 %v5992
    %6903 = vmatprep.mubr.f32.mxu0 %v5510
    %6904 = vmatmul.mubr.f32.gmra.mrb[0].mxu0 %v5509
    %v6905 = vpop.f32.mrb[0].mxu0
    %v6906 = vadd.f32 %v6835, %v6905
    %v6907 = vpop.f32.mrb[0].mxu0
    %v6908 = vadd.f32 %v6837, %v6907
    %6909 = vdwg.mxu0
    %6910 = vmatprep.subr.mxu0 %v5998
    %6911 = vmatpush1.msra.mxu0 %v5997
    %6912 = vmatprep.subr.mxu0 %v6003
    %6913 = vmatpush1.msra.mxu0 %v6002
    %6914 = vmatprep.subr.mxu0 %v6008
    %6915 = vmatpush1.msra.mxu0 %v6007
    %6916 = vmatprep.subr.mxu0 %v6013
    %6917 = vmatpush1.msra.mxu0 %v6012
    %6918 = vmatprep.subr.mxu0 %v6018
    %6919 = vmatpush1.msra.mxu0 %v6017
    %6920 = vmatprep.subr.mxu0 %v6023
    %6921 = vmatpush1.msra.mxu0 %v6022
    %6922 = vmatprep.subr.mxu0 %v6028
    %6923 = vmatpush1.msra.mxu0 %v6027
    %6924 = vmatprep.subr.mxu0 %v6033
    %6925 = vmatpush1.msra.mxu0 %v6032
    %6926 = vmatprep.subr.mxu0 %v6038
    %6927 = vmatpush1.msra.mxu0 %v6037
    %6928 = vmatprep.subr.mxu0 %v6043
    %6929 = vmatpush1.msra.mxu0 %v6042
    %6930 = vmatprep.subr.mxu0 %v6048
    %6931 = vmatpush1.msra.mxu0 %v6047
    %6932 = vmatprep.subr.mxu0 %v6053
    %6933 = vmatpush1.msra.mxu0 %v6052
    %6934 = vmatprep.subr.mxu0 %v6058
    %6935 = vmatpush1.msra.mxu0 %v6057
    %6936 = vmatprep.subr.mxu0 %v6063
    %6937 = vmatpush1.msra.mxu0 %v6062
    %6938 = vmatprep.subr.mxu0 %v6068
    %6939 = vmatpush1.msra.mxu0 %v6067
    %6940 = vmatprep.subr.mxu0 %v6073
    %6941 = vmatpush1.msra.mxu0 %v6072
    %6942 = vmatprep.subr.mxu0 %v6078
    %6943 = vmatpush1.msra.mxu0 %v6077
    %6944 = vmatprep.subr.mxu0 %v6083
    %6945 = vmatpush1.msra.mxu0 %v6082
    %6946 = vmatprep.subr.mxu0 %v6088
    %6947 = vmatpush1.msra.mxu0 %v6087
    %6948 = vmatprep.subr.mxu0 %v6093
    %6949 = vmatpush1.msra.mxu0 %v6092
    %6950 = vmatprep.subr.mxu0 %v6098
    %6951 = vmatpush1.msra.mxu0 %v6097
    %6952 = vmatprep.subr.mxu0 %v6103
    %6953 = vmatpush1.msra.mxu0 %v6102
    %6954 = vmatprep.subr.mxu0 %v6108
    %6955 = vmatpush1.msra.mxu0 %v6107
    %6956 = vmatprep.subr.mxu0 %v6113
    %6957 = vmatpush1.msra.mxu0 %v6112
    %6958 = vmatprep.subr.mxu0 %v6118
    %6959 = vmatpush1.msra.mxu0 %v6117
    %6960 = vmatprep.subr.mxu0 %v6123
    %6961 = vmatpush1.msra.mxu0 %v6122
    %6962 = vmatprep.subr.mxu0 %v6128
    %6963 = vmatpush1.msra.mxu0 %v6127
    %6964 = vmatprep.subr.mxu0 %v6133
    %6965 = vmatpush1.msra.mxu0 %v6132
    %6966 = vmatprep.subr.mxu0 %v6138
    %6967 = vmatpush1.msra.mxu0 %v6137
    %6968 = vmatprep.subr.mxu0 %v6143
    %6969 = vmatpush1.msra.mxu0 %v6142
    %6970 = vmatprep.subr.mxu0 %v6148
    %6971 = vmatpush1.msra.mxu0 %v6147
    %6972 = vmatprep.subr.mxu0 %v6153
    %6973 = vmatpush1.msra.mxu0 %v6152
    %6974 = vmatprep.mubr.f32.mxu0 %v5512
    %6975 = vmatmul.mubr.f32.gmra.mrb[0].mxu0 %v5511
    %v6976 = vpop.f32.mrb[0].mxu0
    %v6977 = vadd.f32 %v6906, %v6976
    %v6978 = vpop.f32.mrb[0].mxu0
    %v6979 = vadd.f32 %v6908, %v6978
    %6980 = vdwg.mxu0
    %6981 = vmatprep.subr.mxu0 %v6158
    %6982 = vmatpush1.msra.mxu0 %v6157
    %6983 = vmatprep.subr.mxu0 %v6163
    %6984 = vmatpush1.msra.mxu0 %v6162
    %6985 = vmatprep.subr.mxu0 %v6168
    %6986 = vmatpush1.msra.mxu0 %v6167
    %6987 = vmatprep.subr.mxu0 %v6173
    %6988 = vmatpush1.msra.mxu0 %v6172
    %6989 = vmatprep.subr.mxu0 %v6178
    %6990 = vmatpush1.msra.mxu0 %v6177
    %6991 = vmatprep.subr.mxu0 %v6183
    %6992 = vmatpush1.msra.mxu0 %v6182
    %6993 = vmatprep.subr.mxu0 %v6188
    %6994 = vmatpush1.msra.mxu0 %v6187
    %6995 = vmatprep.subr.mxu0 %v6193
    %6996 = vmatpush1.msra.mxu0 %v6192
    %6997 = vmatprep.subr.mxu0 %v6198
    %6998 = vmatpush1.msra.mxu0 %v6197
    %6999 = vmatprep.subr.mxu0 %v6203
    %7000 = vmatpush1.msra.mxu0 %v6202
    %7001 = vmatprep.subr.mxu0 %v6208
    %7002 = vmatpush1.msra.mxu0 %v6207
    %7003 = vmatprep.subr.mxu0 %v6213
    %7004 = vmatpush1.msra.mxu0 %v6212
    %7005 = vmatprep.subr.mxu0 %v6218
    %7006 = vmatpush1.msra.mxu0 %v6217
    %7007 = vmatprep.subr.mxu0 %v6223
    %7008 = vmatpush1.msra.mxu0 %v6222
    %7009 = vmatprep.subr.mxu0 %v6228
    %7010 = vmatpush1.msra.mxu0 %v6227
    %7011 = vmatprep.subr.mxu0 %v6233
    %7012 = vmatpush1.msra.mxu0 %v6232
    %7013 = vmatprep.subr.mxu0 %v6238
    %7014 = vmatpush1.msra.mxu0 %v6237
    %7015 = vmatprep.subr.mxu0 %v6243
    %7016 = vmatpush1.msra.mxu0 %v6242
    %7017 = vmatprep.subr.mxu0 %v6248
    %7018 = vmatpush1.msra.mxu0 %v6247
    %7019 = vmatprep.subr.mxu0 %v6253
    %7020 = vmatpush1.msra.mxu0 %v6252
    %7021 = vmatprep.subr.mxu0 %v6258
    %7022 = vmatpush1.msra.mxu0 %v6257
    %7023 = vmatprep.subr.mxu0 %v6263
    %7024 = vmatpush1.msra.mxu0 %v6262
    %7025 = vmatprep.subr.mxu0 %v6268
    %7026 = vmatpush1.msra.mxu0 %v6267
    %7027 = vmatprep.subr.mxu0 %v6273
    %7028 = vmatpush1.msra.mxu0 %v6272
    %7029 = vmatprep.subr.mxu0 %v6278
    %7030 = vmatpush1.msra.mxu0 %v6277
    %7031 = vmatprep.subr.mxu0 %v6283
    %7032 = vmatpush1.msra.mxu0 %v6282
    %7033 = vmatprep.subr.mxu0 %v6288
    %7034 = vmatpush1.msra.mxu0 %v6287
    %7035 = vmatprep.subr.mxu0 %v6293
    %7036 = vmatpush1.msra.mxu0 %v6292
    %7037 = vmatprep.subr.mxu0 %v6298
    %7038 = vmatpush1.msra.mxu0 %v6297
    %7039 = vmatprep.subr.mxu0 %v6303
    %7040 = vmatpush1.msra.mxu0 %v6302
    %7041 = vmatprep.subr.mxu0 %v6308
    %7042 = vmatpush1.msra.mxu0 %v6307
    %7043 = vmatprep.subr.mxu0 %v6313
    %7044 = vmatpush1.msra.mxu0 %v6312
    %7045 = vmatprep.mubr.f32.mxu0 %v5514
    %7046 = vmatmul.mubr.f32.gmra.mrb[0].mxu0 %v5513
    %v7047 = vpop.f32.mrb[0].mxu0
    %v7048 = vadd.f32 %v6977, %v7047
    %v7049 = vpop.f32.mrb[0].mxu0
    %v7050 = vadd.f32 %v6979, %v7049
    %7051 = vdwg.mxu0
    %7052 = vmatprep.subr.mxu0 0.0
    %7053 = vmatpush1.msra.mxu0 %v5519
    %7054 = vmatprep.subr.mxu0 0.0
    %7055 = vmatpush1.msra.mxu0 %v5524
    %7056 = vmatprep.subr.mxu0 0.0
    %7057 = vmatpush1.msra.mxu0 %v5529
    %7058 = vmatprep.subr.mxu0 0.0
    %7059 = vmatpush1.msra.mxu0 %v5534
    %7060 = vmatprep.subr.mxu0 0.0
    %7061 = vmatpush1.msra.mxu0 %v5539
    %7062 = vmatprep.subr.mxu0 0.0
    %7063 = vmatpush1.msra.mxu0 %v5544
    %7064 = vmatprep.subr.mxu0 0.0
    %7065 = vmatpush1.msra.mxu0 %v5549
    %7066 = vmatprep.subr.mxu0 0.0
    %7067 = vmatpush1.msra.mxu0 %v5554
    %7068 = vmatprep.subr.mxu0 0.0
    %7069 = vmatpush1.msra.mxu0 %v5559
    %7070 = vmatprep.subr.mxu0 0.0
    %7071 = vmatpush1.msra.mxu0 %v5564
    %7072 = vmatprep.subr.mxu0 0.0
    %7073 = vmatpush1.msra.mxu0 %v5569
    %7074 = vmatprep.subr.mxu0 0.0
    %7075 = vmatpush1.msra.mxu0 %v5574
    %7076 = vmatprep.subr.mxu0 0.0
    %7077 = vmatpush1.msra.mxu0 %v5579
    %7078 = vmatprep.subr.mxu0 0.0
    %7079 = vmatpush1.msra.mxu0 %v5584
    %7080 = vmatprep.subr.mxu0 0.0
    %7081 = vmatpush1.msra.mxu0 %v5589
    %7082 = vmatprep.subr.mxu0 0.0
    %7083 = vmatpush1.msra.mxu0 %v5594
    %7084 = vmatprep.subr.mxu0 0.0
    %7085 = vmatpush1.msra.mxu0 %v5599
    %7086 = vmatprep.subr.mxu0 0.0
    %7087 = vmatpush1.msra.mxu0 %v5604
    %7088 = vmatprep.subr.mxu0 0.0
    %7089 = vmatpush1.msra.mxu0 %v5609
    %7090 = vmatprep.subr.mxu0 0.0
    %7091 = vmatpush1.msra.mxu0 %v5614
    %7092 = vmatprep.subr.mxu0 0.0
    %7093 = vmatpush1.msra.mxu0 %v5619
    %7094 = vmatprep.subr.mxu0 0.0
    %7095 = vmatpush1.msra.mxu0 %v5624
    %7096 = vmatprep.subr.mxu0 0.0
    %7097 = vmatpush1.msra.mxu0 %v5629
    %7098 = vmatprep.subr.mxu0 0.0
    %7099 = vmatpush1.msra.mxu0 %v5634
    %7100 = vmatprep.subr.mxu0 0.0
    %7101 = vmatpush1.msra.mxu0 %v5639
    %7102 = vmatprep.subr.mxu0 0.0
    %7103 = vmatpush1.msra.mxu0 %v5644
    %7104 = vmatprep.subr.mxu0 0.0
    %7105 = vmatpush1.msra.mxu0 %v5649
    %7106 = vmatprep.subr.mxu0 0.0
    %7107 = vmatpush1.msra.mxu0 %v5654
    %7108 = vmatprep.subr.mxu0 0.0
    %7109 = vmatpush1.msra.mxu0 %v5659
    %7110 = vmatprep.subr.mxu0 0.0
    %7111 = vmatpush1.msra.mxu0 %v5664
    %7112 = vmatprep.subr.mxu0 0.0
    %7113 = vmatpush1.msra.mxu0 %v5669
    %7114 = vmatprep.subr.mxu0 0.0
    %7115 = vmatpush1.msra.mxu0 %v5674
    %7116 = vmatprep.mubr.f32.mxu0 %v5506
    %7117 = vmatmul.mubr.f32.gmra.mrb[0].mxu0 %v5505
    %v7118 = vpop.f32.mrb[0].mxu0
    %v7119 = vadd.f32 %v6336, %v7118
    %v7120 = vpop.f32.mrb[0].mxu0
    %7121 = vdwg.mxu0
    %7122 = vmatprep.subr.mxu0 0.0
    %7123 = vmatpush1.msra.mxu0 %v5679
    %7124 = vmatprep.subr.mxu0 0.0
    %7125 = vmatpush1.msra.mxu0 %v5684
    %7126 = vmatprep.subr.mxu0 0.0
    %7127 = vmatpush1.msra.mxu0 %v5689
    %7128 = vmatprep.subr.mxu0 0.0
    %7129 = vmatpush1.msra.mxu0 %v5694
    %7130 = vmatprep.subr.mxu0 0.0
    %7131 = vmatpush1.msra.mxu0 %v5699
    %7132 = vmatprep.subr.mxu0 0.0
    %7133 = vmatpush1.msra.mxu0 %v5704
    %7134 = vmatprep.subr.mxu0 0.0
    %7135 = vmatpush1.msra.mxu0 %v5709
    %7136 = vmatprep.subr.mxu0 0.0
    %7137 = vmatpush1.msra.mxu0 %v5714
    %7138 = vmatprep.subr.mxu0 0.0
    %7139 = vmatpush1.msra.mxu0 %v5719
    %7140 = vmatprep.subr.mxu0 0.0
    %7141 = vmatpush1.msra.mxu0 %v5724
    %7142 = vmatprep.subr.mxu0 0.0
    %7143 = vmatpush1.msra.mxu0 %v5729
    %7144 = vmatprep.subr.mxu0 0.0
    %7145 = vmatpush1.msra.mxu0 %v5734
    %7146 = vmatprep.subr.mxu0 0.0
    %7147 = vmatpush1.msra.mxu0 %v5739
    %7148 = vmatprep.subr.mxu0 0.0
    %7149 = vmatpush1.msra.mxu0 %v5744
    %7150 = vmatprep.subr.mxu0 0.0
    %7151 = vmatpush1.msra.mxu0 %v5749
    %7152 = vmatprep.subr.mxu0 0.0
    %7153 = vmatpush1.msra.mxu0 %v5754
    %7154 = vmatprep.subr.mxu0 0.0
    %7155 = vmatpush1.msra.mxu0 %v5759
    %7156 = vmatprep.subr.mxu0 0.0
    %7157 = vmatpush1.msra.mxu0 %v5764
    %7158 = vmatprep.subr.mxu0 0.0
    %7159 = vmatpush1.msra.mxu0 %v5769
    %7160 = vmatprep.subr.mxu0 0.0
    %7161 = vmatpush1.msra.mxu0 %v5774
    %7162 = vmatprep.subr.mxu0 0.0
    %7163 = vmatpush1.msra.mxu0 %v5779
    %7164 = vmatprep.subr.mxu0 0.0
    %7165 = vmatpush1.msra.mxu0 %v5784
    %7166 = vmatprep.subr.mxu0 0.0
    %7167 = vmatpush1.msra.mxu0 %v5789
    %7168 = vmatprep.subr.mxu0 0.0
    %7169 = vmatpush1.msra.mxu0 %v5794
    %7170 = vmatprep.subr.mxu0 0.0
    %7171 = vmatpush1.msra.mxu0 %v5799
    %7172 = vmatprep.subr.mxu0 0.0
    %7173 = vmatpush1.msra.mxu0 %v5804
    %7174 = vmatprep.subr.mxu0 0.0
    %7175 = vmatpush1.msra.mxu0 %v5809
    %7176 = vmatprep.subr.mxu0 0.0
    %7177 = vmatpush1.msra.mxu0 %v5814
    %7178 = vmatprep.subr.mxu0 0.0
    %7179 = vmatpush1.msra.mxu0 %v5819
    %7180 = vmatprep.subr.mxu0 0.0
    %7181 = vmatpush1.msra.mxu0 %v5824
    %7182 = vmatprep.subr.mxu0 0.0
    %7183 = vmatpush1.msra.mxu0 %v5829
    %7184 = vmatprep.subr.mxu0 0.0
    %7185 = vmatpush1.msra.mxu0 %v5834
    %7186 = vmatprep.mubr.f32.mxu0 %v5508
    %7187 = vmatmul.mubr.f32.gmra.mrb[0].mxu0 %v5507
    %v7188 = vpop.f32.mrb[0].mxu0
    %v7189 = vadd.f32 %v7119, %v7188
    %v7190 = vpop.f32.mrb[0].mxu0
    %7191 = vdwg.mxu0
    %7192 = vmatprep.subr.mxu0 0.0
    %7193 = vmatpush1.msra.mxu0 %v5839
    %7194 = vmatprep.subr.mxu0 0.0
    %7195 = vmatpush1.msra.mxu0 %v5844
    %7196 = vmatprep.subr.mxu0 0.0
    %7197 = vmatpush1.msra.mxu0 %v5849
    %7198 = vmatprep.subr.mxu0 0.0
    %7199 = vmatpush1.msra.mxu0 %v5854
    %7200 = vmatprep.subr.mxu0 0.0
    %7201 = vmatpush1.msra.mxu0 %v5859
    %7202 = vmatprep.subr.mxu0 0.0
    %7203 = vmatpush1.msra.mxu0 %v5864
    %7204 = vmatprep.subr.mxu0 0.0
    %7205 = vmatpush1.msra.mxu0 %v5869
    %7206 = vmatprep.subr.mxu0 0.0
    %7207 = vmatpush1.msra.mxu0 %v5874
    %7208 = vmatprep.subr.mxu0 0.0
    %7209 = vmatpush1.msra.mxu0 %v5879
    %7210 = vmatprep.subr.mxu0 0.0
    %7211 = vmatpush1.msra.mxu0 %v5884
    %7212 = vmatprep.subr.mxu0 0.0
    %7213 = vmatpush1.msra.mxu0 %v5889
    %7214 = vmatprep.subr.mxu0 0.0
    %7215 = vmatpush1.msra.mxu0 %v5894
    %7216 = vmatprep.subr.mxu0 0.0
    %7217 = vmatpush1.msra.mxu0 %v5899
    %7218 = vmatprep.subr.mxu0 0.0
    %7219 = vmatpush1.msra.mxu0 %v5904
    %7220 = vmatprep.subr.mxu0 0.0
    %7221 = vmatpush1.msra.mxu0 %v5909
    %7222 = vmatprep.subr.mxu0 0.0
    %7223 = vmatpush1.msra.mxu0 %v5914
    %7224 = vmatprep.subr.mxu0 0.0
    %7225 = vmatpush1.msra.mxu0 %v5919
    %7226 = vmatprep.subr.mxu0 0.0
    %7227 = vmatpush1.msra.mxu0 %v5924
    %7228 = vmatprep.subr.mxu0 0.0
    %7229 = vmatpush1.msra.mxu0 %v5929
    %7230 = vmatprep.subr.mxu0 0.0
    %7231 = vmatpush1.msra.mxu0 %v5934
    %7232 = vmatprep.subr.mxu0 0.0
    %7233 = vmatpush1.msra.mxu0 %v5939
    %7234 = vmatprep.subr.mxu0 0.0
    %7235 = vmatpush1.msra.mxu0 %v5944
    %7236 = vmatprep.subr.mxu0 0.0
    %7237 = vmatpush1.msra.mxu0 %v5949
    %7238 = vmatprep.subr.mxu0 0.0
    %7239 = vmatpush1.msra.mxu0 %v5954
    %7240 = vmatprep.subr.mxu0 0.0
    %7241 = vmatpush1.msra.mxu0 %v5959
    %7242 = vmatprep.subr.mxu0 0.0
    %7243 = vmatpush1.msra.mxu0 %v5964
    %7244 = vmatprep.subr.mxu0 0.0
    %7245 = vmatpush1.msra.mxu0 %v5969
    %7246 = vmatprep.subr.mxu0 0.0
    %7247 = vmatpush1.msra.mxu0 %v5974
    %7248 = vmatprep.subr.mxu0 0.0
    %7249 = vmatpush1.msra.mxu0 %v5979
    %7250 = vmatprep.subr.mxu0 0.0
    %7251 = vmatpush1.msra.mxu0 %v5984
    %7252 = vmatprep.subr.mxu0 0.0
    %7253 = vmatpush1.msra.mxu0 %v5989
    %7254 = vmatprep.subr.mxu0 0.0
    %7255 = vmatpush1.msra.mxu0 %v5994
    %7256 = vmatprep.mubr.f32.mxu0 %v5510
    %7257 = vmatmul.mubr.f32.gmra.mrb[0].mxu0 %v5509
    %v7258 = vpop.f32.mrb[0].mxu0
    %v7259 = vadd.f32 %v7189, %v7258
    %v7260 = vpop.f32.mrb[0].mxu0
    %7261 = vdwg.mxu0
    %7262 = vmatprep.subr.mxu0 0.0
    %7263 = vmatpush1.msra.mxu0 %v5999
    %7264 = vmatprep.subr.mxu0 0.0
    %7265 = vmatpush1.msra.mxu0 %v6004
    %7266 = vmatprep.subr.mxu0 0.0
    %7267 = vmatpush1.msra.mxu0 %v6009
    %7268 = vmatprep.subr.mxu0 0.0
    %7269 = vmatpush1.msra.mxu0 %v6014
    %7270 = vmatprep.subr.mxu0 0.0
    %7271 = vmatpush1.msra.mxu0 %v6019
    %7272 = vmatprep.subr.mxu0 0.0
    %7273 = vmatpush1.msra.mxu0 %v6024
    %7274 = vmatprep.subr.mxu0 0.0
    %7275 = vmatpush1.msra.mxu0 %v6029
    %7276 = vmatprep.subr.mxu0 0.0
    %7277 = vmatpush1.msra.mxu0 %v6034
    %7278 = vmatprep.subr.mxu0 0.0
    %7279 = vmatpush1.msra.mxu0 %v6039
    %7280 = vmatprep.subr.mxu0 0.0
    %7281 = vmatpush1.msra.mxu0 %v6044
    %7282 = vmatprep.subr.mxu0 0.0
    %7283 = vmatpush1.msra.mxu0 %v6049
    %7284 = vmatprep.subr.mxu0 0.0
    %7285 = vmatpush1.msra.mxu0 %v6054
    %7286 = vmatprep.subr.mxu0 0.0
    %7287 = vmatpush1.msra.mxu0 %v6059
    %7288 = vmatprep.subr.mxu0 0.0
    %7289 = vmatpush1.msra.mxu0 %v6064
    %7290 = vmatprep.subr.mxu0 0.0
    %7291 = vmatpush1.msra.mxu0 %v6069
    %7292 = vmatprep.subr.mxu0 0.0
    %7293 = vmatpush1.msra.mxu0 %v6074
    %7294 = vmatprep.subr.mxu0 0.0
    %7295 = vmatpush1.msra.mxu0 %v6079
    %7296 = vmatprep.subr.mxu0 0.0
    %7297 = vmatpush1.msra.mxu0 %v6084
    %7298 = vmatprep.subr.mxu0 0.0
    %7299 = vmatpush1.msra.mxu0 %v6089
    %7300 = vmatprep.subr.mxu0 0.0
    %7301 = vmatpush1.msra.mxu0 %v6094
    %7302 = vmatprep.subr.mxu0 0.0
    %7303 = vmatpush1.msra.mxu0 %v6099
    %7304 = vmatprep.subr.mxu0 0.0
    %7305 = vmatpush1.msra.mxu0 %v6104
    %7306 = vmatprep.subr.mxu0 0.0
    %7307 = vmatpush1.msra.mxu0 %v6109
    %7308 = vmatprep.subr.mxu0 0.0
    %7309 = vmatpush1.msra.mxu0 %v6114
    %7310 = vmatprep.subr.mxu0 0.0
    %7311 = vmatpush1.msra.mxu0 %v6119
    %7312 = vmatprep.subr.mxu0 0.0
    %7313 = vmatpush1.msra.mxu0 %v6124
    %7314 = vmatprep.subr.mxu0 0.0
    %7315 = vmatpush1.msra.mxu0 %v6129
    %7316 = vmatprep.subr.mxu0 0.0
    %7317 = vmatpush1.msra.mxu0 %v6134
    %7318 = vmatprep.subr.mxu0 0.0
    %7319 = vmatpush1.msra.mxu0 %v6139
    %7320 = vmatprep.subr.mxu0 0.0
    %7321 = vmatpush1.msra.mxu0 %v6144
    %7322 = vmatprep.subr.mxu0 0.0
    %7323 = vmatpush1.msra.mxu0 %v6149
    %7324 = vmatprep.subr.mxu0 0.0
    %7325 = vmatpush1.msra.mxu0 %v6154
    %7326 = vmatprep.mubr.f32.mxu0 %v5512
    %7327 = vmatmul.mubr.f32.gmra.mrb[0].mxu0 %v5511
    %v7328 = vpop.f32.mrb[0].mxu0
    %v7329 = vadd.f32 %v7259, %v7328
    %v7330 = vpop.f32.mrb[0].mxu0
    %7331 = vdwg.mxu0
    %7332 = vmatprep.subr.mxu0 0.0
    %7333 = vmatpush1.msra.mxu0 %v6159
    %7334 = vmatprep.subr.mxu0 0.0
    %7335 = vmatpush1.msra.mxu0 %v6164
    %7336 = vmatprep.subr.mxu0 0.0
    %7337 = vmatpush1.msra.mxu0 %v6169
    %7338 = vmatprep.subr.mxu0 0.0
    %7339 = vmatpush1.msra.mxu0 %v6174
    %7340 = vmatprep.subr.mxu0 0.0
    %7341 = vmatpush1.msra.mxu0 %v6179
    %7342 = vmatprep.subr.mxu0 0.0
    %7343 = vmatpush1.msra.mxu0 %v6184
    %7344 = vmatprep.subr.mxu0 0.0
    %7345 = vmatpush1.msra.mxu0 %v6189
    %7346 = vmatprep.subr.mxu0 0.0
    %7347 = vmatpush1.msra.mxu0 %v6194
    %7348 = vmatprep.subr.mxu0 0.0
    %7349 = vmatpush1.msra.mxu0 %v6199
    %7350 = vmatprep.subr.mxu0 0.0
    %7351 = vmatpush1.msra.mxu0 %v6204
    %7352 = vmatprep.subr.mxu0 0.0
    %7353 = vmatpush1.msra.mxu0 %v6209
    %7354 = vmatprep.subr.mxu0 0.0
    %7355 = vmatpush1.msra.mxu0 %v6214
    %7356 = vmatprep.subr.mxu0 0.0
    %7357 = vmatpush1.msra.mxu0 %v6219
    %7358 = vmatprep.subr.mxu0 0.0
    %7359 = vmatpush1.msra.mxu0 %v6224
    %7360 = vmatprep.subr.mxu0 0.0
    %7361 = vmatpush1.msra.mxu0 %v6229
    %7362 = vmatprep.subr.mxu0 0.0
    %7363 = vmatpush1.msra.mxu0 %v6234
    %7364 = vmatprep.subr.mxu0 0.0
    %7365 = vmatpush1.msra.mxu0 %v6239
    %7366 = vmatprep.subr.mxu0 0.0
    %7367 = vmatpush1.msra.mxu0 %v6244
    %7368 = vmatprep.subr.mxu0 0.0
    %7369 = vmatpush1.msra.mxu0 %v6249
    %7370 = vmatprep.subr.mxu0 0.0
    %7371 = vmatpush1.msra.mxu0 %v6254
    %7372 = vmatprep.subr.mxu0 0.0
    %7373 = vmatpush1.msra.mxu0 %v6259
    %7374 = vmatprep.subr.mxu0 0.0
    %7375 = vmatpush1.msra.mxu0 %v6264
    %7376 = vmatprep.subr.mxu0 0.0
    %7377 = vmatpush1.msra.mxu0 %v6269
    %7378 = vmatprep.subr.mxu0 0.0
    %7379 = vmatpush1.msra.mxu0 %v6274
    %7380 = vmatprep.subr.mxu0 0.0
    %7381 = vmatpush1.msra.mxu0 %v6279
    %7382 = vmatprep.subr.mxu0 0.0
    %7383 = vmatpush1.msra.mxu0 %v6284
    %7384 = vmatprep.subr.mxu0 0.0
    %7385 = vmatpush1.msra.mxu0 %v6289
    %7386 = vmatprep.subr.mxu0 0.0
    %7387 = vmatpush1.msra.mxu0 %v6294
    %7388 = vmatprep.subr.mxu0 0.0
    %7389 = vmatpush1.msra.mxu0 %v6299
    %7390 = vmatprep.subr.mxu0 0.0
    %7391 = vmatpush1.msra.mxu0 %v6304
    %7392 = vmatprep.subr.mxu0 0.0
    %7393 = vmatpush1.msra.mxu0 %v6309
    %7394 = vmatprep.subr.mxu0 0.0
    %7395 = vmatpush1.msra.mxu0 %v6314
    %7396 = vmatprep.mubr.f32.mxu0 %v5514
    %7397 = vmatmul.mubr.f32.gmra.mrb[0].mxu0 %v5513
    %v7398 = vpop.f32.mrb[0].mxu0
    %v7399 = vadd.f32 %v7329, %v7398
    %v7400 = vpop.f32.mrb[0].mxu0
    %7401 = vdwg.mxu0
    %v7407 = vcombine.low %v6693, %v6695
    %v7408 = vcombine.low %v7048, %v7050
    %v7410 = vunpack.c.l.s4 1983009808
    %v7411 = vunpack.c.0.s8 %v7410
    %v7412 = vlaneseq
    %v7413 = vshrl.u32 %v7412, 7
    %v7414 = vsub.s32 %v7411, %v7413
    %v7415 = vrot.slane %v7407, %v7414
    %v7417 = vunpack.c.l.s4 1983009808
    %v7418 = vunpack.c.0.s8 %v7417
    %v7419 = vlaneseq
    %v7420 = vshrl.u32 %v7419, 7
    %v7421 = vsub.s32 %v7418, %v7420
    %v7422 = vrot.slane %v7408, %v7421
    %v7423 = vcombine.low %v7415, %v7422
    %v7425 = vunpack.c.l.s4 1983009808
    %v7426 = vunpack.c.0.s8 %v7425
    %v7427 = vlaneseq
    %v7428 = vshrl.u32 %v7427, 7
    %v7429 = vsub.s32 %v7426, %v7428
    %v7430 = vrot.slane %v7399, %v7429
    %7433 = vst [vmem:[#allocation14] sm:$0xff] %v7423
    %7434 = vst [vmem:[#allocation14 + $0x8] sm:$0x3] %v7430
    // Predicated region
    $region58: #{tpu_custom_call.1} parent=1 // pred_check
      _
    $region59: #{tpu_custom_call.1} parent=1 // pred_check_branch
      %7436 = sbr.rel (0) target = $region61
    $region60: #{tpu_custom_call.1} parent=1 // pred_region
      %s7438 = ssub.s32 160, 160
      %7439 = vsyncadd [#allocation4], %s7438
      %s7441 = sshll.u32 [#allocation14], 4
      %s7442 = int_to_ptr.vmem [resolvable:$true] %s7441
      %7444 = dma.vmem_to_hbm [thread:$0]  %s7442, 160, %s7, [#allocation4]
    $region61: #{tpu_custom_call.1} parent=1 // pred_fallthru
      _
    // Predicated region
    $region62: #{tpu_custom_call.1} parent=1 // pred_check
      _
    $region63: #{tpu_custom_call.1} parent=1 // pred_check_branch
      %7446 = sbr.rel (0) target = $region65
    $region64: #{tpu_custom_call.1} parent=1 // pred_region
      %7447 = dma.done [#allocation4], 160
    $region65: #{tpu_custom_call.1} parent=1 // pred_fallthru
      _
    %7448 = vsyncpa [#allocation3], 1
    %7449 = vsyncpa [#allocation6], 1
    %7450 = vsyncpa [#allocation9], 1
    %7451 = vsyncpa [#allocation12], 1
    %7452 = vsyncpa [#allocation4], 1

</llo_original>
